<compile_context>
chip_gen: v7x
topology: tpu7x:2x2x1
jax: 0.10.0
libtpu: 0.0.40
codegen_flags: <defaults>
</compile_context>

<pallas_src>
import functools
import math

import numpy as np

import jax
import jax.numpy as jnp
from jax import lax
from jax.experimental import pallas as pl
from jax.experimental.pallas import tpu as pltpu

DV = 256   # video feature dim
DA = 128   # audio feature dim
DH = 128   # co-attention projection dim

PACKED_MAX_M = 256   # pack batches into one dense affinity matmul when BB*T <= this
GATE_PAD = 128       # stage-1 gate columns zero-padded to a full 128-lane group

# Merged weight column layouts (all bf16, right-multiplication (in, out)):
#   wv0   : (DV, DH+DA)           = [wqv0/sqrt(DH) | wva0]
#   wa0   : (DA, DH+DV)           = [wqa0          | wav0]
#   wv1   : (DV, DH+DA+GATE_PAD)  = [wqv1/sqrt(DH) | wva1 | wvg1*10, zero-pad]
#   wa1   : (DA, DH+DV+GATE_PAD)  = [wqa1          | wav1 | wag1*10, zero-pad]
#   wvg2s : (DV, 5)               = [wvg2 | wvgs] * 10
#   wag2s : (DA, 5)               = [wag2 | wags] * 10
WEIGHT_BYTES = 2 * (DV * (DH + DA) + DA * (DH + DV)
                    + DV * (DH + DA + GATE_PAD) + DA * (DH + DV + GATE_PAD)
                    + DV * 5 + DA * 5)


def hgrjca_kernel(video_ref, audio_ref, mask_ref,
                  wv0_ref, wa0_ref, wv1_ref, wa1_ref,
                  wvg2s_ref, wag2s_ref,
                  out_ref, *, packed):
    BB, T, _ = video_ref.shape
    M = BB * T
    eps2 = jnp.float32(1e-24)      # F.normalize eps = 1e-12, squared
    bf16 = jnp.bfloat16

    # ---- load + L2-normalize (f32; rsqrt -> EUP) ----
    v = video_ref[...].reshape(M, DV)
    a = audio_ref[...].reshape(M, DA)
    v = v * lax.rsqrt(jnp.maximum(jnp.sum(v * v, axis=-1, keepdims=True), eps2))
    a = a * lax.rsqrt(jnp.maximum(jnp.sum(a * a, axis=-1, keepdims=True), eps2))

    def mm(x_bf, w_ref):
        # bf16 operands, f32 accumulation on the MXU
        return jnp.dot(x_bf, w_ref[...], preferred_element_type=jnp.float32)

    def softmax_last(x):
        x = x - jnp.max(x, axis=-1, keepdims=True)
        e = jnp.exp(x)
        return e * pl.reciprocal(jnp.sum(e, axis=-1, keepdims=True), approx=True)

    relu = lambda x: jnp.maximum(x, jnp.float32(0.0))

    def coattn_block(v_bf, a_bf, wv_ref, wa_ref, n_gate):
        # One merged matmul per modality:
        #   video: (M,DV) x (DV, DH+DA[+pad]) -> [qv | v->a proj | gate logits]
        #   audio: (M,DA) x (DA, DH+DV[+pad]) -> [qa | a->v proj | gate logits]
        pv = mm(v_bf, wv_ref)
        pa = mm(a_bf, wa_ref)
        qv = pv[:, 0:DH].astype(bf16)                 # 1/sqrt(DH) folded into wqv
        v_proj = pv[:, DH:DH + DA].astype(bf16)
        qa = pa[:, 0:DH].astype(bf16)
        a_proj = pa[:, DH:DH + DV].astype(bf16)
        gv = pv[:, DH + DA:DH + DA + n_gate] if n_gate else None
        ga = pa[:, DH + DV:DH + DV + n_gate] if n_gate else None

        if packed:
            # All BB batches packed into one dense (M, M) affinity; a block-
            # diagonal mask keeps batches independent.  One MXU matmul replaces
            # BB lane-sparse (T, T) batched matmuls; the reverse direction is
            # just the transpose (no second matmul).
            corr = jnp.einsum('md,nd->mn', qv, qa,
                              preferred_element_type=jnp.float32) + mask_ref[...]
            attn_v = softmax_last(corr).astype(bf16)      # video attends audio
            attn_a = softmax_last(corr.T).astype(bf16)    # audio attends video
            v_att = jnp.tanh(jnp.dot(attn_v, a_proj,
                                     preferred_element_type=jnp.float32))
            a_att = jnp.tanh(jnp.dot(attn_a, v_proj,
                                     preferred_element_type=jnp.float32))
        else:
            qv3 = qv.reshape(BB, T, DH)
            qa3 = qa.reshape(BB, T, DH)
            corr = jnp.einsum('btd,bsd->bts', qv3, qa3,
                              preferred_element_type=jnp.float32)     # (BB,T,T)
            attn_v = softmax_last(corr).astype(bf16)
            attn_a = softmax_last(jnp.swapaxes(corr, -1, -2)).astype(bf16)
            v_att = jnp.tanh(jnp.einsum(
                'bts,bsd->btd', attn_v, a_proj.reshape(BB, T, DV),
                preferred_element_type=jnp.float32)).reshape(M, DV)
            a_att = jnp.tanh(jnp.einsum(
                'bst,btd->bsd', attn_a, v_proj.reshape(BB, T, DA),
                preferred_element_type=jnp.float32)).reshape(M, DA)
        return v_att, a_att, gv, ga

    v_bf = v.astype(bf16)
    a_bf = a.astype(bf16)

    # coattn = DCNLayer(256, 128, num_seq=2, dropout)  (dropout inactive at eval)
    v1, a1, _, _ = coattn_block(v_bf, a_bf, wv0_ref, wa0_ref, 0)
    v1_bf = v1.astype(bf16)
    a1_bf = a1.astype(bf16)
    # Block 2 also produces the stage-1 gate logits (gate weights merged in,
    # x10 temperature folded at prep time).
    v2, a2, g1v, g1a = coattn_block(v1_bf, a1_bf, wv1_ref, wa1_ref, 2)
    v2_bf = v2.astype(bf16)
    a2_bf = a2.astype(bf16)
    # atten_video = [v1, v2]; atten_audio = [a1, a2]  -> [-2] = *1, [-1] = *2

    # ---- stage 1 gating ----
    sw1v = softmax_last(g1v)                                   # (M, 2)
    gated_video_s1 = relu(sw1v[:, 0:1] * v + sw1v[:, 1:2] * v1)
    sw1a = softmax_last(g1a)                                   # (M, 2)
    gated_audio_s1 = relu(sw1a[:, 0:1] * a + sw1a[:, 1:2] * a1)

    # ---- stage 2 + final stage gating (merged gate matmul per input) ----
    gv_logits = mm(v2_bf, wvg2s_ref)                           # (M, 5)
    w2v = softmax_last(gv_logits[:, 0:3])
    swsv = softmax_last(gv_logits[:, 3:5])
    gated_video = relu(w2v[:, 0:1] * v + w2v[:, 1:2] * v1 + w2v[:, 2:3] * v2)
    gated_video_stage = relu(swsv[:, 0:1] * gated_video_s1
                             + swsv[:, 1:2] * gated_video)

    ga_logits = mm(a2_bf, wag2s_ref)                           # (M, 5)
    w2a = softmax_last(ga_logits[:, 0:3])
    swsa = softmax_last(ga_logits[:, 3:5])
    gated_audio = relu(w2a[:, 0:1] * a + w2a[:, 1:2] * a1 + w2a[:, 2:3] * a2)
    gated_audio_stage = relu(swsa[:, 0:1] * gated_audio_s1
                             + swsa[:, 1:2] * gated_audio)

    # concat along feature dim: two 128-lane-aligned slab stores (unmasked vst)
    out_ref[:, :, 0:DV] = gated_video_stage.reshape(BB, T, DV).astype(out_ref.dtype)
    out_ref[:, :, DV:DV + DA] = gated_audio_stage.reshape(BB, T, DA).astype(out_ref.dtype)


# (name, fan_in, fan_out) — stored as (in, out) for right-multiplication;
# xavier bound only depends on fan_in + fan_out so it matches the PyTorch init.
PARAM_SHAPES = [
    ("wqv0", DV, DH), ("wqa0", DA, DH), ("wav0", DA, DV), ("wva0", DV, DA),
    ("wqv1", DV, DH), ("wqa1", DA, DH), ("wav1", DA, DV), ("wva1", DV, DA),
    ("wvg1", DV, 2), ("wag1", DA, 2),
    ("wvg2", DV, 3), ("wag2", DA, 3),
    ("wvgs", DV, 2), ("wags", DA, 2),
]


def xavier_uniform(key, fan_in, fan_out, gain=1.0):
    bound = gain * math.sqrt(6.0 / (fan_in + fan_out))
    return jax.random.uniform(key, (fan_in, fan_out), jnp.float32, -bound, bound)


def init_params(key):
    keys = jax.random.split(key, len(PARAM_SHAPES))
    return {name: xavier_uniform(k, fi, fo)
            for k, (name, fi, fo) in zip(keys, PARAM_SHAPES)}
    # All Linear biases are init.constant_(0.0) in the module, so they are
    # omitted (mathematically identical for fresh init).
    # TODO(synk): loading a trained checkpoint needs the bias terms added
    # (gate biases would also need the x10 temperature fold).


def prepare_weights(params):
    """One-time host-side prep: fold constant scales into the weights, merge
    every same-input matmul into one wide weight, pad gate columns to a
    128-lane group, and cast to bf16 for the MXU."""
    inv_sqrt_d = 1.0 / math.sqrt(DH)
    temp = 10.0   # the "/0.1" gate temperature

    def pad_cols(w, width):
        return jnp.pad(w, ((0, 0), (0, width - w.shape[1])))

    wv0 = jnp.concatenate([params["wqv0"] * inv_sqrt_d, params["wva0"]], axis=1)
    wa0 = jnp.concatenate([params["wqa0"], params["wav0"]], axis=1)
    wv1 = jnp.concatenate([params["wqv1"] * inv_sqrt_d, params["wva1"],
                           pad_cols(params["wvg1"] * temp, GATE_PAD)], axis=1)
    wa1 = jnp.concatenate([params["wqa1"], params["wav1"],
                           pad_cols(params["wag1"] * temp, GATE_PAD)], axis=1)
    wvg2s = jnp.concatenate([params["wvg2"], params["wvgs"]], axis=1) * temp
    wag2s = jnp.concatenate([params["wag2"], params["wags"]], axis=1) * temp
    return [w.astype(jnp.bfloat16) for w in (wv0, wa0, wv1, wa1, wvg2s, wag2s)]


def _tpu_generation():
    """Return (num_tensorcores, vmem_limit_bytes) tuned per TPU generation."""
    kind = ""
    try:
        kind = jax.devices()[0].device_kind.lower()
    except Exception:
        pass
    if "v7" in kind or "7x" in kind:
        # v7x: 2 TensorCores/chip, only 64 MiB VMEM/TC -> leave headroom.
        return 2, 48 * 1024 * 1024
    # v5e / v6e (and unknown): 1 TC/chip, 128 MiB physical VMEM.
    return 1, 100 * 1024 * 1024


def _estimate_vmem_bytes(bb, T):
    """Rough upper bound of VMEM use for one grid step."""
    M = bb * T
    io = 2 * 2 * M * (DV + DA) * 4            # in+out blocks, double-buffered, f32
    work = 14 * M * DV * 4                    # f32+bf16 activation/projection temps
    if M <= PACKED_MAX_M:
        work += 5 * M * M * 4                 # packed (M, M) affinity temps
    else:
        work += 5 * bb * T * T * 4            # batched (BB, T, T) affinity temps
    return io + work + WEIGHT_BYTES


def _pick_block_batch(B, T, num_tc, vmem_budget):
    """Largest divisor of B whose block fits the VMEM budget.  On multi-TC
    chips (v7x) split the grid only if each half still feeds the MXU with
    >= 256 rows; single-TC chips never benefit from extra (serial) steps."""
    divisors = [d for d in range(1, B + 1) if B % d == 0]
    fitting = [d for d in divisors if _estimate_vmem_bytes(d, T) <= vmem_budget] or [1]
    bb = max(fitting)
    if num_tc > 1 and bb == B and B > 1:
        halves = [d for d in fitting if d < B and d * T >= 256]
        if halves:
            bb = max(halves)
    return bb


def hgrjca_cam_forward(f1_norm, f2_norm, params, out_dtype=jnp.float32):
    B, T, dv = f1_norm.shape
    _, _, da = f2_norm.shape
    assert dv == DV and da == DA
    if T % 8 != 0:
        # TODO(synk): general T needs masked padding of the sublane/key axes.
        raise ValueError("T must be a multiple of 8 (sublane-aligned reshapes)")

    weights = prepare_weights(params)
    num_tc, vmem_limit = _tpu_generation()
    bb = _pick_block_batch(B, T, num_tc, int(0.75 * vmem_limit))
    grid = (B // bb,)
    M = bb * T
    packed = M <= PACKED_MAX_M

    if packed:
        # Block-diagonal mask keeping the bb packed batches independent in the
        # dense (M, M) affinity.  Static; built on the host, resident in VMEM.
        ids = np.arange(M) // T
        mask = jnp.asarray(
            np.where(ids[:, None] == ids[None, :], 0.0, -1e30).astype(np.float32))
    else:
        mask = jnp.zeros((8, 128), jnp.float32)   # unused dummy

    act_specs = [
        pl.BlockSpec((bb, T, DV), lambda b: (b, 0, 0)),
        pl.BlockSpec((bb, T, DA), lambda b: (b, 0, 0)),
    ]
    # Mask + weights never change across the grid: one whole-array VMEM copy,
    # no per-step double-buffered re-DMA.
    const_specs = [pl.BlockSpec(memory_space=pltpu.MemorySpace.VMEM)
                   for _ in range(1 + len(weights))]
    out_spec = pl.BlockSpec((bb, T, DV + DA), lambda b: (b, 0, 0))

    kernel = functools.partial(hgrjca_kernel, packed=packed)
    return pl.pallas_call(
        kernel,
        out_shape=jax.ShapeDtypeStruct((B, T, DV + DA), out_dtype),
        grid=grid,
        in_specs=act_specs + const_specs,
        out_specs=out_spec,
        compiler_params=pltpu.CompilerParams(
            dimension_semantics=("parallel",),
            vmem_limit_bytes=vmem_limit),
    )(f1_norm, f2_norm, mask, *weights)


if __name__ == "__main__":
    key = jax.random.PRNGKey(0)
    k1, k2, kp = jax.random.split(key, 3)

    B, T = 8, 16
    f1 = jax.random.normal(k1, (B, T, DV), jnp.float32)   # video features
    f2 = jax.random.normal(k2, (B, T, DA), jnp.float32)   # audio features

    params = init_params(kp)

    out = hgrjca_cam_forward(f1, f2, params)
    out = jax.block_until_ready(out)

    assert out.shape == (B, T, DV + DA)
    assert bool(jnp.all(jnp.isfinite(out)))
    assert bool(jnp.all(out >= 0.0))  # both halves pass through ReLU
    print("KERNEL_OK")
</pallas_src>

<mosaic_0001>
module attributes {stable_mosaic.version = 11 : i64} {
  func.func @hgrjca_kernel(%arg0: i32, %arg1: memref<8x16x256xf32, #tpu.memory_space<vmem>>, %arg2: memref<8x16x128xf32, #tpu.memory_space<vmem>>, %arg3: memref<128x128xf32, #tpu.memory_space<vmem>>, %arg4: memref<256x256xbf16, #tpu.memory_space<vmem>>, %arg5: memref<128x384xbf16, #tpu.memory_space<vmem>>, %arg6: memref<256x384xbf16, #tpu.memory_space<vmem>>, %arg7: memref<128x512xbf16, #tpu.memory_space<vmem>>, %arg8: memref<256x5xbf16, #tpu.memory_space<vmem>>, %arg9: memref<128x5xbf16, #tpu.memory_space<vmem>>, %arg10: memref<8x16x384xf32, #tpu.memory_space<vmem>>) attributes {dimension_semantics = [#tpu.dimension_semantics<parallel>], iteration_bounds = array<i64: 1>, scalar_prefetch = 0 : i64, scratch_operands = 0 : i64, tpu.core_type = #tpu.core_type<tc>, window_params = [{transform_indices = @transform_0, window_bounds = array<i64: 8, 16, 256>}, {transform_indices = @transform_1, window_bounds = array<i64: 8, 16, 128>}, {pipeline_mode = #tpu.pipeline_mode<synchronous>, transform_indices = @transform_2, window_bounds = array<i64: 128, 128>}, {pipeline_mode = #tpu.pipeline_mode<synchronous>, transform_indices = @transform_3, window_bounds = array<i64: 256, 256>}, {pipeline_mode = #tpu.pipeline_mode<synchronous>, transform_indices = @transform_4, window_bounds = array<i64: 128, 384>}, {pipeline_mode = #tpu.pipeline_mode<synchronous>, transform_indices = @transform_5, window_bounds = array<i64: 256, 384>}, {pipeline_mode = #tpu.pipeline_mode<synchronous>, transform_indices = @transform_6, window_bounds = array<i64: 128, 512>}, {pipeline_mode = #tpu.pipeline_mode<synchronous>, transform_indices = @transform_7, window_bounds = array<i64: 256, 5>}, {pipeline_mode = #tpu.pipeline_mode<synchronous>, transform_indices = @transform_8, window_bounds = array<i64: 128, 5>}, {transform_indices = @transform_9, window_bounds = array<i64: 8, 16, 384>}]} {
    %c0 = arith.constant 0 : index
    %c0_0 = arith.constant 0 : index
    %c0_1 = arith.constant 0 : index
    %0 = vector.load %arg1[%c0, %c0_0, %c0_1] : memref<8x16x256xf32, #tpu.memory_space<vmem>>, vector<8x16x256xf32>
    %1 = vector.shape_cast %0 : vector<8x16x256xf32> to vector<128x256xf32>
    %c0_2 = arith.constant 0 : index
    %c0_3 = arith.constant 0 : index
    %c0_4 = arith.constant 0 : index
    %2 = vector.load %arg2[%c0_2, %c0_3, %c0_4] : memref<8x16x128xf32, #tpu.memory_space<vmem>>, vector<8x16x128xf32>
    %3 = vector.shape_cast %2 : vector<8x16x128xf32> to vector<128x128xf32>
    %4 = arith.mulf %1, %1 : vector<128x256xf32>
    %cst = arith.constant dense<0.000000e+00> : vector<128xf32>
    %5 = vector.multi_reduction <add>, %4, %cst [1] : vector<128x256xf32> to vector<128xf32>
    %6 = vector.shape_cast %5 : vector<128xf32> to vector<128x1xf32>
    %cst_5 = arith.constant 1.000000e-24 : f32
    %7 = vector.broadcast %cst_5 : f32 to vector<128x1xf32>
    %8 = arith.maximumf %6, %7 : vector<128x1xf32>
    %9 = math.rsqrt %8 : vector<128x1xf32>
    %10 = vector.broadcast %9 : vector<128x1xf32> to vector<128x256xf32>
    %11 = arith.mulf %1, %10 : vector<128x256xf32>
    %12 = arith.mulf %3, %3 : vector<128x128xf32>
    %cst_6 = arith.constant dense<0.000000e+00> : vector<128xf32>
    %13 = vector.multi_reduction <add>, %12, %cst_6 [1] : vector<128x128xf32> to vector<128xf32>
    %14 = vector.shape_cast %13 : vector<128xf32> to vector<128x1xf32>
    %cst_7 = arith.constant 1.000000e-24 : f32
    %15 = vector.broadcast %cst_7 : f32 to vector<128x1xf32>
    %16 = arith.maximumf %14, %15 : vector<128x1xf32>
    %17 = math.rsqrt %16 : vector<128x1xf32>
    %18 = vector.broadcast %17 : vector<128x1xf32> to vector<128x128xf32>
    %19 = arith.mulf %3, %18 : vector<128x128xf32>
    %20 = arith.truncf %11 : vector<128x256xf32> to vector<128x256xbf16>
    %21 = arith.truncf %19 : vector<128x128xf32> to vector<128x128xbf16>
    %c0_8 = arith.constant 0 : index
    %c0_9 = arith.constant 0 : index
    %22 = vector.load %arg4[%c0_8, %c0_9] : memref<256x256xbf16, #tpu.memory_space<vmem>>, vector<256x256xbf16>
    %cst_10 = arith.constant dense<0.000000e+00> : vector<128x256xf32>
    %23 = tpu.matmul %20, %22, %cst_10 {dimension_numbers = #tpu.dot_dimension_numbers<[1], [0], [0], [1], [0, 0, 1, 1], [], []>} : vector<128x256xbf16>, vector<256x256xbf16>, vector<128x256xf32> -> vector<128x256xf32>
    %c0_11 = arith.constant 0 : index
    %c0_12 = arith.constant 0 : index
    %24 = vector.load %arg5[%c0_11, %c0_12] : memref<128x384xbf16, #tpu.memory_space<vmem>>, vector<128x384xbf16>
    %cst_13 = arith.constant dense<0.000000e+00> : vector<128x384xf32>
    %25 = tpu.matmul %21, %24, %cst_13 {dimension_numbers = #tpu.dot_dimension_numbers<[1], [0], [0], [1], [0, 0, 1, 1], [], []>} : vector<128x128xbf16>, vector<128x384xbf16>, vector<128x384xf32> -> vector<128x384xf32>
    %26 = vector.extract_strided_slice %23 {offsets = [0, 0], sizes = [128, 128], strides = [1, 1]} : vector<128x256xf32> to vector<128x128xf32>
    %27 = arith.truncf %26 : vector<128x128xf32> to vector<128x128xbf16>
    %28 = vector.extract_strided_slice %23 {offsets = [0, 128], sizes = [128, 128], strides = [1, 1]} : vector<128x256xf32> to vector<128x128xf32>
    %29 = arith.truncf %28 : vector<128x128xf32> to vector<128x128xbf16>
    %30 = vector.extract_strided_slice %25 {offsets = [0, 0], sizes = [128, 128], strides = [1, 1]} : vector<128x384xf32> to vector<128x128xf32>
    %31 = arith.truncf %30 : vector<128x128xf32> to vector<128x128xbf16>
    %32 = vector.extract_strided_slice %25 {offsets = [0, 128], sizes = [128, 256], strides = [1, 1]} : vector<128x384xf32> to vector<128x256xf32>
    %33 = arith.truncf %32 : vector<128x256xf32> to vector<128x256xbf16>
    "tpu.trace_start"() <{level = 10 : i32, message = "md,nd->mn"}> : () -> ()
    %cst_14 = arith.constant dense<0.000000e+00> : vector<128x128xf32>
    %34 = tpu.matmul %27, %31, %cst_14 {dimension_numbers = #tpu.dot_dimension_numbers<[1], [1], [0], [0], [0, 0, 1, 0], [], []>} : vector<128x128xbf16>, vector<128x128xbf16>, vector<128x128xf32> -> vector<128x128xf32>
    "tpu.trace_stop"() : () -> ()
    %c0_15 = arith.constant 0 : index
    %c0_16 = arith.constant 0 : index
    %35 = vector.load %arg3[%c0_15, %c0_16] : memref<128x128xf32, #tpu.memory_space<vmem>>, vector<128x128xf32>
    %36 = arith.addf %34, %35 : vector<128x128xf32>
    %cst_17 = arith.constant dense<0xFF800000> : vector<128xf32>
    %37 = vector.multi_reduction <maximumf>, %36, %cst_17 [1] : vector<128x128xf32> to vector<128xf32>
    %38 = vector.shape_cast %37 : vector<128xf32> to vector<128x1xf32>
    %39 = vector.broadcast %38 : vector<128x1xf32> to vector<128x128xf32>
    %40 = arith.subf %36, %39 : vector<128x128xf32>
    %41 = math.exp %40 : vector<128x128xf32>
    %cst_18 = arith.constant dense<0.000000e+00> : vector<128xf32>
    %42 = vector.multi_reduction <add>, %41, %cst_18 [1] : vector<128x128xf32> to vector<128xf32>
    %43 = vector.shape_cast %42 : vector<128xf32> to vector<128x1xf32>
    %44 = tpu.reciprocal %43 {approx = true} : vector<128x1xf32> -> vector<128x1xf32>
    %45 = vector.broadcast %44 : vector<128x1xf32> to vector<128x128xf32>
    %46 = arith.mulf %41, %45 : vector<128x128xf32>
    %47 = arith.truncf %46 : vector<128x128xf32> to vector<128x128xbf16>
    %48 = tpu.transpose %36, [1, 0] : vector<128x128xf32> -> vector<128x128xf32>
    %cst_19 = arith.constant dense<0xFF800000> : vector<128xf32>
    %49 = vector.multi_reduction <maximumf>, %48, %cst_19 [1] : vector<128x128xf32> to vector<128xf32>
    %50 = vector.shape_cast %49 : vector<128xf32> to vector<128x1xf32>
    %51 = vector.broadcast %50 : vector<128x1xf32> to vector<128x128xf32>
    %52 = arith.subf %48, %51 : vector<128x128xf32>
    %53 = math.exp %52 : vector<128x128xf32>
    %cst_20 = arith.constant dense<0.000000e+00> : vector<128xf32>
    %54 = vector.multi_reduction <add>, %53, %cst_20 [1] : vector<128x128xf32> to vector<128xf32>
    %55 = vector.shape_cast %54 : vector<128xf32> to vector<128x1xf32>
    %56 = tpu.reciprocal %55 {approx = true} : vector<128x1xf32> -> vector<128x1xf32>
    %57 = vector.broadcast %56 : vector<128x1xf32> to vector<128x128xf32>
    %58 = arith.mulf %53, %57 : vector<128x128xf32>
    %59 = arith.truncf %58 : vector<128x128xf32> to vector<128x128xbf16>
    %cst_21 = arith.constant dense<0.000000e+00> : vector<128x256xf32>
    %60 = tpu.matmul %47, %33, %cst_21 {dimension_numbers = #tpu.dot_dimension_numbers<[1], [0], [0], [1], [0, 0, 1, 1], [], []>} : vector<128x128xbf16>, vector<128x256xbf16>, vector<128x256xf32> -> vector<128x256xf32>
    %61 = math.tanh %60 : vector<128x256xf32>
    %cst_22 = arith.constant dense<0.000000e+00> : vector<128x128xf32>
    %62 = tpu.matmul %59, %29, %cst_22 {dimension_numbers = #tpu.dot_dimension_numbers<[1], [0], [0], [1], [0, 0, 1, 1], [], []>} : vector<128x128xbf16>, vector<128x128xbf16>, vector<128x128xf32> -> vector<128x128xf32>
    %63 = math.tanh %62 : vector<128x128xf32>
    %64 = arith.truncf %61 : vector<128x256xf32> to vector<128x256xbf16>
    %65 = arith.truncf %63 : vector<128x128xf32> to vector<128x128xbf16>
    %c0_23 = arith.constant 0 : index
    %c0_24 = arith.constant 0 : index
    %66 = vector.load %arg6[%c0_23, %c0_24] : memref<256x384xbf16, #tpu.memory_space<vmem>>, vector<256x384xbf16>
    %cst_25 = arith.constant dense<0.000000e+00> : vector<128x384xf32>
    %67 = tpu.matmul %64, %66, %cst_25 {dimension_numbers = #tpu.dot_dimension_numbers<[1], [0], [0], [1], [0, 0, 1, 1], [], []>} : vector<128x256xbf16>, vector<256x384xbf16>, vector<128x384xf32> -> vector<128x384xf32>
    %c0_26 = arith.constant 0 : index
    %c0_27 = arith.constant 0 : index
    %68 = vector.load %arg7[%c0_26, %c0_27] : memref<128x512xbf16, #tpu.memory_space<vmem>>, vector<128x512xbf16>
    %cst_28 = arith.constant dense<0.000000e+00> : vector<128x512xf32>
    %69 = tpu.matmul %65, %68, %cst_28 {dimension_numbers = #tpu.dot_dimension_numbers<[1], [0], [0], [1], [0, 0, 1, 1], [], []>} : vector<128x128xbf16>, vector<128x512xbf16>, vector<128x512xf32> -> vector<128x512xf32>
    %70 = vector.extract_strided_slice %67 {offsets = [0, 0], sizes = [128, 128], strides = [1, 1]} : vector<128x384xf32> to vector<128x128xf32>
    %71 = arith.truncf %70 : vector<128x128xf32> to vector<128x128xbf16>
    %72 = vector.extract_strided_slice %67 {offsets = [0, 128], sizes = [128, 128], strides = [1, 1]} : vector<128x384xf32> to vector<128x128xf32>
    %73 = arith.truncf %72 : vector<128x128xf32> to vector<128x128xbf16>
    %74 = vector.extract_strided_slice %69 {offsets = [0, 0], sizes = [128, 128], strides = [1, 1]} : vector<128x512xf32> to vector<128x128xf32>
    %75 = arith.truncf %74 : vector<128x128xf32> to vector<128x128xbf16>
    %76 = vector.extract_strided_slice %69 {offsets = [0, 128], sizes = [128, 256], strides = [1, 1]} : vector<128x512xf32> to vector<128x256xf32>
    %77 = arith.truncf %76 : vector<128x256xf32> to vector<128x256xbf16>
    %78 = vector.extract_strided_slice %67 {offsets = [0, 256], sizes = [128, 2], strides = [1, 1]} : vector<128x384xf32> to vector<128x2xf32>
    %79 = vector.extract_strided_slice %69 {offsets = [0, 384], sizes = [128, 2], strides = [1, 1]} : vector<128x512xf32> to vector<128x2xf32>
    "tpu.trace_start"() <{level = 10 : i32, message = "md,nd->mn"}> : () -> ()
    %cst_29 = arith.constant dense<0.000000e+00> : vector<128x128xf32>
    %80 = tpu.matmul %71, %75, %cst_29 {dimension_numbers = #tpu.dot_dimension_numbers<[1], [1], [0], [0], [0, 0, 1, 0], [], []>} : vector<128x128xbf16>, vector<128x128xbf16>, vector<128x128xf32> -> vector<128x128xf32>
    "tpu.trace_stop"() : () -> ()
    %c0_30 = arith.constant 0 : index
    %c0_31 = arith.constant 0 : index
    %81 = vector.load %arg3[%c0_30, %c0_31] : memref<128x128xf32, #tpu.memory_space<vmem>>, vector<128x128xf32>
    %82 = arith.addf %80, %81 : vector<128x128xf32>
    %cst_32 = arith.constant dense<0xFF800000> : vector<128xf32>
    %83 = vector.multi_reduction <maximumf>, %82, %cst_32 [1] : vector<128x128xf32> to vector<128xf32>
    %84 = vector.shape_cast %83 : vector<128xf32> to vector<128x1xf32>
    %85 = vector.broadcast %84 : vector<128x1xf32> to vector<128x128xf32>
    %86 = arith.subf %82, %85 : vector<128x128xf32>
    %87 = math.exp %86 : vector<128x128xf32>
    %cst_33 = arith.constant dense<0.000000e+00> : vector<128xf32>
    %88 = vector.multi_reduction <add>, %87, %cst_33 [1] : vector<128x128xf32> to vector<128xf32>
    %89 = vector.shape_cast %88 : vector<128xf32> to vector<128x1xf32>
    %90 = tpu.reciprocal %89 {approx = true} : vector<128x1xf32> -> vector<128x1xf32>
    %91 = vector.broadcast %90 : vector<128x1xf32> to vector<128x128xf32>
    %92 = arith.mulf %87, %91 : vector<128x128xf32>
    %93 = arith.truncf %92 : vector<128x128xf32> to vector<128x128xbf16>
    %94 = tpu.transpose %82, [1, 0] : vector<128x128xf32> -> vector<128x128xf32>
    %cst_34 = arith.constant dense<0xFF800000> : vector<128xf32>
    %95 = vector.multi_reduction <maximumf>, %94, %cst_34 [1] : vector<128x128xf32> to vector<128xf32>
    %96 = vector.shape_cast %95 : vector<128xf32> to vector<128x1xf32>
    %97 = vector.broadcast %96 : vector<128x1xf32> to vector<128x128xf32>
    %98 = arith.subf %94, %97 : vector<128x128xf32>
    %99 = math.exp %98 : vector<128x128xf32>
    %cst_35 = arith.constant dense<0.000000e+00> : vector<128xf32>
    %100 = vector.multi_reduction <add>, %99, %cst_35 [1] : vector<128x128xf32> to vector<128xf32>
    %101 = vector.shape_cast %100 : vector<128xf32> to vector<128x1xf32>
    %102 = tpu.reciprocal %101 {approx = true} : vector<128x1xf32> -> vector<128x1xf32>
    %103 = vector.broadcast %102 : vector<128x1xf32> to vector<128x128xf32>
    %104 = arith.mulf %99, %103 : vector<128x128xf32>
    %105 = arith.truncf %104 : vector<128x128xf32> to vector<128x128xbf16>
    %cst_36 = arith.constant dense<0.000000e+00> : vector<128x256xf32>
    %106 = tpu.matmul %93, %77, %cst_36 {dimension_numbers = #tpu.dot_dimension_numbers<[1], [0], [0], [1], [0, 0, 1, 1], [], []>} : vector<128x128xbf16>, vector<128x256xbf16>, vector<128x256xf32> -> vector<128x256xf32>
    %107 = math.tanh %106 : vector<128x256xf32>
    %cst_37 = arith.constant dense<0.000000e+00> : vector<128x128xf32>
    %108 = tpu.matmul %105, %73, %cst_37 {dimension_numbers = #tpu.dot_dimension_numbers<[1], [0], [0], [1], [0, 0, 1, 1], [], []>} : vector<128x128xbf16>, vector<128x128xbf16>, vector<128x128xf32> -> vector<128x128xf32>
    %109 = math.tanh %108 : vector<128x128xf32>
    %110 = arith.truncf %107 : vector<128x256xf32> to vector<128x256xbf16>
    %111 = arith.truncf %109 : vector<128x128xf32> to vector<128x128xbf16>
    %cst_38 = arith.constant dense<0xFF800000> : vector<128xf32>
    %112 = vector.multi_reduction <maximumf>, %78, %cst_38 [1] : vector<128x2xf32> to vector<128xf32>
    %113 = vector.shape_cast %112 : vector<128xf32> to vector<128x1xf32>
    %114 = vector.broadcast %113 : vector<128x1xf32> to vector<128x2xf32>
    %115 = arith.subf %78, %114 : vector<128x2xf32>
    %116 = math.exp %115 : vector<128x2xf32>
    %cst_39 = arith.constant dense<0.000000e+00> : vector<128xf32>
    %117 = vector.multi_reduction <add>, %116, %cst_39 [1] : vector<128x2xf32> to vector<128xf32>
    %118 = vector.shape_cast %117 : vector<128xf32> to vector<128x1xf32>
    %119 = tpu.reciprocal %118 {approx = true} : vector<128x1xf32> -> vector<128x1xf32>
    %120 = vector.broadcast %119 : vector<128x1xf32> to vector<128x2xf32>
    %121 = arith.mulf %116, %120 : vector<128x2xf32>
    %122 = vector.extract_strided_slice %121 {offsets = [0, 0], sizes = [128, 1], strides = [1, 1]} : vector<128x2xf32> to vector<128x1xf32>
    %123 = vector.broadcast %122 : vector<128x1xf32> to vector<128x256xf32>
    %124 = arith.mulf %123, %11 : vector<128x256xf32>
    %125 = vector.extract_strided_slice %121 {offsets = [0, 1], sizes = [128, 1], strides = [1, 1]} : vector<128x2xf32> to vector<128x1xf32>
    %126 = vector.broadcast %125 : vector<128x1xf32> to vector<128x256xf32>
    %127 = arith.mulf %126, %61 : vector<128x256xf32>
    %128 = arith.addf %124, %127 : vector<128x256xf32>
    %cst_40 = arith.constant 0.000000e+00 : f32
    %129 = vector.broadcast %cst_40 : f32 to vector<128x256xf32>
    %130 = arith.maximumf %128, %129 : vector<128x256xf32>
    %cst_41 = arith.constant dense<0xFF800000> : vector<128xf32>
    %131 = vector.multi_reduction <maximumf>, %79, %cst_41 [1] : vector<128x2xf32> to vector<128xf32>
    %132 = vector.shape_cast %131 : vector<128xf32> to vector<128x1xf32>
    %133 = vector.broadcast %132 : vector<128x1xf32> to vector<128x2xf32>
    %134 = arith.subf %79, %133 : vector<128x2xf32>
    %135 = math.exp %134 : vector<128x2xf32>
    %cst_42 = arith.constant dense<0.000000e+00> : vector<128xf32>
    %136 = vector.multi_reduction <add>, %135, %cst_42 [1] : vector<128x2xf32> to vector<128xf32>
    %137 = vector.shape_cast %136 : vector<128xf32> to vector<128x1xf32>
    %138 = tpu.reciprocal %137 {approx = true} : vector<128x1xf32> -> vector<128x1xf32>
    %139 = vector.broadcast %138 : vector<128x1xf32> to vector<128x2xf32>
    %140 = arith.mulf %135, %139 : vector<128x2xf32>
    %141 = vector.extract_strided_slice %140 {offsets = [0, 0], sizes = [128, 1], strides = [1, 1]} : vector<128x2xf32> to vector<128x1xf32>
    %142 = vector.broadcast %141 : vector<128x1xf32> to vector<128x128xf32>
    %143 = arith.mulf %142, %19 : vector<128x128xf32>
    %144 = vector.extract_strided_slice %140 {offsets = [0, 1], sizes = [128, 1], strides = [1, 1]} : vector<128x2xf32> to vector<128x1xf32>
    %145 = vector.broadcast %144 : vector<128x1xf32> to vector<128x128xf32>
    %146 = arith.mulf %145, %63 : vector<128x128xf32>
    %147 = arith.addf %143, %146 : vector<128x128xf32>
    %cst_43 = arith.constant 0.000000e+00 : f32
    %148 = vector.broadcast %cst_43 : f32 to vector<128x128xf32>
    %149 = arith.maximumf %147, %148 : vector<128x128xf32>
    %c0_44 = arith.constant 0 : index
    %c0_45 = arith.constant 0 : index
    %150 = vector.load %arg8[%c0_44, %c0_45] : memref<256x5xbf16, #tpu.memory_space<vmem>>, vector<256x5xbf16>
    %cst_46 = arith.constant dense<0.000000e+00> : vector<128x5xf32>
    %151 = tpu.matmul %110, %150, %cst_46 {dimension_numbers = #tpu.dot_dimension_numbers<[1], [0], [0], [1], [0, 0, 1, 1], [], []>} : vector<128x256xbf16>, vector<256x5xbf16>, vector<128x5xf32> -> vector<128x5xf32>
    %152 = vector.extract_strided_slice %151 {offsets = [0, 0], sizes = [128, 3], strides = [1, 1]} : vector<128x5xf32> to vector<128x3xf32>
    %cst_47 = arith.constant dense<0xFF800000> : vector<128xf32>
    %153 = vector.multi_reduction <maximumf>, %152, %cst_47 [1] : vector<128x3xf32> to vector<128xf32>
    %154 = vector.shape_cast %153 : vector<128xf32> to vector<128x1xf32>
    %155 = vector.broadcast %154 : vector<128x1xf32> to vector<128x3xf32>
    %156 = arith.subf %152, %155 : vector<128x3xf32>
    %157 = math.exp %156 : vector<128x3xf32>
    %cst_48 = arith.constant dense<0.000000e+00> : vector<128xf32>
    %158 = vector.multi_reduction <add>, %157, %cst_48 [1] : vector<128x3xf32> to vector<128xf32>
    %159 = vector.shape_cast %158 : vector<128xf32> to vector<128x1xf32>
    %160 = tpu.reciprocal %159 {approx = true} : vector<128x1xf32> -> vector<128x1xf32>
    %161 = vector.broadcast %160 : vector<128x1xf32> to vector<128x3xf32>
    %162 = arith.mulf %157, %161 : vector<128x3xf32>
    %163 = vector.extract_strided_slice %151 {offsets = [0, 3], sizes = [128, 2], strides = [1, 1]} : vector<128x5xf32> to vector<128x2xf32>
    %cst_49 = arith.constant dense<0xFF800000> : vector<128xf32>
    %164 = vector.multi_reduction <maximumf>, %163, %cst_49 [1] : vector<128x2xf32> to vector<128xf32>
    %165 = vector.shape_cast %164 : vector<128xf32> to vector<128x1xf32>
    %166 = vector.broadcast %165 : vector<128x1xf32> to vector<128x2xf32>
    %167 = arith.subf %163, %166 : vector<128x2xf32>
    %168 = math.exp %167 : vector<128x2xf32>
    %cst_50 = arith.constant dense<0.000000e+00> : vector<128xf32>
    %169 = vector.multi_reduction <add>, %168, %cst_50 [1] : vector<128x2xf32> to vector<128xf32>
    %170 = vector.shape_cast %169 : vector<128xf32> to vector<128x1xf32>
    %171 = tpu.reciprocal %170 {approx = true} : vector<128x1xf32> -> vector<128x1xf32>
    %172 = vector.broadcast %171 : vector<128x1xf32> to vector<128x2xf32>
    %173 = arith.mulf %168, %172 : vector<128x2xf32>
    %174 = vector.extract_strided_slice %162 {offsets = [0, 0], sizes = [128, 1], strides = [1, 1]} : vector<128x3xf32> to vector<128x1xf32>
    %175 = vector.broadcast %174 : vector<128x1xf32> to vector<128x256xf32>
    %176 = arith.mulf %175, %11 : vector<128x256xf32>
    %177 = vector.extract_strided_slice %162 {offsets = [0, 1], sizes = [128, 1], strides = [1, 1]} : vector<128x3xf32> to vector<128x1xf32>
    %178 = vector.broadcast %177 : vector<128x1xf32> to vector<128x256xf32>
    %179 = arith.mulf %178, %61 : vector<128x256xf32>
    %180 = arith.addf %176, %179 : vector<128x256xf32>
    %181 = vector.extract_strided_slice %162 {offsets = [0, 2], sizes = [128, 1], strides = [1, 1]} : vector<128x3xf32> to vector<128x1xf32>
    %182 = vector.broadcast %181 : vector<128x1xf32> to vector<128x256xf32>
    %183 = arith.mulf %182, %107 : vector<128x256xf32>
    %184 = arith.addf %180, %183 : vector<128x256xf32>
    %cst_51 = arith.constant 0.000000e+00 : f32
    %185 = vector.broadcast %cst_51 : f32 to vector<128x256xf32>
    %186 = arith.maximumf %184, %185 : vector<128x256xf32>
    %187 = vector.extract_strided_slice %173 {offsets = [0, 0], sizes = [128, 1], strides = [1, 1]} : vector<128x2xf32> to vector<128x1xf32>
    %188 = vector.broadcast %187 : vector<128x1xf32> to vector<128x256xf32>
    %189 = arith.mulf %188, %130 : vector<128x256xf32>
    %190 = vector.extract_strided_slice %173 {offsets = [0, 1], sizes = [128, 1], strides = [1, 1]} : vector<128x2xf32> to vector<128x1xf32>
    %191 = vector.broadcast %190 : vector<128x1xf32> to vector<128x256xf32>
    %192 = arith.mulf %191, %186 : vector<128x256xf32>
    %193 = arith.addf %189, %192 : vector<128x256xf32>
    %cst_52 = arith.constant 0.000000e+00 : f32
    %194 = vector.broadcast %cst_52 : f32 to vector<128x256xf32>
    %195 = arith.maximumf %193, %194 : vector<128x256xf32>
    %c0_53 = arith.constant 0 : index
    %c0_54 = arith.constant 0 : index
    %196 = vector.load %arg9[%c0_53, %c0_54] : memref<128x5xbf16, #tpu.memory_space<vmem>>, vector<128x5xbf16>
    %cst_55 = arith.constant dense<0.000000e+00> : vector<128x5xf32>
    %197 = tpu.matmul %111, %196, %cst_55 {dimension_numbers = #tpu.dot_dimension_numbers<[1], [0], [0], [1], [0, 0, 1, 1], [], []>} : vector<128x128xbf16>, vector<128x5xbf16>, vector<128x5xf32> -> vector<128x5xf32>
    %198 = vector.extract_strided_slice %197 {offsets = [0, 0], sizes = [128, 3], strides = [1, 1]} : vector<128x5xf32> to vector<128x3xf32>
    %cst_56 = arith.constant dense<0xFF800000> : vector<128xf32>
    %199 = vector.multi_reduction <maximumf>, %198, %cst_56 [1] : vector<128x3xf32> to vector<128xf32>
    %200 = vector.shape_cast %199 : vector<128xf32> to vector<128x1xf32>
    %201 = vector.broadcast %200 : vector<128x1xf32> to vector<128x3xf32>
    %202 = arith.subf %198, %201 : vector<128x3xf32>
    %203 = math.exp %202 : vector<128x3xf32>
    %cst_57 = arith.constant dense<0.000000e+00> : vector<128xf32>
    %204 = vector.multi_reduction <add>, %203, %cst_57 [1] : vector<128x3xf32> to vector<128xf32>
    %205 = vector.shape_cast %204 : vector<128xf32> to vector<128x1xf32>
    %206 = tpu.reciprocal %205 {approx = true} : vector<128x1xf32> -> vector<128x1xf32>
    %207 = vector.broadcast %206 : vector<128x1xf32> to vector<128x3xf32>
    %208 = arith.mulf %203, %207 : vector<128x3xf32>
    %209 = vector.extract_strided_slice %197 {offsets = [0, 3], sizes = [128, 2], strides = [1, 1]} : vector<128x5xf32> to vector<128x2xf32>
    %cst_58 = arith.constant dense<0xFF800000> : vector<128xf32>
    %210 = vector.multi_reduction <maximumf>, %209, %cst_58 [1] : vector<128x2xf32> to vector<128xf32>
    %211 = vector.shape_cast %210 : vector<128xf32> to vector<128x1xf32>
    %212 = vector.broadcast %211 : vector<128x1xf32> to vector<128x2xf32>
    %213 = arith.subf %209, %212 : vector<128x2xf32>
    %214 = math.exp %213 : vector<128x2xf32>
    %cst_59 = arith.constant dense<0.000000e+00> : vector<128xf32>
    %215 = vector.multi_reduction <add>, %214, %cst_59 [1] : vector<128x2xf32> to vector<128xf32>
    %216 = vector.shape_cast %215 : vector<128xf32> to vector<128x1xf32>
    %217 = tpu.reciprocal %216 {approx = true} : vector<128x1xf32> -> vector<128x1xf32>
    %218 = vector.broadcast %217 : vector<128x1xf32> to vector<128x2xf32>
    %219 = arith.mulf %214, %218 : vector<128x2xf32>
    %220 = vector.extract_strided_slice %208 {offsets = [0, 0], sizes = [128, 1], strides = [1, 1]} : vector<128x3xf32> to vector<128x1xf32>
    %221 = vector.broadcast %220 : vector<128x1xf32> to vector<128x128xf32>
    %222 = arith.mulf %221, %19 : vector<128x128xf32>
    %223 = vector.extract_strided_slice %208 {offsets = [0, 1], sizes = [128, 1], strides = [1, 1]} : vector<128x3xf32> to vector<128x1xf32>
    %224 = vector.broadcast %223 : vector<128x1xf32> to vector<128x128xf32>
    %225 = arith.mulf %224, %63 : vector<128x128xf32>
    %226 = arith.addf %222, %225 : vector<128x128xf32>
    %227 = vector.extract_strided_slice %208 {offsets = [0, 2], sizes = [128, 1], strides = [1, 1]} : vector<128x3xf32> to vector<128x1xf32>
    %228 = vector.broadcast %227 : vector<128x1xf32> to vector<128x128xf32>
    %229 = arith.mulf %228, %109 : vector<128x128xf32>
    %230 = arith.addf %226, %229 : vector<128x128xf32>
    %cst_60 = arith.constant 0.000000e+00 : f32
    %231 = vector.broadcast %cst_60 : f32 to vector<128x128xf32>
    %232 = arith.maximumf %230, %231 : vector<128x128xf32>
    %233 = vector.extract_strided_slice %219 {offsets = [0, 0], sizes = [128, 1], strides = [1, 1]} : vector<128x2xf32> to vector<128x1xf32>
    %234 = vector.broadcast %233 : vector<128x1xf32> to vector<128x128xf32>
    %235 = arith.mulf %234, %149 : vector<128x128xf32>
    %236 = vector.extract_strided_slice %219 {offsets = [0, 1], sizes = [128, 1], strides = [1, 1]} : vector<128x2xf32> to vector<128x1xf32>
    %237 = vector.broadcast %236 : vector<128x1xf32> to vector<128x128xf32>
    %238 = arith.mulf %237, %232 : vector<128x128xf32>
    %239 = arith.addf %235, %238 : vector<128x128xf32>
    %cst_61 = arith.constant 0.000000e+00 : f32
    %240 = vector.broadcast %cst_61 : f32 to vector<128x128xf32>
    %241 = arith.maximumf %239, %240 : vector<128x128xf32>
    %242 = vector.shape_cast %195 : vector<128x256xf32> to vector<8x16x256xf32>
    %c0_62 = arith.constant 0 : index
    %c0_63 = arith.constant 0 : index
    %c0_64 = arith.constant 0 : index
    %243 = vector.load %arg10[%c0_62, %c0_63, %c0_64] : memref<8x16x384xf32, #tpu.memory_space<vmem>>, vector<8x16x256xf32>
    tpu.vector_store %arg10[%c0_62, %c0_63, %c0_64], %242 {strides = array<i32>} : memref<8x16x384xf32, #tpu.memory_space<vmem>>, vector<8x16x256xf32>,
    %244 = vector.shape_cast %241 : vector<128x128xf32> to vector<8x16x128xf32>
    %c0_65 = arith.constant 0 : index
    %c0_66 = arith.constant 0 : index
    %c256 = arith.constant 256 : index
    %245 = vector.load %arg10[%c0_65, %c0_66, %c256] : memref<8x16x384xf32, #tpu.memory_space<vmem>>, vector<8x16x128xf32>
    tpu.vector_store %arg10[%c0_65, %c0_66, %c256], %244 {strides = array<i32>} : memref<8x16x384xf32, #tpu.memory_space<vmem>>, vector<8x16x128xf32>,
    return
  }
  func.func @transform_0(%arg0: i32) -> (i32, i32, i32) {
    %c0_i32 = arith.constant 0 : i32
    %c0_i32_0 = arith.constant 0 : i32
    %c0_i32_1 = arith.constant 0 : i32
    return %arg0, %c0_i32, %c0_i32_0 : i32, i32, i32
  }
  func.func @transform_1(%arg0: i32) -> (i32, i32, i32) {
    %c0_i32 = arith.constant 0 : i32
    %c0_i32_0 = arith.constant 0 : i32
    %c0_i32_1 = arith.constant 0 : i32
    return %arg0, %c0_i32, %c0_i32_0 : i32, i32, i32
  }
  func.func @transform_2(%arg0: i32) -> (i32, i32) {
    %c0_i32 = arith.constant 0 : i32
    %c0_i32_0 = arith.constant 0 : i32
    %c0_i32_1 = arith.constant 0 : i32
    return %c0_i32, %c0_i32_0 : i32, i32
  }
  func.func @transform_3(%arg0: i32) -> (i32, i32) {
    %c0_i32 = arith.constant 0 : i32
    %c0_i32_0 = arith.constant 0 : i32
    %c0_i32_1 = arith.constant 0 : i32
    return %c0_i32, %c0_i32_0 : i32, i32
  }
  func.func @transform_4(%arg0: i32) -> (i32, i32) {
    %c0_i32 = arith.constant 0 : i32
    %c0_i32_0 = arith.constant 0 : i32
    %c0_i32_1 = arith.constant 0 : i32
    return %c0_i32, %c0_i32_0 : i32, i32
  }
  func.func @transform_5(%arg0: i32) -> (i32, i32) {
    %c0_i32 = arith.constant 0 : i32
    %c0_i32_0 = arith.constant 0 : i32
    %c0_i32_1 = arith.constant 0 : i32
    return %c0_i32, %c0_i32_0 : i32, i32
  }
  func.func @transform_6(%arg0: i32) -> (i32, i32) {
    %c0_i32 = arith.constant 0 : i32
    %c0_i32_0 = arith.constant 0 : i32
    %c0_i32_1 = arith.constant 0 : i32
    return %c0_i32, %c0_i32_0 : i32, i32
  }
  func.func @transform_7(%arg0: i32) -> (i32, i32) {
    %c0_i32 = arith.constant 0 : i32
    %c0_i32_0 = arith.constant 0 : i32
    %c0_i32_1 = arith.constant 0 : i32
    return %c0_i32, %c0_i32_0 : i32, i32
  }
  func.func @transform_8(%arg0: i32) -> (i32, i32) {
    %c0_i32 = arith.constant 0 : i32
    %c0_i32_0 = arith.constant 0 : i32
    %c0_i32_1 = arith.constant 0 : i32
    return %c0_i32, %c0_i32_0 : i32, i32
  }
  func.func @transform_9(%arg0: i32) -> (i32, i32, i32) {
    %c0_i32 = arith.constant 0 : i32
    %c0_i32_0 = arith.constant 0 : i32
    %c0_i32_1 = arith.constant 0 : i32
    return %arg0, %c0_i32, %c0_i32_0 : i32, i32, i32
  }
}

</mosaic_0001>

<llo_original>
// kernel: tpu_custom_call.1
$region0: #{tpu_custom_call.1}
  #allocation0 [shape = 'u32[]', space=smem, size = 0x4, offset = 0x4, fixed_abs, tag = 'smem constant byte address 0x4 - core index']
  #allocation1 [shape = 'u32[144,128]{1,0:T(1,128)}', space=vmem, size = 0x12000, scoped, tag = 'internal scratch']
  %s0 = inlined_call_operand.hbm [shape: f32[8,16,256], index: 0, kind: input, shape index: {}]
  %s1 = inlined_call_operand.hbm [shape: f32[8,16,128], index: 1, kind: input, shape index: {}]
  %s2 = inlined_call_operand.hbm [shape: f32[128,128], index: 2, kind: input, shape index: {}]
  %s3 = inlined_call_operand.hbm [shape: bf16[256,256], index: 3, kind: input, shape index: {}]
  %s4 = inlined_call_operand.hbm [shape: bf16[128,384], index: 4, kind: input, shape index: {}]
  %s5 = inlined_call_operand.hbm [shape: bf16[256,384], index: 5, kind: input, shape index: {}]
  %s6 = inlined_call_operand.hbm [shape: bf16[128,512], index: 6, kind: input, shape index: {}]
  %s7 = inlined_call_operand.hbm [shape: bf16[256,5], index: 7, kind: input, shape index: {}]
  %s8 = inlined_call_operand.hbm [shape: bf16[128,5], index: 8, kind: input, shape index: {}]
  %s9 = inlined_call_operand.hbm [shape: f32[8,16,384], index: 9, kind: output, shape index: {}]
  %s10 = sld [smem:[#allocation0]]
  $region82: #{tpu_custom_call.1} parent=0
    _
  %s12 = ssub.s32 1, %s10
  %s13 = scalar_select 0, %s12, %s10
  $region1: #{tpu_custom_call.1} parent=0
    #allocation2 [shape = 'u8[131072]{0}', space=vmem, size = 0x20000, scoped, tag = 'input window, operand 0, single buffered']
    #allocation3 [shape = 's32[1]{0}', space=sflag, size = 0x4, scoped, tag = 'scoped memory for tpu_custom_call.1']
    #allocation4 [shape = 's32[1]{0}', space=sflag, size = 0x4, scoped, tag = 'scoped memory for tpu_custom_call.1']
    #allocation5 [shape = 'u8[65536]{0}', space=vmem, size = 0x10000, scoped, tag = 'input window, operand 1, single buffered']
    #allocation6 [shape = 's32[1]{0}', space=sflag, size = 0x4, scoped, tag = 'scoped memory for tpu_custom_call.1']
    #allocation7 [shape = 'u8[65536]{0}', space=vmem, size = 0x10000, scoped, tag = 'input window, operand 2, single buffered']
    #allocation8 [shape = 'u8[131072]{0}', space=vmem, size = 0x20000, scoped, tag = 'input window, operand 3, single buffered']
    #allocation9 [shape = 's32[1]{0}', space=sflag, size = 0x4, scoped, tag = 'scoped memory for tpu_custom_call.1']
    #allocation10 [shape = 'u8[98304]{0}', space=vmem, size = 0x18000, scoped, tag = 'input window, operand 4, single buffered']
    #allocation11 [shape = 'u8[196608]{0}', space=vmem, size = 0x30000, scoped, tag = 'input window, operand 5, single buffered']
    #allocation12 [shape = 's32[1]{0}', space=sflag, size = 0x4, scoped, tag = 'scoped memory for tpu_custom_call.1']
    #allocation13 [shape = 'u8[131072]{0}', space=vmem, size = 0x20000, scoped, tag = 'input window, operand 6, single buffered']
    #allocation14 [shape = 'u8[65536]{0}', space=vmem, size = 0x10000, scoped, tag = 'input window, operand 7, single buffered']
    #allocation15 [shape = 's32[1]{0}', space=sflag, size = 0x4, scoped, tag = 'scoped memory for tpu_custom_call.1']
    #allocation16 [shape = 'u8[32768]{0}', space=vmem, size = 0x8000, scoped, tag = 'input window, operand 8, single buffered']
    #allocation17 [shape = 'u8[196608]{0}', space=vmem, size = 0x30000, scoped, tag = 'output window, operand 0, single buffered']
    %14 = vsyncpa [#allocation3], 0
    %15 = vsyncpa [#allocation6], 0
    %16 = vsyncpa [#allocation9], 0
    %17 = vsyncpa [#allocation12], 0
    %18 = vsyncpa [#allocation15], 0
    %19 = vsyncpa [#allocation4], 0
    // Predicated region
    $region2: #{tpu_custom_call.1} parent=1 // pred_check
      _
    $region3: #{tpu_custom_call.1} parent=1 // pred_check_branch
      %21 = sbr.rel (0) target = $region5
    $region4: #{tpu_custom_call.1} parent=1 // pred_region
      %s23 = ssub.s32 4096, 4096
      %24 = vsyncadd [#allocation3], %s23
      %s25 = sshll.u32 [#allocation2], 4
      %s26 = int_to_ptr.vmem [resolvable:$true] %s25
      %31 = dma.hbm_to_vmem [thread:$0]  %s0, 4096, %s26, [#allocation3], 256, 256, 16
    $region5: #{tpu_custom_call.1} parent=1 // pred_fallthru
      _
    // Predicated region
    $region6: #{tpu_custom_call.1} parent=1 // pred_check
      _
    $region7: #{tpu_custom_call.1} parent=1 // pred_check_branch
      %33 = sbr.rel (0) target = $region9
    $region8: #{tpu_custom_call.1} parent=1 // pred_region
      %s35 = ssub.s32 2048, 2048
      %36 = vsyncadd [#allocation6], %s35
      %s37 = sshll.u32 [#allocation5], 4
      %s38 = int_to_ptr.vmem [resolvable:$true] %s37
      %43 = dma.hbm_to_vmem [thread:$0]  %s1, 2048, %s38, [#allocation6], 128, 128, 8
    $region9: #{tpu_custom_call.1} parent=1 // pred_fallthru
      _
    // Predicated region
    $region10: #{tpu_custom_call.1} parent=1 // pred_check
      _
    $region11: #{tpu_custom_call.1} parent=1 // pred_check_branch
      %45 = sbr.rel (0) target = $region13
    $region12: #{tpu_custom_call.1} parent=1 // pred_region
      %s47 = ssub.s32 2048, 2048
      %48 = vsyncadd [#allocation6], %s47
      %s49 = sshll.u32 [#allocation7], 4
      %s50 = int_to_ptr.vmem [resolvable:$true] %s49
      %55 = dma.hbm_to_vmem [thread:$0]  %s2, 2048, %s50, [#allocation6], 128, 128, 8
    $region13: #{tpu_custom_call.1} parent=1 // pred_fallthru
      _
    // Predicated region
    $region14: #{tpu_custom_call.1} parent=1 // pred_check
      _
    $region15: #{tpu_custom_call.1} parent=1 // pred_check_branch
      %57 = sbr.rel (0) target = $region17
    $region16: #{tpu_custom_call.1} parent=1 // pred_region
      %s59 = ssub.s32 4096, 4096
      %60 = vsyncadd [#allocation9], %s59
      %s61 = sshll.u32 [#allocation8], 4
      %s62 = int_to_ptr.vmem [resolvable:$true] %s61
      %67 = dma.hbm_to_vmem [thread:$0]  %s3, 4096, %s62, [#allocation9], 128, 128, 8
    $region17: #{tpu_custom_call.1} parent=1 // pred_fallthru
      _
    // Predicated region
    $region18: #{tpu_custom_call.1} parent=1 // pred_check
      _
    $region19: #{tpu_custom_call.1} parent=1 // pred_check_branch
      %69 = sbr.rel (0) target = $region21
    $region20: #{tpu_custom_call.1} parent=1 // pred_region
      %s71 = ssub.s32 3072, 3072
      %72 = vsyncadd [#allocation9], %s71
      %s73 = sshll.u32 [#allocation10], 4
      %s74 = int_to_ptr.vmem [resolvable:$true] %s73
      %79 = dma.hbm_to_vmem [thread:$0]  %s4, 3072, %s74, [#allocation9], 192, 192, 12
    $region21: #{tpu_custom_call.1} parent=1 // pred_fallthru
      _
    // Predicated region
    $region22: #{tpu_custom_call.1} parent=1 // pred_check
      _
    $region23: #{tpu_custom_call.1} parent=1 // pred_check_branch
      %81 = sbr.rel (0) target = $region25
    $region24: #{tpu_custom_call.1} parent=1 // pred_region
      %s83 = ssub.s32 6144, 6144
      %84 = vsyncadd [#allocation12], %s83
      %s85 = sshll.u32 [#allocation11], 4
      %s86 = int_to_ptr.vmem [resolvable:$true] %s85
      %91 = dma.hbm_to_vmem [thread:$0]  %s5, 6144, %s86, [#allocation12], 192, 192, 12
    $region25: #{tpu_custom_call.1} parent=1 // pred_fallthru
      _
    // Predicated region
    $region26: #{tpu_custom_call.1} parent=1 // pred_check
      _
    $region27: #{tpu_custom_call.1} parent=1 // pred_check_branch
      %93 = sbr.rel (0) target = $region29
    $region28: #{tpu_custom_call.1} parent=1 // pred_region
      %s95 = ssub.s32 4096, 4096
      %96 = vsyncadd [#allocation12], %s95
      %s97 = sshll.u32 [#allocation13], 4
      %s98 = int_to_ptr.vmem [resolvable:$true] %s97
      %103 = dma.hbm_to_vmem [thread:$0]  %s6, 4096, %s98, [#allocation12], 256, 256, 16
    $region29: #{tpu_custom_call.1} parent=1 // pred_fallthru
      _
    // Predicated region
    $region30: #{tpu_custom_call.1} parent=1 // pred_check
      _
    $region31: #{tpu_custom_call.1} parent=1 // pred_check_branch
      %105 = sbr.rel (0) target = $region33
    $region32: #{tpu_custom_call.1} parent=1 // pred_region
      %s107 = ssub.s32 2048, 2048
      %108 = vsyncadd [#allocation15], %s107
      %s109 = sshll.u32 [#allocation14], 4
      %s110 = int_to_ptr.vmem [resolvable:$true] %s109
      %115 = dma.hbm_to_vmem [thread:$0]  %s7, 2048, %s110, [#allocation15], 64, 64, 4
    $region33: #{tpu_custom_call.1} parent=1 // pred_fallthru
      _
    // Predicated region
    $region34: #{tpu_custom_call.1} parent=1 // pred_check
      _
    $region35: #{tpu_custom_call.1} parent=1 // pred_check_branch
      %117 = sbr.rel (0) target = $region37
    $region36: #{tpu_custom_call.1} parent=1 // pred_region
      %s119 = ssub.s32 1024, 1024
      %120 = vsyncadd [#allocation15], %s119
      %s121 = sshll.u32 [#allocation16], 4
      %s122 = int_to_ptr.vmem [resolvable:$true] %s121
      %127 = dma.hbm_to_vmem [thread:$0]  %s8, 1024, %s122, [#allocation15], 64, 64, 4
    $region37: #{tpu_custom_call.1} parent=1 // pred_fallthru
      _
    // Predicated region
    $region38: #{tpu_custom_call.1} parent=1 // pred_check
      _
    $region39: #{tpu_custom_call.1} parent=1 // pred_check_branch
      %129 = sbr.rel (0) target = $region41
    $region40: #{tpu_custom_call.1} parent=1 // pred_region
      %130 = dma.done [#allocation3], 4096
    $region41: #{tpu_custom_call.1} parent=1 // pred_fallthru
      _
    // Predicated region
    $region42: #{tpu_custom_call.1} parent=1 // pred_check
      _
    $region43: #{tpu_custom_call.1} parent=1 // pred_check_branch
      %132 = sbr.rel (0) target = $region45
    $region44: #{tpu_custom_call.1} parent=1 // pred_region
      %133 = dma.done [#allocation6], 2048
    $region45: #{tpu_custom_call.1} parent=1 // pred_fallthru
      _
    // Predicated region
    $region46: #{tpu_custom_call.1} parent=1 // pred_check
      _
    $region47: #{tpu_custom_call.1} parent=1 // pred_check_branch
      %135 = sbr.rel (0) target = $region49
    $region48: #{tpu_custom_call.1} parent=1 // pred_region
      %136 = dma.done [#allocation6], 2048
    $region49: #{tpu_custom_call.1} parent=1 // pred_fallthru
      _
    // Predicated region
    $region50: #{tpu_custom_call.1} parent=1 // pred_check
      _
    $region51: #{tpu_custom_call.1} parent=1 // pred_check_branch
      %138 = sbr.rel (0) target = $region53
    $region52: #{tpu_custom_call.1} parent=1 // pred_region
      %139 = dma.done [#allocation9], 4096
    $region53: #{tpu_custom_call.1} parent=1 // pred_fallthru
      _
    // Predicated region
    $region54: #{tpu_custom_call.1} parent=1 // pred_check
      _
    $region55: #{tpu_custom_call.1} parent=1 // pred_check_branch
      %141 = sbr.rel (0) target = $region57
    $region56: #{tpu_custom_call.1} parent=1 // pred_region
      %142 = dma.done [#allocation9], 3072
    $region57: #{tpu_custom_call.1} parent=1 // pred_fallthru
      _
    // Predicated region
    $region58: #{tpu_custom_call.1} parent=1 // pred_check
      _
    $region59: #{tpu_custom_call.1} parent=1 // pred_check_branch
      %144 = sbr.rel (0) target = $region61
    $region60: #{tpu_custom_call.1} parent=1 // pred_region
      %145 = dma.done [#allocation12], 6144
    $region61: #{tpu_custom_call.1} parent=1 // pred_fallthru
      _
    // Predicated region
    $region62: #{tpu_custom_call.1} parent=1 // pred_check
      _
    $region63: #{tpu_custom_call.1} parent=1 // pred_check_branch
      %147 = sbr.rel (0) target = $region65
    $region64: #{tpu_custom_call.1} parent=1 // pred_region
      %148 = dma.done [#allocation12], 4096
    $region65: #{tpu_custom_call.1} parent=1 // pred_fallthru
      _
    // Predicated region
    $region66: #{tpu_custom_call.1} parent=1 // pred_check
      _
    $region67: #{tpu_custom_call.1} parent=1 // pred_check_branch
      %150 = sbr.rel (0) target = $region69
    $region68: #{tpu_custom_call.1} parent=1 // pred_region
      %151 = dma.done [#allocation15], 2048
    $region69: #{tpu_custom_call.1} parent=1 // pred_fallthru
      _
    // Predicated region
    $region70: #{tpu_custom_call.1} parent=1 // pred_check
      _
    $region71: #{tpu_custom_call.1} parent=1 // pred_check_branch
      %153 = sbr.rel (0) target = $region73
    $region72: #{tpu_custom_call.1} parent=1 // pred_region
      %154 = dma.done [#allocation15], 1024
    $region73: #{tpu_custom_call.1} parent=1 // pred_fallthru
      _
    %v156 = vld [vmem:[#allocation2] sm:$0xff]
    %v157 = vld [vmem:[#allocation2 + $0x8] sm:$0xff]
    %v158 = vld [vmem:[#allocation2 + $0x10] sm:$0xff]
    %v159 = vld [vmem:[#allocation2 + $0x18] sm:$0xff]
    %v160 = vld [vmem:[#allocation2 + $0x20] sm:$0xff]
    %v161 = vld [vmem:[#allocation2 + $0x28] sm:$0xff]
    %v162 = vld [vmem:[#allocation2 + $0x30] sm:$0xff]
    %v163 = vld [vmem:[#allocation2 + $0x38] sm:$0xff]
    %v164 = vld [vmem:[#allocation2 + $0x40] sm:$0xff]
    %v165 = vld [vmem:[#allocation2 + $0x48] sm:$0xff]
    %v166 = vld [vmem:[#allocation2 + $0x50] sm:$0xff]
    %v167 = vld [vmem:[#allocation2 + $0x58] sm:$0xff]
    %v168 = vld [vmem:[#allocation2 + $0x60] sm:$0xff]
    %v169 = vld [vmem:[#allocation2 + $0x68] sm:$0xff]
    %v170 = vld [vmem:[#allocation2 + $0x70] sm:$0xff]
    %v171 = vld [vmem:[#allocation2 + $0x78] sm:$0xff]
    %v172 = vld [vmem:[#allocation2 + $0x80] sm:$0xff]
    %v173 = vld [vmem:[#allocation2 + $0x88] sm:$0xff]
    %v174 = vld [vmem:[#allocation2 + $0x90] sm:$0xff]
    %v175 = vld [vmem:[#allocation2 + $0x98] sm:$0xff]
    %v176 = vld [vmem:[#allocation2 + $0xa0] sm:$0xff]
    %v177 = vld [vmem:[#allocation2 + $0xa8] sm:$0xff]
    %v178 = vld [vmem:[#allocation2 + $0xb0] sm:$0xff]
    %v179 = vld [vmem:[#allocation2 + $0xb8] sm:$0xff]
    %v180 = vld [vmem:[#allocation2 + $0xc0] sm:$0xff]
    %v181 = vld [vmem:[#allocation2 + $0xc8] sm:$0xff]
    %v182 = vld [vmem:[#allocation2 + $0xd0] sm:$0xff]
    %v183 = vld [vmem:[#allocation2 + $0xd8] sm:$0xff]
    %v184 = vld [vmem:[#allocation2 + $0xe0] sm:$0xff]
    %v185 = vld [vmem:[#allocation2 + $0xe8] sm:$0xff]
    %v186 = vld [vmem:[#allocation2 + $0xf0] sm:$0xff]
    %v187 = vld [vmem:[#allocation2 + $0xf8] sm:$0xff]
    %v188 = vld [vmem:[#allocation5] sm:$0xff]
    %v189 = vld [vmem:[#allocation5 + $0x8] sm:$0xff]
    %v190 = vld [vmem:[#allocation5 + $0x10] sm:$0xff]
    %v191 = vld [vmem:[#allocation5 + $0x18] sm:$0xff]
    %v192 = vld [vmem:[#allocation5 + $0x20] sm:$0xff]
    %v193 = vld [vmem:[#allocation5 + $0x28] sm:$0xff]
    %v194 = vld [vmem:[#allocation5 + $0x30] sm:$0xff]
    %v195 = vld [vmem:[#allocation5 + $0x38] sm:$0xff]
    %v196 = vld [vmem:[#allocation5 + $0x40] sm:$0xff]
    %v197 = vld [vmem:[#allocation5 + $0x48] sm:$0xff]
    %v198 = vld [vmem:[#allocation5 + $0x50] sm:$0xff]
    %v199 = vld [vmem:[#allocation5 + $0x58] sm:$0xff]
    %v200 = vld [vmem:[#allocation5 + $0x60] sm:$0xff]
    %v201 = vld [vmem:[#allocation5 + $0x68] sm:$0xff]
    %v202 = vld [vmem:[#allocation5 + $0x70] sm:$0xff]
    %v203 = vld [vmem:[#allocation5 + $0x78] sm:$0xff]
    %v204 = vmul.f32 %v156, %v156
    %v205 = vmul.f32 %v157, %v157
    %v206 = vmul.f32 %v158, %v158
    %v207 = vmul.f32 %v159, %v159
    %v208 = vmul.f32 %v160, %v160
    %v209 = vmul.f32 %v161, %v161
    %v210 = vmul.f32 %v162, %v162
    %v211 = vmul.f32 %v163, %v163
    %v212 = vmul.f32 %v164, %v164
    %v213 = vmul.f32 %v165, %v165
    %v214 = vmul.f32 %v166, %v166
    %v215 = vmul.f32 %v167, %v167
    %v216 = vmul.f32 %v168, %v168
    %v217 = vmul.f32 %v169, %v169
    %v218 = vmul.f32 %v170, %v170
    %v219 = vmul.f32 %v171, %v171
    %v220 = vmul.f32 %v172, %v172
    %v221 = vmul.f32 %v173, %v173
    %v222 = vmul.f32 %v174, %v174
    %v223 = vmul.f32 %v175, %v175
    %v224 = vmul.f32 %v176, %v176
    %v225 = vmul.f32 %v177, %v177
    %v226 = vmul.f32 %v178, %v178
    %v227 = vmul.f32 %v179, %v179
    %v228 = vmul.f32 %v180, %v180
    %v229 = vmul.f32 %v181, %v181
    %v230 = vmul.f32 %v182, %v182
    %v231 = vmul.f32 %v183, %v183
    %v232 = vmul.f32 %v184, %v184
    %v233 = vmul.f32 %v185, %v185
    %v234 = vmul.f32 %v186, %v186
    %v235 = vmul.f32 %v187, %v187
    %v236 = vadd.f32 %v204, %v205
    %237 = vadd.xlane.f32.xlu0 %v236
    %v238 = vpop.xlane.xlu0 %237
    %v239 = vadd.f32 %v206, %v207
    %240 = vadd.xlane.f32.xlu0 %v239
    %v241 = vpop.xlane.xlu0 %240
    %v242 = vadd.f32 %v208, %v209
    %243 = vadd.xlane.f32.xlu0 %v242
    %v244 = vpop.xlane.xlu0 %243
    %v245 = vadd.f32 %v210, %v211
    %246 = vadd.xlane.f32.xlu0 %v245
    %v247 = vpop.xlane.xlu0 %246
    %v248 = vadd.f32 %v212, %v213
    %249 = vadd.xlane.f32.xlu0 %v248
    %v250 = vpop.xlane.xlu0 %249
    %v251 = vadd.f32 %v214, %v215
    %252 = vadd.xlane.f32.xlu0 %v251
    %v253 = vpop.xlane.xlu0 %252
    %v254 = vadd.f32 %v216, %v217
    %255 = vadd.xlane.f32.xlu0 %v254
    %v256 = vpop.xlane.xlu0 %255
    %v257 = vadd.f32 %v218, %v219
    %258 = vadd.xlane.f32.xlu0 %v257
    %v259 = vpop.xlane.xlu0 %258
    %v260 = vadd.f32 %v220, %v221
    %261 = vadd.xlane.f32.xlu0 %v260
    %v262 = vpop.xlane.xlu0 %261
    %v263 = vadd.f32 %v222, %v223
    %264 = vadd.xlane.f32.xlu0 %v263
    %v265 = vpop.xlane.xlu0 %264
    %v266 = vadd.f32 %v224, %v225
    %267 = vadd.xlane.f32.xlu0 %v266
    %v268 = vpop.xlane.xlu0 %267
    %v269 = vadd.f32 %v226, %v227
    %270 = vadd.xlane.f32.xlu0 %v269
    %v271 = vpop.xlane.xlu0 %270
    %v272 = vadd.f32 %v228, %v229
    %273 = vadd.xlane.f32.xlu0 %v272
    %v274 = vpop.xlane.xlu0 %273
    %v275 = vadd.f32 %v230, %v231
    %276 = vadd.xlane.f32.xlu0 %v275
    %v277 = vpop.xlane.xlu0 %276
    %v278 = vadd.f32 %v232, %v233
    %279 = vadd.xlane.f32.xlu0 %v278
    %v280 = vpop.xlane.xlu0 %279
    %v281 = vadd.f32 %v234, %v235
    %282 = vadd.xlane.f32.xlu0 %v281
    %v283 = vpop.xlane.xlu0 %282
    %v284 = vmax.f32 %v238, 1e-24
    %v285 = vmax.f32 %v241, 1e-24
    %v286 = vmax.f32 %v244, 1e-24
    %v287 = vmax.f32 %v247, 1e-24
    %v288 = vmax.f32 %v250, 1e-24
    %v289 = vmax.f32 %v253, 1e-24
    %v290 = vmax.f32 %v256, 1e-24
    %v291 = vmax.f32 %v259, 1e-24
    %v292 = vmax.f32 %v262, 1e-24
    %v293 = vmax.f32 %v265, 1e-24
    %v294 = vmax.f32 %v268, 1e-24
    %v295 = vmax.f32 %v271, 1e-24
    %v296 = vmax.f32 %v274, 1e-24
    %v297 = vmax.f32 %v277, 1e-24
    %v298 = vmax.f32 %v280, 1e-24
    %v299 = vmax.f32 %v283, 1e-24
    %v300 = vrsqrt.pop %v284
    %v301 = vrsqrt.pop %v285
    %v302 = vrsqrt.pop %v286
    %v303 = vrsqrt.pop %v287
    %v304 = vrsqrt.pop %v288
    %v305 = vrsqrt.pop %v289
    %v306 = vrsqrt.pop %v290
    %v307 = vrsqrt.pop %v291
    %v308 = vrsqrt.pop %v292
    %v309 = vrsqrt.pop %v293
    %v310 = vrsqrt.pop %v294
    %v311 = vrsqrt.pop %v295
    %v312 = vrsqrt.pop %v296
    %v313 = vrsqrt.pop %v297
    %v314 = vrsqrt.pop %v298
    %v315 = vrsqrt.pop %v299
    %v316 = vmul.f32 %v156, %v300
    %v317 = vmul.f32 %v157, %v300
    %v318 = vmul.f32 %v158, %v301
    %v319 = vmul.f32 %v159, %v301
    %v320 = vmul.f32 %v160, %v302
    %v321 = vmul.f32 %v161, %v302
    %v322 = vmul.f32 %v162, %v303
    %v323 = vmul.f32 %v163, %v303
    %v324 = vmul.f32 %v164, %v304
    %v325 = vmul.f32 %v165, %v304
    %v326 = vmul.f32 %v166, %v305
    %v327 = vmul.f32 %v167, %v305
    %v328 = vmul.f32 %v168, %v306
    %v329 = vmul.f32 %v169, %v306
    %v330 = vmul.f32 %v170, %v307
    %v331 = vmul.f32 %v171, %v307
    %v332 = vmul.f32 %v172, %v308
    %v333 = vmul.f32 %v173, %v308
    %v334 = vmul.f32 %v174, %v309
    %v335 = vmul.f32 %v175, %v309
    %v336 = vmul.f32 %v176, %v310
    %v337 = vmul.f32 %v177, %v310
    %v338 = vmul.f32 %v178, %v311
    %v339 = vmul.f32 %v179, %v311
    %v340 = vmul.f32 %v180, %v312
    %v341 = vmul.f32 %v181, %v312
    %v342 = vmul.f32 %v182, %v313
    %v343 = vmul.f32 %v183, %v313
    %v344 = vmul.f32 %v184, %v314
    %v345 = vmul.f32 %v185, %v314
    %v346 = vmul.f32 %v186, %v315
    %v347 = vmul.f32 %v187, %v315
    %v348 = vmul.f32 %v188, %v188
    %v349 = vmul.f32 %v189, %v189
    %v350 = vmul.f32 %v190, %v190
    %v351 = vmul.f32 %v191, %v191
    %v352 = vmul.f32 %v192, %v192
    %v353 = vmul.f32 %v193, %v193
    %v354 = vmul.f32 %v194, %v194
    %v355 = vmul.f32 %v195, %v195
    %v356 = vmul.f32 %v196, %v196
    %v357 = vmul.f32 %v197, %v197
    %v358 = vmul.f32 %v198, %v198
    %v359 = vmul.f32 %v199, %v199
    %v360 = vmul.f32 %v200, %v200
    %v361 = vmul.f32 %v201, %v201
    %v362 = vmul.f32 %v202, %v202
    %v363 = vmul.f32 %v203, %v203
    %364 = vadd.xlane.f32.xlu0 %v348
    %v365 = vpop.xlane.xlu0 %364
    %366 = vadd.xlane.f32.xlu0 %v349
    %v367 = vpop.xlane.xlu0 %366
    %368 = vadd.xlane.f32.xlu0 %v350
    %v369 = vpop.xlane.xlu0 %368
    %370 = vadd.xlane.f32.xlu0 %v351
    %v371 = vpop.xlane.xlu0 %370
    %372 = vadd.xlane.f32.xlu0 %v352
    %v373 = vpop.xlane.xlu0 %372
    %374 = vadd.xlane.f32.xlu0 %v353
    %v375 = vpop.xlane.xlu0 %374
    %376 = vadd.xlane.f32.xlu0 %v354
    %v377 = vpop.xlane.xlu0 %376
    %378 = vadd.xlane.f32.xlu0 %v355
    %v379 = vpop.xlane.xlu0 %378
    %380 = vadd.xlane.f32.xlu0 %v356
    %v381 = vpop.xlane.xlu0 %380
    %382 = vadd.xlane.f32.xlu0 %v357
    %v383 = vpop.xlane.xlu0 %382
    %384 = vadd.xlane.f32.xlu0 %v358
    %v385 = vpop.xlane.xlu0 %384
    %386 = vadd.xlane.f32.xlu0 %v359
    %v387 = vpop.xlane.xlu0 %386
    %388 = vadd.xlane.f32.xlu0 %v360
    %v389 = vpop.xlane.xlu0 %388
    %390 = vadd.xlane.f32.xlu0 %v361
    %v391 = vpop.xlane.xlu0 %390
    %392 = vadd.xlane.f32.xlu0 %v362
    %v393 = vpop.xlane.xlu0 %392
    %394 = vadd.xlane.f32.xlu0 %v363
    %v395 = vpop.xlane.xlu0 %394
    %v396 = vmax.f32 %v365, 1e-24
    %v397 = vmax.f32 %v367, 1e-24
    %v398 = vmax.f32 %v369, 1e-24
    %v399 = vmax.f32 %v371, 1e-24
    %v400 = vmax.f32 %v373, 1e-24
    %v401 = vmax.f32 %v375, 1e-24
    %v402 = vmax.f32 %v377, 1e-24
    %v403 = vmax.f32 %v379, 1e-24
    %v404 = vmax.f32 %v381, 1e-24
    %v405 = vmax.f32 %v383, 1e-24
    %v406 = vmax.f32 %v385, 1e-24
    %v407 = vmax.f32 %v387, 1e-24
    %v408 = vmax.f32 %v389, 1e-24
    %v409 = vmax.f32 %v391, 1e-24
    %v410 = vmax.f32 %v393, 1e-24
    %v411 = vmax.f32 %v395, 1e-24
    %v412 = vrsqrt.pop %v396
    %v413 = vrsqrt.pop %v397
    %v414 = vrsqrt.pop %v398
    %v415 = vrsqrt.pop %v399
    %v416 = vrsqrt.pop %v400
    %v417 = vrsqrt.pop %v401
    %v418 = vrsqrt.pop %v402
    %v419 = vrsqrt.pop %v403
    %v420 = vrsqrt.pop %v404
    %v421 = vrsqrt.pop %v405
    %v422 = vrsqrt.pop %v406
    %v423 = vrsqrt.pop %v407
    %v424 = vrsqrt.pop %v408
    %v425 = vrsqrt.pop %v409
    %v426 = vrsqrt.pop %v410
    %v427 = vrsqrt.pop %v411
    %v428 = vmul.f32 %v188, %v412
    %v429 = vmul.f32 %v189, %v413
    %v430 = vmul.f32 %v190, %v414
    %v431 = vmul.f32 %v191, %v415
    %v432 = vmul.f32 %v192, %v416
    %v433 = vmul.f32 %v193, %v417
    %v434 = vmul.f32 %v194, %v418
    %v435 = vmul.f32 %v195, %v419
    %v436 = vmul.f32 %v196, %v420
    %v437 = vmul.f32 %v197, %v421
    %v438 = vmul.f32 %v198, %v422
    %v439 = vmul.f32 %v199, %v423
    %v440 = vmul.f32 %v200, %v424
    %v441 = vmul.f32 %v201, %v425
    %v442 = vmul.f32 %v202, %v426
    %v443 = vmul.f32 %v203, %v427
    %v444 = vpack.c.bf16 %v318, %v316
    %v445 = vpack.c.bf16 %v319, %v317
    %v446 = vpack.c.bf16 %v322, %v320
    %v447 = vpack.c.bf16 %v323, %v321
    %v448 = vpack.c.bf16 %v326, %v324
    %v449 = vpack.c.bf16 %v327, %v325
    %v450 = vpack.c.bf16 %v330, %v328
    %v451 = vpack.c.bf16 %v331, %v329
    %v452 = vpack.c.bf16 %v334, %v332
    %v453 = vpack.c.bf16 %v335, %v333
    %v454 = vpack.c.bf16 %v338, %v336
    %v455 = vpack.c.bf16 %v339, %v337
    %v456 = vpack.c.bf16 %v342, %v340
    %v457 = vpack.c.bf16 %v343, %v341
    %v458 = vpack.c.bf16 %v346, %v344
    %v459 = vpack.c.bf16 %v347, %v345
    %v460 = vpack.c.bf16 %v429, %v428
    %v461 = vpack.c.bf16 %v431, %v430
    %v462 = vpack.c.bf16 %v433, %v432
    %v463 = vpack.c.bf16 %v435, %v434
    %v464 = vpack.c.bf16 %v437, %v436
    %v465 = vpack.c.bf16 %v439, %v438
    %v466 = vpack.c.bf16 %v441, %v440
    %v467 = vpack.c.bf16 %v443, %v442
    %v468 = vld [vmem:[#allocation8] sm:$0xff]
    %v469 = vld [vmem:[#allocation8 + $0x8] sm:$0xff]
    %v470 = vld [vmem:[#allocation8 + $0x10] sm:$0xff]
    %v471 = vld [vmem:[#allocation8 + $0x18] sm:$0xff]
    %v472 = vld [vmem:[#allocation8 + $0x20] sm:$0xff]
    %v473 = vld [vmem:[#allocation8 + $0x28] sm:$0xff]
    %v474 = vld [vmem:[#allocation8 + $0x30] sm:$0xff]
    %v475 = vld [vmem:[#allocation8 + $0x38] sm:$0xff]
    %v476 = vld [vmem:[#allocation8 + $0x40] sm:$0xff]
    %v477 = vld [vmem:[#allocation8 + $0x48] sm:$0xff]
    %v478 = vld [vmem:[#allocation8 + $0x50] sm:$0xff]
    %v479 = vld [vmem:[#allocation8 + $0x58] sm:$0xff]
    %v480 = vld [vmem:[#allocation8 + $0x60] sm:$0xff]
    %v481 = vld [vmem:[#allocation8 + $0x68] sm:$0xff]
    %v482 = vld [vmem:[#allocation8 + $0x70] sm:$0xff]
    %v483 = vld [vmem:[#allocation8 + $0x78] sm:$0xff]
    %v484 = vld [vmem:[#allocation8 + $0x80] sm:$0xff]
    %v485 = vld [vmem:[#allocation8 + $0x88] sm:$0xff]
    %v486 = vld [vmem:[#allocation8 + $0x90] sm:$0xff]
    %v487 = vld [vmem:[#allocation8 + $0x98] sm:$0xff]
    %v488 = vld [vmem:[#allocation8 + $0xa0] sm:$0xff]
    %v489 = vld [vmem:[#allocation8 + $0xa8] sm:$0xff]
    %v490 = vld [vmem:[#allocation8 + $0xb0] sm:$0xff]
    %v491 = vld [vmem:[#allocation8 + $0xb8] sm:$0xff]
    %v492 = vld [vmem:[#allocation8 + $0xc0] sm:$0xff]
    %v493 = vld [vmem:[#allocation8 + $0xc8] sm:$0xff]
    %v494 = vld [vmem:[#allocation8 + $0xd0] sm:$0xff]
    %v495 = vld [vmem:[#allocation8 + $0xd8] sm:$0xff]
    %v496 = vld [vmem:[#allocation8 + $0xe0] sm:$0xff]
    %v497 = vld [vmem:[#allocation8 + $0xe8] sm:$0xff]
    %v498 = vld [vmem:[#allocation8 + $0xf0] sm:$0xff]
    %v499 = vld [vmem:[#allocation8 + $0xf8] sm:$0xff]
    %v532 = vunpack.c.l.b16 %v468
    %v533 = vunpack.c.h.b16 %v468
    %v534 = vunpack.c.l.b16 %v469
    %v535 = vunpack.c.h.b16 %v469
    %v536 = vunpack.c.l.b16 %v470
    %v537 = vunpack.c.h.b16 %v470
    %v538 = vunpack.c.l.b16 %v471
    %v539 = vunpack.c.h.b16 %v471
    %v540 = vunpack.c.l.b16 %v472
    %v541 = vunpack.c.h.b16 %v472
    %v542 = vunpack.c.l.b16 %v473
    %v543 = vunpack.c.h.b16 %v473
    %v544 = vunpack.c.l.b16 %v474
    %v545 = vunpack.c.h.b16 %v474
    %v546 = vunpack.c.l.b16 %v475
    %v547 = vunpack.c.h.b16 %v475
    %v548 = vunpack.c.l.b16 %v476
    %v549 = vunpack.c.h.b16 %v476
    %v550 = vunpack.c.l.b16 %v477
    %v551 = vunpack.c.h.b16 %v477
    %v552 = vunpack.c.l.b16 %v478
    %v553 = vunpack.c.h.b16 %v478
    %v554 = vunpack.c.l.b16 %v479
    %v555 = vunpack.c.h.b16 %v479
    %v556 = vunpack.c.l.b16 %v480
    %v557 = vunpack.c.h.b16 %v480
    %v558 = vunpack.c.l.b16 %v481
    %v559 = vunpack.c.h.b16 %v481
    %v560 = vunpack.c.l.b16 %v482
    %v561 = vunpack.c.h.b16 %v482
    %v562 = vunpack.c.l.b16 %v483
    %v563 = vunpack.c.h.b16 %v483
    %v564 = vunpack.c.l.b16 %v484
    %v565 = vunpack.c.h.b16 %v484
    %v566 = vunpack.c.l.b16 %v485
    %v567 = vunpack.c.h.b16 %v485
    %v568 = vunpack.c.l.b16 %v486
    %v569 = vunpack.c.h.b16 %v486
    %v570 = vunpack.c.l.b16 %v487
    %v571 = vunpack.c.h.b16 %v487
    %v572 = vunpack.c.l.b16 %v488
    %v573 = vunpack.c.h.b16 %v488
    %v574 = vunpack.c.l.b16 %v489
    %v575 = vunpack.c.h.b16 %v489
    %v576 = vunpack.c.l.b16 %v490
    %v577 = vunpack.c.h.b16 %v490
    %v578 = vunpack.c.l.b16 %v491
    %v579 = vunpack.c.h.b16 %v491
    %v580 = vunpack.c.l.b16 %v492
    %v581 = vunpack.c.h.b16 %v492
    %v582 = vunpack.c.l.b16 %v493
    %v583 = vunpack.c.h.b16 %v493
    %v584 = vunpack.c.l.b16 %v494
    %v585 = vunpack.c.h.b16 %v494
    %v586 = vunpack.c.l.b16 %v495
    %v587 = vunpack.c.h.b16 %v495
    %v588 = vunpack.c.l.b16 %v496
    %v589 = vunpack.c.h.b16 %v496
    %v590 = vunpack.c.l.b16 %v497
    %v591 = vunpack.c.h.b16 %v497
    %v592 = vunpack.c.l.b16 %v498
    %v593 = vunpack.c.h.b16 %v498
    %v594 = vunpack.c.l.b16 %v499
    %v595 = vunpack.c.h.b16 %v499
    %v596 = vpack.c.b16 %v534, %v532
    %v597 = vpack.c.b16 %v535, %v533
    %v598 = vpack.c.b16 %v538, %v536
    %v599 = vpack.c.b16 %v539, %v537
    %v600 = vpack.c.b16 %v542, %v540
    %v601 = vpack.c.b16 %v543, %v541
    %v602 = vpack.c.b16 %v546, %v544
    %v603 = vpack.c.b16 %v547, %v545
    %v604 = vpack.c.b16 %v550, %v548
    %v605 = vpack.c.b16 %v551, %v549
    %v606 = vpack.c.b16 %v554, %v552
    %v607 = vpack.c.b16 %v555, %v553
    %v608 = vpack.c.b16 %v558, %v556
    %v609 = vpack.c.b16 %v559, %v557
    %v610 = vpack.c.b16 %v562, %v560
    %v611 = vpack.c.b16 %v563, %v561
    %v612 = vpack.c.b16 %v566, %v564
    %v613 = vpack.c.b16 %v567, %v565
    %v614 = vpack.c.b16 %v570, %v568
    %v615 = vpack.c.b16 %v571, %v569
    %v616 = vpack.c.b16 %v574, %v572
    %v617 = vpack.c.b16 %v575, %v573
    %v618 = vpack.c.b16 %v578, %v576
    %v619 = vpack.c.b16 %v579, %v577
    %v620 = vpack.c.b16 %v582, %v580
    %v621 = vpack.c.b16 %v583, %v581
    %v622 = vpack.c.b16 %v586, %v584
    %v623 = vpack.c.b16 %v587, %v585
    %v624 = vpack.c.b16 %v590, %v588
    %v625 = vpack.c.b16 %v591, %v589
    %v626 = vpack.c.b16 %v594, %v592
    %v627 = vpack.c.b16 %v595, %v593
    %660 = vmatprep.subr.bf16.mxu0 %v597
    %661 = vmatpush1.bf16.msra.mxu0 %v596
    %662 = vmatprep.subr.bf16.mxu0 %v599
    %663 = vmatpush1.bf16.msra.mxu0 %v598
    %664 = vmatprep.subr.bf16.mxu0 %v601
    %665 = vmatpush1.bf16.msra.mxu0 %v600
    %666 = vmatprep.subr.bf16.mxu0 %v603
    %667 = vmatpush1.bf16.msra.mxu0 %v602
    %668 = vmatprep.subr.bf16.mxu0 %v605
    %669 = vmatpush1.bf16.msra.mxu0 %v604
    %670 = vmatprep.subr.bf16.mxu0 %v607
    %671 = vmatpush1.bf16.msra.mxu0 %v606
    %672 = vmatprep.subr.bf16.mxu0 %v609
    %673 = vmatpush1.bf16.msra.mxu0 %v608
    %674 = vmatprep.subr.bf16.mxu0 %v611
    %675 = vmatpush1.bf16.msra.mxu0 %v610
    %676 = vmatprep.subr.bf16.mxu0 %v613
    %677 = vmatpush1.bf16.msra.mxu0 %v612
    %678 = vmatprep.subr.bf16.mxu0 %v615
    %679 = vmatpush1.bf16.msra.mxu0 %v614
    %680 = vmatprep.subr.bf16.mxu0 %v617
    %681 = vmatpush1.bf16.msra.mxu0 %v616
    %682 = vmatprep.subr.bf16.mxu0 %v619
    %683 = vmatpush1.bf16.msra.mxu0 %v618
    %684 = vmatprep.subr.bf16.mxu0 %v621
    %685 = vmatpush1.bf16.msra.mxu0 %v620
    %686 = vmatprep.subr.bf16.mxu0 %v623
    %687 = vmatpush1.bf16.msra.mxu0 %v622
    %688 = vmatprep.subr.bf16.mxu0 %v625
    %689 = vmatpush1.bf16.msra.mxu0 %v624
    %690 = vmatprep.subr.bf16.mxu0 %v627
    %691 = vmatpush1.bf16.msra.mxu0 %v626
    %692 = vmatprep.mubr.bf16.mxu0 %v445
    %693 = vmatmul.mubr.bf16.gmra.mrb[0].mxu0 %v444
    %v694 = vpop.f32.mrb[0].mxu0
    %v695 = vadd.f32 0.0, %v694
    %v696 = vpop.f32.mrb[0].mxu0
    %v697 = vadd.f32 0.0, %v696
    %v698 = vpop.f32.mrb[0].mxu0
    %v699 = vadd.f32 0.0, %v698
    %v700 = vpop.f32.mrb[0].mxu0
    %v701 = vadd.f32 0.0, %v700
    %702 = vmatprep.mubr.bf16.mxu0 %v447
    %703 = vmatmul.mubr.bf16.gmra.mrb[0].mxu0 %v446
    %v704 = vpop.f32.mrb[0].mxu0
    %v705 = vadd.f32 0.0, %v704
    %v706 = vpop.f32.mrb[0].mxu0
    %v707 = vadd.f32 0.0, %v706
    %v708 = vpop.f32.mrb[0].mxu0
    %v709 = vadd.f32 0.0, %v708
    %v710 = vpop.f32.mrb[0].mxu0
    %v711 = vadd.f32 0.0, %v710
    %712 = vmatprep.mubr.bf16.mxu0 %v449
    %713 = vmatmul.mubr.bf16.gmra.mrb[0].mxu0 %v448
    %v714 = vpop.f32.mrb[0].mxu0
    %v715 = vadd.f32 0.0, %v714
    %v716 = vpop.f32.mrb[0].mxu0
    %v717 = vadd.f32 0.0, %v716
    %v718 = vpop.f32.mrb[0].mxu0
    %v719 = vadd.f32 0.0, %v718
    %v720 = vpop.f32.mrb[0].mxu0
    %v721 = vadd.f32 0.0, %v720
    %722 = vmatprep.mubr.bf16.mxu0 %v451
    %723 = vmatmul.mubr.bf16.gmra.mrb[0].mxu0 %v450
    %v724 = vpop.f32.mrb[0].mxu0
    %v725 = vadd.f32 0.0, %v724
    %v726 = vpop.f32.mrb[0].mxu0
    %v727 = vadd.f32 0.0, %v726
    %v728 = vpop.f32.mrb[0].mxu0
    %v729 = vadd.f32 0.0, %v728
    %v730 = vpop.f32.mrb[0].mxu0
    %v731 = vadd.f32 0.0, %v730
    %732 = vmatprep.mubr.bf16.mxu0 %v453
    %733 = vmatmul.mubr.bf16.gmra.mrb[0].mxu0 %v452
    %v734 = vpop.f32.mrb[0].mxu0
    %v735 = vadd.f32 0.0, %v734
    %v736 = vpop.f32.mrb[0].mxu0
    %v737 = vadd.f32 0.0, %v736
    %v738 = vpop.f32.mrb[0].mxu0
    %v739 = vadd.f32 0.0, %v738
    %v740 = vpop.f32.mrb[0].mxu0
    %v741 = vadd.f32 0.0, %v740
    %742 = vmatprep.mubr.bf16.mxu0 %v455
    %743 = vmatmul.mubr.bf16.gmra.mrb[0].mxu0 %v454
    %v744 = vpop.f32.mrb[0].mxu0
    %v745 = vadd.f32 0.0, %v744
    %v746 = vpop.f32.mrb[0].mxu0
    %v747 = vadd.f32 0.0, %v746
    %v748 = vpop.f32.mrb[0].mxu0
    %v749 = vadd.f32 0.0, %v748
    %v750 = vpop.f32.mrb[0].mxu0
    %v751 = vadd.f32 0.0, %v750
    %752 = vmatprep.mubr.bf16.mxu0 %v457
    %753 = vmatmul.mubr.bf16.gmra.mrb[0].mxu0 %v456
    %v754 = vpop.f32.mrb[0].mxu0
    %v755 = vadd.f32 0.0, %v754
    %v756 = vpop.f32.mrb[0].mxu0
    %v757 = vadd.f32 0.0, %v756
    %v758 = vpop.f32.mrb[0].mxu0
    %v759 = vadd.f32 0.0, %v758
    %v760 = vpop.f32.mrb[0].mxu0
    %v761 = vadd.f32 0.0, %v760
    %762 = vmatprep.mubr.bf16.mxu0 %v459
    %763 = vmatmul.mubr.bf16.gmra.mrb[0].mxu0 %v458
    %v764 = vpop.f32.mrb[0].mxu0
    %v765 = vadd.f32 0.0, %v764
    %v766 = vpop.f32.mrb[0].mxu0
    %v767 = vadd.f32 0.0, %v766
    %v768 = vpop.f32.mrb[0].mxu0
    %v769 = vadd.f32 0.0, %v768
    %v770 = vpop.f32.mrb[0].mxu0
    %v771 = vadd.f32 0.0, %v770
    %772 = vdwg.mxu0
    %v773 = vld [vmem:[#allocation10] sm:$0xff]
    %v774 = vld [vmem:[#allocation10 + $0x8] sm:$0xf]
    %v775 = vld [vmem:[#allocation10 + $0xc] sm:$0xff]
    %v776 = vld [vmem:[#allocation10 + $0x14] sm:$0xf]
    %v777 = vld [vmem:[#allocation10 + $0x18] sm:$0xff]
    %v778 = vld [vmem:[#allocation10 + $0x20] sm:$0xf]
    %v779 = vld [vmem:[#allocation10 + $0x24] sm:$0xff]
    %v780 = vld [vmem:[#allocation10 + $0x2c] sm:$0xf]
    %v781 = vld [vmem:[#allocation10 + $0x30] sm:$0xff]
    %v782 = vld [vmem:[#allocation10 + $0x38] sm:$0xf]
    %v783 = vld [vmem:[#allocation10 + $0x3c] sm:$0xff]
    %v784 = vld [vmem:[#allocation10 + $0x44] sm:$0xf]
    %v785 = vld [vmem:[#allocation10 + $0x48] sm:$0xff]
    %v786 = vld [vmem:[#allocation10 + $0x50] sm:$0xf]
    %v787 = vld [vmem:[#allocation10 + $0x54] sm:$0xff]
    %v788 = vld [vmem:[#allocation10 + $0x5c] sm:$0xf]
    %v789 = vld [vmem:[#allocation10 + $0x60] sm:$0xff]
    %v790 = vld [vmem:[#allocation10 + $0x68] sm:$0xf]
    %v791 = vld [vmem:[#allocation10 + $0x6c] sm:$0xff]
    %v792 = vld [vmem:[#allocation10 + $0x74] sm:$0xf]
    %v793 = vld [vmem:[#allocation10 + $0x78] sm:$0xff]
    %v794 = vld [vmem:[#allocation10 + $0x80] sm:$0xf]
    %v795 = vld [vmem:[#allocation10 + $0x84] sm:$0xff]
    %v796 = vld [vmem:[#allocation10 + $0x8c] sm:$0xf]
    %v797 = vld [vmem:[#allocation10 + $0x90] sm:$0xff]
    %v798 = vld [vmem:[#allocation10 + $0x98] sm:$0xf]
    %v799 = vld [vmem:[#allocation10 + $0x9c] sm:$0xff]
    %v800 = vld [vmem:[#allocation10 + $0xa4] sm:$0xf]
    %v801 = vld [vmem:[#allocation10 + $0xa8] sm:$0xff]
    %v802 = vld [vmem:[#allocation10 + $0xb0] sm:$0xf]
    %v803 = vld [vmem:[#allocation10 + $0xb4] sm:$0xff]
    %v804 = vld [vmem:[#allocation10 + $0xbc] sm:$0xf]
    %v837 = vunpack.c.l.b16 %v773
    %v838 = vunpack.c.h.b16 %v773
    %v839 = vunpack.c.l.b16 %v774
    %v840 = vunpack.c.l.b16 %v775
    %v841 = vunpack.c.h.b16 %v775
    %v842 = vunpack.c.l.b16 %v776
    %v843 = vunpack.c.l.b16 %v777
    %v844 = vunpack.c.h.b16 %v777
    %v845 = vunpack.c.l.b16 %v778
    %v846 = vunpack.c.l.b16 %v779
    %v847 = vunpack.c.h.b16 %v779
    %v848 = vunpack.c.l.b16 %v780
    %v849 = vunpack.c.l.b16 %v781
    %v850 = vunpack.c.h.b16 %v781
    %v851 = vunpack.c.l.b16 %v782
    %v852 = vunpack.c.l.b16 %v783
    %v853 = vunpack.c.h.b16 %v783
    %v854 = vunpack.c.l.b16 %v784
    %v855 = vunpack.c.l.b16 %v785
    %v856 = vunpack.c.h.b16 %v785
    %v857 = vunpack.c.l.b16 %v786
    %v858 = vunpack.c.l.b16 %v787
    %v859 = vunpack.c.h.b16 %v787
    %v860 = vunpack.c.l.b16 %v788
    %v861 = vunpack.c.l.b16 %v789
    %v862 = vunpack.c.h.b16 %v789
    %v863 = vunpack.c.l.b16 %v790
    %v864 = vunpack.c.l.b16 %v791
    %v865 = vunpack.c.h.b16 %v791
    %v866 = vunpack.c.l.b16 %v792
    %v867 = vunpack.c.l.b16 %v793
    %v868 = vunpack.c.h.b16 %v793
    %v869 = vunpack.c.l.b16 %v794
    %v870 = vunpack.c.l.b16 %v795
    %v871 = vunpack.c.h.b16 %v795
    %v872 = vunpack.c.l.b16 %v796
    %v873 = vunpack.c.l.b16 %v797
    %v874 = vunpack.c.h.b16 %v797
    %v875 = vunpack.c.l.b16 %v798
    %v876 = vunpack.c.l.b16 %v799
    %v877 = vunpack.c.h.b16 %v799
    %v878 = vunpack.c.l.b16 %v800
    %v879 = vunpack.c.l.b16 %v801
    %v880 = vunpack.c.h.b16 %v801
    %v881 = vunpack.c.l.b16 %v802
    %v882 = vunpack.c.l.b16 %v803
    %v883 = vunpack.c.h.b16 %v803
    %v884 = vunpack.c.l.b16 %v804
    %v885 = vpack.c.b16 %v840, %v837
    %v886 = vpack.c.b16 %v841, %v838
    %v887 = vpack.c.b16 %v842, %v839
    %v888 = vpack.c.b16 %v846, %v843
    %v889 = vpack.c.b16 %v847, %v844
    %v890 = vpack.c.b16 %v848, %v845
    %v891 = vpack.c.b16 %v852, %v849
    %v892 = vpack.c.b16 %v853, %v850
    %v893 = vpack.c.b16 %v854, %v851
    %v894 = vpack.c.b16 %v858, %v855
    %v895 = vpack.c.b16 %v859, %v856
    %v896 = vpack.c.b16 %v860, %v857
    %v897 = vpack.c.b16 %v864, %v861
    %v898 = vpack.c.b16 %v865, %v862
    %v899 = vpack.c.b16 %v866, %v863
    %v900 = vpack.c.b16 %v870, %v867
    %v901 = vpack.c.b16 %v871, %v868
    %v902 = vpack.c.b16 %v872, %v869
    %v903 = vpack.c.b16 %v876, %v873
    %v904 = vpack.c.b16 %v877, %v874
    %v905 = vpack.c.b16 %v878, %v875
    %v906 = vpack.c.b16 %v882, %v879
    %v907 = vpack.c.b16 %v883, %v880
    %v908 = vpack.c.b16 %v884, %v881
    %933 = vmatprep.subr.bf16.mxu0 %v886
    %934 = vmatpush1.bf16.msra.mxu0 %v885
    %935 = vmatprep.subr.bf16.mxu0 %v889
    %936 = vmatpush1.bf16.msra.mxu0 %v888
    %937 = vmatprep.subr.bf16.mxu0 %v892
    %938 = vmatpush1.bf16.msra.mxu0 %v891
    %939 = vmatprep.subr.bf16.mxu0 %v895
    %940 = vmatpush1.bf16.msra.mxu0 %v894
    %941 = vmatprep.subr.bf16.mxu0 %v898
    %942 = vmatpush1.bf16.msra.mxu0 %v897
    %943 = vmatprep.subr.bf16.mxu0 %v901
    %944 = vmatpush1.bf16.msra.mxu0 %v900
    %945 = vmatprep.subr.bf16.mxu0 %v904
    %946 = vmatpush1.bf16.msra.mxu0 %v903
    %947 = vmatprep.subr.bf16.mxu0 %v907
    %948 = vmatpush1.bf16.msra.mxu0 %v906
    %949 = vmatprep.subr.bf16.mxu0 0
    %950 = vmatpush1.bf16.msra.mxu0 0
    %951 = vmatprep.subr.bf16.mxu0 0
    %952 = vmatpush1.bf16.msra.mxu0 0
    %953 = vmatprep.subr.bf16.mxu0 0
    %954 = vmatpush1.bf16.msra.mxu0 0
    %955 = vmatprep.subr.bf16.mxu0 0
    %956 = vmatpush1.bf16.msra.mxu0 0
    %957 = vmatprep.subr.bf16.mxu0 0
    %958 = vmatpush1.bf16.msra.mxu0 0
    %959 = vmatprep.subr.bf16.mxu0 0
    %960 = vmatpush1.bf16.msra.mxu0 0
    %961 = vmatprep.subr.bf16.mxu0 0
    %962 = vmatpush1.bf16.msra.mxu0 0
    %963 = vmatprep.subr.bf16.mxu0 0
    %964 = vmatpush1.bf16.msra.mxu0 0
    %965 = vmatprep.mubr.bf16.mxu0 0
    %966 = vmatmul.mubr.bf16.gmra.mrb[0].mxu0 %v460
    %v967 = vpop.f32.mrb[0].mxu0
    %v968 = vadd.f32 0.0, %v967
    %v969 = vpop.f32.mrb[0].mxu0
    %v970 = vadd.f32 0.0, %v969
    %v971 = vpop.f32.mrb[0].mxu0
    %v972 = vadd.f32 0.0, %v971
    %v973 = vpop.f32.mrb[0].mxu0
    %v974 = vadd.f32 0.0, %v973
    %975 = vmatprep.mubr.bf16.mxu0 0
    %976 = vmatmul.mubr.bf16.gmra.mrb[0].mxu0 %v461
    %v977 = vpop.f32.mrb[0].mxu0
    %v978 = vadd.f32 0.0, %v977
    %v979 = vpop.f32.mrb[0].mxu0
    %v980 = vadd.f32 0.0, %v979
    %v981 = vpop.f32.mrb[0].mxu0
    %v982 = vadd.f32 0.0, %v981
    %v983 = vpop.f32.mrb[0].mxu0
    %v984 = vadd.f32 0.0, %v983
    %985 = vmatprep.mubr.bf16.mxu0 0
    %986 = vmatmul.mubr.bf16.gmra.mrb[0].mxu0 %v462
    %v987 = vpop.f32.mrb[0].mxu0
    %v988 = vadd.f32 0.0, %v987
    %v989 = vpop.f32.mrb[0].mxu0
    %v990 = vadd.f32 0.0, %v989
    %v991 = vpop.f32.mrb[0].mxu0
    %v992 = vadd.f32 0.0, %v991
    %v993 = vpop.f32.mrb[0].mxu0
    %v994 = vadd.f32 0.0, %v993
    %995 = vmatprep.mubr.bf16.mxu0 0
    %996 = vmatmul.mubr.bf16.gmra.mrb[0].mxu0 %v463
    %v997 = vpop.f32.mrb[0].mxu0
    %v998 = vadd.f32 0.0, %v997
    %v999 = vpop.f32.mrb[0].mxu0
    %v1000 = vadd.f32 0.0, %v999
    %v1001 = vpop.f32.mrb[0].mxu0
    %v1002 = vadd.f32 0.0, %v1001
    %v1003 = vpop.f32.mrb[0].mxu0
    %v1004 = vadd.f32 0.0, %v1003
    %1005 = vmatprep.mubr.bf16.mxu0 0
    %1006 = vmatmul.mubr.bf16.gmra.mrb[0].mxu0 %v464
    %v1007 = vpop.f32.mrb[0].mxu0
    %v1008 = vadd.f32 0.0, %v1007
    %v1009 = vpop.f32.mrb[0].mxu0
    %v1010 = vadd.f32 0.0, %v1009
    %v1011 = vpop.f32.mrb[0].mxu0
    %v1012 = vadd.f32 0.0, %v1011
    %v1013 = vpop.f32.mrb[0].mxu0
    %v1014 = vadd.f32 0.0, %v1013
    %1015 = vmatprep.mubr.bf16.mxu0 0
    %1016 = vmatmul.mubr.bf16.gmra.mrb[0].mxu0 %v465
    %v1017 = vpop.f32.mrb[0].mxu0
    %v1018 = vadd.f32 0.0, %v1017
    %v1019 = vpop.f32.mrb[0].mxu0
    %v1020 = vadd.f32 0.0, %v1019
    %v1021 = vpop.f32.mrb[0].mxu0
    %v1022 = vadd.f32 0.0, %v1021
    %v1023 = vpop.f32.mrb[0].mxu0
    %v1024 = vadd.f32 0.0, %v1023
    %1025 = vmatprep.mubr.bf16.mxu0 0
    %1026 = vmatmul.mubr.bf16.gmra.mrb[0].mxu0 %v466
    %v1027 = vpop.f32.mrb[0].mxu0
    %v1028 = vadd.f32 0.0, %v1027
    %v1029 = vpop.f32.mrb[0].mxu0
    %v1030 = vadd.f32 0.0, %v1029
    %v1031 = vpop.f32.mrb[0].mxu0
    %v1032 = vadd.f32 0.0, %v1031
    %v1033 = vpop.f32.mrb[0].mxu0
    %v1034 = vadd.f32 0.0, %v1033
    %1035 = vmatprep.mubr.bf16.mxu0 0
    %1036 = vmatmul.mubr.bf16.gmra.mrb[0].mxu0 %v467
    %v1037 = vpop.f32.mrb[0].mxu0
    %v1038 = vadd.f32 0.0, %v1037
    %v1039 = vpop.f32.mrb[0].mxu0
    %v1040 = vadd.f32 0.0, %v1039
    %v1041 = vpop.f32.mrb[0].mxu0
    %v1042 = vadd.f32 0.0, %v1041
    %v1043 = vpop.f32.mrb[0].mxu0
    %v1044 = vadd.f32 0.0, %v1043
    %1045 = vdwg.mxu0
    %1046 = vmatprep.subr.bf16.mxu0 0
    %1047 = vmatpush1.bf16.msra.mxu0 %v887
    %1048 = vmatprep.subr.bf16.mxu0 0
    %1049 = vmatpush1.bf16.msra.mxu0 %v890
    %1050 = vmatprep.subr.bf16.mxu0 0
    %1051 = vmatpush1.bf16.msra.mxu0 %v893
    %1052 = vmatprep.subr.bf16.mxu0 0
    %1053 = vmatpush1.bf16.msra.mxu0 %v896
    %1054 = vmatprep.subr.bf16.mxu0 0
    %1055 = vmatpush1.bf16.msra.mxu0 %v899
    %1056 = vmatprep.subr.bf16.mxu0 0
    %1057 = vmatpush1.bf16.msra.mxu0 %v902
    %1058 = vmatprep.subr.bf16.mxu0 0
    %1059 = vmatpush1.bf16.msra.mxu0 %v905
    %1060 = vmatprep.subr.bf16.mxu0 0
    %1061 = vmatpush1.bf16.msra.mxu0 %v908
    %1062 = vmatprep.subr.bf16.mxu0 0
    %1063 = vmatpush1.bf16.msra.mxu0 0
    %1064 = vmatprep.subr.bf16.mxu0 0
    %1065 = vmatpush1.bf16.msra.mxu0 0
    %1066 = vmatprep.subr.bf16.mxu0 0
    %1067 = vmatpush1.bf16.msra.mxu0 0
    %1068 = vmatprep.subr.bf16.mxu0 0
    %1069 = vmatpush1.bf16.msra.mxu0 0
    %1070 = vmatprep.subr.bf16.mxu0 0
    %1071 = vmatpush1.bf16.msra.mxu0 0
    %1072 = vmatprep.subr.bf16.mxu0 0
    %1073 = vmatpush1.bf16.msra.mxu0 0
    %1074 = vmatprep.subr.bf16.mxu0 0
    %1075 = vmatpush1.bf16.msra.mxu0 0
    %1076 = vmatprep.subr.bf16.mxu0 0
    %1077 = vmatpush1.bf16.msra.mxu0 0
    %1078 = vmatprep.mubr.bf16.mxu0 0
    %1079 = vmatmul.mubr.bf16.gmra.mrb[0].mxu0 %v460
    %v1080 = vpop.f32.mrb[0].mxu0
    %v1081 = vadd.f32 0.0, %v1080
    %v1082 = vpop.f32.mrb[0].mxu0
    %v1083 = vpop.f32.mrb[0].mxu0
    %v1084 = vadd.f32 0.0, %v1083
    %v1085 = vpop.f32.mrb[0].mxu0
    %1086 = vmatprep.mubr.bf16.mxu0 0
    %1087 = vmatmul.mubr.bf16.gmra.mrb[0].mxu0 %v461
    %v1088 = vpop.f32.mrb[0].mxu0
    %v1089 = vadd.f32 0.0, %v1088
    %v1090 = vpop.f32.mrb[0].mxu0
    %v1091 = vpop.f32.mrb[0].mxu0
    %v1092 = vadd.f32 0.0, %v1091
    %v1093 = vpop.f32.mrb[0].mxu0
    %1094 = vmatprep.mubr.bf16.mxu0 0
    %1095 = vmatmul.mubr.bf16.gmra.mrb[0].mxu0 %v462
    %v1096 = vpop.f32.mrb[0].mxu0
    %v1097 = vadd.f32 0.0, %v1096
    %v1098 = vpop.f32.mrb[0].mxu0
    %v1099 = vpop.f32.mrb[0].mxu0
    %v1100 = vadd.f32 0.0, %v1099
    %v1101 = vpop.f32.mrb[0].mxu0
    %1102 = vmatprep.mubr.bf16.mxu0 0
    %1103 = vmatmul.mubr.bf16.gmra.mrb[0].mxu0 %v463
    %v1104 = vpop.f32.mrb[0].mxu0
    %v1105 = vadd.f32 0.0, %v1104
    %v1106 = vpop.f32.mrb[0].mxu0
    %v1107 = vpop.f32.mrb[0].mxu0
    %v1108 = vadd.f32 0.0, %v1107
    %v1109 = vpop.f32.mrb[0].mxu0
    %1110 = vmatprep.mubr.bf16.mxu0 0
    %1111 = vmatmul.mubr.bf16.gmra.mrb[0].mxu0 %v464
    %v1112 = vpop.f32.mrb[0].mxu0
    %v1113 = vadd.f32 0.0, %v1112
    %v1114 = vpop.f32.mrb[0].mxu0
    %v1115 = vpop.f32.mrb[0].mxu0
    %v1116 = vadd.f32 0.0, %v1115
    %v1117 = vpop.f32.mrb[0].mxu0
    %1118 = vmatprep.mubr.bf16.mxu0 0
    %1119 = vmatmul.mubr.bf16.gmra.mrb[0].mxu0 %v465
    %v1120 = vpop.f32.mrb[0].mxu0
    %v1121 = vadd.f32 0.0, %v1120
    %v1122 = vpop.f32.mrb[0].mxu0
    %v1123 = vpop.f32.mrb[0].mxu0
    %v1124 = vadd.f32 0.0, %v1123
    %v1125 = vpop.f32.mrb[0].mxu0
    %1126 = vmatprep.mubr.bf16.mxu0 0
    %1127 = vmatmul.mubr.bf16.gmra.mrb[0].mxu0 %v466
    %v1128 = vpop.f32.mrb[0].mxu0
    %v1129 = vadd.f32 0.0, %v1128
    %v1130 = vpop.f32.mrb[0].mxu0
    %v1131 = vpop.f32.mrb[0].mxu0
    %v1132 = vadd.f32 0.0, %v1131
    %v1133 = vpop.f32.mrb[0].mxu0
    %1134 = vmatprep.mubr.bf16.mxu0 0
    %1135 = vmatmul.mubr.bf16.gmra.mrb[0].mxu0 %v467
    %v1136 = vpop.f32.mrb[0].mxu0
    %v1137 = vadd.f32 0.0, %v1136
    %v1138 = vpop.f32.mrb[0].mxu0
    %v1139 = vpop.f32.mrb[0].mxu0
    %v1140 = vadd.f32 0.0, %v1139
    %v1141 = vpop.f32.mrb[0].mxu0
    %1142 = vdwg.mxu0
    %v1143 = vpack.c.bf16 %v699, %v695
    %v1144 = vpack.c.bf16 %v709, %v705
    %v1145 = vpack.c.bf16 %v719, %v715
    %v1146 = vpack.c.bf16 %v729, %v725
    %v1147 = vpack.c.bf16 %v739, %v735
    %v1148 = vpack.c.bf16 %v749, %v745
    %v1149 = vpack.c.bf16 %v759, %v755
    %v1150 = vpack.c.bf16 %v769, %v765
    %v1151 = vpack.c.bf16 %v701, %v697
    %v1152 = vpack.c.bf16 %v711, %v707
    %v1153 = vpack.c.bf16 %v721, %v717
    %v1154 = vpack.c.bf16 %v731, %v727
    %v1155 = vpack.c.bf16 %v741, %v737
    %v1156 = vpack.c.bf16 %v751, %v747
    %v1157 = vpack.c.bf16 %v761, %v757
    %v1158 = vpack.c.bf16 %v771, %v767
    %v1159 = vpack.c.bf16 %v972, %v968
    %v1160 = vpack.c.bf16 %v982, %v978
    %v1161 = vpack.c.bf16 %v992, %v988
    %v1162 = vpack.c.bf16 %v1002, %v998
    %v1163 = vpack.c.bf16 %v1012, %v1008
    %v1164 = vpack.c.bf16 %v1022, %v1018
    %v1165 = vpack.c.bf16 %v1032, %v1028
    %v1166 = vpack.c.bf16 %v1042, %v1038
    %v1167 = vpack.c.bf16 %v974, %v970
    %v1168 = vpack.c.bf16 %v1084, %v1081
    %v1169 = vpack.c.bf16 %v984, %v980
    %v1170 = vpack.c.bf16 %v1092, %v1089
    %v1171 = vpack.c.bf16 %v994, %v990
    %v1172 = vpack.c.bf16 %v1100, %v1097
    %v1173 = vpack.c.bf16 %v1004, %v1000
    %v1174 = vpack.c.bf16 %v1108, %v1105
    %v1175 = vpack.c.bf16 %v1014, %v1010
    %v1176 = vpack.c.bf16 %v1116, %v1113
    %v1177 = vpack.c.bf16 %v1024, %v1020
    %v1178 = vpack.c.bf16 %v1124, %v1121
    %v1179 = vpack.c.bf16 %v1034, %v1030
    %v1180 = vpack.c.bf16 %v1132, %v1129
    %v1181 = vpack.c.bf16 %v1044, %v1040
    %v1182 = vpack.c.bf16 %v1140, %v1137
    %v1183 = vld [vmem:[#allocation7] sm:$0xff]
    %v1184 = vld [vmem:[#allocation7 + $0x8] sm:$0xff]
    %v1185 = vld [vmem:[#allocation7 + $0x10] sm:$0xff]
    %v1186 = vld [vmem:[#allocation7 + $0x18] sm:$0xff]
    %v1187 = vld [vmem:[#allocation7 + $0x20] sm:$0xff]
    %v1188 = vld [vmem:[#allocation7 + $0x28] sm:$0xff]
    %v1189 = vld [vmem:[#allocation7 + $0x30] sm:$0xff]
    %v1190 = vld [vmem:[#allocation7 + $0x38] sm:$0xff]
    %v1191 = vld [vmem:[#allocation7 + $0x40] sm:$0xff]
    %v1192 = vld [vmem:[#allocation7 + $0x48] sm:$0xff]
    %v1193 = vld [vmem:[#allocation7 + $0x50] sm:$0xff]
    %v1194 = vld [vmem:[#allocation7 + $0x58] sm:$0xff]
    %v1195 = vld [vmem:[#allocation7 + $0x60] sm:$0xff]
    %v1196 = vld [vmem:[#allocation7 + $0x68] sm:$0xff]
    %v1197 = vld [vmem:[#allocation7 + $0x70] sm:$0xff]
    %v1198 = vld [vmem:[#allocation7 + $0x78] sm:$0xff]
    %1199 = vmatprep.subr.bf16.mxu0 0
    %1200 = vmatpush1.bf16.xpose.msra.mxu0 %v1159
    %1201 = vmatprep.subr.bf16.mxu0 0
    %1202 = vmatpush1.bf16.xpose.msra.mxu0 %v1160
    %1203 = vmatprep.subr.bf16.mxu0 0
    %1204 = vmatpush1.bf16.xpose.msra.mxu0 %v1161
    %1205 = vmatprep.subr.bf16.mxu0 0
    %1206 = vmatpush1.bf16.xpose.msra.mxu0 %v1162
    %1207 = vmatprep.subr.bf16.mxu0 0
    %1208 = vmatpush1.bf16.xpose.msra.mxu0 %v1163
    %1209 = vmatprep.subr.bf16.mxu0 0
    %1210 = vmatpush1.bf16.xpose.msra.mxu0 %v1164
    %1211 = vmatprep.subr.bf16.mxu0 0
    %1212 = vmatpush1.bf16.xpose.msra.mxu0 %v1165
    %1213 = vmatprep.subr.bf16.mxu0 0
    %1214 = vmatpush1.bf16.xpose.msra.mxu0 %v1166
    %1215 = vmatprep.subr.bf16.mxu0 0
    %1216 = vmatpush1.bf16.xpose.msra.mxu0 0
    %1217 = vmatprep.subr.bf16.mxu0 0
    %1218 = vmatpush1.bf16.xpose.msra.mxu0 0
    %1219 = vmatprep.subr.bf16.mxu0 0
    %1220 = vmatpush1.bf16.xpose.msra.mxu0 0
    %1221 = vmatprep.subr.bf16.mxu0 0
    %1222 = vmatpush1.bf16.xpose.msra.mxu0 0
    %1223 = vmatprep.subr.bf16.mxu0 0
    %1224 = vmatpush1.bf16.xpose.msra.mxu0 0
    %1225 = vmatprep.subr.bf16.mxu0 0
    %1226 = vmatpush1.bf16.xpose.msra.mxu0 0
    %1227 = vmatprep.subr.bf16.mxu0 0
    %1228 = vmatpush1.bf16.xpose.msra.mxu0 0
    %1229 = vmatprep.subr.bf16.mxu0 0
    %1230 = vmatpush1.bf16.xpose.msra.mxu0 0
    %1231 = vmatprep.mubr.bf16.mxu0 0
    %1232 = vmatmul.mubr.bf16.gmra.mrb[0].mxu0 %v1143
    %v1233 = vpop.f32.mrb[0].mxu0
    %v1234 = vadd.f32 %v1183, %v1233
    %v1235 = vpop.f32.mrb[0].mxu0
    %v1236 = vpop.f32.mrb[0].mxu0
    %v1237 = vadd.f32 %v1184, %v1236
    %v1238 = vpop.f32.mrb[0].mxu0
    %1239 = vmatprep.mubr.bf16.mxu0 0
    %1240 = vmatmul.mubr.bf16.gmra.mrb[0].mxu0 %v1144
    %v1241 = vpop.f32.mrb[0].mxu0
    %v1242 = vadd.f32 %v1185, %v1241
    %v1243 = vpop.f32.mrb[0].mxu0
    %v1244 = vpop.f32.mrb[0].mxu0
    %v1245 = vadd.f32 %v1186, %v1244
    %v1246 = vpop.f32.mrb[0].mxu0
    %1247 = vmatprep.mubr.bf16.mxu0 0
    %1248 = vmatmul.mubr.bf16.gmra.mrb[0].mxu0 %v1145
    %v1249 = vpop.f32.mrb[0].mxu0
    %v1250 = vadd.f32 %v1187, %v1249
    %v1251 = vpop.f32.mrb[0].mxu0
    %v1252 = vpop.f32.mrb[0].mxu0
    %v1253 = vadd.f32 %v1188, %v1252
    %v1254 = vpop.f32.mrb[0].mxu0
    %1255 = vmatprep.mubr.bf16.mxu0 0
    %1256 = vmatmul.mubr.bf16.gmra.mrb[0].mxu0 %v1146
    %v1257 = vpop.f32.mrb[0].mxu0
    %v1258 = vadd.f32 %v1189, %v1257
    %v1259 = vpop.f32.mrb[0].mxu0
    %v1260 = vpop.f32.mrb[0].mxu0
    %v1261 = vadd.f32 %v1190, %v1260
    %v1262 = vpop.f32.mrb[0].mxu0
    %1263 = vmatprep.mubr.bf16.mxu0 0
    %1264 = vmatmul.mubr.bf16.gmra.mrb[0].mxu0 %v1147
    %v1265 = vpop.f32.mrb[0].mxu0
    %v1266 = vadd.f32 %v1191, %v1265
    %v1267 = vpop.f32.mrb[0].mxu0
    %v1268 = vpop.f32.mrb[0].mxu0
    %v1269 = vadd.f32 %v1192, %v1268
    %v1270 = vpop.f32.mrb[0].mxu0
    %1271 = vmatprep.mubr.bf16.mxu0 0
    %1272 = vmatmul.mubr.bf16.gmra.mrb[0].mxu0 %v1148
    %v1273 = vpop.f32.mrb[0].mxu0
    %v1274 = vadd.f32 %v1193, %v1273
    %v1275 = vpop.f32.mrb[0].mxu0
    %v1276 = vpop.f32.mrb[0].mxu0
    %v1277 = vadd.f32 %v1194, %v1276
    %v1278 = vpop.f32.mrb[0].mxu0
    %1279 = vmatprep.mubr.bf16.mxu0 0
    %1280 = vmatmul.mubr.bf16.gmra.mrb[0].mxu0 %v1149
    %v1281 = vpop.f32.mrb[0].mxu0
    %v1282 = vadd.f32 %v1195, %v1281
    %v1283 = vpop.f32.mrb[0].mxu0
    %v1284 = vpop.f32.mrb[0].mxu0
    %v1285 = vadd.f32 %v1196, %v1284
    %v1286 = vpop.f32.mrb[0].mxu0
    %1287 = vmatprep.mubr.bf16.mxu0 0
    %1288 = vmatmul.mubr.bf16.gmra.mrb[0].mxu0 %v1150
    %v1289 = vpop.f32.mrb[0].mxu0
    %v1290 = vadd.f32 %v1197, %v1289
    %v1291 = vpop.f32.mrb[0].mxu0
    %v1292 = vpop.f32.mrb[0].mxu0
    %v1293 = vadd.f32 %v1198, %v1292
    %v1294 = vpop.f32.mrb[0].mxu0
    %1295 = vdwg.mxu0
    %1296 = vmax.xlane.f32.xlu0 %v1234
    %v1297 = vpop.xlane.xlu0 %1296
    %1298 = vmax.xlane.f32.xlu0 %v1237
    %v1299 = vpop.xlane.xlu0 %1298
    %1300 = vmax.xlane.f32.xlu0 %v1242
    %v1301 = vpop.xlane.xlu0 %1300
    %1302 = vmax.xlane.f32.xlu0 %v1245
    %v1303 = vpop.xlane.xlu0 %1302
    %1304 = vmax.xlane.f32.xlu0 %v1250
    %v1305 = vpop.xlane.xlu0 %1304
    %1306 = vmax.xlane.f32.xlu0 %v1253
    %v1307 = vpop.xlane.xlu0 %1306
    %1308 = vmax.xlane.f32.xlu0 %v1258
    %v1309 = vpop.xlane.xlu0 %1308
    %1310 = vmax.xlane.f32.xlu0 %v1261
    %v1311 = vpop.xlane.xlu0 %1310
    %1312 = vmax.xlane.f32.xlu0 %v1266
    %v1313 = vpop.xlane.xlu0 %1312
    %1314 = vmax.xlane.f32.xlu0 %v1269
    %v1315 = vpop.xlane.xlu0 %1314
    %1316 = vmax.xlane.f32.xlu0 %v1274
    %v1317 = vpop.xlane.xlu0 %1316
    %1318 = vmax.xlane.f32.xlu0 %v1277
    %v1319 = vpop.xlane.xlu0 %1318
    %1320 = vmax.xlane.f32.xlu0 %v1282
    %v1321 = vpop.xlane.xlu0 %1320
    %1322 = vmax.xlane.f32.xlu0 %v1285
    %v1323 = vpop.xlane.xlu0 %1322
    %1324 = vmax.xlane.f32.xlu0 %v1290
    %v1325 = vpop.xlane.xlu0 %1324
    %1326 = vmax.xlane.f32.xlu0 %v1293
    %v1327 = vpop.xlane.xlu0 %1326
    %v1328 = vsub.f32 %v1234, %v1297
    %v1329 = vsub.f32 %v1237, %v1299
    %v1330 = vsub.f32 %v1242, %v1301
    %v1331 = vsub.f32 %v1245, %v1303
    %v1332 = vsub.f32 %v1250, %v1305
    %v1333 = vsub.f32 %v1253, %v1307
    %v1334 = vsub.f32 %v1258, %v1309
    %v1335 = vsub.f32 %v1261, %v1311
    %v1336 = vsub.f32 %v1266, %v1313
    %v1337 = vsub.f32 %v1269, %v1315
    %v1338 = vsub.f32 %v1274, %v1317
    %v1339 = vsub.f32 %v1277, %v1319
    %v1340 = vsub.f32 %v1282, %v1321
    %v1341 = vsub.f32 %v1285, %v1323
    %v1342 = vsub.f32 %v1290, %v1325
    %v1343 = vsub.f32 %v1293, %v1327
    %v1344 = vmul.f32 %v1328, 1.442695
    %v1345 = vpow.pop %v1344
    %v1346 = vmul.f32 %v1329, 1.442695
    %v1347 = vpow.pop %v1346
    %v1348 = vmul.f32 %v1330, 1.442695
    %v1349 = vpow.pop %v1348
    %v1350 = vmul.f32 %v1331, 1.442695
    %v1351 = vpow.pop %v1350
    %v1352 = vmul.f32 %v1332, 1.442695
    %v1353 = vpow.pop %v1352
    %v1354 = vmul.f32 %v1333, 1.442695
    %v1355 = vpow.pop %v1354
    %v1356 = vmul.f32 %v1334, 1.442695
    %v1357 = vpow.pop %v1356
    %v1358 = vmul.f32 %v1335, 1.442695
    %v1359 = vpow.pop %v1358
    %v1360 = vmul.f32 %v1336, 1.442695
    %v1361 = vpow.pop %v1360
    %v1362 = vmul.f32 %v1337, 1.442695
    %v1363 = vpow.pop %v1362
    %v1364 = vmul.f32 %v1338, 1.442695
    %v1365 = vpow.pop %v1364
    %v1366 = vmul.f32 %v1339, 1.442695
    %v1367 = vpow.pop %v1366
    %v1368 = vmul.f32 %v1340, 1.442695
    %v1369 = vpow.pop %v1368
    %v1370 = vmul.f32 %v1341, 1.442695
    %v1371 = vpow.pop %v1370
    %v1372 = vmul.f32 %v1342, 1.442695
    %v1373 = vpow.pop %v1372
    %v1374 = vmul.f32 %v1343, 1.442695
    %v1375 = vpow.pop %v1374
    %1376 = vadd.xlane.f32.xlu0 %v1345
    %v1377 = vpop.xlane.xlu0 %1376
    %1378 = vadd.xlane.f32.xlu0 %v1347
    %v1379 = vpop.xlane.xlu0 %1378
    %1380 = vadd.xlane.f32.xlu0 %v1349
    %v1381 = vpop.xlane.xlu0 %1380
    %1382 = vadd.xlane.f32.xlu0 %v1351
    %v1383 = vpop.xlane.xlu0 %1382
    %1384 = vadd.xlane.f32.xlu0 %v1353
    %v1385 = vpop.xlane.xlu0 %1384
    %1386 = vadd.xlane.f32.xlu0 %v1355
    %v1387 = vpop.xlane.xlu0 %1386
    %1388 = vadd.xlane.f32.xlu0 %v1357
    %v1389 = vpop.xlane.xlu0 %1388
    %1390 = vadd.xlane.f32.xlu0 %v1359
    %v1391 = vpop.xlane.xlu0 %1390
    %1392 = vadd.xlane.f32.xlu0 %v1361
    %v1393 = vpop.xlane.xlu0 %1392
    %1394 = vadd.xlane.f32.xlu0 %v1363
    %v1395 = vpop.xlane.xlu0 %1394
    %1396 = vadd.xlane.f32.xlu0 %v1365
    %v1397 = vpop.xlane.xlu0 %1396
    %1398 = vadd.xlane.f32.xlu0 %v1367
    %v1399 = vpop.xlane.xlu0 %1398
    %1400 = vadd.xlane.f32.xlu0 %v1369
    %v1401 = vpop.xlane.xlu0 %1400
    %1402 = vadd.xlane.f32.xlu0 %v1371
    %v1403 = vpop.xlane.xlu0 %1402
    %1404 = vadd.xlane.f32.xlu0 %v1373
    %v1405 = vpop.xlane.xlu0 %1404
    %1406 = vadd.xlane.f32.xlu0 %v1375
    %v1407 = vpop.xlane.xlu0 %1406
    %v1408 = vrcp.pop %v1377
    %v1409 = vrcp.pop %v1379
    %v1410 = vrcp.pop %v1381
    %v1411 = vrcp.pop %v1383
    %v1412 = vrcp.pop %v1385
    %v1413 = vrcp.pop %v1387
    %v1414 = vrcp.pop %v1389
    %v1415 = vrcp.pop %v1391
    %v1416 = vrcp.pop %v1393
    %v1417 = vrcp.pop %v1395
    %v1418 = vrcp.pop %v1397
    %v1419 = vrcp.pop %v1399
    %v1420 = vrcp.pop %v1401
    %v1421 = vrcp.pop %v1403
    %v1422 = vrcp.pop %v1405
    %v1423 = vrcp.pop %v1407
    %v1424 = vmul.f32 %v1345, %v1408
    %v1425 = vmul.f32 %v1347, %v1409
    %v1426 = vmul.f32 %v1349, %v1410
    %v1427 = vmul.f32 %v1351, %v1411
    %v1428 = vmul.f32 %v1353, %v1412
    %v1429 = vmul.f32 %v1355, %v1413
    %v1430 = vmul.f32 %v1357, %v1414
    %v1431 = vmul.f32 %v1359, %v1415
    %v1432 = vmul.f32 %v1361, %v1416
    %v1433 = vmul.f32 %v1363, %v1417
    %v1434 = vmul.f32 %v1365, %v1418
    %v1435 = vmul.f32 %v1367, %v1419
    %v1436 = vmul.f32 %v1369, %v1420
    %v1437 = vmul.f32 %v1371, %v1421
    %v1438 = vmul.f32 %v1373, %v1422
    %v1439 = vmul.f32 %v1375, %v1423
    %v1440 = vpack.c.bf16 %v1425, %v1424
    %v1441 = vpack.c.bf16 %v1427, %v1426
    %v1442 = vpack.c.bf16 %v1429, %v1428
    %v1443 = vpack.c.bf16 %v1431, %v1430
    %v1444 = vpack.c.bf16 %v1433, %v1432
    %v1445 = vpack.c.bf16 %v1435, %v1434
    %v1446 = vpack.c.bf16 %v1437, %v1436
    %v1447 = vpack.c.bf16 %v1439, %v1438
    %1448 = vxpose.xlu0.b32.start [1/16] %v1234, 128
    %1449 = vxpose.xlu0.b32.cont [2/16] %v1237, 128
    %1450 = vxpose.xlu0.b32.cont [3/16] %v1242, 128
    %1451 = vxpose.xlu0.b32.cont [4/16] %v1245, 128
    %1452 = vxpose.xlu0.b32.cont [5/16] %v1250, 128
    %1453 = vxpose.xlu0.b32.cont [6/16] %v1253, 128
    %1454 = vxpose.xlu0.b32.cont [7/16] %v1258, 128
    %1455 = vxpose.xlu0.b32.cont [8/16] %v1261, 128
    %1456 = vxpose.xlu0.b32.cont [9/16] %v1266, 128
    %1457 = vxpose.xlu0.b32.cont [10/16] %v1269, 128
    %1458 = vxpose.xlu0.b32.cont [11/16] %v1274, 128
    %1459 = vxpose.xlu0.b32.cont [12/16] %v1277, 128
    %1460 = vxpose.xlu0.b32.cont [13/16] %v1282, 128
    %1461 = vxpose.xlu0.b32.cont [14/16] %v1285, 128
    %1462 = vxpose.xlu0.b32.cont [15/16] %v1290, 128
    %1463 = vxpose.xlu0.b32.end [16/16] %v1293, 128
    %v1464 = vpop.trf.xlu0
    %v1465 = vpop.trf.xlu0
    %v1466 = vpop.trf.xlu0
    %v1467 = vpop.trf.xlu0
    %v1468 = vpop.trf.xlu0
    %v1469 = vpop.trf.xlu0
    %v1470 = vpop.trf.xlu0
    %v1471 = vpop.trf.xlu0
    %v1472 = vpop.trf.xlu0
    %v1473 = vpop.trf.xlu0
    %v1474 = vpop.trf.xlu0
    %v1475 = vpop.trf.xlu0
    %v1476 = vpop.trf.xlu0
    %v1477 = vpop.trf.xlu0
    %v1478 = vpop.trf.xlu0
    %v1479 = vpop.trf.xlu0
    %1480 = vmax.xlane.f32.xlu0 %v1464
    %v1481 = vpop.xlane.xlu0 %1480
    %1482 = vmax.xlane.f32.xlu0 %v1465
    %v1483 = vpop.xlane.xlu0 %1482
    %1484 = vmax.xlane.f32.xlu0 %v1466
    %v1485 = vpop.xlane.xlu0 %1484
    %1486 = vmax.xlane.f32.xlu0 %v1467
    %v1487 = vpop.xlane.xlu0 %1486
    %1488 = vmax.xlane.f32.xlu0 %v1468
    %v1489 = vpop.xlane.xlu0 %1488
    %1490 = vmax.xlane.f32.xlu0 %v1469
    %v1491 = vpop.xlane.xlu0 %1490
    %1492 = vmax.xlane.f32.xlu0 %v1470
    %v1493 = vpop.xlane.xlu0 %1492
    %1494 = vmax.xlane.f32.xlu0 %v1471
    %v1495 = vpop.xlane.xlu0 %1494
    %1496 = vmax.xlane.f32.xlu0 %v1472
    %v1497 = vpop.xlane.xlu0 %1496
    %1498 = vmax.xlane.f32.xlu0 %v1473
    %v1499 = vpop.xlane.xlu0 %1498
    %1500 = vmax.xlane.f32.xlu0 %v1474
    %v1501 = vpop.xlane.xlu0 %1500
    %1502 = vmax.xlane.f32.xlu0 %v1475
    %v1503 = vpop.xlane.xlu0 %1502
    %1504 = vmax.xlane.f32.xlu0 %v1476
    %v1505 = vpop.xlane.xlu0 %1504
    %1506 = vmax.xlane.f32.xlu0 %v1477
    %v1507 = vpop.xlane.xlu0 %1506
    %1508 = vmax.xlane.f32.xlu0 %v1478
    %v1509 = vpop.xlane.xlu0 %1508
    %1510 = vmax.xlane.f32.xlu0 %v1479
    %v1511 = vpop.xlane.xlu0 %1510
    %v1512 = vsub.f32 %v1464, %v1481
    %v1513 = vsub.f32 %v1465, %v1483
    %v1514 = vsub.f32 %v1466, %v1485
    %v1515 = vsub.f32 %v1467, %v1487
    %v1516 = vsub.f32 %v1468, %v1489
    %v1517 = vsub.f32 %v1469, %v1491
    %v1518 = vsub.f32 %v1470, %v1493
    %v1519 = vsub.f32 %v1471, %v1495
    %v1520 = vsub.f32 %v1472, %v1497
    %v1521 = vsub.f32 %v1473, %v1499
    %v1522 = vsub.f32 %v1474, %v1501
    %v1523 = vsub.f32 %v1475, %v1503
    %v1524 = vsub.f32 %v1476, %v1505
    %v1525 = vsub.f32 %v1477, %v1507
    %v1526 = vsub.f32 %v1478, %v1509
    %v1527 = vsub.f32 %v1479, %v1511
    %v1528 = vmul.f32 %v1512, 1.442695
    %v1529 = vpow.pop %v1528
    %v1530 = vmul.f32 %v1513, 1.442695
    %v1531 = vpow.pop %v1530
    %v1532 = vmul.f32 %v1514, 1.442695
    %v1533 = vpow.pop %v1532
    %v1534 = vmul.f32 %v1515, 1.442695
    %v1535 = vpow.pop %v1534
    %v1536 = vmul.f32 %v1516, 1.442695
    %v1537 = vpow.pop %v1536
    %v1538 = vmul.f32 %v1517, 1.442695
    %v1539 = vpow.pop %v1538
    %v1540 = vmul.f32 %v1518, 1.442695
    %v1541 = vpow.pop %v1540
    %v1542 = vmul.f32 %v1519, 1.442695
    %v1543 = vpow.pop %v1542
    %v1544 = vmul.f32 %v1520, 1.442695
    %v1545 = vpow.pop %v1544
    %v1546 = vmul.f32 %v1521, 1.442695
    %v1547 = vpow.pop %v1546
    %v1548 = vmul.f32 %v1522, 1.442695
    %v1549 = vpow.pop %v1548
    %v1550 = vmul.f32 %v1523, 1.442695
    %v1551 = vpow.pop %v1550
    %v1552 = vmul.f32 %v1524, 1.442695
    %v1553 = vpow.pop %v1552
    %v1554 = vmul.f32 %v1525, 1.442695
    %v1555 = vpow.pop %v1554
    %v1556 = vmul.f32 %v1526, 1.442695
    %v1557 = vpow.pop %v1556
    %v1558 = vmul.f32 %v1527, 1.442695
    %v1559 = vpow.pop %v1558
    %1560 = vadd.xlane.f32.xlu0 %v1529
    %v1561 = vpop.xlane.xlu0 %1560
    %1562 = vadd.xlane.f32.xlu0 %v1531
    %v1563 = vpop.xlane.xlu0 %1562
    %1564 = vadd.xlane.f32.xlu0 %v1533
    %v1565 = vpop.xlane.xlu0 %1564
    %1566 = vadd.xlane.f32.xlu0 %v1535
    %v1567 = vpop.xlane.xlu0 %1566
    %1568 = vadd.xlane.f32.xlu0 %v1537
    %v1569 = vpop.xlane.xlu0 %1568
    %1570 = vadd.xlane.f32.xlu0 %v1539
    %v1571 = vpop.xlane.xlu0 %1570
    %1572 = vadd.xlane.f32.xlu0 %v1541
    %v1573 = vpop.xlane.xlu0 %1572
    %1574 = vadd.xlane.f32.xlu0 %v1543
    %v1575 = vpop.xlane.xlu0 %1574
    %1576 = vadd.xlane.f32.xlu0 %v1545
    %v1577 = vpop.xlane.xlu0 %1576
    %1578 = vadd.xlane.f32.xlu0 %v1547
    %v1579 = vpop.xlane.xlu0 %1578
    %1580 = vadd.xlane.f32.xlu0 %v1549
    %v1581 = vpop.xlane.xlu0 %1580
    %1582 = vadd.xlane.f32.xlu0 %v1551
    %v1583 = vpop.xlane.xlu0 %1582
    %1584 = vadd.xlane.f32.xlu0 %v1553
    %v1585 = vpop.xlane.xlu0 %1584
    %1586 = vadd.xlane.f32.xlu0 %v1555
    %v1587 = vpop.xlane.xlu0 %1586
    %1588 = vadd.xlane.f32.xlu0 %v1557
    %v1589 = vpop.xlane.xlu0 %1588
    %1590 = vadd.xlane.f32.xlu0 %v1559
    %v1591 = vpop.xlane.xlu0 %1590
    %v1592 = vrcp.pop %v1561
    %v1593 = vrcp.pop %v1563
    %v1594 = vrcp.pop %v1565
    %v1595 = vrcp.pop %v1567
    %v1596 = vrcp.pop %v1569
    %v1597 = vrcp.pop %v1571
    %v1598 = vrcp.pop %v1573
    %v1599 = vrcp.pop %v1575
    %v1600 = vrcp.pop %v1577
    %v1601 = vrcp.pop %v1579
    %v1602 = vrcp.pop %v1581
    %v1603 = vrcp.pop %v1583
    %v1604 = vrcp.pop %v1585
    %v1605 = vrcp.pop %v1587
    %v1606 = vrcp.pop %v1589
    %v1607 = vrcp.pop %v1591
    %v1608 = vmul.f32 %v1529, %v1592
    %v1609 = vmul.f32 %v1531, %v1593
    %v1610 = vmul.f32 %v1533, %v1594
    %v1611 = vmul.f32 %v1535, %v1595
    %v1612 = vmul.f32 %v1537, %v1596
    %v1613 = vmul.f32 %v1539, %v1597
    %v1614 = vmul.f32 %v1541, %v1598
    %v1615 = vmul.f32 %v1543, %v1599
    %v1616 = vmul.f32 %v1545, %v1600
    %v1617 = vmul.f32 %v1547, %v1601
    %v1618 = vmul.f32 %v1549, %v1602
    %v1619 = vmul.f32 %v1551, %v1603
    %v1620 = vmul.f32 %v1553, %v1604
    %v1621 = vmul.f32 %v1555, %v1605
    %v1622 = vmul.f32 %v1557, %v1606
    %v1623 = vmul.f32 %v1559, %v1607
    %v1624 = vpack.c.bf16 %v1609, %v1608
    %v1625 = vpack.c.bf16 %v1611, %v1610
    %v1626 = vpack.c.bf16 %v1613, %v1612
    %v1627 = vpack.c.bf16 %v1615, %v1614
    %v1628 = vpack.c.bf16 %v1617, %v1616
    %v1629 = vpack.c.bf16 %v1619, %v1618
    %v1630 = vpack.c.bf16 %v1621, %v1620
    %v1631 = vpack.c.bf16 %v1623, %v1622
    %1632 = vmatprep.subr.bf16.mxu0 %v1168
    %1633 = vmatpush1.bf16.msra.mxu0 %v1167
    %1634 = vmatprep.subr.bf16.mxu0 %v1170
    %1635 = vmatpush1.bf16.msra.mxu0 %v1169
    %1636 = vmatprep.subr.bf16.mxu0 %v1172
    %1637 = vmatpush1.bf16.msra.mxu0 %v1171
    %1638 = vmatprep.subr.bf16.mxu0 %v1174
    %1639 = vmatpush1.bf16.msra.mxu0 %v1173
    %1640 = vmatprep.subr.bf16.mxu0 %v1176
    %1641 = vmatpush1.bf16.msra.mxu0 %v1175
    %1642 = vmatprep.subr.bf16.mxu0 %v1178
    %1643 = vmatpush1.bf16.msra.mxu0 %v1177
    %1644 = vmatprep.subr.bf16.mxu0 %v1180
    %1645 = vmatpush1.bf16.msra.mxu0 %v1179
    %1646 = vmatprep.subr.bf16.mxu0 %v1182
    %1647 = vmatpush1.bf16.msra.mxu0 %v1181
    %1648 = vmatprep.subr.bf16.mxu0 0
    %1649 = vmatpush1.bf16.msra.mxu0 0
    %1650 = vmatprep.subr.bf16.mxu0 0
    %1651 = vmatpush1.bf16.msra.mxu0 0
    %1652 = vmatprep.subr.bf16.mxu0 0
    %1653 = vmatpush1.bf16.msra.mxu0 0
    %1654 = vmatprep.subr.bf16.mxu0 0
    %1655 = vmatpush1.bf16.msra.mxu0 0
    %1656 = vmatprep.subr.bf16.mxu0 0
    %1657 = vmatpush1.bf16.msra.mxu0 0
    %1658 = vmatprep.subr.bf16.mxu0 0
    %1659 = vmatpush1.bf16.msra.mxu0 0
    %1660 = vmatprep.subr.bf16.mxu0 0
    %1661 = vmatpush1.bf16.msra.mxu0 0
    %1662 = vmatprep.subr.bf16.mxu0 0
    %1663 = vmatpush1.bf16.msra.mxu0 0
    %1664 = vmatprep.mubr.bf16.mxu0 0
    %1665 = vmatmul.mubr.bf16.gmra.mrb[0].mxu0 %v1440
    %v1666 = vpop.f32.mrb[0].mxu0
    %v1667 = vadd.f32 0.0, %v1666
    %v1668 = vpop.f32.mrb[0].mxu0
    %v1669 = vadd.f32 0.0, %v1668
    %v1670 = vpop.f32.mrb[0].mxu0
    %v1671 = vadd.f32 0.0, %v1670
    %v1672 = vpop.f32.mrb[0].mxu0
    %v1673 = vadd.f32 0.0, %v1672
    %1674 = vmatprep.mubr.bf16.mxu0 0
    %1675 = vmatmul.mubr.bf16.gmra.mrb[0].mxu0 %v1441
    %v1676 = vpop.f32.mrb[0].mxu0
    %v1677 = vadd.f32 0.0, %v1676
    %v1678 = vpop.f32.mrb[0].mxu0
    %v1679 = vadd.f32 0.0, %v1678
    %v1680 = vpop.f32.mrb[0].mxu0
    %v1681 = vadd.f32 0.0, %v1680
    %v1682 = vpop.f32.mrb[0].mxu0
    %v1683 = vadd.f32 0.0, %v1682
    %1684 = vmatprep.mubr.bf16.mxu0 0
    %1685 = vmatmul.mubr.bf16.gmra.mrb[0].mxu0 %v1442
    %v1686 = vpop.f32.mrb[0].mxu0
    %v1687 = vadd.f32 0.0, %v1686
    %v1688 = vpop.f32.mrb[0].mxu0
    %v1689 = vadd.f32 0.0, %v1688
    %v1690 = vpop.f32.mrb[0].mxu0
    %v1691 = vadd.f32 0.0, %v1690
    %v1692 = vpop.f32.mrb[0].mxu0
    %v1693 = vadd.f32 0.0, %v1692
    %1694 = vmatprep.mubr.bf16.mxu0 0
    %1695 = vmatmul.mubr.bf16.gmra.mrb[0].mxu0 %v1443
    %v1696 = vpop.f32.mrb[0].mxu0
    %v1697 = vadd.f32 0.0, %v1696
    %v1698 = vpop.f32.mrb[0].mxu0
    %v1699 = vadd.f32 0.0, %v1698
    %v1700 = vpop.f32.mrb[0].mxu0
    %v1701 = vadd.f32 0.0, %v1700
    %v1702 = vpop.f32.mrb[0].mxu0
    %v1703 = vadd.f32 0.0, %v1702
    %1704 = vmatprep.mubr.bf16.mxu0 0
    %1705 = vmatmul.mubr.bf16.gmra.mrb[0].mxu0 %v1444
    %v1706 = vpop.f32.mrb[0].mxu0
    %v1707 = vadd.f32 0.0, %v1706
    %v1708 = vpop.f32.mrb[0].mxu0
    %v1709 = vadd.f32 0.0, %v1708
    %v1710 = vpop.f32.mrb[0].mxu0
    %v1711 = vadd.f32 0.0, %v1710
    %v1712 = vpop.f32.mrb[0].mxu0
    %v1713 = vadd.f32 0.0, %v1712
    %1714 = vmatprep.mubr.bf16.mxu0 0
    %1715 = vmatmul.mubr.bf16.gmra.mrb[0].mxu0 %v1445
    %v1716 = vpop.f32.mrb[0].mxu0
    %v1717 = vadd.f32 0.0, %v1716
    %v1718 = vpop.f32.mrb[0].mxu0
    %v1719 = vadd.f32 0.0, %v1718
    %v1720 = vpop.f32.mrb[0].mxu0
    %v1721 = vadd.f32 0.0, %v1720
    %v1722 = vpop.f32.mrb[0].mxu0
    %v1723 = vadd.f32 0.0, %v1722
    %1724 = vmatprep.mubr.bf16.mxu0 0
    %1725 = vmatmul.mubr.bf16.gmra.mrb[0].mxu0 %v1446
    %v1726 = vpop.f32.mrb[0].mxu0
    %v1727 = vadd.f32 0.0, %v1726
    %v1728 = vpop.f32.mrb[0].mxu0
    %v1729 = vadd.f32 0.0, %v1728
    %v1730 = vpop.f32.mrb[0].mxu0
    %v1731 = vadd.f32 0.0, %v1730
    %v1732 = vpop.f32.mrb[0].mxu0
    %v1733 = vadd.f32 0.0, %v1732
    %1734 = vmatprep.mubr.bf16.mxu0 0
    %1735 = vmatmul.mubr.bf16.gmra.mrb[0].mxu0 %v1447
    %v1736 = vpop.f32.mrb[0].mxu0
    %v1737 = vadd.f32 0.0, %v1736
    %v1738 = vpop.f32.mrb[0].mxu0
    %v1739 = vadd.f32 0.0, %v1738
    %v1740 = vpop.f32.mrb[0].mxu0
    %v1741 = vadd.f32 0.0, %v1740
    %v1742 = vpop.f32.mrb[0].mxu0
    %v1743 = vadd.f32 0.0, %v1742
    %1744 = vdwg.mxu0
    %v1745 = vtanh.pop %v1667
    %v1746 = vtanh.pop %v1669
    %v1747 = vtanh.pop %v1671
    %v1748 = vtanh.pop %v1673
    %v1749 = vtanh.pop %v1677
    %v1750 = vtanh.pop %v1679
    %v1751 = vtanh.pop %v1681
    %v1752 = vtanh.pop %v1683
    %v1753 = vtanh.pop %v1687
    %v1754 = vtanh.pop %v1689
    %v1755 = vtanh.pop %v1691
    %v1756 = vtanh.pop %v1693
    %v1757 = vtanh.pop %v1697
    %v1758 = vtanh.pop %v1699
    %v1759 = vtanh.pop %v1701
    %v1760 = vtanh.pop %v1703
    %v1761 = vtanh.pop %v1707
    %v1762 = vtanh.pop %v1709
    %v1763 = vtanh.pop %v1711
    %v1764 = vtanh.pop %v1713
    %v1765 = vtanh.pop %v1717
    %v1766 = vtanh.pop %v1719
    %v1767 = vtanh.pop %v1721
    %v1768 = vtanh.pop %v1723
    %v1769 = vtanh.pop %v1727
    %v1770 = vtanh.pop %v1729
    %v1771 = vtanh.pop %v1731
    %v1772 = vtanh.pop %v1733
    %v1773 = vtanh.pop %v1737
    %v1774 = vtanh.pop %v1739
    %v1775 = vtanh.pop %v1741
    %v1776 = vtanh.pop %v1743
    %1777 = vmatprep.subr.bf16.mxu0 0
    %1778 = vmatpush1.bf16.msra.mxu0 %v1151
    %1779 = vmatprep.subr.bf16.mxu0 0
    %1780 = vmatpush1.bf16.msra.mxu0 %v1152
    %1781 = vmatprep.subr.bf16.mxu0 0
    %1782 = vmatpush1.bf16.msra.mxu0 %v1153
    %1783 = vmatprep.subr.bf16.mxu0 0
    %1784 = vmatpush1.bf16.msra.mxu0 %v1154
    %1785 = vmatprep.subr.bf16.mxu0 0
    %1786 = vmatpush1.bf16.msra.mxu0 %v1155
    %1787 = vmatprep.subr.bf16.mxu0 0
    %1788 = vmatpush1.bf16.msra.mxu0 %v1156
    %1789 = vmatprep.subr.bf16.mxu0 0
    %1790 = vmatpush1.bf16.msra.mxu0 %v1157
    %1791 = vmatprep.subr.bf16.mxu0 0
    %1792 = vmatpush1.bf16.msra.mxu0 %v1158
    %1793 = vmatprep.subr.bf16.mxu0 0
    %1794 = vmatpush1.bf16.msra.mxu0 0
    %1795 = vmatprep.subr.bf16.mxu0 0
    %1796 = vmatpush1.bf16.msra.mxu0 0
    %1797 = vmatprep.subr.bf16.mxu0 0
    %1798 = vmatpush1.bf16.msra.mxu0 0
    %1799 = vmatprep.subr.bf16.mxu0 0
    %1800 = vmatpush1.bf16.msra.mxu0 0
    %1801 = vmatprep.subr.bf16.mxu0 0
    %1802 = vmatpush1.bf16.msra.mxu0 0
    %1803 = vmatprep.subr.bf16.mxu0 0
    %1804 = vmatpush1.bf16.msra.mxu0 0
    %1805 = vmatprep.subr.bf16.mxu0 0
    %1806 = vmatpush1.bf16.msra.mxu0 0
    %1807 = vmatprep.subr.bf16.mxu0 0
    %1808 = vmatpush1.bf16.msra.mxu0 0
    %1809 = vmatprep.mubr.bf16.mxu0 0
    %1810 = vmatmul.mubr.bf16.gmra.mrb[0].mxu0 %v1624
    %v1811 = vpop.f32.mrb[0].mxu0
    %v1812 = vadd.f32 0.0, %v1811
    %v1813 = vpop.f32.mrb[0].mxu0
    %v1814 = vpop.f32.mrb[0].mxu0
    %v1815 = vadd.f32 0.0, %v1814
    %v1816 = vpop.f32.mrb[0].mxu0
    %1817 = vmatprep.mubr.bf16.mxu0 0
    %1818 = vmatmul.mubr.bf16.gmra.mrb[0].mxu0 %v1625
    %v1819 = vpop.f32.mrb[0].mxu0
    %v1820 = vadd.f32 0.0, %v1819
    %v1821 = vpop.f32.mrb[0].mxu0
    %v1822 = vpop.f32.mrb[0].mxu0
    %v1823 = vadd.f32 0.0, %v1822
    %v1824 = vpop.f32.mrb[0].mxu0
    %1825 = vmatprep.mubr.bf16.mxu0 0
    %1826 = vmatmul.mubr.bf16.gmra.mrb[0].mxu0 %v1626
    %v1827 = vpop.f32.mrb[0].mxu0
    %v1828 = vadd.f32 0.0, %v1827
    %v1829 = vpop.f32.mrb[0].mxu0
    %v1830 = vpop.f32.mrb[0].mxu0
    %v1831 = vadd.f32 0.0, %v1830
    %v1832 = vpop.f32.mrb[0].mxu0
    %1833 = vmatprep.mubr.bf16.mxu0 0
    %1834 = vmatmul.mubr.bf16.gmra.mrb[0].mxu0 %v1627
    %v1835 = vpop.f32.mrb[0].mxu0
    %v1836 = vadd.f32 0.0, %v1835
    %v1837 = vpop.f32.mrb[0].mxu0
    %v1838 = vpop.f32.mrb[0].mxu0
    %v1839 = vadd.f32 0.0, %v1838
    %v1840 = vpop.f32.mrb[0].mxu0
    %1841 = vmatprep.mubr.bf16.mxu0 0
    %1842 = vmatmul.mubr.bf16.gmra.mrb[0].mxu0 %v1628
    %v1843 = vpop.f32.mrb[0].mxu0
    %v1844 = vadd.f32 0.0, %v1843
    %v1845 = vpop.f32.mrb[0].mxu0
    %v1846 = vpop.f32.mrb[0].mxu0
    %v1847 = vadd.f32 0.0, %v1846
    %v1848 = vpop.f32.mrb[0].mxu0
    %1849 = vmatprep.mubr.bf16.mxu0 0
    %1850 = vmatmul.mubr.bf16.gmra.mrb[0].mxu0 %v1629
    %v1851 = vpop.f32.mrb[0].mxu0
    %v1852 = vadd.f32 0.0, %v1851
    %v1853 = vpop.f32.mrb[0].mxu0
    %v1854 = vpop.f32.mrb[0].mxu0
    %v1855 = vadd.f32 0.0, %v1854
    %v1856 = vpop.f32.mrb[0].mxu0
    %1857 = vmatprep.mubr.bf16.mxu0 0
    %1858 = vmatmul.mubr.bf16.gmra.mrb[0].mxu0 %v1630
    %v1859 = vpop.f32.mrb[0].mxu0
    %v1860 = vadd.f32 0.0, %v1859
    %v1861 = vpop.f32.mrb[0].mxu0
    %v1862 = vpop.f32.mrb[0].mxu0
    %v1863 = vadd.f32 0.0, %v1862
    %v1864 = vpop.f32.mrb[0].mxu0
    %1865 = vmatprep.mubr.bf16.mxu0 0
    %1866 = vmatmul.mubr.bf16.gmra.mrb[0].mxu0 %v1631
    %v1867 = vpop.f32.mrb[0].mxu0
    %v1868 = vadd.f32 0.0, %v1867
    %v1869 = vpop.f32.mrb[0].mxu0
    %v1870 = vpop.f32.mrb[0].mxu0
    %v1871 = vadd.f32 0.0, %v1870
    %v1872 = vpop.f32.mrb[0].mxu0
    %1873 = vdwg.mxu0
    %v1874 = vtanh.pop %v1812
    %v1875 = vtanh.pop %v1815
    %v1876 = vtanh.pop %v1820
    %v1877 = vtanh.pop %v1823
    %v1878 = vtanh.pop %v1828
    %v1879 = vtanh.pop %v1831
    %v1880 = vtanh.pop %v1836
    %v1881 = vtanh.pop %v1839
    %v1882 = vtanh.pop %v1844
    %v1883 = vtanh.pop %v1847
    %v1884 = vtanh.pop %v1852
    %v1885 = vtanh.pop %v1855
    %v1886 = vtanh.pop %v1860
    %v1887 = vtanh.pop %v1863
    %v1888 = vtanh.pop %v1868
    %v1889 = vtanh.pop %v1871
    %v1890 = vpack.c.bf16 %v1747, %v1745
    %v1891 = vpack.c.bf16 %v1748, %v1746
    %v1892 = vpack.c.bf16 %v1751, %v1749
    %v1893 = vpack.c.bf16 %v1752, %v1750
    %v1894 = vpack.c.bf16 %v1755, %v1753
    %v1895 = vpack.c.bf16 %v1756, %v1754
    %v1896 = vpack.c.bf16 %v1759, %v1757
    %v1897 = vpack.c.bf16 %v1760, %v1758
    %v1898 = vpack.c.bf16 %v1763, %v1761
    %v1899 = vpack.c.bf16 %v1764, %v1762
    %v1900 = vpack.c.bf16 %v1767, %v1765
    %v1901 = vpack.c.bf16 %v1768, %v1766
    %v1902 = vpack.c.bf16 %v1771, %v1769
    %v1903 = vpack.c.bf16 %v1772, %v1770
    %v1904 = vpack.c.bf16 %v1775, %v1773
    %v1905 = vpack.c.bf16 %v1776, %v1774
    %v1906 = vpack.c.bf16 %v1875, %v1874
    %v1907 = vpack.c.bf16 %v1877, %v1876
    %v1908 = vpack.c.bf16 %v1879, %v1878
    %v1909 = vpack.c.bf16 %v1881, %v1880
    %v1910 = vpack.c.bf16 %v1883, %v1882
    %v1911 = vpack.c.bf16 %v1885, %v1884
    %v1912 = vpack.c.bf16 %v1887, %v1886
    %v1913 = vpack.c.bf16 %v1889, %v1888
    %v1914 = vld [vmem:[#allocation11] sm:$0xff]
    %v1915 = vld [vmem:[#allocation11 + $0x8] sm:$0xf]
    %v1916 = vld [vmem:[#allocation11 + $0xc] sm:$0xff]
    %v1917 = vld [vmem:[#allocation11 + $0x14] sm:$0xf]
    %v1918 = vld [vmem:[#allocation11 + $0x18] sm:$0xff]
    %v1919 = vld [vmem:[#allocation11 + $0x20] sm:$0xf]
    %v1920 = vld [vmem:[#allocation11 + $0x24] sm:$0xff]
    %v1921 = vld [vmem:[#allocation11 + $0x2c] sm:$0xf]
    %v1922 = vld [vmem:[#allocation11 + $0x30] sm:$0xff]
    %v1923 = vld [vmem:[#allocation11 + $0x38] sm:$0xf]
    %v1924 = vld [vmem:[#allocation11 + $0x3c] sm:$0xff]
    %v1925 = vld [vmem:[#allocation11 + $0x44] sm:$0xf]
    %v1926 = vld [vmem:[#allocation11 + $0x48] sm:$0xff]
    %v1927 = vld [vmem:[#allocation11 + $0x50] sm:$0xf]
    %v1928 = vld [vmem:[#allocation11 + $0x54] sm:$0xff]
    %v1929 = vld [vmem:[#allocation11 + $0x5c] sm:$0xf]
    %v1930 = vld [vmem:[#allocation11 + $0x60] sm:$0xff]
    %v1931 = vld [vmem:[#allocation11 + $0x68] sm:$0xf]
    %v1932 = vld [vmem:[#allocation11 + $0x6c] sm:$0xff]
    %v1933 = vld [vmem:[#allocation11 + $0x74] sm:$0xf]
    %v1934 = vld [vmem:[#allocation11 + $0x78] sm:$0xff]
    %v1935 = vld [vmem:[#allocation11 + $0x80] sm:$0xf]
    %v1936 = vld [vmem:[#allocation11 + $0x84] sm:$0xff]
    %v1937 = vld [vmem:[#allocation11 + $0x8c] sm:$0xf]
    %v1938 = vld [vmem:[#allocation11 + $0x90] sm:$0xff]
    %v1939 = vld [vmem:[#allocation11 + $0x98] sm:$0xf]
    %v1940 = vld [vmem:[#allocation11 + $0x9c] sm:$0xff]
    %v1941 = vld [vmem:[#allocation11 + $0xa4] sm:$0xf]
    %v1942 = vld [vmem:[#allocation11 + $0xa8] sm:$0xff]
    %v1943 = vld [vmem:[#allocation11 + $0xb0] sm:$0xf]
    %v1944 = vld [vmem:[#allocation11 + $0xb4] sm:$0xff]
    %v1945 = vld [vmem:[#allocation11 + $0xbc] sm:$0xf]
    %v1946 = vld [vmem:[#allocation11 + $0xc0] sm:$0xff]
    %v1947 = vld [vmem:[#allocation11 + $0xc8] sm:$0xf]
    %v1948 = vld [vmem:[#allocation11 + $0xcc] sm:$0xff]
    %v1949 = vld [vmem:[#allocation11 + $0xd4] sm:$0xf]
    %v1950 = vld [vmem:[#allocation11 + $0xd8] sm:$0xff]
    %v1951 = vld [vmem:[#allocation11 + $0xe0] sm:$0xf]
    %v1952 = vld [vmem:[#allocation11 + $0xe4] sm:$0xff]
    %v1953 = vld [vmem:[#allocation11 + $0xec] sm:$0xf]
    %v1954 = vld [vmem:[#allocation11 + $0xf0] sm:$0xff]
    %v1955 = vld [vmem:[#allocation11 + $0xf8] sm:$0xf]
    %v1956 = vld [vmem:[#allocation11 + $0xfc] sm:$0xff]
    %v1957 = vld [vmem:[#allocation11 + $0x104] sm:$0xf]
    %v1958 = vld [vmem:[#allocation11 + $0x108] sm:$0xff]
    %v1959 = vld [vmem:[#allocation11 + $0x110] sm:$0xf]
    %v1960 = vld [vmem:[#allocation11 + $0x114] sm:$0xff]
    %v1961 = vld [vmem:[#allocation11 + $0x11c] sm:$0xf]
    %v1962 = vld [vmem:[#allocation11 + $0x120] sm:$0xff]
    %v1963 = vld [vmem:[#allocation11 + $0x128] sm:$0xf]
    %v1964 = vld [vmem:[#allocation11 + $0x12c] sm:$0xff]
    %v1965 = vld [vmem:[#allocation11 + $0x134] sm:$0xf]
    %v1966 = vld [vmem:[#allocation11 + $0x138] sm:$0xff]
    %v1967 = vld [vmem:[#allocation11 + $0x140] sm:$0xf]
    %v1968 = vld [vmem:[#allocation11 + $0x144] sm:$0xff]
    %v1969 = vld [vmem:[#allocation11 + $0x14c] sm:$0xf]
    %v1970 = vld [vmem:[#allocation11 + $0x150] sm:$0xff]
    %v1971 = vld [vmem:[#allocation11 + $0x158] sm:$0xf]
    %v1972 = vld [vmem:[#allocation11 + $0x15c] sm:$0xff]
    %v1973 = vld [vmem:[#allocation11 + $0x164] sm:$0xf]
    %v1974 = vld [vmem:[#allocation11 + $0x168] sm:$0xff]
    %v1975 = vld [vmem:[#allocation11 + $0x170] sm:$0xf]
    %v1976 = vld [vmem:[#allocation11 + $0x174] sm:$0xff]
    %v1977 = vld [vmem:[#allocation11 + $0x17c] sm:$0xf]
    %v2042 = vunpack.c.l.b16 %v1914
    %v2043 = vunpack.c.h.b16 %v1914
    %v2044 = vunpack.c.l.b16 %v1915
    %v2045 = vunpack.c.l.b16 %v1916
    %v2046 = vunpack.c.h.b16 %v1916
    %v2047 = vunpack.c.l.b16 %v1917
    %v2048 = vunpack.c.l.b16 %v1918
    %v2049 = vunpack.c.h.b16 %v1918
    %v2050 = vunpack.c.l.b16 %v1919
    %v2051 = vunpack.c.l.b16 %v1920
    %v2052 = vunpack.c.h.b16 %v1920
    %v2053 = vunpack.c.l.b16 %v1921
    %v2054 = vunpack.c.l.b16 %v1922
    %v2055 = vunpack.c.h.b16 %v1922
    %v2056 = vunpack.c.l.b16 %v1923
    %v2057 = vunpack.c.l.b16 %v1924
    %v2058 = vunpack.c.h.b16 %v1924
    %v2059 = vunpack.c.l.b16 %v1925
    %v2060 = vunpack.c.l.b16 %v1926
    %v2061 = vunpack.c.h.b16 %v1926
    %v2062 = vunpack.c.l.b16 %v1927
    %v2063 = vunpack.c.l.b16 %v1928
    %v2064 = vunpack.c.h.b16 %v1928
    %v2065 = vunpack.c.l.b16 %v1929
    %v2066 = vunpack.c.l.b16 %v1930
    %v2067 = vunpack.c.h.b16 %v1930
    %v2068 = vunpack.c.l.b16 %v1931
    %v2069 = vunpack.c.l.b16 %v1932
    %v2070 = vunpack.c.h.b16 %v1932
    %v2071 = vunpack.c.l.b16 %v1933
    %v2072 = vunpack.c.l.b16 %v1934
    %v2073 = vunpack.c.h.b16 %v1934
    %v2074 = vunpack.c.l.b16 %v1935
    %v2075 = vunpack.c.l.b16 %v1936
    %v2076 = vunpack.c.h.b16 %v1936
    %v2077 = vunpack.c.l.b16 %v1937
    %v2078 = vunpack.c.l.b16 %v1938
    %v2079 = vunpack.c.h.b16 %v1938
    %v2080 = vunpack.c.l.b16 %v1939
    %v2081 = vunpack.c.l.b16 %v1940
    %v2082 = vunpack.c.h.b16 %v1940
    %v2083 = vunpack.c.l.b16 %v1941
    %v2084 = vunpack.c.l.b16 %v1942
    %v2085 = vunpack.c.h.b16 %v1942
    %v2086 = vunpack.c.l.b16 %v1943
    %v2087 = vunpack.c.l.b16 %v1944
    %v2088 = vunpack.c.h.b16 %v1944
    %v2089 = vunpack.c.l.b16 %v1945
    %v2090 = vunpack.c.l.b16 %v1946
    %v2091 = vunpack.c.h.b16 %v1946
    %v2092 = vunpack.c.l.b16 %v1947
    %v2093 = vunpack.c.l.b16 %v1948
    %v2094 = vunpack.c.h.b16 %v1948
    %v2095 = vunpack.c.l.b16 %v1949
    %v2096 = vunpack.c.l.b16 %v1950
    %v2097 = vunpack.c.h.b16 %v1950
    %v2098 = vunpack.c.l.b16 %v1951
    %v2099 = vunpack.c.l.b16 %v1952
    %v2100 = vunpack.c.h.b16 %v1952
    %v2101 = vunpack.c.l.b16 %v1953
    %v2102 = vunpack.c.l.b16 %v1954
    %v2103 = vunpack.c.h.b16 %v1954
    %v2104 = vunpack.c.l.b16 %v1955
    %v2105 = vunpack.c.l.b16 %v1956
    %v2106 = vunpack.c.h.b16 %v1956
    %v2107 = vunpack.c.l.b16 %v1957
    %v2108 = vunpack.c.l.b16 %v1958
    %v2109 = vunpack.c.h.b16 %v1958
    %v2110 = vunpack.c.l.b16 %v1959
    %v2111 = vunpack.c.l.b16 %v1960
    %v2112 = vunpack.c.h.b16 %v1960
    %v2113 = vunpack.c.l.b16 %v1961
    %v2114 = vunpack.c.l.b16 %v1962
    %v2115 = vunpack.c.h.b16 %v1962
    %v2116 = vunpack.c.l.b16 %v1963
    %v2117 = vunpack.c.l.b16 %v1964
    %v2118 = vunpack.c.h.b16 %v1964
    %v2119 = vunpack.c.l.b16 %v1965
    %v2120 = vunpack.c.l.b16 %v1966
    %v2121 = vunpack.c.h.b16 %v1966
    %v2122 = vunpack.c.l.b16 %v1967
    %v2123 = vunpack.c.l.b16 %v1968
    %v2124 = vunpack.c.h.b16 %v1968
    %v2125 = vunpack.c.l.b16 %v1969
    %v2126 = vunpack.c.l.b16 %v1970
    %v2127 = vunpack.c.h.b16 %v1970
    %v2128 = vunpack.c.l.b16 %v1971
    %v2129 = vunpack.c.l.b16 %v1972
    %v2130 = vunpack.c.h.b16 %v1972
    %v2131 = vunpack.c.l.b16 %v1973
    %v2132 = vunpack.c.l.b16 %v1974
    %v2133 = vunpack.c.h.b16 %v1974
    %v2134 = vunpack.c.l.b16 %v1975
    %v2135 = vunpack.c.l.b16 %v1976
    %v2136 = vunpack.c.h.b16 %v1976
    %v2137 = vunpack.c.l.b16 %v1977
    %v2138 = vpack.c.b16 %v2045, %v2042
    %v2139 = vpack.c.b16 %v2046, %v2043
    %v2140 = vpack.c.b16 %v2047, %v2044
    %v2141 = vpack.c.b16 %v2051, %v2048
    %v2142 = vpack.c.b16 %v2052, %v2049
    %v2143 = vpack.c.b16 %v2053, %v2050
    %v2144 = vpack.c.b16 %v2057, %v2054
    %v2145 = vpack.c.b16 %v2058, %v2055
    %v2146 = vpack.c.b16 %v2059, %v2056
    %v2147 = vpack.c.b16 %v2063, %v2060
    %v2148 = vpack.c.b16 %v2064, %v2061
    %v2149 = vpack.c.b16 %v2065, %v2062
    %v2150 = vpack.c.b16 %v2069, %v2066
    %v2151 = vpack.c.b16 %v2070, %v2067
    %v2152 = vpack.c.b16 %v2071, %v2068
    %v2153 = vpack.c.b16 %v2075, %v2072
    %v2154 = vpack.c.b16 %v2076, %v2073
    %v2155 = vpack.c.b16 %v2077, %v2074
    %v2156 = vpack.c.b16 %v2081, %v2078
    %v2157 = vpack.c.b16 %v2082, %v2079
    %v2158 = vpack.c.b16 %v2083, %v2080
    %v2159 = vpack.c.b16 %v2087, %v2084
    %v2160 = vpack.c.b16 %v2088, %v2085
    %v2161 = vpack.c.b16 %v2089, %v2086
    %v2162 = vpack.c.b16 %v2093, %v2090
    %v2163 = vpack.c.b16 %v2094, %v2091
    %v2164 = vpack.c.b16 %v2095, %v2092
    %v2165 = vpack.c.b16 %v2099, %v2096
    %v2166 = vpack.c.b16 %v2100, %v2097
    %v2167 = vpack.c.b16 %v2101, %v2098
    %v2168 = vpack.c.b16 %v2105, %v2102
    %v2169 = vpack.c.b16 %v2106, %v2103
    %v2170 = vpack.c.b16 %v2107, %v2104
    %v2171 = vpack.c.b16 %v2111, %v2108
    %v2172 = vpack.c.b16 %v2112, %v2109
    %v2173 = vpack.c.b16 %v2113, %v2110
    %v2174 = vpack.c.b16 %v2117, %v2114
    %v2175 = vpack.c.b16 %v2118, %v2115
    %v2176 = vpack.c.b16 %v2119, %v2116
    %v2177 = vpack.c.b16 %v2123, %v2120
    %v2178 = vpack.c.b16 %v2124, %v2121
    %v2179 = vpack.c.b16 %v2125, %v2122
    %v2180 = vpack.c.b16 %v2129, %v2126
    %v2181 = vpack.c.b16 %v2130, %v2127
    %v2182 = vpack.c.b16 %v2131, %v2128
    %v2183 = vpack.c.b16 %v2135, %v2132
    %v2184 = vpack.c.b16 %v2136, %v2133
    %v2185 = vpack.c.b16 %v2137, %v2134
    %2234 = vmatprep.subr.bf16.mxu0 %v2139
    %2235 = vmatpush1.bf16.msra.mxu0 %v2138
    %2236 = vmatprep.subr.bf16.mxu0 %v2142
    %2237 = vmatpush1.bf16.msra.mxu0 %v2141
    %2238 = vmatprep.subr.bf16.mxu0 %v2145
    %2239 = vmatpush1.bf16.msra.mxu0 %v2144
    %2240 = vmatprep.subr.bf16.mxu0 %v2148
    %2241 = vmatpush1.bf16.msra.mxu0 %v2147
    %2242 = vmatprep.subr.bf16.mxu0 %v2151
    %2243 = vmatpush1.bf16.msra.mxu0 %v2150
    %2244 = vmatprep.subr.bf16.mxu0 %v2154
    %2245 = vmatpush1.bf16.msra.mxu0 %v2153
    %2246 = vmatprep.subr.bf16.mxu0 %v2157
    %2247 = vmatpush1.bf16.msra.mxu0 %v2156
    %2248 = vmatprep.subr.bf16.mxu0 %v2160
    %2249 = vmatpush1.bf16.msra.mxu0 %v2159
    %2250 = vmatprep.subr.bf16.mxu0 %v2163
    %2251 = vmatpush1.bf16.msra.mxu0 %v2162
    %2252 = vmatprep.subr.bf16.mxu0 %v2166
    %2253 = vmatpush1.bf16.msra.mxu0 %v2165
    %2254 = vmatprep.subr.bf16.mxu0 %v2169
    %2255 = vmatpush1.bf16.msra.mxu0 %v2168
    %2256 = vmatprep.subr.bf16.mxu0 %v2172
    %2257 = vmatpush1.bf16.msra.mxu0 %v2171
    %2258 = vmatprep.subr.bf16.mxu0 %v2175
    %2259 = vmatpush1.bf16.msra.mxu0 %v2174
    %2260 = vmatprep.subr.bf16.mxu0 %v2178
    %2261 = vmatpush1.bf16.msra.mxu0 %v2177
    %2262 = vmatprep.subr.bf16.mxu0 %v2181
    %2263 = vmatpush1.bf16.msra.mxu0 %v2180
    %2264 = vmatprep.subr.bf16.mxu0 %v2184
    %2265 = vmatpush1.bf16.msra.mxu0 %v2183
    %2266 = vmatprep.mubr.bf16.mxu0 %v1891
    %2267 = vmatmul.mubr.bf16.gmra.mrb[0].mxu0 %v1890
    %v2268 = vpop.f32.mrb[0].mxu0
    %v2269 = vadd.f32 0.0, %v2268
    %v2270 = vpop.f32.mrb[0].mxu0
    %v2271 = vadd.f32 0.0, %v2270
    %v2272 = vpop.f32.mrb[0].mxu0
    %v2273 = vadd.f32 0.0, %v2272
    %v2274 = vpop.f32.mrb[0].mxu0
    %v2275 = vadd.f32 0.0, %v2274
    %2276 = vmatprep.mubr.bf16.mxu0 %v1893
    %2277 = vmatmul.mubr.bf16.gmra.mrb[0].mxu0 %v1892
    %v2278 = vpop.f32.mrb[0].mxu0
    %v2279 = vadd.f32 0.0, %v2278
    %v2280 = vpop.f32.mrb[0].mxu0
    %v2281 = vadd.f32 0.0, %v2280
    %v2282 = vpop.f32.mrb[0].mxu0
    %v2283 = vadd.f32 0.0, %v2282
    %v2284 = vpop.f32.mrb[0].mxu0
    %v2285 = vadd.f32 0.0, %v2284
    %2286 = vmatprep.mubr.bf16.mxu0 %v1895
    %2287 = vmatmul.mubr.bf16.gmra.mrb[0].mxu0 %v1894
    %v2288 = vpop.f32.mrb[0].mxu0
    %v2289 = vadd.f32 0.0, %v2288
    %v2290 = vpop.f32.mrb[0].mxu0
    %v2291 = vadd.f32 0.0, %v2290
    %v2292 = vpop.f32.mrb[0].mxu0
    %v2293 = vadd.f32 0.0, %v2292
    %v2294 = vpop.f32.mrb[0].mxu0
    %v2295 = vadd.f32 0.0, %v2294
    %2296 = vmatprep.mubr.bf16.mxu0 %v1897
    %2297 = vmatmul.mubr.bf16.gmra.mrb[0].mxu0 %v1896
    %v2298 = vpop.f32.mrb[0].mxu0
    %v2299 = vadd.f32 0.0, %v2298
    %v2300 = vpop.f32.mrb[0].mxu0
    %v2301 = vadd.f32 0.0, %v2300
    %v2302 = vpop.f32.mrb[0].mxu0
    %v2303 = vadd.f32 0.0, %v2302
    %v2304 = vpop.f32.mrb[0].mxu0
    %v2305 = vadd.f32 0.0, %v2304
    %2306 = vmatprep.mubr.bf16.mxu0 %v1899
    %2307 = vmatmul.mubr.bf16.gmra.mrb[0].mxu0 %v1898
    %v2308 = vpop.f32.mrb[0].mxu0
    %v2309 = vadd.f32 0.0, %v2308
    %v2310 = vpop.f32.mrb[0].mxu0
    %v2311 = vadd.f32 0.0, %v2310
    %v2312 = vpop.f32.mrb[0].mxu0
    %v2313 = vadd.f32 0.0, %v2312
    %v2314 = vpop.f32.mrb[0].mxu0
    %v2315 = vadd.f32 0.0, %v2314
    %2316 = vmatprep.mubr.bf16.mxu0 %v1901
    %2317 = vmatmul.mubr.bf16.gmra.mrb[0].mxu0 %v1900
    %v2318 = vpop.f32.mrb[0].mxu0
    %v2319 = vadd.f32 0.0, %v2318
    %v2320 = vpop.f32.mrb[0].mxu0
    %v2321 = vadd.f32 0.0, %v2320
    %v2322 = vpop.f32.mrb[0].mxu0
    %v2323 = vadd.f32 0.0, %v2322
    %v2324 = vpop.f32.mrb[0].mxu0
    %v2325 = vadd.f32 0.0, %v2324
    %2326 = vmatprep.mubr.bf16.mxu0 %v1903
    %2327 = vmatmul.mubr.bf16.gmra.mrb[0].mxu0 %v1902
    %v2328 = vpop.f32.mrb[0].mxu0
    %v2329 = vadd.f32 0.0, %v2328
    %v2330 = vpop.f32.mrb[0].mxu0
    %v2331 = vadd.f32 0.0, %v2330
    %v2332 = vpop.f32.mrb[0].mxu0
    %v2333 = vadd.f32 0.0, %v2332
    %v2334 = vpop.f32.mrb[0].mxu0
    %v2335 = vadd.f32 0.0, %v2334
    %2336 = vmatprep.mubr.bf16.mxu0 %v1905
    %2337 = vmatmul.mubr.bf16.gmra.mrb[0].mxu0 %v1904
    %v2338 = vpop.f32.mrb[0].mxu0
    %v2339 = vadd.f32 0.0, %v2338
    %v2340 = vpop.f32.mrb[0].mxu0
    %v2341 = vadd.f32 0.0, %v2340
    %v2342 = vpop.f32.mrb[0].mxu0
    %v2343 = vadd.f32 0.0, %v2342
    %v2344 = vpop.f32.mrb[0].mxu0
    %v2345 = vadd.f32 0.0, %v2344
    %2346 = vdwg.mxu0
    %2347 = vmatprep.subr.bf16.mxu0 0
    %2348 = vmatpush1.bf16.msra.mxu0 %v2140
    %2349 = vmatprep.subr.bf16.mxu0 0
    %2350 = vmatpush1.bf16.msra.mxu0 %v2143
    %2351 = vmatprep.subr.bf16.mxu0 0
    %2352 = vmatpush1.bf16.msra.mxu0 %v2146
    %2353 = vmatprep.subr.bf16.mxu0 0
    %2354 = vmatpush1.bf16.msra.mxu0 %v2149
    %2355 = vmatprep.subr.bf16.mxu0 0
    %2356 = vmatpush1.bf16.msra.mxu0 %v2152
    %2357 = vmatprep.subr.bf16.mxu0 0
    %2358 = vmatpush1.bf16.msra.mxu0 %v2155
    %2359 = vmatprep.subr.bf16.mxu0 0
    %2360 = vmatpush1.bf16.msra.mxu0 %v2158
    %2361 = vmatprep.subr.bf16.mxu0 0
    %2362 = vmatpush1.bf16.msra.mxu0 %v2161
    %2363 = vmatprep.subr.bf16.mxu0 0
    %2364 = vmatpush1.bf16.msra.mxu0 %v2164
    %2365 = vmatprep.subr.bf16.mxu0 0
    %2366 = vmatpush1.bf16.msra.mxu0 %v2167
    %2367 = vmatprep.subr.bf16.mxu0 0
    %2368 = vmatpush1.bf16.msra.mxu0 %v2170
    %2369 = vmatprep.subr.bf16.mxu0 0
    %2370 = vmatpush1.bf16.msra.mxu0 %v2173
    %2371 = vmatprep.subr.bf16.mxu0 0
    %2372 = vmatpush1.bf16.msra.mxu0 %v2176
    %2373 = vmatprep.subr.bf16.mxu0 0
    %2374 = vmatpush1.bf16.msra.mxu0 %v2179
    %2375 = vmatprep.subr.bf16.mxu0 0
    %2376 = vmatpush1.bf16.msra.mxu0 %v2182
    %2377 = vmatprep.subr.bf16.mxu0 0
    %2378 = vmatpush1.bf16.msra.mxu0 %v2185
    %2379 = vmatprep.mubr.bf16.mxu0 %v1891
    %2380 = vmatmul.mubr.bf16.gmra.mrb[0].mxu0 %v1890
    %v2381 = vpop.f32.mrb[0].mxu0
    %v2382 = vadd.f32 0.0, %v2381
    %v2383 = vpop.f32.mrb[0].mxu0
    %v2384 = vpop.f32.mrb[0].mxu0
    %v2385 = vadd.f32 0.0, %v2384
    %v2386 = vpop.f32.mrb[0].mxu0
    %2387 = vmatprep.mubr.bf16.mxu0 %v1893
    %2388 = vmatmul.mubr.bf16.gmra.mrb[0].mxu0 %v1892
    %v2389 = vpop.f32.mrb[0].mxu0
    %v2390 = vadd.f32 0.0, %v2389
    %v2391 = vpop.f32.mrb[0].mxu0
    %v2392 = vpop.f32.mrb[0].mxu0
    %v2393 = vadd.f32 0.0, %v2392
    %v2394 = vpop.f32.mrb[0].mxu0
    %2395 = vmatprep.mubr.bf16.mxu0 %v1895
    %2396 = vmatmul.mubr.bf16.gmra.mrb[0].mxu0 %v1894
    %v2397 = vpop.f32.mrb[0].mxu0
    %v2398 = vadd.f32 0.0, %v2397
    %v2399 = vpop.f32.mrb[0].mxu0
    %v2400 = vpop.f32.mrb[0].mxu0
    %v2401 = vadd.f32 0.0, %v2400
    %v2402 = vpop.f32.mrb[0].mxu0
    %2403 = vmatprep.mubr.bf16.mxu0 %v1897
    %2404 = vmatmul.mubr.bf16.gmra.mrb[0].mxu0 %v1896
    %v2405 = vpop.f32.mrb[0].mxu0
    %v2406 = vadd.f32 0.0, %v2405
    %v2407 = vpop.f32.mrb[0].mxu0
    %v2408 = vpop.f32.mrb[0].mxu0
    %v2409 = vadd.f32 0.0, %v2408
    %v2410 = vpop.f32.mrb[0].mxu0
    %2411 = vmatprep.mubr.bf16.mxu0 %v1899
    %2412 = vmatmul.mubr.bf16.gmra.mrb[0].mxu0 %v1898
    %v2413 = vpop.f32.mrb[0].mxu0
    %v2414 = vadd.f32 0.0, %v2413
    %v2415 = vpop.f32.mrb[0].mxu0
    %v2416 = vpop.f32.mrb[0].mxu0
    %v2417 = vadd.f32 0.0, %v2416
    %v2418 = vpop.f32.mrb[0].mxu0
    %2419 = vmatprep.mubr.bf16.mxu0 %v1901
    %2420 = vmatmul.mubr.bf16.gmra.mrb[0].mxu0 %v1900
    %v2421 = vpop.f32.mrb[0].mxu0
    %v2422 = vadd.f32 0.0, %v2421
    %v2423 = vpop.f32.mrb[0].mxu0
    %v2424 = vpop.f32.mrb[0].mxu0
    %v2425 = vadd.f32 0.0, %v2424
    %v2426 = vpop.f32.mrb[0].mxu0
    %2427 = vmatprep.mubr.bf16.mxu0 %v1903
    %2428 = vmatmul.mubr.bf16.gmra.mrb[0].mxu0 %v1902
    %v2429 = vpop.f32.mrb[0].mxu0
    %v2430 = vadd.f32 0.0, %v2429
    %v2431 = vpop.f32.mrb[0].mxu0
    %v2432 = vpop.f32.mrb[0].mxu0
    %v2433 = vadd.f32 0.0, %v2432
    %v2434 = vpop.f32.mrb[0].mxu0
    %2435 = vmatprep.mubr.bf16.mxu0 %v1905
    %2436 = vmatmul.mubr.bf16.gmra.mrb[0].mxu0 %v1904
    %v2437 = vpop.f32.mrb[0].mxu0
    %v2438 = vadd.f32 0.0, %v2437
    %v2439 = vpop.f32.mrb[0].mxu0
    %v2440 = vpop.f32.mrb[0].mxu0
    %v2441 = vadd.f32 0.0, %v2440
    %v2442 = vpop.f32.mrb[0].mxu0
    %2443 = vdwg.mxu0
    %v2444 = vld [vmem:[#allocation13] sm:$0xff]
    %v2445 = vld [vmem:[#allocation13 + $0x8] sm:$0xff]
    %v2446 = vld [vmem:[#allocation13 + $0x10] sm:$0xff]
    %v2447 = vld [vmem:[#allocation13 + $0x18] sm:$0xff]
    %v2448 = vld [vmem:[#allocation13 + $0x20] sm:$0xff]
    %v2449 = vld [vmem:[#allocation13 + $0x28] sm:$0xff]
    %v2450 = vld [vmem:[#allocation13 + $0x30] sm:$0xff]
    %v2451 = vld [vmem:[#allocation13 + $0x38] sm:$0xff]
    %v2452 = vld [vmem:[#allocation13 + $0x40] sm:$0xff]
    %v2453 = vld [vmem:[#allocation13 + $0x48] sm:$0xff]
    %v2454 = vld [vmem:[#allocation13 + $0x50] sm:$0xff]
    %v2455 = vld [vmem:[#allocation13 + $0x58] sm:$0xff]
    %v2456 = vld [vmem:[#allocation13 + $0x60] sm:$0xff]
    %v2457 = vld [vmem:[#allocation13 + $0x68] sm:$0xff]
    %v2458 = vld [vmem:[#allocation13 + $0x70] sm:$0xff]
    %v2459 = vld [vmem:[#allocation13 + $0x78] sm:$0xff]
    %v2460 = vld [vmem:[#allocation13 + $0x80] sm:$0xff]
    %v2461 = vld [vmem:[#allocation13 + $0x88] sm:$0xff]
    %v2462 = vld [vmem:[#allocation13 + $0x90] sm:$0xff]
    %v2463 = vld [vmem:[#allocation13 + $0x98] sm:$0xff]
    %v2464 = vld [vmem:[#allocation13 + $0xa0] sm:$0xff]
    %v2465 = vld [vmem:[#allocation13 + $0xa8] sm:$0xff]
    %v2466 = vld [vmem:[#allocation13 + $0xb0] sm:$0xff]
    %v2467 = vld [vmem:[#allocation13 + $0xb8] sm:$0xff]
    %v2468 = vld [vmem:[#allocation13 + $0xc0] sm:$0xff]
    %v2469 = vld [vmem:[#allocation13 + $0xc8] sm:$0xff]
    %v2470 = vld [vmem:[#allocation13 + $0xd0] sm:$0xff]
    %v2471 = vld [vmem:[#allocation13 + $0xd8] sm:$0xff]
    %v2472 = vld [vmem:[#allocation13 + $0xe0] sm:$0xff]
    %v2473 = vld [vmem:[#allocation13 + $0xe8] sm:$0xff]
    %v2474 = vld [vmem:[#allocation13 + $0xf0] sm:$0xff]
    %v2475 = vld [vmem:[#allocation13 + $0xf8] sm:$0xff]
    %v2508 = vunpack.c.l.b16 %v2444
    %v2509 = vunpack.c.h.b16 %v2444
    %v2510 = vunpack.c.l.b16 %v2445
    %v2511 = vunpack.c.h.b16 %v2445
    %v2512 = vunpack.c.l.b16 %v2446
    %v2513 = vunpack.c.h.b16 %v2446
    %v2514 = vunpack.c.l.b16 %v2447
    %v2515 = vunpack.c.h.b16 %v2447
    %v2516 = vunpack.c.l.b16 %v2448
    %v2517 = vunpack.c.h.b16 %v2448
    %v2518 = vunpack.c.l.b16 %v2449
    %v2519 = vunpack.c.h.b16 %v2449
    %v2520 = vunpack.c.l.b16 %v2450
    %v2521 = vunpack.c.h.b16 %v2450
    %v2522 = vunpack.c.l.b16 %v2451
    %v2523 = vunpack.c.h.b16 %v2451
    %v2524 = vunpack.c.l.b16 %v2452
    %v2525 = vunpack.c.h.b16 %v2452
    %v2526 = vunpack.c.l.b16 %v2453
    %v2527 = vunpack.c.h.b16 %v2453
    %v2528 = vunpack.c.l.b16 %v2454
    %v2529 = vunpack.c.h.b16 %v2454
    %v2530 = vunpack.c.l.b16 %v2455
    %v2531 = vunpack.c.h.b16 %v2455
    %v2532 = vunpack.c.l.b16 %v2456
    %v2533 = vunpack.c.h.b16 %v2456
    %v2534 = vunpack.c.l.b16 %v2457
    %v2535 = vunpack.c.h.b16 %v2457
    %v2536 = vunpack.c.l.b16 %v2458
    %v2537 = vunpack.c.h.b16 %v2458
    %v2538 = vunpack.c.l.b16 %v2459
    %v2539 = vunpack.c.h.b16 %v2459
    %v2540 = vunpack.c.l.b16 %v2460
    %v2541 = vunpack.c.h.b16 %v2460
    %v2542 = vunpack.c.l.b16 %v2461
    %v2543 = vunpack.c.h.b16 %v2461
    %v2544 = vunpack.c.l.b16 %v2462
    %v2545 = vunpack.c.h.b16 %v2462
    %v2546 = vunpack.c.l.b16 %v2463
    %v2547 = vunpack.c.h.b16 %v2463
    %v2548 = vunpack.c.l.b16 %v2464
    %v2549 = vunpack.c.h.b16 %v2464
    %v2550 = vunpack.c.l.b16 %v2465
    %v2551 = vunpack.c.h.b16 %v2465
    %v2552 = vunpack.c.l.b16 %v2466
    %v2553 = vunpack.c.h.b16 %v2466
    %v2554 = vunpack.c.l.b16 %v2467
    %v2555 = vunpack.c.h.b16 %v2467
    %v2556 = vunpack.c.l.b16 %v2468
    %v2557 = vunpack.c.h.b16 %v2468
    %v2558 = vunpack.c.l.b16 %v2469
    %v2559 = vunpack.c.h.b16 %v2469
    %v2560 = vunpack.c.l.b16 %v2470
    %v2561 = vunpack.c.h.b16 %v2470
    %v2562 = vunpack.c.l.b16 %v2471
    %v2563 = vunpack.c.h.b16 %v2471
    %v2564 = vunpack.c.l.b16 %v2472
    %v2565 = vunpack.c.h.b16 %v2472
    %v2566 = vunpack.c.l.b16 %v2473
    %v2567 = vunpack.c.h.b16 %v2473
    %v2568 = vunpack.c.l.b16 %v2474
    %v2569 = vunpack.c.h.b16 %v2474
    %v2570 = vunpack.c.l.b16 %v2475
    %v2571 = vunpack.c.h.b16 %v2475
    %v2572 = vpack.c.b16 %v2512, %v2508
    %v2573 = vpack.c.b16 %v2513, %v2509
    %v2574 = vpack.c.b16 %v2514, %v2510
    %v2575 = vpack.c.b16 %v2515, %v2511
    %v2576 = vpack.c.b16 %v2520, %v2516
    %v2577 = vpack.c.b16 %v2521, %v2517
    %v2578 = vpack.c.b16 %v2522, %v2518
    %v2579 = vpack.c.b16 %v2523, %v2519
    %v2580 = vpack.c.b16 %v2528, %v2524
    %v2581 = vpack.c.b16 %v2529, %v2525
    %v2582 = vpack.c.b16 %v2530, %v2526
    %v2583 = vpack.c.b16 %v2531, %v2527
    %v2584 = vpack.c.b16 %v2536, %v2532
    %v2585 = vpack.c.b16 %v2537, %v2533
    %v2586 = vpack.c.b16 %v2538, %v2534
    %v2587 = vpack.c.b16 %v2539, %v2535
    %v2588 = vpack.c.b16 %v2544, %v2540
    %v2589 = vpack.c.b16 %v2545, %v2541
    %v2590 = vpack.c.b16 %v2546, %v2542
    %v2591 = vpack.c.b16 %v2547, %v2543
    %v2592 = vpack.c.b16 %v2552, %v2548
    %v2593 = vpack.c.b16 %v2553, %v2549
    %v2594 = vpack.c.b16 %v2554, %v2550
    %v2595 = vpack.c.b16 %v2555, %v2551
    %v2596 = vpack.c.b16 %v2560, %v2556
    %v2597 = vpack.c.b16 %v2561, %v2557
    %v2598 = vpack.c.b16 %v2562, %v2558
    %v2599 = vpack.c.b16 %v2563, %v2559
    %v2600 = vpack.c.b16 %v2568, %v2564
    %v2601 = vpack.c.b16 %v2569, %v2565
    %v2602 = vpack.c.b16 %v2570, %v2566
    %v2603 = vpack.c.b16 %v2571, %v2567
    %2636 = vmatprep.subr.bf16.mxu0 %v2573
    %2637 = vmatpush1.bf16.msra.mxu0 %v2572
    %2638 = vmatprep.subr.bf16.mxu0 %v2577
    %2639 = vmatpush1.bf16.msra.mxu0 %v2576
    %2640 = vmatprep.subr.bf16.mxu0 %v2581
    %2641 = vmatpush1.bf16.msra.mxu0 %v2580
    %2642 = vmatprep.subr.bf16.mxu0 %v2585
    %2643 = vmatpush1.bf16.msra.mxu0 %v2584
    %2644 = vmatprep.subr.bf16.mxu0 %v2589
    %2645 = vmatpush1.bf16.msra.mxu0 %v2588
    %2646 = vmatprep.subr.bf16.mxu0 %v2593
    %2647 = vmatpush1.bf16.msra.mxu0 %v2592
    %2648 = vmatprep.subr.bf16.mxu0 %v2597
    %2649 = vmatpush1.bf16.msra.mxu0 %v2596
    %2650 = vmatprep.subr.bf16.mxu0 %v2601
    %2651 = vmatpush1.bf16.msra.mxu0 %v2600
    %2652 = vmatprep.subr.bf16.mxu0 0
    %2653 = vmatpush1.bf16.msra.mxu0 0
    %2654 = vmatprep.subr.bf16.mxu0 0
    %2655 = vmatpush1.bf16.msra.mxu0 0
    %2656 = vmatprep.subr.bf16.mxu0 0
    %2657 = vmatpush1.bf16.msra.mxu0 0
    %2658 = vmatprep.subr.bf16.mxu0 0
    %2659 = vmatpush1.bf16.msra.mxu0 0
    %2660 = vmatprep.subr.bf16.mxu0 0
    %2661 = vmatpush1.bf16.msra.mxu0 0
    %2662 = vmatprep.subr.bf16.mxu0 0
    %2663 = vmatpush1.bf16.msra.mxu0 0
    %2664 = vmatprep.subr.bf16.mxu0 0
    %2665 = vmatpush1.bf16.msra.mxu0 0
    %2666 = vmatprep.subr.bf16.mxu0 0
    %2667 = vmatpush1.bf16.msra.mxu0 0
    %2668 = vmatprep.mubr.bf16.mxu0 0
    %2669 = vmatmul.mubr.bf16.gmra.mrb[0].mxu0 %v1906
    %v2670 = vpop.f32.mrb[0].mxu0
    %v2671 = vadd.f32 0.0, %v2670
    %v2672 = vpop.f32.mrb[0].mxu0
    %v2673 = vadd.f32 0.0, %v2672
    %v2674 = vpop.f32.mrb[0].mxu0
    %v2675 = vadd.f32 0.0, %v2674
    %v2676 = vpop.f32.mrb[0].mxu0
    %v2677 = vadd.f32 0.0, %v2676
    %2678 = vmatprep.mubr.bf16.mxu0 0
    %2679 = vmatmul.mubr.bf16.gmra.mrb[0].mxu0 %v1907
    %v2680 = vpop.f32.mrb[0].mxu0
    %v2681 = vadd.f32 0.0, %v2680
    %v2682 = vpop.f32.mrb[0].mxu0
    %v2683 = vadd.f32 0.0, %v2682
    %v2684 = vpop.f32.mrb[0].mxu0
    %v2685 = vadd.f32 0.0, %v2684
    %v2686 = vpop.f32.mrb[0].mxu0
    %v2687 = vadd.f32 0.0, %v2686
    %2688 = vmatprep.mubr.bf16.mxu0 0
    %2689 = vmatmul.mubr.bf16.gmra.mrb[0].mxu0 %v1908
    %v2690 = vpop.f32.mrb[0].mxu0
    %v2691 = vadd.f32 0.0, %v2690
    %v2692 = vpop.f32.mrb[0].mxu0
    %v2693 = vadd.f32 0.0, %v2692
    %v2694 = vpop.f32.mrb[0].mxu0
    %v2695 = vadd.f32 0.0, %v2694
    %v2696 = vpop.f32.mrb[0].mxu0
    %v2697 = vadd.f32 0.0, %v2696
    %2698 = vmatprep.mubr.bf16.mxu0 0
    %2699 = vmatmul.mubr.bf16.gmra.mrb[0].mxu0 %v1909
    %v2700 = vpop.f32.mrb[0].mxu0
    %v2701 = vadd.f32 0.0, %v2700
    %v2702 = vpop.f32.mrb[0].mxu0
    %v2703 = vadd.f32 0.0, %v2702
    %v2704 = vpop.f32.mrb[0].mxu0
    %v2705 = vadd.f32 0.0, %v2704
    %v2706 = vpop.f32.mrb[0].mxu0
    %v2707 = vadd.f32 0.0, %v2706
    %2708 = vmatprep.mubr.bf16.mxu0 0
    %2709 = vmatmul.mubr.bf16.gmra.mrb[0].mxu0 %v1910
    %v2710 = vpop.f32.mrb[0].mxu0
    %v2711 = vadd.f32 0.0, %v2710
    %v2712 = vpop.f32.mrb[0].mxu0
    %v2713 = vadd.f32 0.0, %v2712
    %v2714 = vpop.f32.mrb[0].mxu0
    %v2715 = vadd.f32 0.0, %v2714
    %v2716 = vpop.f32.mrb[0].mxu0
    %v2717 = vadd.f32 0.0, %v2716
    %2718 = vmatprep.mubr.bf16.mxu0 0
    %2719 = vmatmul.mubr.bf16.gmra.mrb[0].mxu0 %v1911
    %v2720 = vpop.f32.mrb[0].mxu0
    %v2721 = vadd.f32 0.0, %v2720
    %v2722 = vpop.f32.mrb[0].mxu0
    %v2723 = vadd.f32 0.0, %v2722
    %v2724 = vpop.f32.mrb[0].mxu0
    %v2725 = vadd.f32 0.0, %v2724
    %v2726 = vpop.f32.mrb[0].mxu0
    %v2727 = vadd.f32 0.0, %v2726
    %2728 = vmatprep.mubr.bf16.mxu0 0
    %2729 = vmatmul.mubr.bf16.gmra.mrb[0].mxu0 %v1912
    %v2730 = vpop.f32.mrb[0].mxu0
    %v2731 = vadd.f32 0.0, %v2730
    %v2732 = vpop.f32.mrb[0].mxu0
    %v2733 = vadd.f32 0.0, %v2732
    %v2734 = vpop.f32.mrb[0].mxu0
    %v2735 = vadd.f32 0.0, %v2734
    %v2736 = vpop.f32.mrb[0].mxu0
    %v2737 = vadd.f32 0.0, %v2736
    %2738 = vmatprep.mubr.bf16.mxu0 0
    %2739 = vmatmul.mubr.bf16.gmra.mrb[0].mxu0 %v1913
    %v2740 = vpop.f32.mrb[0].mxu0
    %v2741 = vadd.f32 0.0, %v2740
    %v2742 = vpop.f32.mrb[0].mxu0
    %v2743 = vadd.f32 0.0, %v2742
    %v2744 = vpop.f32.mrb[0].mxu0
    %v2745 = vadd.f32 0.0, %v2744
    %v2746 = vpop.f32.mrb[0].mxu0
    %v2747 = vadd.f32 0.0, %v2746
    %2748 = vdwg.mxu0
    %2749 = vmatprep.subr.bf16.mxu0 %v2575
    %2750 = vmatpush1.bf16.msra.mxu0 %v2574
    %2751 = vmatprep.subr.bf16.mxu0 %v2579
    %2752 = vmatpush1.bf16.msra.mxu0 %v2578
    %2753 = vmatprep.subr.bf16.mxu0 %v2583
    %2754 = vmatpush1.bf16.msra.mxu0 %v2582
    %2755 = vmatprep.subr.bf16.mxu0 %v2587
    %2756 = vmatpush1.bf16.msra.mxu0 %v2586
    %2757 = vmatprep.subr.bf16.mxu0 %v2591
    %2758 = vmatpush1.bf16.msra.mxu0 %v2590
    %2759 = vmatprep.subr.bf16.mxu0 %v2595
    %2760 = vmatpush1.bf16.msra.mxu0 %v2594
    %2761 = vmatprep.subr.bf16.mxu0 %v2599
    %2762 = vmatpush1.bf16.msra.mxu0 %v2598
    %2763 = vmatprep.subr.bf16.mxu0 %v2603
    %2764 = vmatpush1.bf16.msra.mxu0 %v2602
    %2765 = vmatprep.subr.bf16.mxu0 0
    %2766 = vmatpush1.bf16.msra.mxu0 0
    %2767 = vmatprep.subr.bf16.mxu0 0
    %2768 = vmatpush1.bf16.msra.mxu0 0
    %2769 = vmatprep.subr.bf16.mxu0 0
    %2770 = vmatpush1.bf16.msra.mxu0 0
    %2771 = vmatprep.subr.bf16.mxu0 0
    %2772 = vmatpush1.bf16.msra.mxu0 0
    %2773 = vmatprep.subr.bf16.mxu0 0
    %2774 = vmatpush1.bf16.msra.mxu0 0
    %2775 = vmatprep.subr.bf16.mxu0 0
    %2776 = vmatpush1.bf16.msra.mxu0 0
    %2777 = vmatprep.subr.bf16.mxu0 0
    %2778 = vmatpush1.bf16.msra.mxu0 0
    %2779 = vmatprep.subr.bf16.mxu0 0
    %2780 = vmatpush1.bf16.msra.mxu0 0
    %2781 = vmatprep.mubr.bf16.mxu0 0
    %2782 = vmatmul.mubr.bf16.gmra.mrb[0].mxu0 %v1906
    %v2783 = vpop.f32.mrb[0].mxu0
    %v2784 = vadd.f32 0.0, %v2783
    %v2785 = vpop.f32.mrb[0].mxu0
    %v2786 = vadd.f32 0.0, %v2785
    %v2787 = vpop.f32.mrb[0].mxu0
    %v2788 = vadd.f32 0.0, %v2787
    %v2789 = vpop.f32.mrb[0].mxu0
    %v2790 = vadd.f32 0.0, %v2789
    %2791 = vmatprep.mubr.bf16.mxu0 0
    %2792 = vmatmul.mubr.bf16.gmra.mrb[0].mxu0 %v1907
    %v2793 = vpop.f32.mrb[0].mxu0
    %v2794 = vadd.f32 0.0, %v2793
    %v2795 = vpop.f32.mrb[0].mxu0
    %v2796 = vadd.f32 0.0, %v2795
    %v2797 = vpop.f32.mrb[0].mxu0
    %v2798 = vadd.f32 0.0, %v2797
    %v2799 = vpop.f32.mrb[0].mxu0
    %v2800 = vadd.f32 0.0, %v2799
    %2801 = vmatprep.mubr.bf16.mxu0 0
    %2802 = vmatmul.mubr.bf16.gmra.mrb[0].mxu0 %v1908
    %v2803 = vpop.f32.mrb[0].mxu0
    %v2804 = vadd.f32 0.0, %v2803
    %v2805 = vpop.f32.mrb[0].mxu0
    %v2806 = vadd.f32 0.0, %v2805
    %v2807 = vpop.f32.mrb[0].mxu0
    %v2808 = vadd.f32 0.0, %v2807
    %v2809 = vpop.f32.mrb[0].mxu0
    %v2810 = vadd.f32 0.0, %v2809
    %2811 = vmatprep.mubr.bf16.mxu0 0
    %2812 = vmatmul.mubr.bf16.gmra.mrb[0].mxu0 %v1909
    %v2813 = vpop.f32.mrb[0].mxu0
    %v2814 = vadd.f32 0.0, %v2813
    %v2815 = vpop.f32.mrb[0].mxu0
    %v2816 = vadd.f32 0.0, %v2815
    %v2817 = vpop.f32.mrb[0].mxu0
    %v2818 = vadd.f32 0.0, %v2817
    %v2819 = vpop.f32.mrb[0].mxu0
    %v2820 = vadd.f32 0.0, %v2819
    %2821 = vmatprep.mubr.bf16.mxu0 0
    %2822 = vmatmul.mubr.bf16.gmra.mrb[0].mxu0 %v1910
    %v2823 = vpop.f32.mrb[0].mxu0
    %v2824 = vadd.f32 0.0, %v2823
    %v2825 = vpop.f32.mrb[0].mxu0
    %v2826 = vadd.f32 0.0, %v2825
    %v2827 = vpop.f32.mrb[0].mxu0
    %v2828 = vadd.f32 0.0, %v2827
    %v2829 = vpop.f32.mrb[0].mxu0
    %v2830 = vadd.f32 0.0, %v2829
    %2831 = vmatprep.mubr.bf16.mxu0 0
    %2832 = vmatmul.mubr.bf16.gmra.mrb[0].mxu0 %v1911
    %v2833 = vpop.f32.mrb[0].mxu0
    %v2834 = vadd.f32 0.0, %v2833
    %v2835 = vpop.f32.mrb[0].mxu0
    %v2836 = vadd.f32 0.0, %v2835
    %v2837 = vpop.f32.mrb[0].mxu0
    %v2838 = vadd.f32 0.0, %v2837
    %v2839 = vpop.f32.mrb[0].mxu0
    %v2840 = vadd.f32 0.0, %v2839
    %2841 = vmatprep.mubr.bf16.mxu0 0
    %2842 = vmatmul.mubr.bf16.gmra.mrb[0].mxu0 %v1912
    %v2843 = vpop.f32.mrb[0].mxu0
    %v2844 = vadd.f32 0.0, %v2843
    %v2845 = vpop.f32.mrb[0].mxu0
    %v2846 = vadd.f32 0.0, %v2845
    %v2847 = vpop.f32.mrb[0].mxu0
    %v2848 = vadd.f32 0.0, %v2847
    %v2849 = vpop.f32.mrb[0].mxu0
    %v2850 = vadd.f32 0.0, %v2849
    %2851 = vmatprep.mubr.bf16.mxu0 0
    %2852 = vmatmul.mubr.bf16.gmra.mrb[0].mxu0 %v1913
    %v2853 = vpop.f32.mrb[0].mxu0
    %v2854 = vadd.f32 0.0, %v2853
    %v2855 = vpop.f32.mrb[0].mxu0
    %v2856 = vadd.f32 0.0, %v2855
    %v2857 = vpop.f32.mrb[0].mxu0
    %v2858 = vadd.f32 0.0, %v2857
    %v2859 = vpop.f32.mrb[0].mxu0
    %v2860 = vadd.f32 0.0, %v2859
    %2861 = vdwg.mxu0
    %v2862 = vpack.c.bf16 %v2273, %v2269
    %v2863 = vpack.c.bf16 %v2283, %v2279
    %v2864 = vpack.c.bf16 %v2293, %v2289
    %v2865 = vpack.c.bf16 %v2303, %v2299
    %v2866 = vpack.c.bf16 %v2313, %v2309
    %v2867 = vpack.c.bf16 %v2323, %v2319
    %v2868 = vpack.c.bf16 %v2333, %v2329
    %v2869 = vpack.c.bf16 %v2343, %v2339
    %v2870 = vpack.c.bf16 %v2275, %v2271
    %v2871 = vpack.c.bf16 %v2285, %v2281
    %v2872 = vpack.c.bf16 %v2295, %v2291
    %v2873 = vpack.c.bf16 %v2305, %v2301
    %v2874 = vpack.c.bf16 %v2315, %v2311
    %v2875 = vpack.c.bf16 %v2325, %v2321
    %v2876 = vpack.c.bf16 %v2335, %v2331
    %v2877 = vpack.c.bf16 %v2345, %v2341
    %v2878 = vpack.c.bf16 %v2675, %v2671
    %v2879 = vpack.c.bf16 %v2685, %v2681
    %v2880 = vpack.c.bf16 %v2695, %v2691
    %v2881 = vpack.c.bf16 %v2705, %v2701
    %v2882 = vpack.c.bf16 %v2715, %v2711
    %v2883 = vpack.c.bf16 %v2725, %v2721
    %v2884 = vpack.c.bf16 %v2735, %v2731
    %v2885 = vpack.c.bf16 %v2745, %v2741
    %v2886 = vpack.c.bf16 %v2677, %v2673
    %v2887 = vpack.c.bf16 %v2788, %v2784
    %v2888 = vpack.c.bf16 %v2687, %v2683
    %v2889 = vpack.c.bf16 %v2798, %v2794
    %v2890 = vpack.c.bf16 %v2697, %v2693
    %v2891 = vpack.c.bf16 %v2808, %v2804
    %v2892 = vpack.c.bf16 %v2707, %v2703
    %v2893 = vpack.c.bf16 %v2818, %v2814
    %v2894 = vpack.c.bf16 %v2717, %v2713
    %v2895 = vpack.c.bf16 %v2828, %v2824
    %v2896 = vpack.c.bf16 %v2727, %v2723
    %v2897 = vpack.c.bf16 %v2838, %v2834
    %v2898 = vpack.c.bf16 %v2737, %v2733
    %v2899 = vpack.c.bf16 %v2848, %v2844
    %v2900 = vpack.c.bf16 %v2747, %v2743
    %v2901 = vpack.c.bf16 %v2858, %v2854
    %v2902 = vld [vmem:[#allocation7] sm:$0xff]
    %v2903 = vld [vmem:[#allocation7 + $0x8] sm:$0xff]
    %v2904 = vld [vmem:[#allocation7 + $0x10] sm:$0xff]
    %v2905 = vld [vmem:[#allocation7 + $0x18] sm:$0xff]
    %v2906 = vld [vmem:[#allocation7 + $0x20] sm:$0xff]
    %v2907 = vld [vmem:[#allocation7 + $0x28] sm:$0xff]
    %v2908 = vld [vmem:[#allocation7 + $0x30] sm:$0xff]
    %v2909 = vld [vmem:[#allocation7 + $0x38] sm:$0xff]
    %v2910 = vld [vmem:[#allocation7 + $0x40] sm:$0xff]
    %v2911 = vld [vmem:[#allocation7 + $0x48] sm:$0xff]
    %v2912 = vld [vmem:[#allocation7 + $0x50] sm:$0xff]
    %v2913 = vld [vmem:[#allocation7 + $0x58] sm:$0xff]
    %v2914 = vld [vmem:[#allocation7 + $0x60] sm:$0xff]
    %v2915 = vld [vmem:[#allocation7 + $0x68] sm:$0xff]
    %v2916 = vld [vmem:[#allocation7 + $0x70] sm:$0xff]
    %v2917 = vld [vmem:[#allocation7 + $0x78] sm:$0xff]
    %2918 = vmatprep.subr.bf16.mxu0 0
    %2919 = vmatpush1.bf16.xpose.msra.mxu0 %v2878
    %2920 = vmatprep.subr.bf16.mxu0 0
    %2921 = vmatpush1.bf16.xpose.msra.mxu0 %v2879
    %2922 = vmatprep.subr.bf16.mxu0 0
    %2923 = vmatpush1.bf16.xpose.msra.mxu0 %v2880
    %2924 = vmatprep.subr.bf16.mxu0 0
    %2925 = vmatpush1.bf16.xpose.msra.mxu0 %v2881
    %2926 = vmatprep.subr.bf16.mxu0 0
    %2927 = vmatpush1.bf16.xpose.msra.mxu0 %v2882
    %2928 = vmatprep.subr.bf16.mxu0 0
    %2929 = vmatpush1.bf16.xpose.msra.mxu0 %v2883
    %2930 = vmatprep.subr.bf16.mxu0 0
    %2931 = vmatpush1.bf16.xpose.msra.mxu0 %v2884
    %2932 = vmatprep.subr.bf16.mxu0 0
    %2933 = vmatpush1.bf16.xpose.msra.mxu0 %v2885
    %2934 = vmatprep.subr.bf16.mxu0 0
    %2935 = vmatpush1.bf16.xpose.msra.mxu0 0
    %2936 = vmatprep.subr.bf16.mxu0 0
    %2937 = vmatpush1.bf16.xpose.msra.mxu0 0
    %2938 = vmatprep.subr.bf16.mxu0 0
    %2939 = vmatpush1.bf16.xpose.msra.mxu0 0
    %2940 = vmatprep.subr.bf16.mxu0 0
    %2941 = vmatpush1.bf16.xpose.msra.mxu0 0
    %2942 = vmatprep.subr.bf16.mxu0 0
    %2943 = vmatpush1.bf16.xpose.msra.mxu0 0
    %2944 = vmatprep.subr.bf16.mxu0 0
    %2945 = vmatpush1.bf16.xpose.msra.mxu0 0
    %2946 = vmatprep.subr.bf16.mxu0 0
    %2947 = vmatpush1.bf16.xpose.msra.mxu0 0
    %2948 = vmatprep.subr.bf16.mxu0 0
    %2949 = vmatpush1.bf16.xpose.msra.mxu0 0
    %2950 = vmatprep.mubr.bf16.mxu0 0
    %2951 = vmatmul.mubr.bf16.gmra.mrb[0].mxu0 %v2862
    %v2952 = vpop.f32.mrb[0].mxu0
    %v2953 = vadd.f32 %v2902, %v2952
    %v2954 = vpop.f32.mrb[0].mxu0
    %v2955 = vpop.f32.mrb[0].mxu0
    %v2956 = vadd.f32 %v2903, %v2955
    %v2957 = vpop.f32.mrb[0].mxu0
    %2958 = vmatprep.mubr.bf16.mxu0 0
    %2959 = vmatmul.mubr.bf16.gmra.mrb[0].mxu0 %v2863
    %v2960 = vpop.f32.mrb[0].mxu0
    %v2961 = vadd.f32 %v2904, %v2960
    %v2962 = vpop.f32.mrb[0].mxu0
    %v2963 = vpop.f32.mrb[0].mxu0
    %v2964 = vadd.f32 %v2905, %v2963
    %v2965 = vpop.f32.mrb[0].mxu0
    %2966 = vmatprep.mubr.bf16.mxu0 0
    %2967 = vmatmul.mubr.bf16.gmra.mrb[0].mxu0 %v2864
    %v2968 = vpop.f32.mrb[0].mxu0
    %v2969 = vadd.f32 %v2906, %v2968
    %v2970 = vpop.f32.mrb[0].mxu0
    %v2971 = vpop.f32.mrb[0].mxu0
    %v2972 = vadd.f32 %v2907, %v2971
    %v2973 = vpop.f32.mrb[0].mxu0
    %2974 = vmatprep.mubr.bf16.mxu0 0
    %2975 = vmatmul.mubr.bf16.gmra.mrb[0].mxu0 %v2865
    %v2976 = vpop.f32.mrb[0].mxu0
    %v2977 = vadd.f32 %v2908, %v2976
    %v2978 = vpop.f32.mrb[0].mxu0
    %v2979 = vpop.f32.mrb[0].mxu0
    %v2980 = vadd.f32 %v2909, %v2979
    %v2981 = vpop.f32.mrb[0].mxu0
    %2982 = vmatprep.mubr.bf16.mxu0 0
    %2983 = vmatmul.mubr.bf16.gmra.mrb[0].mxu0 %v2866
    %v2984 = vpop.f32.mrb[0].mxu0
    %v2985 = vadd.f32 %v2910, %v2984
    %v2986 = vpop.f32.mrb[0].mxu0
    %v2987 = vpop.f32.mrb[0].mxu0
    %v2988 = vadd.f32 %v2911, %v2987
    %v2989 = vpop.f32.mrb[0].mxu0
    %2990 = vmatprep.mubr.bf16.mxu0 0
    %2991 = vmatmul.mubr.bf16.gmra.mrb[0].mxu0 %v2867
    %v2992 = vpop.f32.mrb[0].mxu0
    %v2993 = vadd.f32 %v2912, %v2992
    %v2994 = vpop.f32.mrb[0].mxu0
    %v2995 = vpop.f32.mrb[0].mxu0
    %v2996 = vadd.f32 %v2913, %v2995
    %v2997 = vpop.f32.mrb[0].mxu0
    %2998 = vmatprep.mubr.bf16.mxu0 0
    %2999 = vmatmul.mubr.bf16.gmra.mrb[0].mxu0 %v2868
    %v3000 = vpop.f32.mrb[0].mxu0
    %v3001 = vadd.f32 %v2914, %v3000
    %v3002 = vpop.f32.mrb[0].mxu0
    %v3003 = vpop.f32.mrb[0].mxu0
    %v3004 = vadd.f32 %v2915, %v3003
    %v3005 = vpop.f32.mrb[0].mxu0
    %3006 = vmatprep.mubr.bf16.mxu0 0
    %3007 = vmatmul.mubr.bf16.gmra.mrb[0].mxu0 %v2869
    %v3008 = vpop.f32.mrb[0].mxu0
    %v3009 = vadd.f32 %v2916, %v3008
    %v3010 = vpop.f32.mrb[0].mxu0
    %v3011 = vpop.f32.mrb[0].mxu0
    %v3012 = vadd.f32 %v2917, %v3011
    %v3013 = vpop.f32.mrb[0].mxu0
    %3014 = vdwg.mxu0
    %3015 = vmax.xlane.f32.xlu0 %v2953
    %v3016 = vpop.xlane.xlu0 %3015
    %3017 = vmax.xlane.f32.xlu0 %v2956
    %v3018 = vpop.xlane.xlu0 %3017
    %3019 = vmax.xlane.f32.xlu0 %v2961
    %v3020 = vpop.xlane.xlu0 %3019
    %3021 = vmax.xlane.f32.xlu0 %v2964
    %v3022 = vpop.xlane.xlu0 %3021
    %3023 = vmax.xlane.f32.xlu0 %v2969
    %v3024 = vpop.xlane.xlu0 %3023
    %3025 = vmax.xlane.f32.xlu0 %v2972
    %v3026 = vpop.xlane.xlu0 %3025
    %3027 = vmax.xlane.f32.xlu0 %v2977
    %v3028 = vpop.xlane.xlu0 %3027
    %3029 = vmax.xlane.f32.xlu0 %v2980
    %v3030 = vpop.xlane.xlu0 %3029
    %3031 = vmax.xlane.f32.xlu0 %v2985
    %v3032 = vpop.xlane.xlu0 %3031
    %3033 = vmax.xlane.f32.xlu0 %v2988
    %v3034 = vpop.xlane.xlu0 %3033
    %3035 = vmax.xlane.f32.xlu0 %v2993
    %v3036 = vpop.xlane.xlu0 %3035
    %3037 = vmax.xlane.f32.xlu0 %v2996
    %v3038 = vpop.xlane.xlu0 %3037
    %3039 = vmax.xlane.f32.xlu0 %v3001
    %v3040 = vpop.xlane.xlu0 %3039
    %3041 = vmax.xlane.f32.xlu0 %v3004
    %v3042 = vpop.xlane.xlu0 %3041
    %3043 = vmax.xlane.f32.xlu0 %v3009
    %v3044 = vpop.xlane.xlu0 %3043
    %3045 = vmax.xlane.f32.xlu0 %v3012
    %v3046 = vpop.xlane.xlu0 %3045
    %v3047 = vsub.f32 %v2953, %v3016
    %v3048 = vsub.f32 %v2956, %v3018
    %v3049 = vsub.f32 %v2961, %v3020
    %v3050 = vsub.f32 %v2964, %v3022
    %v3051 = vsub.f32 %v2969, %v3024
    %v3052 = vsub.f32 %v2972, %v3026
    %v3053 = vsub.f32 %v2977, %v3028
    %v3054 = vsub.f32 %v2980, %v3030
    %v3055 = vsub.f32 %v2985, %v3032
    %v3056 = vsub.f32 %v2988, %v3034
    %v3057 = vsub.f32 %v2993, %v3036
    %v3058 = vsub.f32 %v2996, %v3038
    %v3059 = vsub.f32 %v3001, %v3040
    %v3060 = vsub.f32 %v3004, %v3042
    %v3061 = vsub.f32 %v3009, %v3044
    %v3062 = vsub.f32 %v3012, %v3046
    %v3063 = vmul.f32 %v3047, 1.442695
    %v3064 = vpow.pop %v3063
    %v3065 = vmul.f32 %v3048, 1.442695
    %v3066 = vpow.pop %v3065
    %v3067 = vmul.f32 %v3049, 1.442695
    %v3068 = vpow.pop %v3067
    %v3069 = vmul.f32 %v3050, 1.442695
    %v3070 = vpow.pop %v3069
    %v3071 = vmul.f32 %v3051, 1.442695
    %v3072 = vpow.pop %v3071
    %v3073 = vmul.f32 %v3052, 1.442695
    %v3074 = vpow.pop %v3073
    %v3075 = vmul.f32 %v3053, 1.442695
    %v3076 = vpow.pop %v3075
    %v3077 = vmul.f32 %v3054, 1.442695
    %v3078 = vpow.pop %v3077
    %v3079 = vmul.f32 %v3055, 1.442695
    %v3080 = vpow.pop %v3079
    %v3081 = vmul.f32 %v3056, 1.442695
    %v3082 = vpow.pop %v3081
    %v3083 = vmul.f32 %v3057, 1.442695
    %v3084 = vpow.pop %v3083
    %v3085 = vmul.f32 %v3058, 1.442695
    %v3086 = vpow.pop %v3085
    %v3087 = vmul.f32 %v3059, 1.442695
    %v3088 = vpow.pop %v3087
    %v3089 = vmul.f32 %v3060, 1.442695
    %v3090 = vpow.pop %v3089
    %v3091 = vmul.f32 %v3061, 1.442695
    %v3092 = vpow.pop %v3091
    %v3093 = vmul.f32 %v3062, 1.442695
    %v3094 = vpow.pop %v3093
    %3095 = vadd.xlane.f32.xlu0 %v3064
    %v3096 = vpop.xlane.xlu0 %3095
    %3097 = vadd.xlane.f32.xlu0 %v3066
    %v3098 = vpop.xlane.xlu0 %3097
    %3099 = vadd.xlane.f32.xlu0 %v3068
    %v3100 = vpop.xlane.xlu0 %3099
    %3101 = vadd.xlane.f32.xlu0 %v3070
    %v3102 = vpop.xlane.xlu0 %3101
    %3103 = vadd.xlane.f32.xlu0 %v3072
    %v3104 = vpop.xlane.xlu0 %3103
    %3105 = vadd.xlane.f32.xlu0 %v3074
    %v3106 = vpop.xlane.xlu0 %3105
    %3107 = vadd.xlane.f32.xlu0 %v3076
    %v3108 = vpop.xlane.xlu0 %3107
    %3109 = vadd.xlane.f32.xlu0 %v3078
    %v3110 = vpop.xlane.xlu0 %3109
    %3111 = vadd.xlane.f32.xlu0 %v3080
    %v3112 = vpop.xlane.xlu0 %3111
    %3113 = vadd.xlane.f32.xlu0 %v3082
    %v3114 = vpop.xlane.xlu0 %3113
    %3115 = vadd.xlane.f32.xlu0 %v3084
    %v3116 = vpop.xlane.xlu0 %3115
    %3117 = vadd.xlane.f32.xlu0 %v3086
    %v3118 = vpop.xlane.xlu0 %3117
    %3119 = vadd.xlane.f32.xlu0 %v3088
    %v3120 = vpop.xlane.xlu0 %3119
    %3121 = vadd.xlane.f32.xlu0 %v3090
    %v3122 = vpop.xlane.xlu0 %3121
    %3123 = vadd.xlane.f32.xlu0 %v3092
    %v3124 = vpop.xlane.xlu0 %3123
    %3125 = vadd.xlane.f32.xlu0 %v3094
    %v3126 = vpop.xlane.xlu0 %3125
    %v3127 = vrcp.pop %v3096
    %v3128 = vrcp.pop %v3098
    %v3129 = vrcp.pop %v3100
    %v3130 = vrcp.pop %v3102
    %v3131 = vrcp.pop %v3104
    %v3132 = vrcp.pop %v3106
    %v3133 = vrcp.pop %v3108
    %v3134 = vrcp.pop %v3110
    %v3135 = vrcp.pop %v3112
    %v3136 = vrcp.pop %v3114
    %v3137 = vrcp.pop %v3116
    %v3138 = vrcp.pop %v3118
    %v3139 = vrcp.pop %v3120
    %v3140 = vrcp.pop %v3122
    %v3141 = vrcp.pop %v3124
    %v3142 = vrcp.pop %v3126
    %v3143 = vmul.f32 %v3064, %v3127
    %v3144 = vmul.f32 %v3066, %v3128
    %v3145 = vmul.f32 %v3068, %v3129
    %v3146 = vmul.f32 %v3070, %v3130
    %v3147 = vmul.f32 %v3072, %v3131
    %v3148 = vmul.f32 %v3074, %v3132
    %v3149 = vmul.f32 %v3076, %v3133
    %v3150 = vmul.f32 %v3078, %v3134
    %v3151 = vmul.f32 %v3080, %v3135
    %v3152 = vmul.f32 %v3082, %v3136
    %v3153 = vmul.f32 %v3084, %v3137
    %v3154 = vmul.f32 %v3086, %v3138
    %v3155 = vmul.f32 %v3088, %v3139
    %v3156 = vmul.f32 %v3090, %v3140
    %v3157 = vmul.f32 %v3092, %v3141
    %v3158 = vmul.f32 %v3094, %v3142
    %v3159 = vpack.c.bf16 %v3144, %v3143
    %v3160 = vpack.c.bf16 %v3146, %v3145
    %v3161 = vpack.c.bf16 %v3148, %v3147
    %v3162 = vpack.c.bf16 %v3150, %v3149
    %v3163 = vpack.c.bf16 %v3152, %v3151
    %v3164 = vpack.c.bf16 %v3154, %v3153
    %v3165 = vpack.c.bf16 %v3156, %v3155
    %v3166 = vpack.c.bf16 %v3158, %v3157
    %3167 = vxpose.xlu0.b32.start [1/16] %v2953, 128
    %3168 = vxpose.xlu0.b32.cont [2/16] %v2956, 128
    %3169 = vxpose.xlu0.b32.cont [3/16] %v2961, 128
    %3170 = vxpose.xlu0.b32.cont [4/16] %v2964, 128
    %3171 = vxpose.xlu0.b32.cont [5/16] %v2969, 128
    %3172 = vxpose.xlu0.b32.cont [6/16] %v2972, 128
    %3173 = vxpose.xlu0.b32.cont [7/16] %v2977, 128
    %3174 = vxpose.xlu0.b32.cont [8/16] %v2980, 128
    %3175 = vxpose.xlu0.b32.cont [9/16] %v2985, 128
    %3176 = vxpose.xlu0.b32.cont [10/16] %v2988, 128
    %3177 = vxpose.xlu0.b32.cont [11/16] %v2993, 128
    %3178 = vxpose.xlu0.b32.cont [12/16] %v2996, 128
    %3179 = vxpose.xlu0.b32.cont [13/16] %v3001, 128
    %3180 = vxpose.xlu0.b32.cont [14/16] %v3004, 128
    %3181 = vxpose.xlu0.b32.cont [15/16] %v3009, 128
    %3182 = vxpose.xlu0.b32.end [16/16] %v3012, 128
    %v3183 = vpop.trf.xlu0
    %v3184 = vpop.trf.xlu0
    %v3185 = vpop.trf.xlu0
    %v3186 = vpop.trf.xlu0
    %v3187 = vpop.trf.xlu0
    %v3188 = vpop.trf.xlu0
    %v3189 = vpop.trf.xlu0
    %v3190 = vpop.trf.xlu0
    %v3191 = vpop.trf.xlu0
    %v3192 = vpop.trf.xlu0
    %v3193 = vpop.trf.xlu0
    %v3194 = vpop.trf.xlu0
    %v3195 = vpop.trf.xlu0
    %v3196 = vpop.trf.xlu0
    %v3197 = vpop.trf.xlu0
    %v3198 = vpop.trf.xlu0
    %3199 = vmax.xlane.f32.xlu0 %v3183
    %v3200 = vpop.xlane.xlu0 %3199
    %3201 = vmax.xlane.f32.xlu0 %v3184
    %v3202 = vpop.xlane.xlu0 %3201
    %3203 = vmax.xlane.f32.xlu0 %v3185
    %v3204 = vpop.xlane.xlu0 %3203
    %3205 = vmax.xlane.f32.xlu0 %v3186
    %v3206 = vpop.xlane.xlu0 %3205
    %3207 = vmax.xlane.f32.xlu0 %v3187
    %v3208 = vpop.xlane.xlu0 %3207
    %3209 = vmax.xlane.f32.xlu0 %v3188
    %v3210 = vpop.xlane.xlu0 %3209
    %3211 = vmax.xlane.f32.xlu0 %v3189
    %v3212 = vpop.xlane.xlu0 %3211
    %3213 = vmax.xlane.f32.xlu0 %v3190
    %v3214 = vpop.xlane.xlu0 %3213
    %3215 = vmax.xlane.f32.xlu0 %v3191
    %v3216 = vpop.xlane.xlu0 %3215
    %3217 = vmax.xlane.f32.xlu0 %v3192
    %v3218 = vpop.xlane.xlu0 %3217
    %3219 = vmax.xlane.f32.xlu0 %v3193
    %v3220 = vpop.xlane.xlu0 %3219
    %3221 = vmax.xlane.f32.xlu0 %v3194
    %v3222 = vpop.xlane.xlu0 %3221
    %3223 = vmax.xlane.f32.xlu0 %v3195
    %v3224 = vpop.xlane.xlu0 %3223
    %3225 = vmax.xlane.f32.xlu0 %v3196
    %v3226 = vpop.xlane.xlu0 %3225
    %3227 = vmax.xlane.f32.xlu0 %v3197
    %v3228 = vpop.xlane.xlu0 %3227
    %3229 = vmax.xlane.f32.xlu0 %v3198
    %v3230 = vpop.xlane.xlu0 %3229
    %v3231 = vsub.f32 %v3183, %v3200
    %v3232 = vsub.f32 %v3184, %v3202
    %v3233 = vsub.f32 %v3185, %v3204
    %v3234 = vsub.f32 %v3186, %v3206
    %v3235 = vsub.f32 %v3187, %v3208
    %v3236 = vsub.f32 %v3188, %v3210
    %v3237 = vsub.f32 %v3189, %v3212
    %v3238 = vsub.f32 %v3190, %v3214
    %v3239 = vsub.f32 %v3191, %v3216
    %v3240 = vsub.f32 %v3192, %v3218
    %v3241 = vsub.f32 %v3193, %v3220
    %v3242 = vsub.f32 %v3194, %v3222
    %v3243 = vsub.f32 %v3195, %v3224
    %v3244 = vsub.f32 %v3196, %v3226
    %v3245 = vsub.f32 %v3197, %v3228
    %v3246 = vsub.f32 %v3198, %v3230
    %v3247 = vmul.f32 %v3231, 1.442695
    %v3248 = vpow.pop %v3247
    %v3249 = vmul.f32 %v3232, 1.442695
    %v3250 = vpow.pop %v3249
    %v3251 = vmul.f32 %v3233, 1.442695
    %v3252 = vpow.pop %v3251
    %v3253 = vmul.f32 %v3234, 1.442695
    %v3254 = vpow.pop %v3253
    %v3255 = vmul.f32 %v3235, 1.442695
    %v3256 = vpow.pop %v3255
    %v3257 = vmul.f32 %v3236, 1.442695
    %v3258 = vpow.pop %v3257
    %v3259 = vmul.f32 %v3237, 1.442695
    %v3260 = vpow.pop %v3259
    %v3261 = vmul.f32 %v3238, 1.442695
    %v3262 = vpow.pop %v3261
    %v3263 = vmul.f32 %v3239, 1.442695
    %v3264 = vpow.pop %v3263
    %v3265 = vmul.f32 %v3240, 1.442695
    %v3266 = vpow.pop %v3265
    %v3267 = vmul.f32 %v3241, 1.442695
    %v3268 = vpow.pop %v3267
    %v3269 = vmul.f32 %v3242, 1.442695
    %v3270 = vpow.pop %v3269
    %v3271 = vmul.f32 %v3243, 1.442695
    %v3272 = vpow.pop %v3271
    %v3273 = vmul.f32 %v3244, 1.442695
    %v3274 = vpow.pop %v3273
    %v3275 = vmul.f32 %v3245, 1.442695
    %v3276 = vpow.pop %v3275
    %v3277 = vmul.f32 %v3246, 1.442695
    %v3278 = vpow.pop %v3277
    %3279 = vadd.xlane.f32.xlu0 %v3248
    %v3280 = vpop.xlane.xlu0 %3279
    %3281 = vadd.xlane.f32.xlu0 %v3250
    %v3282 = vpop.xlane.xlu0 %3281
    %3283 = vadd.xlane.f32.xlu0 %v3252
    %v3284 = vpop.xlane.xlu0 %3283
    %3285 = vadd.xlane.f32.xlu0 %v3254
    %v3286 = vpop.xlane.xlu0 %3285
    %3287 = vadd.xlane.f32.xlu0 %v3256
    %v3288 = vpop.xlane.xlu0 %3287
    %3289 = vadd.xlane.f32.xlu0 %v3258
    %v3290 = vpop.xlane.xlu0 %3289
    %3291 = vadd.xlane.f32.xlu0 %v3260
    %v3292 = vpop.xlane.xlu0 %3291
    %3293 = vadd.xlane.f32.xlu0 %v3262
    %v3294 = vpop.xlane.xlu0 %3293
    %3295 = vadd.xlane.f32.xlu0 %v3264
    %v3296 = vpop.xlane.xlu0 %3295
    %3297 = vadd.xlane.f32.xlu0 %v3266
    %v3298 = vpop.xlane.xlu0 %3297
    %3299 = vadd.xlane.f32.xlu0 %v3268
    %v3300 = vpop.xlane.xlu0 %3299
    %3301 = vadd.xlane.f32.xlu0 %v3270
    %v3302 = vpop.xlane.xlu0 %3301
    %3303 = vadd.xlane.f32.xlu0 %v3272
    %v3304 = vpop.xlane.xlu0 %3303
    %3305 = vadd.xlane.f32.xlu0 %v3274
    %v3306 = vpop.xlane.xlu0 %3305
    %3307 = vadd.xlane.f32.xlu0 %v3276
    %v3308 = vpop.xlane.xlu0 %3307
    %3309 = vadd.xlane.f32.xlu0 %v3278
    %v3310 = vpop.xlane.xlu0 %3309
    %v3311 = vrcp.pop %v3280
    %v3312 = vrcp.pop %v3282
    %v3313 = vrcp.pop %v3284
    %v3314 = vrcp.pop %v3286
    %v3315 = vrcp.pop %v3288
    %v3316 = vrcp.pop %v3290
    %v3317 = vrcp.pop %v3292
    %v3318 = vrcp.pop %v3294
    %v3319 = vrcp.pop %v3296
    %v3320 = vrcp.pop %v3298
    %v3321 = vrcp.pop %v3300
    %v3322 = vrcp.pop %v3302
    %v3323 = vrcp.pop %v3304
    %v3324 = vrcp.pop %v3306
    %v3325 = vrcp.pop %v3308
    %v3326 = vrcp.pop %v3310
    %v3327 = vmul.f32 %v3248, %v3311
    %v3328 = vmul.f32 %v3250, %v3312
    %v3329 = vmul.f32 %v3252, %v3313
    %v3330 = vmul.f32 %v3254, %v3314
    %v3331 = vmul.f32 %v3256, %v3315
    %v3332 = vmul.f32 %v3258, %v3316
    %v3333 = vmul.f32 %v3260, %v3317
    %v3334 = vmul.f32 %v3262, %v3318
    %v3335 = vmul.f32 %v3264, %v3319
    %v3336 = vmul.f32 %v3266, %v3320
    %v3337 = vmul.f32 %v3268, %v3321
    %v3338 = vmul.f32 %v3270, %v3322
    %v3339 = vmul.f32 %v3272, %v3323
    %v3340 = vmul.f32 %v3274, %v3324
    %v3341 = vmul.f32 %v3276, %v3325
    %v3342 = vmul.f32 %v3278, %v3326
    %v3343 = vpack.c.bf16 %v3328, %v3327
    %v3344 = vpack.c.bf16 %v3330, %v3329
    %v3345 = vpack.c.bf16 %v3332, %v3331
    %v3346 = vpack.c.bf16 %v3334, %v3333
    %v3347 = vpack.c.bf16 %v3336, %v3335
    %v3348 = vpack.c.bf16 %v3338, %v3337
    %v3349 = vpack.c.bf16 %v3340, %v3339
    %v3350 = vpack.c.bf16 %v3342, %v3341
    %3351 = vmatprep.subr.bf16.mxu0 %v2887
    %3352 = vmatpush1.bf16.msra.mxu0 %v2886
    %3353 = vmatprep.subr.bf16.mxu0 %v2889
    %3354 = vmatpush1.bf16.msra.mxu0 %v2888
    %3355 = vmatprep.subr.bf16.mxu0 %v2891
    %3356 = vmatpush1.bf16.msra.mxu0 %v2890
    %3357 = vmatprep.subr.bf16.mxu0 %v2893
    %3358 = vmatpush1.bf16.msra.mxu0 %v2892
    %3359 = vmatprep.subr.bf16.mxu0 %v2895
    %3360 = vmatpush1.bf16.msra.mxu0 %v2894
    %3361 = vmatprep.subr.bf16.mxu0 %v2897
    %3362 = vmatpush1.bf16.msra.mxu0 %v2896
    %3363 = vmatprep.subr.bf16.mxu0 %v2899
    %3364 = vmatpush1.bf16.msra.mxu0 %v2898
    %3365 = vmatprep.subr.bf16.mxu0 %v2901
    %3366 = vmatpush1.bf16.msra.mxu0 %v2900
    %3367 = vmatprep.subr.bf16.mxu0 0
    %3368 = vmatpush1.bf16.msra.mxu0 0
    %3369 = vmatprep.subr.bf16.mxu0 0
    %3370 = vmatpush1.bf16.msra.mxu0 0
    %3371 = vmatprep.subr.bf16.mxu0 0
    %3372 = vmatpush1.bf16.msra.mxu0 0
    %3373 = vmatprep.subr.bf16.mxu0 0
    %3374 = vmatpush1.bf16.msra.mxu0 0
    %3375 = vmatprep.subr.bf16.mxu0 0
    %3376 = vmatpush1.bf16.msra.mxu0 0
    %3377 = vmatprep.subr.bf16.mxu0 0
    %3378 = vmatpush1.bf16.msra.mxu0 0
    %3379 = vmatprep.subr.bf16.mxu0 0
    %3380 = vmatpush1.bf16.msra.mxu0 0
    %3381 = vmatprep.subr.bf16.mxu0 0
    %3382 = vmatpush1.bf16.msra.mxu0 0
    %3383 = vmatprep.mubr.bf16.mxu0 0
    %3384 = vmatmul.mubr.bf16.gmra.mrb[0].mxu0 %v3159
    %v3385 = vpop.f32.mrb[0].mxu0
    %v3386 = vadd.f32 0.0, %v3385
    %v3387 = vpop.f32.mrb[0].mxu0
    %v3388 = vadd.f32 0.0, %v3387
    %v3389 = vpop.f32.mrb[0].mxu0
    %v3390 = vadd.f32 0.0, %v3389
    %v3391 = vpop.f32.mrb[0].mxu0
    %v3392 = vadd.f32 0.0, %v3391
    %3393 = vmatprep.mubr.bf16.mxu0 0
    %3394 = vmatmul.mubr.bf16.gmra.mrb[0].mxu0 %v3160
    %v3395 = vpop.f32.mrb[0].mxu0
    %v3396 = vadd.f32 0.0, %v3395
    %v3397 = vpop.f32.mrb[0].mxu0
    %v3398 = vadd.f32 0.0, %v3397
    %v3399 = vpop.f32.mrb[0].mxu0
    %v3400 = vadd.f32 0.0, %v3399
    %v3401 = vpop.f32.mrb[0].mxu0
    %v3402 = vadd.f32 0.0, %v3401
    %3403 = vmatprep.mubr.bf16.mxu0 0
    %3404 = vmatmul.mubr.bf16.gmra.mrb[0].mxu0 %v3161
    %v3405 = vpop.f32.mrb[0].mxu0
    %v3406 = vadd.f32 0.0, %v3405
    %v3407 = vpop.f32.mrb[0].mxu0
    %v3408 = vadd.f32 0.0, %v3407
    %v3409 = vpop.f32.mrb[0].mxu0
    %v3410 = vadd.f32 0.0, %v3409
    %v3411 = vpop.f32.mrb[0].mxu0
    %v3412 = vadd.f32 0.0, %v3411
    %3413 = vmatprep.mubr.bf16.mxu0 0
    %3414 = vmatmul.mubr.bf16.gmra.mrb[0].mxu0 %v3162
    %v3415 = vpop.f32.mrb[0].mxu0
    %v3416 = vadd.f32 0.0, %v3415
    %v3417 = vpop.f32.mrb[0].mxu0
    %v3418 = vadd.f32 0.0, %v3417
    %v3419 = vpop.f32.mrb[0].mxu0
    %v3420 = vadd.f32 0.0, %v3419
    %v3421 = vpop.f32.mrb[0].mxu0
    %v3422 = vadd.f32 0.0, %v3421
    %3423 = vmatprep.mubr.bf16.mxu0 0
    %3424 = vmatmul.mubr.bf16.gmra.mrb[0].mxu0 %v3163
    %v3425 = vpop.f32.mrb[0].mxu0
    %v3426 = vadd.f32 0.0, %v3425
    %v3427 = vpop.f32.mrb[0].mxu0
    %v3428 = vadd.f32 0.0, %v3427
    %v3429 = vpop.f32.mrb[0].mxu0
    %v3430 = vadd.f32 0.0, %v3429
    %v3431 = vpop.f32.mrb[0].mxu0
    %v3432 = vadd.f32 0.0, %v3431
    %3433 = vmatprep.mubr.bf16.mxu0 0
    %3434 = vmatmul.mubr.bf16.gmra.mrb[0].mxu0 %v3164
    %v3435 = vpop.f32.mrb[0].mxu0
    %v3436 = vadd.f32 0.0, %v3435
    %v3437 = vpop.f32.mrb[0].mxu0
    %v3438 = vadd.f32 0.0, %v3437
    %v3439 = vpop.f32.mrb[0].mxu0
    %v3440 = vadd.f32 0.0, %v3439
    %v3441 = vpop.f32.mrb[0].mxu0
    %v3442 = vadd.f32 0.0, %v3441
    %3443 = vmatprep.mubr.bf16.mxu0 0
    %3444 = vmatmul.mubr.bf16.gmra.mrb[0].mxu0 %v3165
    %v3445 = vpop.f32.mrb[0].mxu0
    %v3446 = vadd.f32 0.0, %v3445
    %v3447 = vpop.f32.mrb[0].mxu0
    %v3448 = vadd.f32 0.0, %v3447
    %v3449 = vpop.f32.mrb[0].mxu0
    %v3450 = vadd.f32 0.0, %v3449
    %v3451 = vpop.f32.mrb[0].mxu0
    %v3452 = vadd.f32 0.0, %v3451
    %3453 = vmatprep.mubr.bf16.mxu0 0
    %3454 = vmatmul.mubr.bf16.gmra.mrb[0].mxu0 %v3166
    %v3455 = vpop.f32.mrb[0].mxu0
    %v3456 = vadd.f32 0.0, %v3455
    %v3457 = vpop.f32.mrb[0].mxu0
    %v3458 = vadd.f32 0.0, %v3457
    %v3459 = vpop.f32.mrb[0].mxu0
    %v3460 = vadd.f32 0.0, %v3459
    %v3461 = vpop.f32.mrb[0].mxu0
    %v3462 = vadd.f32 0.0, %v3461
    %3463 = vdwg.mxu0
    %v3464 = vtanh.pop %v3386
    %v3465 = vtanh.pop %v3388
    %v3466 = vtanh.pop %v3390
    %v3467 = vtanh.pop %v3392
    %v3468 = vtanh.pop %v3396
    %v3469 = vtanh.pop %v3398
    %v3470 = vtanh.pop %v3400
    %v3471 = vtanh.pop %v3402
    %v3472 = vtanh.pop %v3406
    %v3473 = vtanh.pop %v3408
    %v3474 = vtanh.pop %v3410
    %v3475 = vtanh.pop %v3412
    %v3476 = vtanh.pop %v3416
    %v3477 = vtanh.pop %v3418
    %v3478 = vtanh.pop %v3420
    %v3479 = vtanh.pop %v3422
    %v3480 = vtanh.pop %v3426
    %v3481 = vtanh.pop %v3428
    %v3482 = vtanh.pop %v3430
    %v3483 = vtanh.pop %v3432
    %v3484 = vtanh.pop %v3436
    %v3485 = vtanh.pop %v3438
    %v3486 = vtanh.pop %v3440
    %v3487 = vtanh.pop %v3442
    %v3488 = vtanh.pop %v3446
    %v3489 = vtanh.pop %v3448
    %v3490 = vtanh.pop %v3450
    %v3491 = vtanh.pop %v3452
    %v3492 = vtanh.pop %v3456
    %v3493 = vtanh.pop %v3458
    %v3494 = vtanh.pop %v3460
    %v3495 = vtanh.pop %v3462
    %3496 = vmatprep.subr.bf16.mxu0 0
    %3497 = vmatpush1.bf16.msra.mxu0 %v2870
    %3498 = vmatprep.subr.bf16.mxu0 0
    %3499 = vmatpush1.bf16.msra.mxu0 %v2871
    %3500 = vmatprep.subr.bf16.mxu0 0
    %3501 = vmatpush1.bf16.msra.mxu0 %v2872
    %3502 = vmatprep.subr.bf16.mxu0 0
    %3503 = vmatpush1.bf16.msra.mxu0 %v2873
    %3504 = vmatprep.subr.bf16.mxu0 0
    %3505 = vmatpush1.bf16.msra.mxu0 %v2874
    %3506 = vmatprep.subr.bf16.mxu0 0
    %3507 = vmatpush1.bf16.msra.mxu0 %v2875
    %3508 = vmatprep.subr.bf16.mxu0 0
    %3509 = vmatpush1.bf16.msra.mxu0 %v2876
    %3510 = vmatprep.subr.bf16.mxu0 0
    %3511 = vmatpush1.bf16.msra.mxu0 %v2877
    %3512 = vmatprep.subr.bf16.mxu0 0
    %3513 = vmatpush1.bf16.msra.mxu0 0
    %3514 = vmatprep.subr.bf16.mxu0 0
    %3515 = vmatpush1.bf16.msra.mxu0 0
    %3516 = vmatprep.subr.bf16.mxu0 0
    %3517 = vmatpush1.bf16.msra.mxu0 0
    %3518 = vmatprep.subr.bf16.mxu0 0
    %3519 = vmatpush1.bf16.msra.mxu0 0
    %3520 = vmatprep.subr.bf16.mxu0 0
    %3521 = vmatpush1.bf16.msra.mxu0 0
    %3522 = vmatprep.subr.bf16.mxu0 0
    %3523 = vmatpush1.bf16.msra.mxu0 0
    %3524 = vmatprep.subr.bf16.mxu0 0
    %3525 = vmatpush1.bf16.msra.mxu0 0
    %3526 = vmatprep.subr.bf16.mxu0 0
    %3527 = vmatpush1.bf16.msra.mxu0 0
    %3528 = vmatprep.mubr.bf16.mxu0 0
    %3529 = vmatmul.mubr.bf16.gmra.mrb[0].mxu0 %v3343
    %v3530 = vpop.f32.mrb[0].mxu0
    %v3531 = vadd.f32 0.0, %v3530
    %v3532 = vpop.f32.mrb[0].mxu0
    %v3533 = vpop.f32.mrb[0].mxu0
    %v3534 = vadd.f32 0.0, %v3533
    %v3535 = vpop.f32.mrb[0].mxu0
    %3536 = vmatprep.mubr.bf16.mxu0 0
    %3537 = vmatmul.mubr.bf16.gmra.mrb[0].mxu0 %v3344
    %v3538 = vpop.f32.mrb[0].mxu0
    %v3539 = vadd.f32 0.0, %v3538
    %v3540 = vpop.f32.mrb[0].mxu0
    %v3541 = vpop.f32.mrb[0].mxu0
    %v3542 = vadd.f32 0.0, %v3541
    %v3543 = vpop.f32.mrb[0].mxu0
    %3544 = vmatprep.mubr.bf16.mxu0 0
    %3545 = vmatmul.mubr.bf16.gmra.mrb[0].mxu0 %v3345
    %v3546 = vpop.f32.mrb[0].mxu0
    %v3547 = vadd.f32 0.0, %v3546
    %v3548 = vpop.f32.mrb[0].mxu0
    %v3549 = vpop.f32.mrb[0].mxu0
    %v3550 = vadd.f32 0.0, %v3549
    %v3551 = vpop.f32.mrb[0].mxu0
    %3552 = vmatprep.mubr.bf16.mxu0 0
    %3553 = vmatmul.mubr.bf16.gmra.mrb[0].mxu0 %v3346
    %v3554 = vpop.f32.mrb[0].mxu0
    %v3555 = vadd.f32 0.0, %v3554
    %v3556 = vpop.f32.mrb[0].mxu0
    %v3557 = vpop.f32.mrb[0].mxu0
    %v3558 = vadd.f32 0.0, %v3557
    %v3559 = vpop.f32.mrb[0].mxu0
    %3560 = vmatprep.mubr.bf16.mxu0 0
    %3561 = vmatmul.mubr.bf16.gmra.mrb[0].mxu0 %v3347
    %v3562 = vpop.f32.mrb[0].mxu0
    %v3563 = vadd.f32 0.0, %v3562
    %v3564 = vpop.f32.mrb[0].mxu0
    %v3565 = vpop.f32.mrb[0].mxu0
    %v3566 = vadd.f32 0.0, %v3565
    %v3567 = vpop.f32.mrb[0].mxu0
    %3568 = vmatprep.mubr.bf16.mxu0 0
    %3569 = vmatmul.mubr.bf16.gmra.mrb[0].mxu0 %v3348
    %v3570 = vpop.f32.mrb[0].mxu0
    %v3571 = vadd.f32 0.0, %v3570
    %v3572 = vpop.f32.mrb[0].mxu0
    %v3573 = vpop.f32.mrb[0].mxu0
    %v3574 = vadd.f32 0.0, %v3573
    %v3575 = vpop.f32.mrb[0].mxu0
    %3576 = vmatprep.mubr.bf16.mxu0 0
    %3577 = vmatmul.mubr.bf16.gmra.mrb[0].mxu0 %v3349
    %v3578 = vpop.f32.mrb[0].mxu0
    %v3579 = vadd.f32 0.0, %v3578
    %v3580 = vpop.f32.mrb[0].mxu0
    %v3581 = vpop.f32.mrb[0].mxu0
    %v3582 = vadd.f32 0.0, %v3581
    %v3583 = vpop.f32.mrb[0].mxu0
    %3584 = vmatprep.mubr.bf16.mxu0 0
    %3585 = vmatmul.mubr.bf16.gmra.mrb[0].mxu0 %v3350
    %v3586 = vpop.f32.mrb[0].mxu0
    %v3587 = vadd.f32 0.0, %v3586
    %v3588 = vpop.f32.mrb[0].mxu0
    %v3589 = vpop.f32.mrb[0].mxu0
    %v3590 = vadd.f32 0.0, %v3589
    %v3591 = vpop.f32.mrb[0].mxu0
    %3592 = vdwg.mxu0
    %v3593 = vtanh.pop %v3531
    %v3594 = vtanh.pop %v3534
    %v3595 = vtanh.pop %v3539
    %v3596 = vtanh.pop %v3542
    %v3597 = vtanh.pop %v3547
    %v3598 = vtanh.pop %v3550
    %v3599 = vtanh.pop %v3555
    %v3600 = vtanh.pop %v3558
    %v3601 = vtanh.pop %v3563
    %v3602 = vtanh.pop %v3566
    %v3603 = vtanh.pop %v3571
    %v3604 = vtanh.pop %v3574
    %v3605 = vtanh.pop %v3579
    %v3606 = vtanh.pop %v3582
    %v3607 = vtanh.pop %v3587
    %v3608 = vtanh.pop %v3590
    %v3609 = vpack.c.bf16 %v3466, %v3464
    %v3610 = vpack.c.bf16 %v3467, %v3465
    %v3611 = vpack.c.bf16 %v3470, %v3468
    %v3612 = vpack.c.bf16 %v3471, %v3469
    %v3613 = vpack.c.bf16 %v3474, %v3472
    %v3614 = vpack.c.bf16 %v3475, %v3473
    %v3615 = vpack.c.bf16 %v3478, %v3476
    %v3616 = vpack.c.bf16 %v3479, %v3477
    %v3617 = vpack.c.bf16 %v3482, %v3480
    %v3618 = vpack.c.bf16 %v3483, %v3481
    %v3619 = vpack.c.bf16 %v3486, %v3484
    %v3620 = vpack.c.bf16 %v3487, %v3485
    %v3621 = vpack.c.bf16 %v3490, %v3488
    %v3622 = vpack.c.bf16 %v3491, %v3489
    %v3623 = vpack.c.bf16 %v3494, %v3492
    %v3624 = vpack.c.bf16 %v3495, %v3493
    %v3625 = vpack.c.bf16 %v3594, %v3593
    %v3626 = vpack.c.bf16 %v3596, %v3595
    %v3627 = vpack.c.bf16 %v3598, %v3597
    %v3628 = vpack.c.bf16 %v3600, %v3599
    %v3629 = vpack.c.bf16 %v3602, %v3601
    %v3630 = vpack.c.bf16 %v3604, %v3603
    %v3631 = vpack.c.bf16 %v3606, %v3605
    %v3632 = vpack.c.bf16 %v3608, %v3607
    %vm3633 = vcmask 15360
    %v3634 = vsel %vm3633, %v2382, -inf
    %3635 = vmax.xlane.f32.xlu0 %v3634
    %v3636 = vpop.xlane.xlu0 %3635
    %v3637 = vsel %vm3633, %v2385, -inf
    %3638 = vmax.xlane.f32.xlu0 %v3637
    %v3639 = vpop.xlane.xlu0 %3638
    %v3640 = vsel %vm3633, %v2390, -inf
    %3641 = vmax.xlane.f32.xlu0 %v3640
    %v3642 = vpop.xlane.xlu0 %3641
    %v3643 = vsel %vm3633, %v2393, -inf
    %3644 = vmax.xlane.f32.xlu0 %v3643
    %v3645 = vpop.xlane.xlu0 %3644
    %v3646 = vsel %vm3633, %v2398, -inf
    %3647 = vmax.xlane.f32.xlu0 %v3646
    %v3648 = vpop.xlane.xlu0 %3647
    %v3649 = vsel %vm3633, %v2401, -inf
    %3650 = vmax.xlane.f32.xlu0 %v3649
    %v3651 = vpop.xlane.xlu0 %3650
    %v3652 = vsel %vm3633, %v2406, -inf
    %3653 = vmax.xlane.f32.xlu0 %v3652
    %v3654 = vpop.xlane.xlu0 %3653
    %v3655 = vsel %vm3633, %v2409, -inf
    %3656 = vmax.xlane.f32.xlu0 %v3655
    %v3657 = vpop.xlane.xlu0 %3656
    %v3658 = vsel %vm3633, %v2414, -inf
    %3659 = vmax.xlane.f32.xlu0 %v3658
    %v3660 = vpop.xlane.xlu0 %3659
    %v3661 = vsel %vm3633, %v2417, -inf
    %3662 = vmax.xlane.f32.xlu0 %v3661
    %v3663 = vpop.xlane.xlu0 %3662
    %v3664 = vsel %vm3633, %v2422, -inf
    %3665 = vmax.xlane.f32.xlu0 %v3664
    %v3666 = vpop.xlane.xlu0 %3665
    %v3667 = vsel %vm3633, %v2425, -inf
    %3668 = vmax.xlane.f32.xlu0 %v3667
    %v3669 = vpop.xlane.xlu0 %3668
    %v3670 = vsel %vm3633, %v2430, -inf
    %3671 = vmax.xlane.f32.xlu0 %v3670
    %v3672 = vpop.xlane.xlu0 %3671
    %v3673 = vsel %vm3633, %v2433, -inf
    %3674 = vmax.xlane.f32.xlu0 %v3673
    %v3675 = vpop.xlane.xlu0 %3674
    %v3676 = vsel %vm3633, %v2438, -inf
    %3677 = vmax.xlane.f32.xlu0 %v3676
    %v3678 = vpop.xlane.xlu0 %3677
    %v3679 = vsel %vm3633, %v2441, -inf
    %3680 = vmax.xlane.f32.xlu0 %v3679
    %v3681 = vpop.xlane.xlu0 %3680
    %v3682 = vsub.f32 %v2382, %v3636
    %v3683 = vsub.f32 %v2385, %v3639
    %v3684 = vsub.f32 %v2390, %v3642
    %v3685 = vsub.f32 %v2393, %v3645
    %v3686 = vsub.f32 %v2398, %v3648
    %v3687 = vsub.f32 %v2401, %v3651
    %v3688 = vsub.f32 %v2406, %v3654
    %v3689 = vsub.f32 %v2409, %v3657
    %v3690 = vsub.f32 %v2414, %v3660
    %v3691 = vsub.f32 %v2417, %v3663
    %v3692 = vsub.f32 %v2422, %v3666
    %v3693 = vsub.f32 %v2425, %v3669
    %v3694 = vsub.f32 %v2430, %v3672
    %v3695 = vsub.f32 %v2433, %v3675
    %v3696 = vsub.f32 %v2438, %v3678
    %v3697 = vsub.f32 %v2441, %v3681
    %v3698 = vmul.f32 %v3682, 1.442695
    %v3699 = vpow.pop %v3698
    %v3700 = vmul.f32 %v3683, 1.442695
    %v3701 = vpow.pop %v3700
    %v3702 = vmul.f32 %v3684, 1.442695
    %v3703 = vpow.pop %v3702
    %v3704 = vmul.f32 %v3685, 1.442695
    %v3705 = vpow.pop %v3704
    %v3706 = vmul.f32 %v3686, 1.442695
    %v3707 = vpow.pop %v3706
    %v3708 = vmul.f32 %v3687, 1.442695
    %v3709 = vpow.pop %v3708
    %v3710 = vmul.f32 %v3688, 1.442695
    %v3711 = vpow.pop %v3710
    %v3712 = vmul.f32 %v3689, 1.442695
    %v3713 = vpow.pop %v3712
    %v3714 = vmul.f32 %v3690, 1.442695
    %v3715 = vpow.pop %v3714
    %v3716 = vmul.f32 %v3691, 1.442695
    %v3717 = vpow.pop %v3716
    %v3718 = vmul.f32 %v3692, 1.442695
    %v3719 = vpow.pop %v3718
    %v3720 = vmul.f32 %v3693, 1.442695
    %v3721 = vpow.pop %v3720
    %v3722 = vmul.f32 %v3694, 1.442695
    %v3723 = vpow.pop %v3722
    %v3724 = vmul.f32 %v3695, 1.442695
    %v3725 = vpow.pop %v3724
    %v3726 = vmul.f32 %v3696, 1.442695
    %v3727 = vpow.pop %v3726
    %v3728 = vmul.f32 %v3697, 1.442695
    %v3729 = vpow.pop %v3728
    %v3730 = vsel %vm3633, %v3699, 0.0
    %3731 = vadd.xlane.f32.xlu0 %v3730
    %v3732 = vpop.xlane.xlu0 %3731
    %v3733 = vsel %vm3633, %v3701, 0.0
    %3734 = vadd.xlane.f32.xlu0 %v3733
    %v3735 = vpop.xlane.xlu0 %3734
    %v3736 = vsel %vm3633, %v3703, 0.0
    %3737 = vadd.xlane.f32.xlu0 %v3736
    %v3738 = vpop.xlane.xlu0 %3737
    %v3739 = vsel %vm3633, %v3705, 0.0
    %3740 = vadd.xlane.f32.xlu0 %v3739
    %v3741 = vpop.xlane.xlu0 %3740
    %v3742 = vsel %vm3633, %v3707, 0.0
    %3743 = vadd.xlane.f32.xlu0 %v3742
    %v3744 = vpop.xlane.xlu0 %3743
    %v3745 = vsel %vm3633, %v3709, 0.0
    %3746 = vadd.xlane.f32.xlu0 %v3745
    %v3747 = vpop.xlane.xlu0 %3746
    %v3748 = vsel %vm3633, %v3711, 0.0
    %3749 = vadd.xlane.f32.xlu0 %v3748
    %v3750 = vpop.xlane.xlu0 %3749
    %v3751 = vsel %vm3633, %v3713, 0.0
    %3752 = vadd.xlane.f32.xlu0 %v3751
    %v3753 = vpop.xlane.xlu0 %3752
    %v3754 = vsel %vm3633, %v3715, 0.0
    %3755 = vadd.xlane.f32.xlu0 %v3754
    %v3756 = vpop.xlane.xlu0 %3755
    %v3757 = vsel %vm3633, %v3717, 0.0
    %3758 = vadd.xlane.f32.xlu0 %v3757
    %v3759 = vpop.xlane.xlu0 %3758
    %v3760 = vsel %vm3633, %v3719, 0.0
    %3761 = vadd.xlane.f32.xlu0 %v3760
    %v3762 = vpop.xlane.xlu0 %3761
    %v3763 = vsel %vm3633, %v3721, 0.0
    %3764 = vadd.xlane.f32.xlu0 %v3763
    %v3765 = vpop.xlane.xlu0 %3764
    %v3766 = vsel %vm3633, %v3723, 0.0
    %3767 = vadd.xlane.f32.xlu0 %v3766
    %v3768 = vpop.xlane.xlu0 %3767
    %v3769 = vsel %vm3633, %v3725, 0.0
    %3770 = vadd.xlane.f32.xlu0 %v3769
    %v3771 = vpop.xlane.xlu0 %3770
    %v3772 = vsel %vm3633, %v3727, 0.0
    %3773 = vadd.xlane.f32.xlu0 %v3772
    %v3774 = vpop.xlane.xlu0 %3773
    %v3775 = vsel %vm3633, %v3729, 0.0
    %3776 = vadd.xlane.f32.xlu0 %v3775
    %v3777 = vpop.xlane.xlu0 %3776
    %v3778 = vrcp.pop %v3732
    %v3779 = vrcp.pop %v3735
    %v3780 = vrcp.pop %v3738
    %v3781 = vrcp.pop %v3741
    %v3782 = vrcp.pop %v3744
    %v3783 = vrcp.pop %v3747
    %v3784 = vrcp.pop %v3750
    %v3785 = vrcp.pop %v3753
    %v3786 = vrcp.pop %v3756
    %v3787 = vrcp.pop %v3759
    %v3788 = vrcp.pop %v3762
    %v3789 = vrcp.pop %v3765
    %v3790 = vrcp.pop %v3768
    %v3791 = vrcp.pop %v3771
    %v3792 = vrcp.pop %v3774
    %v3793 = vrcp.pop %v3777
    %v3794 = vmul.f32 %v3699, %v3778
    %v3795 = vmul.f32 %v3701, %v3779
    %v3796 = vmul.f32 %v3703, %v3780
    %v3797 = vmul.f32 %v3705, %v3781
    %v3798 = vmul.f32 %v3707, %v3782
    %v3799 = vmul.f32 %v3709, %v3783
    %v3800 = vmul.f32 %v3711, %v3784
    %v3801 = vmul.f32 %v3713, %v3785
    %v3802 = vmul.f32 %v3715, %v3786
    %v3803 = vmul.f32 %v3717, %v3787
    %v3804 = vmul.f32 %v3719, %v3788
    %v3805 = vmul.f32 %v3721, %v3789
    %v3806 = vmul.f32 %v3723, %v3790
    %v3807 = vmul.f32 %v3725, %v3791
    %v3808 = vmul.f32 %v3727, %v3792
    %v3809 = vmul.f32 %v3729, %v3793
    %3811 = vset.pattern.permute.xlu0 0
    %3812 = vperm.xlu0 %3811, %v3794
    %v3813 = vpop.permute.xlu0 %3812
    %3816 = vset.pattern.permute.xlu0 0
    %3817 = vperm.xlu0 %3816, %v3795
    %v3818 = vpop.permute.xlu0 %3817
    %3821 = vset.pattern.permute.xlu0 0
    %3822 = vperm.xlu0 %3821, %v3796
    %v3823 = vpop.permute.xlu0 %3822
    %3826 = vset.pattern.permute.xlu0 0
    %3827 = vperm.xlu0 %3826, %v3797
    %v3828 = vpop.permute.xlu0 %3827
    %3831 = vset.pattern.permute.xlu0 0
    %3832 = vperm.xlu0 %3831, %v3798
    %v3833 = vpop.permute.xlu0 %3832
    %3836 = vset.pattern.permute.xlu0 0
    %3837 = vperm.xlu0 %3836, %v3799
    %v3838 = vpop.permute.xlu0 %3837
    %3841 = vset.pattern.permute.xlu0 0
    %3842 = vperm.xlu0 %3841, %v3800
    %v3843 = vpop.permute.xlu0 %3842
    %3846 = vset.pattern.permute.xlu0 0
    %3847 = vperm.xlu0 %3846, %v3801
    %v3848 = vpop.permute.xlu0 %3847
    %3851 = vset.pattern.permute.xlu0 0
    %3852 = vperm.xlu0 %3851, %v3802
    %v3853 = vpop.permute.xlu0 %3852
    %3856 = vset.pattern.permute.xlu0 0
    %3857 = vperm.xlu0 %3856, %v3803
    %v3858 = vpop.permute.xlu0 %3857
    %3861 = vset.pattern.permute.xlu0 0
    %3862 = vperm.xlu0 %3861, %v3804
    %v3863 = vpop.permute.xlu0 %3862
    %3866 = vset.pattern.permute.xlu0 0
    %3867 = vperm.xlu0 %3866, %v3805
    %v3868 = vpop.permute.xlu0 %3867
    %3871 = vset.pattern.permute.xlu0 0
    %3872 = vperm.xlu0 %3871, %v3806
    %v3873 = vpop.permute.xlu0 %3872
    %3876 = vset.pattern.permute.xlu0 0
    %3877 = vperm.xlu0 %3876, %v3807
    %v3878 = vpop.permute.xlu0 %3877
    %3881 = vset.pattern.permute.xlu0 0
    %3882 = vperm.xlu0 %3881, %v3808
    %v3883 = vpop.permute.xlu0 %3882
    %3886 = vset.pattern.permute.xlu0 0
    %3887 = vperm.xlu0 %3886, %v3809
    %v3888 = vpop.permute.xlu0 %3887
    %v3890 = vmul.f32 %v3813, %v316
    %v3891 = vmul.f32 %v3813, %v317
    %v3892 = vmul.f32 %v3818, %v318
    %v3893 = vmul.f32 %v3818, %v319
    %v3894 = vmul.f32 %v3823, %v320
    %v3895 = vmul.f32 %v3823, %v321
    %v3896 = vmul.f32 %v3828, %v322
    %v3897 = vmul.f32 %v3828, %v323
    %v3898 = vmul.f32 %v3833, %v324
    %v3899 = vmul.f32 %v3833, %v325
    %v3900 = vmul.f32 %v3838, %v326
    %v3901 = vmul.f32 %v3838, %v327
    %v3902 = vmul.f32 %v3843, %v328
    %v3903 = vmul.f32 %v3843, %v329
    %v3904 = vmul.f32 %v3848, %v330
    %v3905 = vmul.f32 %v3848, %v331
    %v3906 = vmul.f32 %v3853, %v332
    %v3907 = vmul.f32 %v3853, %v333
    %v3908 = vmul.f32 %v3858, %v334
    %v3909 = vmul.f32 %v3858, %v335
    %v3910 = vmul.f32 %v3863, %v336
    %v3911 = vmul.f32 %v3863, %v337
    %v3912 = vmul.f32 %v3868, %v338
    %v3913 = vmul.f32 %v3868, %v339
    %v3914 = vmul.f32 %v3873, %v340
    %v3915 = vmul.f32 %v3873, %v341
    %v3916 = vmul.f32 %v3878, %v342
    %v3917 = vmul.f32 %v3878, %v343
    %v3918 = vmul.f32 %v3883, %v344
    %v3919 = vmul.f32 %v3883, %v345
    %v3920 = vmul.f32 %v3888, %v346
    %v3921 = vmul.f32 %v3888, %v347
    %3922 = vset.pattern.permute.xlu0 1
    %3923 = vperm.xlu0 %3922, %v3794
    %v3924 = vpop.permute.xlu0 %3923
    %3926 = vset.pattern.permute.xlu0 1
    %3927 = vperm.xlu0 %3926, %v3795
    %v3928 = vpop.permute.xlu0 %3927
    %3930 = vset.pattern.permute.xlu0 1
    %3931 = vperm.xlu0 %3930, %v3796
    %v3932 = vpop.permute.xlu0 %3931
    %3934 = vset.pattern.permute.xlu0 1
    %3935 = vperm.xlu0 %3934, %v3797
    %v3936 = vpop.permute.xlu0 %3935
    %3938 = vset.pattern.permute.xlu0 1
    %3939 = vperm.xlu0 %3938, %v3798
    %v3940 = vpop.permute.xlu0 %3939
    %3942 = vset.pattern.permute.xlu0 1
    %3943 = vperm.xlu0 %3942, %v3799
    %v3944 = vpop.permute.xlu0 %3943
    %3946 = vset.pattern.permute.xlu0 1
    %3947 = vperm.xlu0 %3946, %v3800
    %v3948 = vpop.permute.xlu0 %3947
    %3950 = vset.pattern.permute.xlu0 1
    %3951 = vperm.xlu0 %3950, %v3801
    %v3952 = vpop.permute.xlu0 %3951
    %3954 = vset.pattern.permute.xlu0 1
    %3955 = vperm.xlu0 %3954, %v3802
    %v3956 = vpop.permute.xlu0 %3955
    %3958 = vset.pattern.permute.xlu0 1
    %3959 = vperm.xlu0 %3958, %v3803
    %v3960 = vpop.permute.xlu0 %3959
    %3962 = vset.pattern.permute.xlu0 1
    %3963 = vperm.xlu0 %3962, %v3804
    %v3964 = vpop.permute.xlu0 %3963
    %3966 = vset.pattern.permute.xlu0 1
    %3967 = vperm.xlu0 %3966, %v3805
    %v3968 = vpop.permute.xlu0 %3967
    %3970 = vset.pattern.permute.xlu0 1
    %3971 = vperm.xlu0 %3970, %v3806
    %v3972 = vpop.permute.xlu0 %3971
    %3974 = vset.pattern.permute.xlu0 1
    %3975 = vperm.xlu0 %3974, %v3807
    %v3976 = vpop.permute.xlu0 %3975
    %3978 = vset.pattern.permute.xlu0 1
    %3979 = vperm.xlu0 %3978, %v3808
    %v3980 = vpop.permute.xlu0 %3979
    %3982 = vset.pattern.permute.xlu0 1
    %3983 = vperm.xlu0 %3982, %v3809
    %v3984 = vpop.permute.xlu0 %3983
    %v3986 = vmul.f32 %v3924, %v1745
    %v3987 = vmul.f32 %v3924, %v1746
    %v3988 = vmul.f32 %v3928, %v1747
    %v3989 = vmul.f32 %v3928, %v1748
    %v3990 = vmul.f32 %v3932, %v1749
    %v3991 = vmul.f32 %v3932, %v1750
    %v3992 = vmul.f32 %v3936, %v1751
    %v3993 = vmul.f32 %v3936, %v1752
    %v3994 = vmul.f32 %v3940, %v1753
    %v3995 = vmul.f32 %v3940, %v1754
    %v3996 = vmul.f32 %v3944, %v1755
    %v3997 = vmul.f32 %v3944, %v1756
    %v3998 = vmul.f32 %v3948, %v1757
    %v3999 = vmul.f32 %v3948, %v1758
    %v4000 = vmul.f32 %v3952, %v1759
    %v4001 = vmul.f32 %v3952, %v1760
    %v4002 = vmul.f32 %v3956, %v1761
    %v4003 = vmul.f32 %v3956, %v1762
    %v4004 = vmul.f32 %v3960, %v1763
    %v4005 = vmul.f32 %v3960, %v1764
    %v4006 = vmul.f32 %v3964, %v1765
    %v4007 = vmul.f32 %v3964, %v1766
    %v4008 = vmul.f32 %v3968, %v1767
    %v4009 = vmul.f32 %v3968, %v1768
    %v4010 = vmul.f32 %v3972, %v1769
    %v4011 = vmul.f32 %v3972, %v1770
    %v4012 = vmul.f32 %v3976, %v1771
    %v4013 = vmul.f32 %v3976, %v1772
    %v4014 = vmul.f32 %v3980, %v1773
    %v4015 = vmul.f32 %v3980, %v1774
    %v4016 = vmul.f32 %v3984, %v1775
    %v4017 = vmul.f32 %v3984, %v1776
    %v4018 = vadd.f32 %v3890, %v3986
    %v4019 = vadd.f32 %v3891, %v3987
    %v4020 = vadd.f32 %v3892, %v3988
    %v4021 = vadd.f32 %v3893, %v3989
    %v4022 = vadd.f32 %v3894, %v3990
    %v4023 = vadd.f32 %v3895, %v3991
    %v4024 = vadd.f32 %v3896, %v3992
    %v4025 = vadd.f32 %v3897, %v3993
    %v4026 = vadd.f32 %v3898, %v3994
    %v4027 = vadd.f32 %v3899, %v3995
    %v4028 = vadd.f32 %v3900, %v3996
    %v4029 = vadd.f32 %v3901, %v3997
    %v4030 = vadd.f32 %v3902, %v3998
    %v4031 = vadd.f32 %v3903, %v3999
    %v4032 = vadd.f32 %v3904, %v4000
    %v4033 = vadd.f32 %v3905, %v4001
    %v4034 = vadd.f32 %v3906, %v4002
    %v4035 = vadd.f32 %v3907, %v4003
    %v4036 = vadd.f32 %v3908, %v4004
    %v4037 = vadd.f32 %v3909, %v4005
    %v4038 = vadd.f32 %v3910, %v4006
    %v4039 = vadd.f32 %v3911, %v4007
    %v4040 = vadd.f32 %v3912, %v4008
    %v4041 = vadd.f32 %v3913, %v4009
    %v4042 = vadd.f32 %v3914, %v4010
    %v4043 = vadd.f32 %v3915, %v4011
    %v4044 = vadd.f32 %v3916, %v4012
    %v4045 = vadd.f32 %v3917, %v4013
    %v4046 = vadd.f32 %v3918, %v4014
    %v4047 = vadd.f32 %v3919, %v4015
    %v4048 = vadd.f32 %v3920, %v4016
    %v4049 = vadd.f32 %v3921, %v4017
    %v4050 = vmax.f32 %v4018, 0.0
    %v4051 = vmax.f32 %v4019, 0.0
    %v4052 = vmax.f32 %v4020, 0.0
    %v4053 = vmax.f32 %v4021, 0.0
    %v4054 = vmax.f32 %v4022, 0.0
    %v4055 = vmax.f32 %v4023, 0.0
    %v4056 = vmax.f32 %v4024, 0.0
    %v4057 = vmax.f32 %v4025, 0.0
    %v4058 = vmax.f32 %v4026, 0.0
    %v4059 = vmax.f32 %v4027, 0.0
    %v4060 = vmax.f32 %v4028, 0.0
    %v4061 = vmax.f32 %v4029, 0.0
    %v4062 = vmax.f32 %v4030, 0.0
    %v4063 = vmax.f32 %v4031, 0.0
    %v4064 = vmax.f32 %v4032, 0.0
    %v4065 = vmax.f32 %v4033, 0.0
    %v4066 = vmax.f32 %v4034, 0.0
    %v4067 = vmax.f32 %v4035, 0.0
    %v4068 = vmax.f32 %v4036, 0.0
    %v4069 = vmax.f32 %v4037, 0.0
    %v4070 = vmax.f32 %v4038, 0.0
    %v4071 = vmax.f32 %v4039, 0.0
    %v4072 = vmax.f32 %v4040, 0.0
    %v4073 = vmax.f32 %v4041, 0.0
    %v4074 = vmax.f32 %v4042, 0.0
    %v4075 = vmax.f32 %v4043, 0.0
    %v4076 = vmax.f32 %v4044, 0.0
    %v4077 = vmax.f32 %v4045, 0.0
    %v4078 = vmax.f32 %v4046, 0.0
    %v4079 = vmax.f32 %v4047, 0.0
    %v4080 = vmax.f32 %v4048, 0.0
    %v4081 = vmax.f32 %v4049, 0.0
    %v4082 = vsel %vm3633, %v2786, -inf
    %4083 = vmax.xlane.f32.xlu0 %v4082
    %v4084 = vpop.xlane.xlu0 %4083
    %v4085 = vsel %vm3633, %v2790, -inf
    %4086 = vmax.xlane.f32.xlu0 %v4085
    %v4087 = vpop.xlane.xlu0 %4086
    %v4088 = vsel %vm3633, %v2796, -inf
    %4089 = vmax.xlane.f32.xlu0 %v4088
    %v4090 = vpop.xlane.xlu0 %4089
    %v4091 = vsel %vm3633, %v2800, -inf
    %4092 = vmax.xlane.f32.xlu0 %v4091
    %v4093 = vpop.xlane.xlu0 %4092
    %v4094 = vsel %vm3633, %v2806, -inf
    %4095 = vmax.xlane.f32.xlu0 %v4094
    %v4096 = vpop.xlane.xlu0 %4095
    %v4097 = vsel %vm3633, %v2810, -inf
    %4098 = vmax.xlane.f32.xlu0 %v4097
    %v4099 = vpop.xlane.xlu0 %4098
    %v4100 = vsel %vm3633, %v2816, -inf
    %4101 = vmax.xlane.f32.xlu0 %v4100
    %v4102 = vpop.xlane.xlu0 %4101
    %v4103 = vsel %vm3633, %v2820, -inf
    %4104 = vmax.xlane.f32.xlu0 %v4103
    %v4105 = vpop.xlane.xlu0 %4104
    %v4106 = vsel %vm3633, %v2826, -inf
    %4107 = vmax.xlane.f32.xlu0 %v4106
    %v4108 = vpop.xlane.xlu0 %4107
    %v4109 = vsel %vm3633, %v2830, -inf
    %4110 = vmax.xlane.f32.xlu0 %v4109
    %v4111 = vpop.xlane.xlu0 %4110
    %v4112 = vsel %vm3633, %v2836, -inf
    %4113 = vmax.xlane.f32.xlu0 %v4112
    %v4114 = vpop.xlane.xlu0 %4113
    %v4115 = vsel %vm3633, %v2840, -inf
    %4116 = vmax.xlane.f32.xlu0 %v4115
    %v4117 = vpop.xlane.xlu0 %4116
    %v4118 = vsel %vm3633, %v2846, -inf
    %4119 = vmax.xlane.f32.xlu0 %v4118
    %v4120 = vpop.xlane.xlu0 %4119
    %v4121 = vsel %vm3633, %v2850, -inf
    %4122 = vmax.xlane.f32.xlu0 %v4121
    %v4123 = vpop.xlane.xlu0 %4122
    %v4124 = vsel %vm3633, %v2856, -inf
    %4125 = vmax.xlane.f32.xlu0 %v4124
    %v4126 = vpop.xlane.xlu0 %4125
    %v4127 = vsel %vm3633, %v2860, -inf
    %4128 = vmax.xlane.f32.xlu0 %v4127
    %v4129 = vpop.xlane.xlu0 %4128
    %v4130 = vsub.f32 %v2786, %v4084
    %v4131 = vsub.f32 %v2790, %v4087
    %v4132 = vsub.f32 %v2796, %v4090
    %v4133 = vsub.f32 %v2800, %v4093
    %v4134 = vsub.f32 %v2806, %v4096
    %v4135 = vsub.f32 %v2810, %v4099
    %v4136 = vsub.f32 %v2816, %v4102
    %v4137 = vsub.f32 %v2820, %v4105
    %v4138 = vsub.f32 %v2826, %v4108
    %v4139 = vsub.f32 %v2830, %v4111
    %v4140 = vsub.f32 %v2836, %v4114
    %v4141 = vsub.f32 %v2840, %v4117
    %v4142 = vsub.f32 %v2846, %v4120
    %v4143 = vsub.f32 %v2850, %v4123
    %v4144 = vsub.f32 %v2856, %v4126
    %v4145 = vsub.f32 %v2860, %v4129
    %v4146 = vmul.f32 %v4130, 1.442695
    %v4147 = vpow.pop %v4146
    %v4148 = vmul.f32 %v4131, 1.442695
    %v4149 = vpow.pop %v4148
    %v4150 = vmul.f32 %v4132, 1.442695
    %v4151 = vpow.pop %v4150
    %v4152 = vmul.f32 %v4133, 1.442695
    %v4153 = vpow.pop %v4152
    %v4154 = vmul.f32 %v4134, 1.442695
    %v4155 = vpow.pop %v4154
    %v4156 = vmul.f32 %v4135, 1.442695
    %v4157 = vpow.pop %v4156
    %v4158 = vmul.f32 %v4136, 1.442695
    %v4159 = vpow.pop %v4158
    %v4160 = vmul.f32 %v4137, 1.442695
    %v4161 = vpow.pop %v4160
    %v4162 = vmul.f32 %v4138, 1.442695
    %v4163 = vpow.pop %v4162
    %v4164 = vmul.f32 %v4139, 1.442695
    %v4165 = vpow.pop %v4164
    %v4166 = vmul.f32 %v4140, 1.442695
    %v4167 = vpow.pop %v4166
    %v4168 = vmul.f32 %v4141, 1.442695
    %v4169 = vpow.pop %v4168
    %v4170 = vmul.f32 %v4142, 1.442695
    %v4171 = vpow.pop %v4170
    %v4172 = vmul.f32 %v4143, 1.442695
    %v4173 = vpow.pop %v4172
    %v4174 = vmul.f32 %v4144, 1.442695
    %v4175 = vpow.pop %v4174
    %v4176 = vmul.f32 %v4145, 1.442695
    %v4177 = vpow.pop %v4176
    %v4178 = vsel %vm3633, %v4147, 0.0
    %4179 = vadd.xlane.f32.xlu0 %v4178
    %v4180 = vpop.xlane.xlu0 %4179
    %v4181 = vsel %vm3633, %v4149, 0.0
    %4182 = vadd.xlane.f32.xlu0 %v4181
    %v4183 = vpop.xlane.xlu0 %4182
    %v4184 = vsel %vm3633, %v4151, 0.0
    %4185 = vadd.xlane.f32.xlu0 %v4184
    %v4186 = vpop.xlane.xlu0 %4185
    %v4187 = vsel %vm3633, %v4153, 0.0
    %4188 = vadd.xlane.f32.xlu0 %v4187
    %v4189 = vpop.xlane.xlu0 %4188
    %v4190 = vsel %vm3633, %v4155, 0.0
    %4191 = vadd.xlane.f32.xlu0 %v4190
    %v4192 = vpop.xlane.xlu0 %4191
    %v4193 = vsel %vm3633, %v4157, 0.0
    %4194 = vadd.xlane.f32.xlu0 %v4193
    %v4195 = vpop.xlane.xlu0 %4194
    %v4196 = vsel %vm3633, %v4159, 0.0
    %4197 = vadd.xlane.f32.xlu0 %v4196
    %v4198 = vpop.xlane.xlu0 %4197
    %v4199 = vsel %vm3633, %v4161, 0.0
    %4200 = vadd.xlane.f32.xlu0 %v4199
    %v4201 = vpop.xlane.xlu0 %4200
    %v4202 = vsel %vm3633, %v4163, 0.0
    %4203 = vadd.xlane.f32.xlu0 %v4202
    %v4204 = vpop.xlane.xlu0 %4203
    %v4205 = vsel %vm3633, %v4165, 0.0
    %4206 = vadd.xlane.f32.xlu0 %v4205
    %v4207 = vpop.xlane.xlu0 %4206
    %v4208 = vsel %vm3633, %v4167, 0.0
    %4209 = vadd.xlane.f32.xlu0 %v4208
    %v4210 = vpop.xlane.xlu0 %4209
    %v4211 = vsel %vm3633, %v4169, 0.0
    %4212 = vadd.xlane.f32.xlu0 %v4211
    %v4213 = vpop.xlane.xlu0 %4212
    %v4214 = vsel %vm3633, %v4171, 0.0
    %4215 = vadd.xlane.f32.xlu0 %v4214
    %v4216 = vpop.xlane.xlu0 %4215
    %v4217 = vsel %vm3633, %v4173, 0.0
    %4218 = vadd.xlane.f32.xlu0 %v4217
    %v4219 = vpop.xlane.xlu0 %4218
    %v4220 = vsel %vm3633, %v4175, 0.0
    %4221 = vadd.xlane.f32.xlu0 %v4220
    %v4222 = vpop.xlane.xlu0 %4221
    %v4223 = vsel %vm3633, %v4177, 0.0
    %4224 = vadd.xlane.f32.xlu0 %v4223
    %v4225 = vpop.xlane.xlu0 %4224
    %v4226 = vrcp.pop %v4180
    %v4227 = vrcp.pop %v4183
    %v4228 = vrcp.pop %v4186
    %v4229 = vrcp.pop %v4189
    %v4230 = vrcp.pop %v4192
    %v4231 = vrcp.pop %v4195
    %v4232 = vrcp.pop %v4198
    %v4233 = vrcp.pop %v4201
    %v4234 = vrcp.pop %v4204
    %v4235 = vrcp.pop %v4207
    %v4236 = vrcp.pop %v4210
    %v4237 = vrcp.pop %v4213
    %v4238 = vrcp.pop %v4216
    %v4239 = vrcp.pop %v4219
    %v4240 = vrcp.pop %v4222
    %v4241 = vrcp.pop %v4225
    %v4242 = vmul.f32 %v4147, %v4226
    %v4243 = vmul.f32 %v4149, %v4227
    %v4244 = vmul.f32 %v4151, %v4228
    %v4245 = vmul.f32 %v4153, %v4229
    %v4246 = vmul.f32 %v4155, %v4230
    %v4247 = vmul.f32 %v4157, %v4231
    %v4248 = vmul.f32 %v4159, %v4232
    %v4249 = vmul.f32 %v4161, %v4233
    %v4250 = vmul.f32 %v4163, %v4234
    %v4251 = vmul.f32 %v4165, %v4235
    %v4252 = vmul.f32 %v4167, %v4236
    %v4253 = vmul.f32 %v4169, %v4237
    %v4254 = vmul.f32 %v4171, %v4238
    %v4255 = vmul.f32 %v4173, %v4239
    %v4256 = vmul.f32 %v4175, %v4240
    %v4257 = vmul.f32 %v4177, %v4241
    %4259 = vset.pattern.permute.xlu0 0
    %4260 = vperm.xlu0 %4259, %v4242
    %v4261 = vpop.permute.xlu0 %4260
    %4264 = vset.pattern.permute.xlu0 0
    %4265 = vperm.xlu0 %4264, %v4243
    %v4266 = vpop.permute.xlu0 %4265
    %4269 = vset.pattern.permute.xlu0 0
    %4270 = vperm.xlu0 %4269, %v4244
    %v4271 = vpop.permute.xlu0 %4270
    %4274 = vset.pattern.permute.xlu0 0
    %4275 = vperm.xlu0 %4274, %v4245
    %v4276 = vpop.permute.xlu0 %4275
    %4279 = vset.pattern.permute.xlu0 0
    %4280 = vperm.xlu0 %4279, %v4246
    %v4281 = vpop.permute.xlu0 %4280
    %4284 = vset.pattern.permute.xlu0 0
    %4285 = vperm.xlu0 %4284, %v4247
    %v4286 = vpop.permute.xlu0 %4285
    %4289 = vset.pattern.permute.xlu0 0
    %4290 = vperm.xlu0 %4289, %v4248
    %v4291 = vpop.permute.xlu0 %4290
    %4294 = vset.pattern.permute.xlu0 0
    %4295 = vperm.xlu0 %4294, %v4249
    %v4296 = vpop.permute.xlu0 %4295
    %4299 = vset.pattern.permute.xlu0 0
    %4300 = vperm.xlu0 %4299, %v4250
    %v4301 = vpop.permute.xlu0 %4300
    %4304 = vset.pattern.permute.xlu0 0
    %4305 = vperm.xlu0 %4304, %v4251
    %v4306 = vpop.permute.xlu0 %4305
    %4309 = vset.pattern.permute.xlu0 0
    %4310 = vperm.xlu0 %4309, %v4252
    %v4311 = vpop.permute.xlu0 %4310
    %4314 = vset.pattern.permute.xlu0 0
    %4315 = vperm.xlu0 %4314, %v4253
    %v4316 = vpop.permute.xlu0 %4315
    %4319 = vset.pattern.permute.xlu0 0
    %4320 = vperm.xlu0 %4319, %v4254
    %v4321 = vpop.permute.xlu0 %4320
    %4324 = vset.pattern.permute.xlu0 0
    %4325 = vperm.xlu0 %4324, %v4255
    %v4326 = vpop.permute.xlu0 %4325
    %4329 = vset.pattern.permute.xlu0 0
    %4330 = vperm.xlu0 %4329, %v4256
    %v4331 = vpop.permute.xlu0 %4330
    %4334 = vset.pattern.permute.xlu0 0
    %4335 = vperm.xlu0 %4334, %v4257
    %v4336 = vpop.permute.xlu0 %4335
    %v4338 = vmul.f32 %v4261, %v428
    %v4339 = vmul.f32 %v4266, %v429
    %v4340 = vmul.f32 %v4271, %v430
    %v4341 = vmul.f32 %v4276, %v431
    %v4342 = vmul.f32 %v4281, %v432
    %v4343 = vmul.f32 %v4286, %v433
    %v4344 = vmul.f32 %v4291, %v434
    %v4345 = vmul.f32 %v4296, %v435
    %v4346 = vmul.f32 %v4301, %v436
    %v4347 = vmul.f32 %v4306, %v437
    %v4348 = vmul.f32 %v4311, %v438
    %v4349 = vmul.f32 %v4316, %v439
    %v4350 = vmul.f32 %v4321, %v440
    %v4351 = vmul.f32 %v4326, %v441
    %v4352 = vmul.f32 %v4331, %v442
    %v4353 = vmul.f32 %v4336, %v443
    %4354 = vset.pattern.permute.xlu0 1
    %4355 = vperm.xlu0 %4354, %v4242
    %v4356 = vpop.permute.xlu0 %4355
    %4358 = vset.pattern.permute.xlu0 1
    %4359 = vperm.xlu0 %4358, %v4243
    %v4360 = vpop.permute.xlu0 %4359
    %4362 = vset.pattern.permute.xlu0 1
    %4363 = vperm.xlu0 %4362, %v4244
    %v4364 = vpop.permute.xlu0 %4363
    %4366 = vset.pattern.permute.xlu0 1
    %4367 = vperm.xlu0 %4366, %v4245
    %v4368 = vpop.permute.xlu0 %4367
    %4370 = vset.pattern.permute.xlu0 1
    %4371 = vperm.xlu0 %4370, %v4246
    %v4372 = vpop.permute.xlu0 %4371
    %4374 = vset.pattern.permute.xlu0 1
    %4375 = vperm.xlu0 %4374, %v4247
    %v4376 = vpop.permute.xlu0 %4375
    %4378 = vset.pattern.permute.xlu0 1
    %4379 = vperm.xlu0 %4378, %v4248
    %v4380 = vpop.permute.xlu0 %4379
    %4382 = vset.pattern.permute.xlu0 1
    %4383 = vperm.xlu0 %4382, %v4249
    %v4384 = vpop.permute.xlu0 %4383
    %4386 = vset.pattern.permute.xlu0 1
    %4387 = vperm.xlu0 %4386, %v4250
    %v4388 = vpop.permute.xlu0 %4387
    %4390 = vset.pattern.permute.xlu0 1
    %4391 = vperm.xlu0 %4390, %v4251
    %v4392 = vpop.permute.xlu0 %4391
    %4394 = vset.pattern.permute.xlu0 1
    %4395 = vperm.xlu0 %4394, %v4252
    %v4396 = vpop.permute.xlu0 %4395
    %4398 = vset.pattern.permute.xlu0 1
    %4399 = vperm.xlu0 %4398, %v4253
    %v4400 = vpop.permute.xlu0 %4399
    %4402 = vset.pattern.permute.xlu0 1
    %4403 = vperm.xlu0 %4402, %v4254
    %v4404 = vpop.permute.xlu0 %4403
    %4406 = vset.pattern.permute.xlu0 1
    %4407 = vperm.xlu0 %4406, %v4255
    %v4408 = vpop.permute.xlu0 %4407
    %4410 = vset.pattern.permute.xlu0 1
    %4411 = vperm.xlu0 %4410, %v4256
    %v4412 = vpop.permute.xlu0 %4411
    %4414 = vset.pattern.permute.xlu0 1
    %4415 = vperm.xlu0 %4414, %v4257
    %v4416 = vpop.permute.xlu0 %4415
    %v4418 = vmul.f32 %v4356, %v1874
    %v4419 = vmul.f32 %v4360, %v1875
    %v4420 = vmul.f32 %v4364, %v1876
    %v4421 = vmul.f32 %v4368, %v1877
    %v4422 = vmul.f32 %v4372, %v1878
    %v4423 = vmul.f32 %v4376, %v1879
    %v4424 = vmul.f32 %v4380, %v1880
    %v4425 = vmul.f32 %v4384, %v1881
    %v4426 = vmul.f32 %v4388, %v1882
    %v4427 = vmul.f32 %v4392, %v1883
    %v4428 = vmul.f32 %v4396, %v1884
    %v4429 = vmul.f32 %v4400, %v1885
    %v4430 = vmul.f32 %v4404, %v1886
    %v4431 = vmul.f32 %v4408, %v1887
    %v4432 = vmul.f32 %v4412, %v1888
    %v4433 = vmul.f32 %v4416, %v1889
    %v4434 = vadd.f32 %v4338, %v4418
    %v4435 = vadd.f32 %v4339, %v4419
    %v4436 = vadd.f32 %v4340, %v4420
    %v4437 = vadd.f32 %v4341, %v4421
    %v4438 = vadd.f32 %v4342, %v4422
    %v4439 = vadd.f32 %v4343, %v4423
    %v4440 = vadd.f32 %v4344, %v4424
    %v4441 = vadd.f32 %v4345, %v4425
    %v4442 = vadd.f32 %v4346, %v4426
    %v4443 = vadd.f32 %v4347, %v4427
    %v4444 = vadd.f32 %v4348, %v4428
    %v4445 = vadd.f32 %v4349, %v4429
    %v4446 = vadd.f32 %v4350, %v4430
    %v4447 = vadd.f32 %v4351, %v4431
    %v4448 = vadd.f32 %v4352, %v4432
    %v4449 = vadd.f32 %v4353, %v4433
    %v4450 = vmax.f32 %v4434, 0.0
    %v4451 = vmax.f32 %v4435, 0.0
    %v4452 = vmax.f32 %v4436, 0.0
    %v4453 = vmax.f32 %v4437, 0.0
    %v4454 = vmax.f32 %v4438, 0.0
    %v4455 = vmax.f32 %v4439, 0.0
    %v4456 = vmax.f32 %v4440, 0.0
    %v4457 = vmax.f32 %v4441, 0.0
    %v4458 = vmax.f32 %v4442, 0.0
    %v4459 = vmax.f32 %v4443, 0.0
    %v4460 = vmax.f32 %v4444, 0.0
    %v4461 = vmax.f32 %v4445, 0.0
    %v4462 = vmax.f32 %v4446, 0.0
    %v4463 = vmax.f32 %v4447, 0.0
    %v4464 = vmax.f32 %v4448, 0.0
    %v4465 = vmax.f32 %v4449, 0.0
    %v4466 = vld [vmem:[#allocation14] sm:$0xf]
    %v4467 = vld [vmem:[#allocation14 + $0x4] sm:$0xf]
    %v4468 = vld [vmem:[#allocation14 + $0x8] sm:$0xf]
    %v4469 = vld [vmem:[#allocation14 + $0xc] sm:$0xf]
    %v4470 = vld [vmem:[#allocation14 + $0x10] sm:$0xf]
    %v4471 = vld [vmem:[#allocation14 + $0x14] sm:$0xf]
    %v4472 = vld [vmem:[#allocation14 + $0x18] sm:$0xf]
    %v4473 = vld [vmem:[#allocation14 + $0x1c] sm:$0xf]
    %v4474 = vld [vmem:[#allocation14 + $0x20] sm:$0xf]
    %v4475 = vld [vmem:[#allocation14 + $0x24] sm:$0xf]
    %v4476 = vld [vmem:[#allocation14 + $0x28] sm:$0xf]
    %v4477 = vld [vmem:[#allocation14 + $0x2c] sm:$0xf]
    %v4478 = vld [vmem:[#allocation14 + $0x30] sm:$0xf]
    %v4479 = vld [vmem:[#allocation14 + $0x34] sm:$0xf]
    %v4480 = vld [vmem:[#allocation14 + $0x38] sm:$0xf]
    %v4481 = vld [vmem:[#allocation14 + $0x3c] sm:$0xf]
    %v4482 = vld [vmem:[#allocation14 + $0x40] sm:$0xf]
    %v4483 = vld [vmem:[#allocation14 + $0x44] sm:$0xf]
    %v4484 = vld [vmem:[#allocation14 + $0x48] sm:$0xf]
    %v4485 = vld [vmem:[#allocation14 + $0x4c] sm:$0xf]
    %v4486 = vld [vmem:[#allocation14 + $0x50] sm:$0xf]
    %v4487 = vld [vmem:[#allocation14 + $0x54] sm:$0xf]
    %v4488 = vld [vmem:[#allocation14 + $0x58] sm:$0xf]
    %v4489 = vld [vmem:[#allocation14 + $0x5c] sm:$0xf]
    %v4490 = vld [vmem:[#allocation14 + $0x60] sm:$0xf]
    %v4491 = vld [vmem:[#allocation14 + $0x64] sm:$0xf]
    %v4492 = vld [vmem:[#allocation14 + $0x68] sm:$0xf]
    %v4493 = vld [vmem:[#allocation14 + $0x6c] sm:$0xf]
    %v4494 = vld [vmem:[#allocation14 + $0x70] sm:$0xf]
    %v4495 = vld [vmem:[#allocation14 + $0x74] sm:$0xf]
    %v4496 = vld [vmem:[#allocation14 + $0x78] sm:$0xf]
    %v4497 = vld [vmem:[#allocation14 + $0x7c] sm:$0xf]
    %v4530 = vunpack.c.l.b16 %v4466
    %v4531 = vunpack.c.l.b16 %v4467
    %v4532 = vunpack.c.l.b16 %v4468
    %v4533 = vunpack.c.l.b16 %v4469
    %v4534 = vunpack.c.l.b16 %v4470
    %v4535 = vunpack.c.l.b16 %v4471
    %v4536 = vunpack.c.l.b16 %v4472
    %v4537 = vunpack.c.l.b16 %v4473
    %v4538 = vunpack.c.l.b16 %v4474
    %v4539 = vunpack.c.l.b16 %v4475
    %v4540 = vunpack.c.l.b16 %v4476
    %v4541 = vunpack.c.l.b16 %v4477
    %v4542 = vunpack.c.l.b16 %v4478
    %v4543 = vunpack.c.l.b16 %v4479
    %v4544 = vunpack.c.l.b16 %v4480
    %v4545 = vunpack.c.l.b16 %v4481
    %v4546 = vunpack.c.l.b16 %v4482
    %v4547 = vunpack.c.l.b16 %v4483
    %v4548 = vunpack.c.l.b16 %v4484
    %v4549 = vunpack.c.l.b16 %v4485
    %v4550 = vunpack.c.l.b16 %v4486
    %v4551 = vunpack.c.l.b16 %v4487
    %v4552 = vunpack.c.l.b16 %v4488
    %v4553 = vunpack.c.l.b16 %v4489
    %v4554 = vunpack.c.l.b16 %v4490
    %v4555 = vunpack.c.l.b16 %v4491
    %v4556 = vunpack.c.l.b16 %v4492
    %v4557 = vunpack.c.l.b16 %v4493
    %v4558 = vunpack.c.l.b16 %v4494
    %v4559 = vunpack.c.l.b16 %v4495
    %v4560 = vunpack.c.l.b16 %v4496
    %v4561 = vunpack.c.l.b16 %v4497
    %v4562 = vpack.c.b16 %v4531, %v4530
    %v4563 = vpack.c.b16 %v4533, %v4532
    %v4564 = vpack.c.b16 %v4535, %v4534
    %v4565 = vpack.c.b16 %v4537, %v4536
    %v4566 = vpack.c.b16 %v4539, %v4538
    %v4567 = vpack.c.b16 %v4541, %v4540
    %v4568 = vpack.c.b16 %v4543, %v4542
    %v4569 = vpack.c.b16 %v4545, %v4544
    %v4570 = vpack.c.b16 %v4547, %v4546
    %v4571 = vpack.c.b16 %v4549, %v4548
    %v4572 = vpack.c.b16 %v4551, %v4550
    %v4573 = vpack.c.b16 %v4553, %v4552
    %v4574 = vpack.c.b16 %v4555, %v4554
    %v4575 = vpack.c.b16 %v4557, %v4556
    %v4576 = vpack.c.b16 %v4559, %v4558
    %v4577 = vpack.c.b16 %v4561, %v4560
    %4594 = vmatprep.subr.bf16.mxu0 0
    %4595 = vmatpush1.bf16.msra.mxu0 %v4562
    %4596 = vmatprep.subr.bf16.mxu0 0
    %4597 = vmatpush1.bf16.msra.mxu0 %v4563
    %4598 = vmatprep.subr.bf16.mxu0 0
    %4599 = vmatpush1.bf16.msra.mxu0 %v4564
    %4600 = vmatprep.subr.bf16.mxu0 0
    %4601 = vmatpush1.bf16.msra.mxu0 %v4565
    %4602 = vmatprep.subr.bf16.mxu0 0
    %4603 = vmatpush1.bf16.msra.mxu0 %v4566
    %4604 = vmatprep.subr.bf16.mxu0 0
    %4605 = vmatpush1.bf16.msra.mxu0 %v4567
    %4606 = vmatprep.subr.bf16.mxu0 0
    %4607 = vmatpush1.bf16.msra.mxu0 %v4568
    %4608 = vmatprep.subr.bf16.mxu0 0
    %4609 = vmatpush1.bf16.msra.mxu0 %v4569
    %4610 = vmatprep.subr.bf16.mxu0 0
    %4611 = vmatpush1.bf16.msra.mxu0 %v4570
    %4612 = vmatprep.subr.bf16.mxu0 0
    %4613 = vmatpush1.bf16.msra.mxu0 %v4571
    %4614 = vmatprep.subr.bf16.mxu0 0
    %4615 = vmatpush1.bf16.msra.mxu0 %v4572
    %4616 = vmatprep.subr.bf16.mxu0 0
    %4617 = vmatpush1.bf16.msra.mxu0 %v4573
    %4618 = vmatprep.subr.bf16.mxu0 0
    %4619 = vmatpush1.bf16.msra.mxu0 %v4574
    %4620 = vmatprep.subr.bf16.mxu0 0
    %4621 = vmatpush1.bf16.msra.mxu0 %v4575
    %4622 = vmatprep.subr.bf16.mxu0 0
    %4623 = vmatpush1.bf16.msra.mxu0 %v4576
    %4624 = vmatprep.subr.bf16.mxu0 0
    %4625 = vmatpush1.bf16.msra.mxu0 %v4577
    %4626 = vmatprep.mubr.bf16.mxu0 %v3610
    %4627 = vmatmul.mubr.bf16.gmra.mrb[0].mxu0 %v3609
    %v4628 = vpop.f32.mrb[0].mxu0
    %v4629 = vadd.f32 0.0, %v4628
    %v4630 = vpop.f32.mrb[0].mxu0
    %v4631 = vpop.f32.mrb[0].mxu0
    %v4632 = vadd.f32 0.0, %v4631
    %v4633 = vpop.f32.mrb[0].mxu0
    %4634 = vmatprep.mubr.bf16.mxu0 %v3612
    %4635 = vmatmul.mubr.bf16.gmra.mrb[0].mxu0 %v3611
    %v4636 = vpop.f32.mrb[0].mxu0
    %v4637 = vadd.f32 0.0, %v4636
    %v4638 = vpop.f32.mrb[0].mxu0
    %v4639 = vpop.f32.mrb[0].mxu0
    %v4640 = vadd.f32 0.0, %v4639
    %v4641 = vpop.f32.mrb[0].mxu0
    %4642 = vmatprep.mubr.bf16.mxu0 %v3614
    %4643 = vmatmul.mubr.bf16.gmra.mrb[0].mxu0 %v3613
    %v4644 = vpop.f32.mrb[0].mxu0
    %v4645 = vadd.f32 0.0, %v4644
    %v4646 = vpop.f32.mrb[0].mxu0
    %v4647 = vpop.f32.mrb[0].mxu0
    %v4648 = vadd.f32 0.0, %v4647
    %v4649 = vpop.f32.mrb[0].mxu0
    %4650 = vmatprep.mubr.bf16.mxu0 %v3616
    %4651 = vmatmul.mubr.bf16.gmra.mrb[0].mxu0 %v3615
    %v4652 = vpop.f32.mrb[0].mxu0
    %v4653 = vadd.f32 0.0, %v4652
    %v4654 = vpop.f32.mrb[0].mxu0
    %v4655 = vpop.f32.mrb[0].mxu0
    %v4656 = vadd.f32 0.0, %v4655
    %v4657 = vpop.f32.mrb[0].mxu0
    %4658 = vmatprep.mubr.bf16.mxu0 %v3618
    %4659 = vmatmul.mubr.bf16.gmra.mrb[0].mxu0 %v3617
    %v4660 = vpop.f32.mrb[0].mxu0
    %v4661 = vadd.f32 0.0, %v4660
    %v4662 = vpop.f32.mrb[0].mxu0
    %v4663 = vpop.f32.mrb[0].mxu0
    %v4664 = vadd.f32 0.0, %v4663
    %v4665 = vpop.f32.mrb[0].mxu0
    %4666 = vmatprep.mubr.bf16.mxu0 %v3620
    %4667 = vmatmul.mubr.bf16.gmra.mrb[0].mxu0 %v3619
    %v4668 = vpop.f32.mrb[0].mxu0
    %v4669 = vadd.f32 0.0, %v4668
    %v4670 = vpop.f32.mrb[0].mxu0
    %v4671 = vpop.f32.mrb[0].mxu0
    %v4672 = vadd.f32 0.0, %v4671
    %v4673 = vpop.f32.mrb[0].mxu0
    %4674 = vmatprep.mubr.bf16.mxu0 %v3622
    %4675 = vmatmul.mubr.bf16.gmra.mrb[0].mxu0 %v3621
    %v4676 = vpop.f32.mrb[0].mxu0
    %v4677 = vadd.f32 0.0, %v4676
    %v4678 = vpop.f32.mrb[0].mxu0
    %v4679 = vpop.f32.mrb[0].mxu0
    %v4680 = vadd.f32 0.0, %v4679
    %v4681 = vpop.f32.mrb[0].mxu0
    %4682 = vmatprep.mubr.bf16.mxu0 %v3624
    %4683 = vmatmul.mubr.bf16.gmra.mrb[0].mxu0 %v3623
    %v4684 = vpop.f32.mrb[0].mxu0
    %v4685 = vadd.f32 0.0, %v4684
    %v4686 = vpop.f32.mrb[0].mxu0
    %v4687 = vpop.f32.mrb[0].mxu0
    %v4688 = vadd.f32 0.0, %v4687
    %v4689 = vpop.f32.mrb[0].mxu0
    %4690 = vdwg.mxu0
    %vm4691 = vcmask 23552
    %v4692 = vsel %vm4691, %v4629, -inf
    %4693 = vmax.xlane.f32.xlu0 %v4692
    %v4694 = vpop.xlane.xlu0 %4693
    %v4695 = vsel %vm4691, %v4632, -inf
    %4696 = vmax.xlane.f32.xlu0 %v4695
    %v4697 = vpop.xlane.xlu0 %4696
    %v4698 = vsel %vm4691, %v4637, -inf
    %4699 = vmax.xlane.f32.xlu0 %v4698
    %v4700 = vpop.xlane.xlu0 %4699
    %v4701 = vsel %vm4691, %v4640, -inf
    %4702 = vmax.xlane.f32.xlu0 %v4701
    %v4703 = vpop.xlane.xlu0 %4702
    %v4704 = vsel %vm4691, %v4645, -inf
    %4705 = vmax.xlane.f32.xlu0 %v4704
    %v4706 = vpop.xlane.xlu0 %4705
    %v4707 = vsel %vm4691, %v4648, -inf
    %4708 = vmax.xlane.f32.xlu0 %v4707
    %v4709 = vpop.xlane.xlu0 %4708
    %v4710 = vsel %vm4691, %v4653, -inf
    %4711 = vmax.xlane.f32.xlu0 %v4710
    %v4712 = vpop.xlane.xlu0 %4711
    %v4713 = vsel %vm4691, %v4656, -inf
    %4714 = vmax.xlane.f32.xlu0 %v4713
    %v4715 = vpop.xlane.xlu0 %4714
    %v4716 = vsel %vm4691, %v4661, -inf
    %4717 = vmax.xlane.f32.xlu0 %v4716
    %v4718 = vpop.xlane.xlu0 %4717
    %v4719 = vsel %vm4691, %v4664, -inf
    %4720 = vmax.xlane.f32.xlu0 %v4719
    %v4721 = vpop.xlane.xlu0 %4720
    %v4722 = vsel %vm4691, %v4669, -inf
    %4723 = vmax.xlane.f32.xlu0 %v4722
    %v4724 = vpop.xlane.xlu0 %4723
    %v4725 = vsel %vm4691, %v4672, -inf
    %4726 = vmax.xlane.f32.xlu0 %v4725
    %v4727 = vpop.xlane.xlu0 %4726
    %v4728 = vsel %vm4691, %v4677, -inf
    %4729 = vmax.xlane.f32.xlu0 %v4728
    %v4730 = vpop.xlane.xlu0 %4729
    %v4731 = vsel %vm4691, %v4680, -inf
    %4732 = vmax.xlane.f32.xlu0 %v4731
    %v4733 = vpop.xlane.xlu0 %4732
    %v4734 = vsel %vm4691, %v4685, -inf
    %4735 = vmax.xlane.f32.xlu0 %v4734
    %v4736 = vpop.xlane.xlu0 %4735
    %v4737 = vsel %vm4691, %v4688, -inf
    %4738 = vmax.xlane.f32.xlu0 %v4737
    %v4739 = vpop.xlane.xlu0 %4738
    %v4740 = vsub.f32 %v4629, %v4694
    %v4741 = vsub.f32 %v4632, %v4697
    %v4742 = vsub.f32 %v4637, %v4700
    %v4743 = vsub.f32 %v4640, %v4703
    %v4744 = vsub.f32 %v4645, %v4706
    %v4745 = vsub.f32 %v4648, %v4709
    %v4746 = vsub.f32 %v4653, %v4712
    %v4747 = vsub.f32 %v4656, %v4715
    %v4748 = vsub.f32 %v4661, %v4718
    %v4749 = vsub.f32 %v4664, %v4721
    %v4750 = vsub.f32 %v4669, %v4724
    %v4751 = vsub.f32 %v4672, %v4727
    %v4752 = vsub.f32 %v4677, %v4730
    %v4753 = vsub.f32 %v4680, %v4733
    %v4754 = vsub.f32 %v4685, %v4736
    %v4755 = vsub.f32 %v4688, %v4739
    %v4756 = vmul.f32 %v4740, 1.442695
    %v4757 = vpow.pop %v4756
    %v4758 = vmul.f32 %v4741, 1.442695
    %v4759 = vpow.pop %v4758
    %v4760 = vmul.f32 %v4742, 1.442695
    %v4761 = vpow.pop %v4760
    %v4762 = vmul.f32 %v4743, 1.442695
    %v4763 = vpow.pop %v4762
    %v4764 = vmul.f32 %v4744, 1.442695
    %v4765 = vpow.pop %v4764
    %v4766 = vmul.f32 %v4745, 1.442695
    %v4767 = vpow.pop %v4766
    %v4768 = vmul.f32 %v4746, 1.442695
    %v4769 = vpow.pop %v4768
    %v4770 = vmul.f32 %v4747, 1.442695
    %v4771 = vpow.pop %v4770
    %v4772 = vmul.f32 %v4748, 1.442695
    %v4773 = vpow.pop %v4772
    %v4774 = vmul.f32 %v4749, 1.442695
    %v4775 = vpow.pop %v4774
    %v4776 = vmul.f32 %v4750, 1.442695
    %v4777 = vpow.pop %v4776
    %v4778 = vmul.f32 %v4751, 1.442695
    %v4779 = vpow.pop %v4778
    %v4780 = vmul.f32 %v4752, 1.442695
    %v4781 = vpow.pop %v4780
    %v4782 = vmul.f32 %v4753, 1.442695
    %v4783 = vpow.pop %v4782
    %v4784 = vmul.f32 %v4754, 1.442695
    %v4785 = vpow.pop %v4784
    %v4786 = vmul.f32 %v4755, 1.442695
    %v4787 = vpow.pop %v4786
    %v4788 = vsel %vm4691, %v4757, 0.0
    %4789 = vadd.xlane.f32.xlu0 %v4788
    %v4790 = vpop.xlane.xlu0 %4789
    %v4791 = vsel %vm4691, %v4759, 0.0
    %4792 = vadd.xlane.f32.xlu0 %v4791
    %v4793 = vpop.xlane.xlu0 %4792
    %v4794 = vsel %vm4691, %v4761, 0.0
    %4795 = vadd.xlane.f32.xlu0 %v4794
    %v4796 = vpop.xlane.xlu0 %4795
    %v4797 = vsel %vm4691, %v4763, 0.0
    %4798 = vadd.xlane.f32.xlu0 %v4797
    %v4799 = vpop.xlane.xlu0 %4798
    %v4800 = vsel %vm4691, %v4765, 0.0
    %4801 = vadd.xlane.f32.xlu0 %v4800
    %v4802 = vpop.xlane.xlu0 %4801
    %v4803 = vsel %vm4691, %v4767, 0.0
    %4804 = vadd.xlane.f32.xlu0 %v4803
    %v4805 = vpop.xlane.xlu0 %4804
    %v4806 = vsel %vm4691, %v4769, 0.0
    %4807 = vadd.xlane.f32.xlu0 %v4806
    %v4808 = vpop.xlane.xlu0 %4807
    %v4809 = vsel %vm4691, %v4771, 0.0
    %4810 = vadd.xlane.f32.xlu0 %v4809
    %v4811 = vpop.xlane.xlu0 %4810
    %v4812 = vsel %vm4691, %v4773, 0.0
    %4813 = vadd.xlane.f32.xlu0 %v4812
    %v4814 = vpop.xlane.xlu0 %4813
    %v4815 = vsel %vm4691, %v4775, 0.0
    %4816 = vadd.xlane.f32.xlu0 %v4815
    %v4817 = vpop.xlane.xlu0 %4816
    %v4818 = vsel %vm4691, %v4777, 0.0
    %4819 = vadd.xlane.f32.xlu0 %v4818
    %v4820 = vpop.xlane.xlu0 %4819
    %v4821 = vsel %vm4691, %v4779, 0.0
    %4822 = vadd.xlane.f32.xlu0 %v4821
    %v4823 = vpop.xlane.xlu0 %4822
    %v4824 = vsel %vm4691, %v4781, 0.0
    %4825 = vadd.xlane.f32.xlu0 %v4824
    %v4826 = vpop.xlane.xlu0 %4825
    %v4827 = vsel %vm4691, %v4783, 0.0
    %4828 = vadd.xlane.f32.xlu0 %v4827
    %v4829 = vpop.xlane.xlu0 %4828
    %v4830 = vsel %vm4691, %v4785, 0.0
    %4831 = vadd.xlane.f32.xlu0 %v4830
    %v4832 = vpop.xlane.xlu0 %4831
    %v4833 = vsel %vm4691, %v4787, 0.0
    %4834 = vadd.xlane.f32.xlu0 %v4833
    %v4835 = vpop.xlane.xlu0 %4834
    %v4836 = vrcp.pop %v4790
    %v4837 = vrcp.pop %v4793
    %v4838 = vrcp.pop %v4796
    %v4839 = vrcp.pop %v4799
    %v4840 = vrcp.pop %v4802
    %v4841 = vrcp.pop %v4805
    %v4842 = vrcp.pop %v4808
    %v4843 = vrcp.pop %v4811
    %v4844 = vrcp.pop %v4814
    %v4845 = vrcp.pop %v4817
    %v4846 = vrcp.pop %v4820
    %v4847 = vrcp.pop %v4823
    %v4848 = vrcp.pop %v4826
    %v4849 = vrcp.pop %v4829
    %v4850 = vrcp.pop %v4832
    %v4851 = vrcp.pop %v4835
    %v4852 = vmul.f32 %v4757, %v4836
    %v4853 = vmul.f32 %v4759, %v4837
    %v4854 = vmul.f32 %v4761, %v4838
    %v4855 = vmul.f32 %v4763, %v4839
    %v4856 = vmul.f32 %v4765, %v4840
    %v4857 = vmul.f32 %v4767, %v4841
    %v4858 = vmul.f32 %v4769, %v4842
    %v4859 = vmul.f32 %v4771, %v4843
    %v4860 = vmul.f32 %v4773, %v4844
    %v4861 = vmul.f32 %v4775, %v4845
    %v4862 = vmul.f32 %v4777, %v4846
    %v4863 = vmul.f32 %v4779, %v4847
    %v4864 = vmul.f32 %v4781, %v4848
    %v4865 = vmul.f32 %v4783, %v4849
    %v4866 = vmul.f32 %v4785, %v4850
    %v4867 = vmul.f32 %v4787, %v4851
    %vm4868 = vcmask 39960
    %v4869 = vsel %vm4868, %v4629, -inf
    %4870 = vmax.xlane.f32.xlu0 %v4869
    %v4871 = vpop.xlane.xlu0 %4870
    %v4872 = vsel %vm4868, %v4632, -inf
    %4873 = vmax.xlane.f32.xlu0 %v4872
    %v4874 = vpop.xlane.xlu0 %4873
    %v4875 = vsel %vm4868, %v4637, -inf
    %4876 = vmax.xlane.f32.xlu0 %v4875
    %v4877 = vpop.xlane.xlu0 %4876
    %v4878 = vsel %vm4868, %v4640, -inf
    %4879 = vmax.xlane.f32.xlu0 %v4878
    %v4880 = vpop.xlane.xlu0 %4879
    %v4881 = vsel %vm4868, %v4645, -inf
    %4882 = vmax.xlane.f32.xlu0 %v4881
    %v4883 = vpop.xlane.xlu0 %4882
    %v4884 = vsel %vm4868, %v4648, -inf
    %4885 = vmax.xlane.f32.xlu0 %v4884
    %v4886 = vpop.xlane.xlu0 %4885
    %v4887 = vsel %vm4868, %v4653, -inf
    %4888 = vmax.xlane.f32.xlu0 %v4887
    %v4889 = vpop.xlane.xlu0 %4888
    %v4890 = vsel %vm4868, %v4656, -inf
    %4891 = vmax.xlane.f32.xlu0 %v4890
    %v4892 = vpop.xlane.xlu0 %4891
    %v4893 = vsel %vm4868, %v4661, -inf
    %4894 = vmax.xlane.f32.xlu0 %v4893
    %v4895 = vpop.xlane.xlu0 %4894
    %v4896 = vsel %vm4868, %v4664, -inf
    %4897 = vmax.xlane.f32.xlu0 %v4896
    %v4898 = vpop.xlane.xlu0 %4897
    %v4899 = vsel %vm4868, %v4669, -inf
    %4900 = vmax.xlane.f32.xlu0 %v4899
    %v4901 = vpop.xlane.xlu0 %4900
    %v4902 = vsel %vm4868, %v4672, -inf
    %4903 = vmax.xlane.f32.xlu0 %v4902
    %v4904 = vpop.xlane.xlu0 %4903
    %v4905 = vsel %vm4868, %v4677, -inf
    %4906 = vmax.xlane.f32.xlu0 %v4905
    %v4907 = vpop.xlane.xlu0 %4906
    %v4908 = vsel %vm4868, %v4680, -inf
    %4909 = vmax.xlane.f32.xlu0 %v4908
    %v4910 = vpop.xlane.xlu0 %4909
    %v4911 = vsel %vm4868, %v4685, -inf
    %4912 = vmax.xlane.f32.xlu0 %v4911
    %v4913 = vpop.xlane.xlu0 %4912
    %v4914 = vsel %vm4868, %v4688, -inf
    %4915 = vmax.xlane.f32.xlu0 %v4914
    %v4916 = vpop.xlane.xlu0 %4915
    %v4917 = vsub.f32 %v4629, %v4871
    %v4918 = vsub.f32 %v4632, %v4874
    %v4919 = vsub.f32 %v4637, %v4877
    %v4920 = vsub.f32 %v4640, %v4880
    %v4921 = vsub.f32 %v4645, %v4883
    %v4922 = vsub.f32 %v4648, %v4886
    %v4923 = vsub.f32 %v4653, %v4889
    %v4924 = vsub.f32 %v4656, %v4892
    %v4925 = vsub.f32 %v4661, %v4895
    %v4926 = vsub.f32 %v4664, %v4898
    %v4927 = vsub.f32 %v4669, %v4901
    %v4928 = vsub.f32 %v4672, %v4904
    %v4929 = vsub.f32 %v4677, %v4907
    %v4930 = vsub.f32 %v4680, %v4910
    %v4931 = vsub.f32 %v4685, %v4913
    %v4932 = vsub.f32 %v4688, %v4916
    %v4933 = vmul.f32 %v4917, 1.442695
    %v4934 = vpow.pop %v4933
    %v4935 = vmul.f32 %v4918, 1.442695
    %v4936 = vpow.pop %v4935
    %v4937 = vmul.f32 %v4919, 1.442695
    %v4938 = vpow.pop %v4937
    %v4939 = vmul.f32 %v4920, 1.442695
    %v4940 = vpow.pop %v4939
    %v4941 = vmul.f32 %v4921, 1.442695
    %v4942 = vpow.pop %v4941
    %v4943 = vmul.f32 %v4922, 1.442695
    %v4944 = vpow.pop %v4943
    %v4945 = vmul.f32 %v4923, 1.442695
    %v4946 = vpow.pop %v4945
    %v4947 = vmul.f32 %v4924, 1.442695
    %v4948 = vpow.pop %v4947
    %v4949 = vmul.f32 %v4925, 1.442695
    %v4950 = vpow.pop %v4949
    %v4951 = vmul.f32 %v4926, 1.442695
    %v4952 = vpow.pop %v4951
    %v4953 = vmul.f32 %v4927, 1.442695
    %v4954 = vpow.pop %v4953
    %v4955 = vmul.f32 %v4928, 1.442695
    %v4956 = vpow.pop %v4955
    %v4957 = vmul.f32 %v4929, 1.442695
    %v4958 = vpow.pop %v4957
    %v4959 = vmul.f32 %v4930, 1.442695
    %v4960 = vpow.pop %v4959
    %v4961 = vmul.f32 %v4931, 1.442695
    %v4962 = vpow.pop %v4961
    %v4963 = vmul.f32 %v4932, 1.442695
    %v4964 = vpow.pop %v4963
    %4981 = vrot.lane.b32.xlu0 %v4934, 125
    %v4982 = vpop.permute.xlu0 %4981
    %4983 = vrot.lane.b32.xlu0 %v4936, 125
    %v4984 = vpop.permute.xlu0 %4983
    %4985 = vrot.lane.b32.xlu0 %v4938, 125
    %v4986 = vpop.permute.xlu0 %4985
    %4987 = vrot.lane.b32.xlu0 %v4940, 125
    %v4988 = vpop.permute.xlu0 %4987
    %4989 = vrot.lane.b32.xlu0 %v4942, 125
    %v4990 = vpop.permute.xlu0 %4989
    %4991 = vrot.lane.b32.xlu0 %v4944, 125
    %v4992 = vpop.permute.xlu0 %4991
    %4993 = vrot.lane.b32.xlu0 %v4946, 125
    %v4994 = vpop.permute.xlu0 %4993
    %4995 = vrot.lane.b32.xlu0 %v4948, 125
    %v4996 = vpop.permute.xlu0 %4995
    %4997 = vrot.lane.b32.xlu0 %v4950, 125
    %v4998 = vpop.permute.xlu0 %4997
    %4999 = vrot.lane.b32.xlu0 %v4952, 125
    %v5000 = vpop.permute.xlu0 %4999
    %5001 = vrot.lane.b32.xlu0 %v4954, 125
    %v5002 = vpop.permute.xlu0 %5001
    %5003 = vrot.lane.b32.xlu0 %v4956, 125
    %v5004 = vpop.permute.xlu0 %5003
    %5005 = vrot.lane.b32.xlu0 %v4958, 125
    %v5006 = vpop.permute.xlu0 %5005
    %5007 = vrot.lane.b32.xlu0 %v4960, 125
    %v5008 = vpop.permute.xlu0 %5007
    %5009 = vrot.lane.b32.xlu0 %v4962, 125
    %v5010 = vpop.permute.xlu0 %5009
    %5011 = vrot.lane.b32.xlu0 %v4964, 125
    %v5012 = vpop.permute.xlu0 %5011
    %v5029 = vsel %vm3633, %v4982, 0.0
    %5030 = vadd.xlane.f32.xlu0 %v5029
    %v5031 = vpop.xlane.xlu0 %5030
    %v5032 = vsel %vm3633, %v4984, 0.0
    %5033 = vadd.xlane.f32.xlu0 %v5032
    %v5034 = vpop.xlane.xlu0 %5033
    %v5035 = vsel %vm3633, %v4986, 0.0
    %5036 = vadd.xlane.f32.xlu0 %v5035
    %v5037 = vpop.xlane.xlu0 %5036
    %v5038 = vsel %vm3633, %v4988, 0.0
    %5039 = vadd.xlane.f32.xlu0 %v5038
    %v5040 = vpop.xlane.xlu0 %5039
    %v5041 = vsel %vm3633, %v4990, 0.0
    %5042 = vadd.xlane.f32.xlu0 %v5041
    %v5043 = vpop.xlane.xlu0 %5042
    %v5044 = vsel %vm3633, %v4992, 0.0
    %5045 = vadd.xlane.f32.xlu0 %v5044
    %v5046 = vpop.xlane.xlu0 %5045
    %v5047 = vsel %vm3633, %v4994, 0.0
    %5048 = vadd.xlane.f32.xlu0 %v5047
    %v5049 = vpop.xlane.xlu0 %5048
    %v5050 = vsel %vm3633, %v4996, 0.0
    %5051 = vadd.xlane.f32.xlu0 %v5050
    %v5052 = vpop.xlane.xlu0 %5051
    %v5053 = vsel %vm3633, %v4998, 0.0
    %5054 = vadd.xlane.f32.xlu0 %v5053
    %v5055 = vpop.xlane.xlu0 %5054
    %v5056 = vsel %vm3633, %v5000, 0.0
    %5057 = vadd.xlane.f32.xlu0 %v5056
    %v5058 = vpop.xlane.xlu0 %5057
    %v5059 = vsel %vm3633, %v5002, 0.0
    %5060 = vadd.xlane.f32.xlu0 %v5059
    %v5061 = vpop.xlane.xlu0 %5060
    %v5062 = vsel %vm3633, %v5004, 0.0
    %5063 = vadd.xlane.f32.xlu0 %v5062
    %v5064 = vpop.xlane.xlu0 %5063
    %v5065 = vsel %vm3633, %v5006, 0.0
    %5066 = vadd.xlane.f32.xlu0 %v5065
    %v5067 = vpop.xlane.xlu0 %5066
    %v5068 = vsel %vm3633, %v5008, 0.0
    %5069 = vadd.xlane.f32.xlu0 %v5068
    %v5070 = vpop.xlane.xlu0 %5069
    %v5071 = vsel %vm3633, %v5010, 0.0
    %5072 = vadd.xlane.f32.xlu0 %v5071
    %v5073 = vpop.xlane.xlu0 %5072
    %v5074 = vsel %vm3633, %v5012, 0.0
    %5075 = vadd.xlane.f32.xlu0 %v5074
    %v5076 = vpop.xlane.xlu0 %5075
    %v5077 = vrcp.pop %v5031
    %v5078 = vrcp.pop %v5034
    %v5079 = vrcp.pop %v5037
    %v5080 = vrcp.pop %v5040
    %v5081 = vrcp.pop %v5043
    %v5082 = vrcp.pop %v5046
    %v5083 = vrcp.pop %v5049
    %v5084 = vrcp.pop %v5052
    %v5085 = vrcp.pop %v5055
    %v5086 = vrcp.pop %v5058
    %v5087 = vrcp.pop %v5061
    %v5088 = vrcp.pop %v5064
    %v5089 = vrcp.pop %v5067
    %v5090 = vrcp.pop %v5070
    %v5091 = vrcp.pop %v5073
    %v5092 = vrcp.pop %v5076
    %v5093 = vmul.f32 %v4934, %v5077
    %v5094 = vmul.f32 %v4936, %v5078
    %v5095 = vmul.f32 %v4938, %v5079
    %v5096 = vmul.f32 %v4940, %v5080
    %v5097 = vmul.f32 %v4942, %v5081
    %v5098 = vmul.f32 %v4944, %v5082
    %v5099 = vmul.f32 %v4946, %v5083
    %v5100 = vmul.f32 %v4948, %v5084
    %v5101 = vmul.f32 %v4950, %v5085
    %v5102 = vmul.f32 %v4952, %v5086
    %v5103 = vmul.f32 %v4954, %v5087
    %v5104 = vmul.f32 %v4956, %v5088
    %v5105 = vmul.f32 %v4958, %v5089
    %v5106 = vmul.f32 %v4960, %v5090
    %v5107 = vmul.f32 %v4962, %v5091
    %v5108 = vmul.f32 %v4964, %v5092
    %5110 = vset.pattern.permute.xlu0 0
    %5111 = vperm.xlu0 %5110, %v4852
    %v5112 = vpop.permute.xlu0 %5111
    %5115 = vset.pattern.permute.xlu0 0
    %5116 = vperm.xlu0 %5115, %v4853
    %v5117 = vpop.permute.xlu0 %5116
    %5120 = vset.pattern.permute.xlu0 0
    %5121 = vperm.xlu0 %5120, %v4854
    %v5122 = vpop.permute.xlu0 %5121
    %5125 = vset.pattern.permute.xlu0 0
    %5126 = vperm.xlu0 %5125, %v4855
    %v5127 = vpop.permute.xlu0 %5126
    %5130 = vset.pattern.permute.xlu0 0
    %5131 = vperm.xlu0 %5130, %v4856
    %v5132 = vpop.permute.xlu0 %5131
    %5135 = vset.pattern.permute.xlu0 0
    %5136 = vperm.xlu0 %5135, %v4857
    %v5137 = vpop.permute.xlu0 %5136
    %5140 = vset.pattern.permute.xlu0 0
    %5141 = vperm.xlu0 %5140, %v4858
    %v5142 = vpop.permute.xlu0 %5141
    %5145 = vset.pattern.permute.xlu0 0
    %5146 = vperm.xlu0 %5145, %v4859
    %v5147 = vpop.permute.xlu0 %5146
    %5150 = vset.pattern.permute.xlu0 0
    %5151 = vperm.xlu0 %5150, %v4860
    %v5152 = vpop.permute.xlu0 %5151
    %5155 = vset.pattern.permute.xlu0 0
    %5156 = vperm.xlu0 %5155, %v4861
    %v5157 = vpop.permute.xlu0 %5156
    %5160 = vset.pattern.permute.xlu0 0
    %5161 = vperm.xlu0 %5160, %v4862
    %v5162 = vpop.permute.xlu0 %5161
    %5165 = vset.pattern.permute.xlu0 0
    %5166 = vperm.xlu0 %5165, %v4863
    %v5167 = vpop.permute.xlu0 %5166
    %5170 = vset.pattern.permute.xlu0 0
    %5171 = vperm.xlu0 %5170, %v4864
    %v5172 = vpop.permute.xlu0 %5171
    %5175 = vset.pattern.permute.xlu0 0
    %5176 = vperm.xlu0 %5175, %v4865
    %v5177 = vpop.permute.xlu0 %5176
    %5180 = vset.pattern.permute.xlu0 0
    %5181 = vperm.xlu0 %5180, %v4866
    %v5182 = vpop.permute.xlu0 %5181
    %5185 = vset.pattern.permute.xlu0 0
    %5186 = vperm.xlu0 %5185, %v4867
    %v5187 = vpop.permute.xlu0 %5186
    %v5189 = vmul.f32 %v5112, %v316
    %v5190 = vmul.f32 %v5112, %v317
    %v5191 = vmul.f32 %v5117, %v318
    %v5192 = vmul.f32 %v5117, %v319
    %v5193 = vmul.f32 %v5122, %v320
    %v5194 = vmul.f32 %v5122, %v321
    %v5195 = vmul.f32 %v5127, %v322
    %v5196 = vmul.f32 %v5127, %v323
    %v5197 = vmul.f32 %v5132, %v324
    %v5198 = vmul.f32 %v5132, %v325
    %v5199 = vmul.f32 %v5137, %v326
    %v5200 = vmul.f32 %v5137, %v327
    %v5201 = vmul.f32 %v5142, %v328
    %v5202 = vmul.f32 %v5142, %v329
    %v5203 = vmul.f32 %v5147, %v330
    %v5204 = vmul.f32 %v5147, %v331
    %v5205 = vmul.f32 %v5152, %v332
    %v5206 = vmul.f32 %v5152, %v333
    %v5207 = vmul.f32 %v5157, %v334
    %v5208 = vmul.f32 %v5157, %v335
    %v5209 = vmul.f32 %v5162, %v336
    %v5210 = vmul.f32 %v5162, %v337
    %v5211 = vmul.f32 %v5167, %v338
    %v5212 = vmul.f32 %v5167, %v339
    %v5213 = vmul.f32 %v5172, %v340
    %v5214 = vmul.f32 %v5172, %v341
    %v5215 = vmul.f32 %v5177, %v342
    %v5216 = vmul.f32 %v5177, %v343
    %v5217 = vmul.f32 %v5182, %v344
    %v5218 = vmul.f32 %v5182, %v345
    %v5219 = vmul.f32 %v5187, %v346
    %v5220 = vmul.f32 %v5187, %v347
    %5221 = vset.pattern.permute.xlu0 1
    %5222 = vperm.xlu0 %5221, %v4852
    %v5223 = vpop.permute.xlu0 %5222
    %5225 = vset.pattern.permute.xlu0 1
    %5226 = vperm.xlu0 %5225, %v4853
    %v5227 = vpop.permute.xlu0 %5226
    %5229 = vset.pattern.permute.xlu0 1
    %5230 = vperm.xlu0 %5229, %v4854
    %v5231 = vpop.permute.xlu0 %5230
    %5233 = vset.pattern.permute.xlu0 1
    %5234 = vperm.xlu0 %5233, %v4855
    %v5235 = vpop.permute.xlu0 %5234
    %5237 = vset.pattern.permute.xlu0 1
    %5238 = vperm.xlu0 %5237, %v4856
    %v5239 = vpop.permute.xlu0 %5238
    %5241 = vset.pattern.permute.xlu0 1
    %5242 = vperm.xlu0 %5241, %v4857
    %v5243 = vpop.permute.xlu0 %5242
    %5245 = vset.pattern.permute.xlu0 1
    %5246 = vperm.xlu0 %5245, %v4858
    %v5247 = vpop.permute.xlu0 %5246
    %5249 = vset.pattern.permute.xlu0 1
    %5250 = vperm.xlu0 %5249, %v4859
    %v5251 = vpop.permute.xlu0 %5250
    %5253 = vset.pattern.permute.xlu0 1
    %5254 = vperm.xlu0 %5253, %v4860
    %v5255 = vpop.permute.xlu0 %5254
    %5257 = vset.pattern.permute.xlu0 1
    %5258 = vperm.xlu0 %5257, %v4861
    %v5259 = vpop.permute.xlu0 %5258
    %5261 = vset.pattern.permute.xlu0 1
    %5262 = vperm.xlu0 %5261, %v4862
    %v5263 = vpop.permute.xlu0 %5262
    %5265 = vset.pattern.permute.xlu0 1
    %5266 = vperm.xlu0 %5265, %v4863
    %v5267 = vpop.permute.xlu0 %5266
    %5269 = vset.pattern.permute.xlu0 1
    %5270 = vperm.xlu0 %5269, %v4864
    %v5271 = vpop.permute.xlu0 %5270
    %5273 = vset.pattern.permute.xlu0 1
    %5274 = vperm.xlu0 %5273, %v4865
    %v5275 = vpop.permute.xlu0 %5274
    %5277 = vset.pattern.permute.xlu0 1
    %5278 = vperm.xlu0 %5277, %v4866
    %v5279 = vpop.permute.xlu0 %5278
    %5281 = vset.pattern.permute.xlu0 1
    %5282 = vperm.xlu0 %5281, %v4867
    %v5283 = vpop.permute.xlu0 %5282
    %v5285 = vmul.f32 %v5223, %v1745
    %v5286 = vmul.f32 %v5223, %v1746
    %v5287 = vmul.f32 %v5227, %v1747
    %v5288 = vmul.f32 %v5227, %v1748
    %v5289 = vmul.f32 %v5231, %v1749
    %v5290 = vmul.f32 %v5231, %v1750
    %v5291 = vmul.f32 %v5235, %v1751
    %v5292 = vmul.f32 %v5235, %v1752
    %v5293 = vmul.f32 %v5239, %v1753
    %v5294 = vmul.f32 %v5239, %v1754
    %v5295 = vmul.f32 %v5243, %v1755
    %v5296 = vmul.f32 %v5243, %v1756
    %v5297 = vmul.f32 %v5247, %v1757
    %v5298 = vmul.f32 %v5247, %v1758
    %v5299 = vmul.f32 %v5251, %v1759
    %v5300 = vmul.f32 %v5251, %v1760
    %v5301 = vmul.f32 %v5255, %v1761
    %v5302 = vmul.f32 %v5255, %v1762
    %v5303 = vmul.f32 %v5259, %v1763
    %v5304 = vmul.f32 %v5259, %v1764
    %v5305 = vmul.f32 %v5263, %v1765
    %v5306 = vmul.f32 %v5263, %v1766
    %v5307 = vmul.f32 %v5267, %v1767
    %v5308 = vmul.f32 %v5267, %v1768
    %v5309 = vmul.f32 %v5271, %v1769
    %v5310 = vmul.f32 %v5271, %v1770
    %v5311 = vmul.f32 %v5275, %v1771
    %v5312 = vmul.f32 %v5275, %v1772
    %v5313 = vmul.f32 %v5279, %v1773
    %v5314 = vmul.f32 %v5279, %v1774
    %v5315 = vmul.f32 %v5283, %v1775
    %v5316 = vmul.f32 %v5283, %v1776
    %v5317 = vadd.f32 %v5189, %v5285
    %v5318 = vadd.f32 %v5190, %v5286
    %v5319 = vadd.f32 %v5191, %v5287
    %v5320 = vadd.f32 %v5192, %v5288
    %v5321 = vadd.f32 %v5193, %v5289
    %v5322 = vadd.f32 %v5194, %v5290
    %v5323 = vadd.f32 %v5195, %v5291
    %v5324 = vadd.f32 %v5196, %v5292
    %v5325 = vadd.f32 %v5197, %v5293
    %v5326 = vadd.f32 %v5198, %v5294
    %v5327 = vadd.f32 %v5199, %v5295
    %v5328 = vadd.f32 %v5200, %v5296
    %v5329 = vadd.f32 %v5201, %v5297
    %v5330 = vadd.f32 %v5202, %v5298
    %v5331 = vadd.f32 %v5203, %v5299
    %v5332 = vadd.f32 %v5204, %v5300
    %v5333 = vadd.f32 %v5205, %v5301
    %v5334 = vadd.f32 %v5206, %v5302
    %v5335 = vadd.f32 %v5207, %v5303
    %v5336 = vadd.f32 %v5208, %v5304
    %v5337 = vadd.f32 %v5209, %v5305
    %v5338 = vadd.f32 %v5210, %v5306
    %v5339 = vadd.f32 %v5211, %v5307
    %v5340 = vadd.f32 %v5212, %v5308
    %v5341 = vadd.f32 %v5213, %v5309
    %v5342 = vadd.f32 %v5214, %v5310
    %v5343 = vadd.f32 %v5215, %v5311
    %v5344 = vadd.f32 %v5216, %v5312
    %v5345 = vadd.f32 %v5217, %v5313
    %v5346 = vadd.f32 %v5218, %v5314
    %v5347 = vadd.f32 %v5219, %v5315
    %v5348 = vadd.f32 %v5220, %v5316
    %5349 = vset.pattern.permute.xlu0 2
    %5350 = vperm.xlu0 %5349, %v4852
    %v5351 = vpop.permute.xlu0 %5350
    %5353 = vset.pattern.permute.xlu0 2
    %5354 = vperm.xlu0 %5353, %v4853
    %v5355 = vpop.permute.xlu0 %5354
    %5357 = vset.pattern.permute.xlu0 2
    %5358 = vperm.xlu0 %5357, %v4854
    %v5359 = vpop.permute.xlu0 %5358
    %5361 = vset.pattern.permute.xlu0 2
    %5362 = vperm.xlu0 %5361, %v4855
    %v5363 = vpop.permute.xlu0 %5362
    %5365 = vset.pattern.permute.xlu0 2
    %5366 = vperm.xlu0 %5365, %v4856
    %v5367 = vpop.permute.xlu0 %5366
    %5369 = vset.pattern.permute.xlu0 2
    %5370 = vperm.xlu0 %5369, %v4857
    %v5371 = vpop.permute.xlu0 %5370
    %5373 = vset.pattern.permute.xlu0 2
    %5374 = vperm.xlu0 %5373, %v4858
    %v5375 = vpop.permute.xlu0 %5374
    %5377 = vset.pattern.permute.xlu0 2
    %5378 = vperm.xlu0 %5377, %v4859
    %v5379 = vpop.permute.xlu0 %5378
    %5381 = vset.pattern.permute.xlu0 2
    %5382 = vperm.xlu0 %5381, %v4860
    %v5383 = vpop.permute.xlu0 %5382
    %5385 = vset.pattern.permute.xlu0 2
    %5386 = vperm.xlu0 %5385, %v4861
    %v5387 = vpop.permute.xlu0 %5386
    %5389 = vset.pattern.permute.xlu0 2
    %5390 = vperm.xlu0 %5389, %v4862
    %v5391 = vpop.permute.xlu0 %5390
    %5393 = vset.pattern.permute.xlu0 2
    %5394 = vperm.xlu0 %5393, %v4863
    %v5395 = vpop.permute.xlu0 %5394
    %5397 = vset.pattern.permute.xlu0 2
    %5398 = vperm.xlu0 %5397, %v4864
    %v5399 = vpop.permute.xlu0 %5398
    %5401 = vset.pattern.permute.xlu0 2
    %5402 = vperm.xlu0 %5401, %v4865
    %v5403 = vpop.permute.xlu0 %5402
    %5405 = vset.pattern.permute.xlu0 2
    %5406 = vperm.xlu0 %5405, %v4866
    %v5407 = vpop.permute.xlu0 %5406
    %5409 = vset.pattern.permute.xlu0 2
    %5410 = vperm.xlu0 %5409, %v4867
    %v5411 = vpop.permute.xlu0 %5410
    %v5413 = vmul.f32 %v5351, %v3464
    %v5414 = vmul.f32 %v5351, %v3465
    %v5415 = vmul.f32 %v5355, %v3466
    %v5416 = vmul.f32 %v5355, %v3467
    %v5417 = vmul.f32 %v5359, %v3468
    %v5418 = vmul.f32 %v5359, %v3469
    %v5419 = vmul.f32 %v5363, %v3470
    %v5420 = vmul.f32 %v5363, %v3471
    %v5421 = vmul.f32 %v5367, %v3472
    %v5422 = vmul.f32 %v5367, %v3473
    %v5423 = vmul.f32 %v5371, %v3474
    %v5424 = vmul.f32 %v5371, %v3475
    %v5425 = vmul.f32 %v5375, %v3476
    %v5426 = vmul.f32 %v5375, %v3477
    %v5427 = vmul.f32 %v5379, %v3478
    %v5428 = vmul.f32 %v5379, %v3479
    %v5429 = vmul.f32 %v5383, %v3480
    %v5430 = vmul.f32 %v5383, %v3481
    %v5431 = vmul.f32 %v5387, %v3482
    %v5432 = vmul.f32 %v5387, %v3483
    %v5433 = vmul.f32 %v5391, %v3484
    %v5434 = vmul.f32 %v5391, %v3485
    %v5435 = vmul.f32 %v5395, %v3486
    %v5436 = vmul.f32 %v5395, %v3487
    %v5437 = vmul.f32 %v5399, %v3488
    %v5438 = vmul.f32 %v5399, %v3489
    %v5439 = vmul.f32 %v5403, %v3490
    %v5440 = vmul.f32 %v5403, %v3491
    %v5441 = vmul.f32 %v5407, %v3492
    %v5442 = vmul.f32 %v5407, %v3493
    %v5443 = vmul.f32 %v5411, %v3494
    %v5444 = vmul.f32 %v5411, %v3495
    %v5445 = vadd.f32 %v5317, %v5413
    %v5446 = vadd.f32 %v5318, %v5414
    %v5447 = vadd.f32 %v5319, %v5415
    %v5448 = vadd.f32 %v5320, %v5416
    %v5449 = vadd.f32 %v5321, %v5417
    %v5450 = vadd.f32 %v5322, %v5418
    %v5451 = vadd.f32 %v5323, %v5419
    %v5452 = vadd.f32 %v5324, %v5420
    %v5453 = vadd.f32 %v5325, %v5421
    %v5454 = vadd.f32 %v5326, %v5422
    %v5455 = vadd.f32 %v5327, %v5423
    %v5456 = vadd.f32 %v5328, %v5424
    %v5457 = vadd.f32 %v5329, %v5425
    %v5458 = vadd.f32 %v5330, %v5426
    %v5459 = vadd.f32 %v5331, %v5427
    %v5460 = vadd.f32 %v5332, %v5428
    %v5461 = vadd.f32 %v5333, %v5429
    %v5462 = vadd.f32 %v5334, %v5430
    %v5463 = vadd.f32 %v5335, %v5431
    %v5464 = vadd.f32 %v5336, %v5432
    %v5465 = vadd.f32 %v5337, %v5433
    %v5466 = vadd.f32 %v5338, %v5434
    %v5467 = vadd.f32 %v5339, %v5435
    %v5468 = vadd.f32 %v5340, %v5436
    %v5469 = vadd.f32 %v5341, %v5437
    %v5470 = vadd.f32 %v5342, %v5438
    %v5471 = vadd.f32 %v5343, %v5439
    %v5472 = vadd.f32 %v5344, %v5440
    %v5473 = vadd.f32 %v5345, %v5441
    %v5474 = vadd.f32 %v5346, %v5442
    %v5475 = vadd.f32 %v5347, %v5443
    %v5476 = vadd.f32 %v5348, %v5444
    %v5477 = vmax.f32 %v5445, 0.0
    %v5478 = vmax.f32 %v5446, 0.0
    %v5479 = vmax.f32 %v5447, 0.0
    %v5480 = vmax.f32 %v5448, 0.0
    %v5481 = vmax.f32 %v5449, 0.0
    %v5482 = vmax.f32 %v5450, 0.0
    %v5483 = vmax.f32 %v5451, 0.0
    %v5484 = vmax.f32 %v5452, 0.0
    %v5485 = vmax.f32 %v5453, 0.0
    %v5486 = vmax.f32 %v5454, 0.0
    %v5487 = vmax.f32 %v5455, 0.0
    %v5488 = vmax.f32 %v5456, 0.0
    %v5489 = vmax.f32 %v5457, 0.0
    %v5490 = vmax.f32 %v5458, 0.0
    %v5491 = vmax.f32 %v5459, 0.0
    %v5492 = vmax.f32 %v5460, 0.0
    %v5493 = vmax.f32 %v5461, 0.0
    %v5494 = vmax.f32 %v5462, 0.0
    %v5495 = vmax.f32 %v5463, 0.0
    %v5496 = vmax.f32 %v5464, 0.0
    %v5497 = vmax.f32 %v5465, 0.0
    %v5498 = vmax.f32 %v5466, 0.0
    %v5499 = vmax.f32 %v5467, 0.0
    %v5500 = vmax.f32 %v5468, 0.0
    %v5501 = vmax.f32 %v5469, 0.0
    %v5502 = vmax.f32 %v5470, 0.0
    %v5503 = vmax.f32 %v5471, 0.0
    %v5504 = vmax.f32 %v5472, 0.0
    %v5505 = vmax.f32 %v5473, 0.0
    %v5506 = vmax.f32 %v5474, 0.0
    %v5507 = vmax.f32 %v5475, 0.0
    %v5508 = vmax.f32 %v5476, 0.0
    %5510 = vset.pattern.permute.xlu0 3
    %5511 = vperm.xlu0 %5510, %v5093
    %v5512 = vpop.permute.xlu0 %5511
    %5515 = vset.pattern.permute.xlu0 3
    %5516 = vperm.xlu0 %5515, %v5094
    %v5517 = vpop.permute.xlu0 %5516
    %5520 = vset.pattern.permute.xlu0 3
    %5521 = vperm.xlu0 %5520, %v5095
    %v5522 = vpop.permute.xlu0 %5521
    %5525 = vset.pattern.permute.xlu0 3
    %5526 = vperm.xlu0 %5525, %v5096
    %v5527 = vpop.permute.xlu0 %5526
    %5530 = vset.pattern.permute.xlu0 3
    %5531 = vperm.xlu0 %5530, %v5097
    %v5532 = vpop.permute.xlu0 %5531
    %5535 = vset.pattern.permute.xlu0 3
    %5536 = vperm.xlu0 %5535, %v5098
    %v5537 = vpop.permute.xlu0 %5536
    %5540 = vset.pattern.permute.xlu0 3
    %5541 = vperm.xlu0 %5540, %v5099
    %v5542 = vpop.permute.xlu0 %5541
    %5545 = vset.pattern.permute.xlu0 3
    %5546 = vperm.xlu0 %5545, %v5100
    %v5547 = vpop.permute.xlu0 %5546
    %5550 = vset.pattern.permute.xlu0 3
    %5551 = vperm.xlu0 %5550, %v5101
    %v5552 = vpop.permute.xlu0 %5551
    %5555 = vset.pattern.permute.xlu0 3
    %5556 = vperm.xlu0 %5555, %v5102
    %v5557 = vpop.permute.xlu0 %5556
    %5560 = vset.pattern.permute.xlu0 3
    %5561 = vperm.xlu0 %5560, %v5103
    %v5562 = vpop.permute.xlu0 %5561
    %5565 = vset.pattern.permute.xlu0 3
    %5566 = vperm.xlu0 %5565, %v5104
    %v5567 = vpop.permute.xlu0 %5566
    %5570 = vset.pattern.permute.xlu0 3
    %5571 = vperm.xlu0 %5570, %v5105
    %v5572 = vpop.permute.xlu0 %5571
    %5575 = vset.pattern.permute.xlu0 3
    %5576 = vperm.xlu0 %5575, %v5106
    %v5577 = vpop.permute.xlu0 %5576
    %5580 = vset.pattern.permute.xlu0 3
    %5581 = vperm.xlu0 %5580, %v5107
    %v5582 = vpop.permute.xlu0 %5581
    %5585 = vset.pattern.permute.xlu0 3
    %5586 = vperm.xlu0 %5585, %v5108
    %v5587 = vpop.permute.xlu0 %5586
    %v5589 = vmul.f32 %v5512, %v4050
    %v5590 = vmul.f32 %v5512, %v4051
    %v5591 = vmul.f32 %v5517, %v4052
    %v5592 = vmul.f32 %v5517, %v4053
    %v5593 = vmul.f32 %v5522, %v4054
    %v5594 = vmul.f32 %v5522, %v4055
    %v5595 = vmul.f32 %v5527, %v4056
    %v5596 = vmul.f32 %v5527, %v4057
    %v5597 = vmul.f32 %v5532, %v4058
    %v5598 = vmul.f32 %v5532, %v4059
    %v5599 = vmul.f32 %v5537, %v4060
    %v5600 = vmul.f32 %v5537, %v4061
    %v5601 = vmul.f32 %v5542, %v4062
    %v5602 = vmul.f32 %v5542, %v4063
    %v5603 = vmul.f32 %v5547, %v4064
    %v5604 = vmul.f32 %v5547, %v4065
    %v5605 = vmul.f32 %v5552, %v4066
    %v5606 = vmul.f32 %v5552, %v4067
    %v5607 = vmul.f32 %v5557, %v4068
    %v5608 = vmul.f32 %v5557, %v4069
    %v5609 = vmul.f32 %v5562, %v4070
    %v5610 = vmul.f32 %v5562, %v4071
    %v5611 = vmul.f32 %v5567, %v4072
    %v5612 = vmul.f32 %v5567, %v4073
    %v5613 = vmul.f32 %v5572, %v4074
    %v5614 = vmul.f32 %v5572, %v4075
    %v5615 = vmul.f32 %v5577, %v4076
    %v5616 = vmul.f32 %v5577, %v4077
    %v5617 = vmul.f32 %v5582, %v4078
    %v5618 = vmul.f32 %v5582, %v4079
    %v5619 = vmul.f32 %v5587, %v4080
    %v5620 = vmul.f32 %v5587, %v4081
    %5621 = vset.pattern.permute.xlu0 4
    %5622 = vperm.xlu0 %5621, %v5093
    %v5623 = vpop.permute.xlu0 %5622
    %5625 = vset.pattern.permute.xlu0 4
    %5626 = vperm.xlu0 %5625, %v5094
    %v5627 = vpop.permute.xlu0 %5626
    %5629 = vset.pattern.permute.xlu0 4
    %5630 = vperm.xlu0 %5629, %v5095
    %v5631 = vpop.permute.xlu0 %5630
    %5633 = vset.pattern.permute.xlu0 4
    %5634 = vperm.xlu0 %5633, %v5096
    %v5635 = vpop.permute.xlu0 %5634
    %5637 = vset.pattern.permute.xlu0 4
    %5638 = vperm.xlu0 %5637, %v5097
    %v5639 = vpop.permute.xlu0 %5638
    %5641 = vset.pattern.permute.xlu0 4
    %5642 = vperm.xlu0 %5641, %v5098
    %v5643 = vpop.permute.xlu0 %5642
    %5645 = vset.pattern.permute.xlu0 4
    %5646 = vperm.xlu0 %5645, %v5099
    %v5647 = vpop.permute.xlu0 %5646
    %5649 = vset.pattern.permute.xlu0 4
    %5650 = vperm.xlu0 %5649, %v5100
    %v5651 = vpop.permute.xlu0 %5650
    %5653 = vset.pattern.permute.xlu0 4
    %5654 = vperm.xlu0 %5653, %v5101
    %v5655 = vpop.permute.xlu0 %5654
    %5657 = vset.pattern.permute.xlu0 4
    %5658 = vperm.xlu0 %5657, %v5102
    %v5659 = vpop.permute.xlu0 %5658
    %5661 = vset.pattern.permute.xlu0 4
    %5662 = vperm.xlu0 %5661, %v5103
    %v5663 = vpop.permute.xlu0 %5662
    %5665 = vset.pattern.permute.xlu0 4
    %5666 = vperm.xlu0 %5665, %v5104
    %v5667 = vpop.permute.xlu0 %5666
    %5669 = vset.pattern.permute.xlu0 4
    %5670 = vperm.xlu0 %5669, %v5105
    %v5671 = vpop.permute.xlu0 %5670
    %5673 = vset.pattern.permute.xlu0 4
    %5674 = vperm.xlu0 %5673, %v5106
    %v5675 = vpop.permute.xlu0 %5674
    %5677 = vset.pattern.permute.xlu0 4
    %5678 = vperm.xlu0 %5677, %v5107
    %v5679 = vpop.permute.xlu0 %5678
    %5681 = vset.pattern.permute.xlu0 4
    %5682 = vperm.xlu0 %5681, %v5108
    %v5683 = vpop.permute.xlu0 %5682
    %v5685 = vmul.f32 %v5623, %v5477
    %v5686 = vmul.f32 %v5623, %v5478
    %v5687 = vmul.f32 %v5627, %v5479
    %v5688 = vmul.f32 %v5627, %v5480
    %v5689 = vmul.f32 %v5631, %v5481
    %v5690 = vmul.f32 %v5631, %v5482
    %v5691 = vmul.f32 %v5635, %v5483
    %v5692 = vmul.f32 %v5635, %v5484
    %v5693 = vmul.f32 %v5639, %v5485
    %v5694 = vmul.f32 %v5639, %v5486
    %v5695 = vmul.f32 %v5643, %v5487
    %v5696 = vmul.f32 %v5643, %v5488
    %v5697 = vmul.f32 %v5647, %v5489
    %v5698 = vmul.f32 %v5647, %v5490
    %v5699 = vmul.f32 %v5651, %v5491
    %v5700 = vmul.f32 %v5651, %v5492
    %v5701 = vmul.f32 %v5655, %v5493
    %v5702 = vmul.f32 %v5655, %v5494
    %v5703 = vmul.f32 %v5659, %v5495
    %v5704 = vmul.f32 %v5659, %v5496
    %v5705 = vmul.f32 %v5663, %v5497
    %v5706 = vmul.f32 %v5663, %v5498
    %v5707 = vmul.f32 %v5667, %v5499
    %v5708 = vmul.f32 %v5667, %v5500
    %v5709 = vmul.f32 %v5671, %v5501
    %v5710 = vmul.f32 %v5671, %v5502
    %v5711 = vmul.f32 %v5675, %v5503
    %v5712 = vmul.f32 %v5675, %v5504
    %v5713 = vmul.f32 %v5679, %v5505
    %v5714 = vmul.f32 %v5679, %v5506
    %v5715 = vmul.f32 %v5683, %v5507
    %v5716 = vmul.f32 %v5683, %v5508
    %v5717 = vadd.f32 %v5589, %v5685
    %v5718 = vadd.f32 %v5590, %v5686
    %v5719 = vadd.f32 %v5591, %v5687
    %v5720 = vadd.f32 %v5592, %v5688
    %v5721 = vadd.f32 %v5593, %v5689
    %v5722 = vadd.f32 %v5594, %v5690
    %v5723 = vadd.f32 %v5595, %v5691
    %v5724 = vadd.f32 %v5596, %v5692
    %v5725 = vadd.f32 %v5597, %v5693
    %v5726 = vadd.f32 %v5598, %v5694
    %v5727 = vadd.f32 %v5599, %v5695
    %v5728 = vadd.f32 %v5600, %v5696
    %v5729 = vadd.f32 %v5601, %v5697
    %v5730 = vadd.f32 %v5602, %v5698
    %v5731 = vadd.f32 %v5603, %v5699
    %v5732 = vadd.f32 %v5604, %v5700
    %v5733 = vadd.f32 %v5605, %v5701
    %v5734 = vadd.f32 %v5606, %v5702
    %v5735 = vadd.f32 %v5607, %v5703
    %v5736 = vadd.f32 %v5608, %v5704
    %v5737 = vadd.f32 %v5609, %v5705
    %v5738 = vadd.f32 %v5610, %v5706
    %v5739 = vadd.f32 %v5611, %v5707
    %v5740 = vadd.f32 %v5612, %v5708
    %v5741 = vadd.f32 %v5613, %v5709
    %v5742 = vadd.f32 %v5614, %v5710
    %v5743 = vadd.f32 %v5615, %v5711
    %v5744 = vadd.f32 %v5616, %v5712
    %v5745 = vadd.f32 %v5617, %v5713
    %v5746 = vadd.f32 %v5618, %v5714
    %v5747 = vadd.f32 %v5619, %v5715
    %v5748 = vadd.f32 %v5620, %v5716
    %v5749 = vmax.f32 %v5717, 0.0
    %v5750 = vmax.f32 %v5718, 0.0
    %v5751 = vmax.f32 %v5719, 0.0
    %v5752 = vmax.f32 %v5720, 0.0
    %v5753 = vmax.f32 %v5721, 0.0
    %v5754 = vmax.f32 %v5722, 0.0
    %v5755 = vmax.f32 %v5723, 0.0
    %v5756 = vmax.f32 %v5724, 0.0
    %v5757 = vmax.f32 %v5725, 0.0
    %v5758 = vmax.f32 %v5726, 0.0
    %v5759 = vmax.f32 %v5727, 0.0
    %v5760 = vmax.f32 %v5728, 0.0
    %v5761 = vmax.f32 %v5729, 0.0
    %v5762 = vmax.f32 %v5730, 0.0
    %v5763 = vmax.f32 %v5731, 0.0
    %v5764 = vmax.f32 %v5732, 0.0
    %v5765 = vmax.f32 %v5733, 0.0
    %v5766 = vmax.f32 %v5734, 0.0
    %v5767 = vmax.f32 %v5735, 0.0
    %v5768 = vmax.f32 %v5736, 0.0
    %v5769 = vmax.f32 %v5737, 0.0
    %v5770 = vmax.f32 %v5738, 0.0
    %v5771 = vmax.f32 %v5739, 0.0
    %v5772 = vmax.f32 %v5740, 0.0
    %v5773 = vmax.f32 %v5741, 0.0
    %v5774 = vmax.f32 %v5742, 0.0
    %v5775 = vmax.f32 %v5743, 0.0
    %v5776 = vmax.f32 %v5744, 0.0
    %v5777 = vmax.f32 %v5745, 0.0
    %v5778 = vmax.f32 %v5746, 0.0
    %v5779 = vmax.f32 %v5747, 0.0
    %v5780 = vmax.f32 %v5748, 0.0
    %v5781 = vld [vmem:[#allocation16] sm:$0xf]
    %v5782 = vld [vmem:[#allocation16 + $0x4] sm:$0xf]
    %v5783 = vld [vmem:[#allocation16 + $0x8] sm:$0xf]
    %v5784 = vld [vmem:[#allocation16 + $0xc] sm:$0xf]
    %v5785 = vld [vmem:[#allocation16 + $0x10] sm:$0xf]
    %v5786 = vld [vmem:[#allocation16 + $0x14] sm:$0xf]
    %v5787 = vld [vmem:[#allocation16 + $0x18] sm:$0xf]
    %v5788 = vld [vmem:[#allocation16 + $0x1c] sm:$0xf]
    %v5789 = vld [vmem:[#allocation16 + $0x20] sm:$0xf]
    %v5790 = vld [vmem:[#allocation16 + $0x24] sm:$0xf]
    %v5791 = vld [vmem:[#allocation16 + $0x28] sm:$0xf]
    %v5792 = vld [vmem:[#allocation16 + $0x2c] sm:$0xf]
    %v5793 = vld [vmem:[#allocation16 + $0x30] sm:$0xf]
    %v5794 = vld [vmem:[#allocation16 + $0x34] sm:$0xf]
    %v5795 = vld [vmem:[#allocation16 + $0x38] sm:$0xf]
    %v5796 = vld [vmem:[#allocation16 + $0x3c] sm:$0xf]
    %v5813 = vunpack.c.l.b16 %v5781
    %v5814 = vunpack.c.l.b16 %v5782
    %v5815 = vunpack.c.l.b16 %v5783
    %v5816 = vunpack.c.l.b16 %v5784
    %v5817 = vunpack.c.l.b16 %v5785
    %v5818 = vunpack.c.l.b16 %v5786
    %v5819 = vunpack.c.l.b16 %v5787
    %v5820 = vunpack.c.l.b16 %v5788
    %v5821 = vunpack.c.l.b16 %v5789
    %v5822 = vunpack.c.l.b16 %v5790
    %v5823 = vunpack.c.l.b16 %v5791
    %v5824 = vunpack.c.l.b16 %v5792
    %v5825 = vunpack.c.l.b16 %v5793
    %v5826 = vunpack.c.l.b16 %v5794
    %v5827 = vunpack.c.l.b16 %v5795
    %v5828 = vunpack.c.l.b16 %v5796
    %v5829 = vpack.c.b16 %v5814, %v5813
    %v5830 = vpack.c.b16 %v5816, %v5815
    %v5831 = vpack.c.b16 %v5818, %v5817
    %v5832 = vpack.c.b16 %v5820, %v5819
    %v5833 = vpack.c.b16 %v5822, %v5821
    %v5834 = vpack.c.b16 %v5824, %v5823
    %v5835 = vpack.c.b16 %v5826, %v5825
    %v5836 = vpack.c.b16 %v5828, %v5827
    %5845 = vmatprep.subr.bf16.mxu0 0
    %5846 = vmatpush1.bf16.msra.mxu0 %v5829
    %5847 = vmatprep.subr.bf16.mxu0 0
    %5848 = vmatpush1.bf16.msra.mxu0 %v5830
    %5849 = vmatprep.subr.bf16.mxu0 0
    %5850 = vmatpush1.bf16.msra.mxu0 %v5831
    %5851 = vmatprep.subr.bf16.mxu0 0
    %5852 = vmatpush1.bf16.msra.mxu0 %v5832
    %5853 = vmatprep.subr.bf16.mxu0 0
    %5854 = vmatpush1.bf16.msra.mxu0 %v5833
    %5855 = vmatprep.subr.bf16.mxu0 0
    %5856 = vmatpush1.bf16.msra.mxu0 %v5834
    %5857 = vmatprep.subr.bf16.mxu0 0
    %5858 = vmatpush1.bf16.msra.mxu0 %v5835
    %5859 = vmatprep.subr.bf16.mxu0 0
    %5860 = vmatpush1.bf16.msra.mxu0 %v5836
    %5861 = vmatprep.subr.bf16.mxu0 0
    %5862 = vmatpush1.bf16.msra.mxu0 0
    %5863 = vmatprep.subr.bf16.mxu0 0
    %5864 = vmatpush1.bf16.msra.mxu0 0
    %5865 = vmatprep.subr.bf16.mxu0 0
    %5866 = vmatpush1.bf16.msra.mxu0 0
    %5867 = vmatprep.subr.bf16.mxu0 0
    %5868 = vmatpush1.bf16.msra.mxu0 0
    %5869 = vmatprep.subr.bf16.mxu0 0
    %5870 = vmatpush1.bf16.msra.mxu0 0
    %5871 = vmatprep.subr.bf16.mxu0 0
    %5872 = vmatpush1.bf16.msra.mxu0 0
    %5873 = vmatprep.subr.bf16.mxu0 0
    %5874 = vmatpush1.bf16.msra.mxu0 0
    %5875 = vmatprep.subr.bf16.mxu0 0
    %5876 = vmatpush1.bf16.msra.mxu0 0
    %5877 = vmatprep.mubr.bf16.mxu0 0
    %5878 = vmatmul.mubr.bf16.gmra.mrb[0].mxu0 %v3625
    %v5879 = vpop.f32.mrb[0].mxu0
    %v5880 = vadd.f32 0.0, %v5879
    %v5881 = vpop.f32.mrb[0].mxu0
    %v5882 = vpop.f32.mrb[0].mxu0
    %v5883 = vadd.f32 0.0, %v5882
    %v5884 = vpop.f32.mrb[0].mxu0
    %5885 = vmatprep.mubr.bf16.mxu0 0
    %5886 = vmatmul.mubr.bf16.gmra.mrb[0].mxu0 %v3626
    %v5887 = vpop.f32.mrb[0].mxu0
    %v5888 = vadd.f32 0.0, %v5887
    %v5889 = vpop.f32.mrb[0].mxu0
    %v5890 = vpop.f32.mrb[0].mxu0
    %v5891 = vadd.f32 0.0, %v5890
    %v5892 = vpop.f32.mrb[0].mxu0
    %5893 = vmatprep.mubr.bf16.mxu0 0
    %5894 = vmatmul.mubr.bf16.gmra.mrb[0].mxu0 %v3627
    %v5895 = vpop.f32.mrb[0].mxu0
    %v5896 = vadd.f32 0.0, %v5895
    %v5897 = vpop.f32.mrb[0].mxu0
    %v5898 = vpop.f32.mrb[0].mxu0
    %v5899 = vadd.f32 0.0, %v5898
    %v5900 = vpop.f32.mrb[0].mxu0
    %5901 = vmatprep.mubr.bf16.mxu0 0
    %5902 = vmatmul.mubr.bf16.gmra.mrb[0].mxu0 %v3628
    %v5903 = vpop.f32.mrb[0].mxu0
    %v5904 = vadd.f32 0.0, %v5903
    %v5905 = vpop.f32.mrb[0].mxu0
    %v5906 = vpop.f32.mrb[0].mxu0
    %v5907 = vadd.f32 0.0, %v5906
    %v5908 = vpop.f32.mrb[0].mxu0
    %5909 = vmatprep.mubr.bf16.mxu0 0
    %5910 = vmatmul.mubr.bf16.gmra.mrb[0].mxu0 %v3629
    %v5911 = vpop.f32.mrb[0].mxu0
    %v5912 = vadd.f32 0.0, %v5911
    %v5913 = vpop.f32.mrb[0].mxu0
    %v5914 = vpop.f32.mrb[0].mxu0
    %v5915 = vadd.f32 0.0, %v5914
    %v5916 = vpop.f32.mrb[0].mxu0
    %5917 = vmatprep.mubr.bf16.mxu0 0
    %5918 = vmatmul.mubr.bf16.gmra.mrb[0].mxu0 %v3630
    %v5919 = vpop.f32.mrb[0].mxu0
    %v5920 = vadd.f32 0.0, %v5919
    %v5921 = vpop.f32.mrb[0].mxu0
    %v5922 = vpop.f32.mrb[0].mxu0
    %v5923 = vadd.f32 0.0, %v5922
    %v5924 = vpop.f32.mrb[0].mxu0
    %5925 = vmatprep.mubr.bf16.mxu0 0
    %5926 = vmatmul.mubr.bf16.gmra.mrb[0].mxu0 %v3631
    %v5927 = vpop.f32.mrb[0].mxu0
    %v5928 = vadd.f32 0.0, %v5927
    %v5929 = vpop.f32.mrb[0].mxu0
    %v5930 = vpop.f32.mrb[0].mxu0
    %v5931 = vadd.f32 0.0, %v5930
    %v5932 = vpop.f32.mrb[0].mxu0
    %5933 = vmatprep.mubr.bf16.mxu0 0
    %5934 = vmatmul.mubr.bf16.gmra.mrb[0].mxu0 %v3632
    %v5935 = vpop.f32.mrb[0].mxu0
    %v5936 = vadd.f32 0.0, %v5935
    %v5937 = vpop.f32.mrb[0].mxu0
    %v5938 = vpop.f32.mrb[0].mxu0
    %v5939 = vadd.f32 0.0, %v5938
    %v5940 = vpop.f32.mrb[0].mxu0
    %5941 = vdwg.mxu0
    %v5942 = vsel %vm4691, %v5880, -inf
    %5943 = vmax.xlane.f32.xlu0 %v5942
    %v5944 = vpop.xlane.xlu0 %5943
    %v5945 = vsel %vm4691, %v5883, -inf
    %5946 = vmax.xlane.f32.xlu0 %v5945
    %v5947 = vpop.xlane.xlu0 %5946
    %v5948 = vsel %vm4691, %v5888, -inf
    %5949 = vmax.xlane.f32.xlu0 %v5948
    %v5950 = vpop.xlane.xlu0 %5949
    %v5951 = vsel %vm4691, %v5891, -inf
    %5952 = vmax.xlane.f32.xlu0 %v5951
    %v5953 = vpop.xlane.xlu0 %5952
    %v5954 = vsel %vm4691, %v5896, -inf
    %5955 = vmax.xlane.f32.xlu0 %v5954
    %v5956 = vpop.xlane.xlu0 %5955
    %v5957 = vsel %vm4691, %v5899, -inf
    %5958 = vmax.xlane.f32.xlu0 %v5957
    %v5959 = vpop.xlane.xlu0 %5958
    %v5960 = vsel %vm4691, %v5904, -inf
    %5961 = vmax.xlane.f32.xlu0 %v5960
    %v5962 = vpop.xlane.xlu0 %5961
    %v5963 = vsel %vm4691, %v5907, -inf
    %5964 = vmax.xlane.f32.xlu0 %v5963
    %v5965 = vpop.xlane.xlu0 %5964
    %v5966 = vsel %vm4691, %v5912, -inf
    %5967 = vmax.xlane.f32.xlu0 %v5966
    %v5968 = vpop.xlane.xlu0 %5967
    %v5969 = vsel %vm4691, %v5915, -inf
    %5970 = vmax.xlane.f32.xlu0 %v5969
    %v5971 = vpop.xlane.xlu0 %5970
    %v5972 = vsel %vm4691, %v5920, -inf
    %5973 = vmax.xlane.f32.xlu0 %v5972
    %v5974 = vpop.xlane.xlu0 %5973
    %v5975 = vsel %vm4691, %v5923, -inf
    %5976 = vmax.xlane.f32.xlu0 %v5975
    %v5977 = vpop.xlane.xlu0 %5976
    %v5978 = vsel %vm4691, %v5928, -inf
    %5979 = vmax.xlane.f32.xlu0 %v5978
    %v5980 = vpop.xlane.xlu0 %5979
    %v5981 = vsel %vm4691, %v5931, -inf
    %5982 = vmax.xlane.f32.xlu0 %v5981
    %v5983 = vpop.xlane.xlu0 %5982
    %v5984 = vsel %vm4691, %v5936, -inf
    %5985 = vmax.xlane.f32.xlu0 %v5984
    %v5986 = vpop.xlane.xlu0 %5985
    %v5987 = vsel %vm4691, %v5939, -inf
    %5988 = vmax.xlane.f32.xlu0 %v5987
    %v5989 = vpop.xlane.xlu0 %5988
    %v5990 = vsub.f32 %v5880, %v5944
    %v5991 = vsub.f32 %v5883, %v5947
    %v5992 = vsub.f32 %v5888, %v5950
    %v5993 = vsub.f32 %v5891, %v5953
    %v5994 = vsub.f32 %v5896, %v5956
    %v5995 = vsub.f32 %v5899, %v5959
    %v5996 = vsub.f32 %v5904, %v5962
    %v5997 = vsub.f32 %v5907, %v5965
    %v5998 = vsub.f32 %v5912, %v5968
    %v5999 = vsub.f32 %v5915, %v5971
    %v6000 = vsub.f32 %v5920, %v5974
    %v6001 = vsub.f32 %v5923, %v5977
    %v6002 = vsub.f32 %v5928, %v5980
    %v6003 = vsub.f32 %v5931, %v5983
    %v6004 = vsub.f32 %v5936, %v5986
    %v6005 = vsub.f32 %v5939, %v5989
    %v6006 = vmul.f32 %v5990, 1.442695
    %v6007 = vpow.pop %v6006
    %v6008 = vmul.f32 %v5991, 1.442695
    %v6009 = vpow.pop %v6008
    %v6010 = vmul.f32 %v5992, 1.442695
    %v6011 = vpow.pop %v6010
    %v6012 = vmul.f32 %v5993, 1.442695
    %v6013 = vpow.pop %v6012
    %v6014 = vmul.f32 %v5994, 1.442695
    %v6015 = vpow.pop %v6014
    %v6016 = vmul.f32 %v5995, 1.442695
    %v6017 = vpow.pop %v6016
    %v6018 = vmul.f32 %v5996, 1.442695
    %v6019 = vpow.pop %v6018
    %v6020 = vmul.f32 %v5997, 1.442695
    %v6021 = vpow.pop %v6020
    %v6022 = vmul.f32 %v5998, 1.442695
    %v6023 = vpow.pop %v6022
    %v6024 = vmul.f32 %v5999, 1.442695
    %v6025 = vpow.pop %v6024
    %v6026 = vmul.f32 %v6000, 1.442695
    %v6027 = vpow.pop %v6026
    %v6028 = vmul.f32 %v6001, 1.442695
    %v6029 = vpow.pop %v6028
    %v6030 = vmul.f32 %v6002, 1.442695
    %v6031 = vpow.pop %v6030
    %v6032 = vmul.f32 %v6003, 1.442695
    %v6033 = vpow.pop %v6032
    %v6034 = vmul.f32 %v6004, 1.442695
    %v6035 = vpow.pop %v6034
    %v6036 = vmul.f32 %v6005, 1.442695
    %v6037 = vpow.pop %v6036
    %v6038 = vsel %vm4691, %v6007, 0.0
    %6039 = vadd.xlane.f32.xlu0 %v6038
    %v6040 = vpop.xlane.xlu0 %6039
    %v6041 = vsel %vm4691, %v6009, 0.0
    %6042 = vadd.xlane.f32.xlu0 %v6041
    %v6043 = vpop.xlane.xlu0 %6042
    %v6044 = vsel %vm4691, %v6011, 0.0
    %6045 = vadd.xlane.f32.xlu0 %v6044
    %v6046 = vpop.xlane.xlu0 %6045
    %v6047 = vsel %vm4691, %v6013, 0.0
    %6048 = vadd.xlane.f32.xlu0 %v6047
    %v6049 = vpop.xlane.xlu0 %6048
    %v6050 = vsel %vm4691, %v6015, 0.0
    %6051 = vadd.xlane.f32.xlu0 %v6050
    %v6052 = vpop.xlane.xlu0 %6051
    %v6053 = vsel %vm4691, %v6017, 0.0
    %6054 = vadd.xlane.f32.xlu0 %v6053
    %v6055 = vpop.xlane.xlu0 %6054
    %v6056 = vsel %vm4691, %v6019, 0.0
    %6057 = vadd.xlane.f32.xlu0 %v6056
    %v6058 = vpop.xlane.xlu0 %6057
    %v6059 = vsel %vm4691, %v6021, 0.0
    %6060 = vadd.xlane.f32.xlu0 %v6059
    %v6061 = vpop.xlane.xlu0 %6060
    %v6062 = vsel %vm4691, %v6023, 0.0
    %6063 = vadd.xlane.f32.xlu0 %v6062
    %v6064 = vpop.xlane.xlu0 %6063
    %v6065 = vsel %vm4691, %v6025, 0.0
    %6066 = vadd.xlane.f32.xlu0 %v6065
    %v6067 = vpop.xlane.xlu0 %6066
    %v6068 = vsel %vm4691, %v6027, 0.0
    %6069 = vadd.xlane.f32.xlu0 %v6068
    %v6070 = vpop.xlane.xlu0 %6069
    %v6071 = vsel %vm4691, %v6029, 0.0
    %6072 = vadd.xlane.f32.xlu0 %v6071
    %v6073 = vpop.xlane.xlu0 %6072
    %v6074 = vsel %vm4691, %v6031, 0.0
    %6075 = vadd.xlane.f32.xlu0 %v6074
    %v6076 = vpop.xlane.xlu0 %6075
    %v6077 = vsel %vm4691, %v6033, 0.0
    %6078 = vadd.xlane.f32.xlu0 %v6077
    %v6079 = vpop.xlane.xlu0 %6078
    %v6080 = vsel %vm4691, %v6035, 0.0
    %6081 = vadd.xlane.f32.xlu0 %v6080
    %v6082 = vpop.xlane.xlu0 %6081
    %v6083 = vsel %vm4691, %v6037, 0.0
    %6084 = vadd.xlane.f32.xlu0 %v6083
    %v6085 = vpop.xlane.xlu0 %6084
    %v6086 = vrcp.pop %v6040
    %v6087 = vrcp.pop %v6043
    %v6088 = vrcp.pop %v6046
    %v6089 = vrcp.pop %v6049
    %v6090 = vrcp.pop %v6052
    %v6091 = vrcp.pop %v6055
    %v6092 = vrcp.pop %v6058
    %v6093 = vrcp.pop %v6061
    %v6094 = vrcp.pop %v6064
    %v6095 = vrcp.pop %v6067
    %v6096 = vrcp.pop %v6070
    %v6097 = vrcp.pop %v6073
    %v6098 = vrcp.pop %v6076
    %v6099 = vrcp.pop %v6079
    %v6100 = vrcp.pop %v6082
    %v6101 = vrcp.pop %v6085
    %v6102 = vmul.f32 %v6007, %v6086
    %v6103 = vmul.f32 %v6009, %v6087
    %v6104 = vmul.f32 %v6011, %v6088
    %v6105 = vmul.f32 %v6013, %v6089
    %v6106 = vmul.f32 %v6015, %v6090
    %v6107 = vmul.f32 %v6017, %v6091
    %v6108 = vmul.f32 %v6019, %v6092
    %v6109 = vmul.f32 %v6021, %v6093
    %v6110 = vmul.f32 %v6023, %v6094
    %v6111 = vmul.f32 %v6025, %v6095
    %v6112 = vmul.f32 %v6027, %v6096
    %v6113 = vmul.f32 %v6029, %v6097
    %v6114 = vmul.f32 %v6031, %v6098
    %v6115 = vmul.f32 %v6033, %v6099
    %v6116 = vmul.f32 %v6035, %v6100
    %v6117 = vmul.f32 %v6037, %v6101
    %v6118 = vsel %vm4868, %v5880, -inf
    %6119 = vmax.xlane.f32.xlu0 %v6118
    %v6120 = vpop.xlane.xlu0 %6119
    %v6121 = vsel %vm4868, %v5883, -inf
    %6122 = vmax.xlane.f32.xlu0 %v6121
    %v6123 = vpop.xlane.xlu0 %6122
    %v6124 = vsel %vm4868, %v5888, -inf
    %6125 = vmax.xlane.f32.xlu0 %v6124
    %v6126 = vpop.xlane.xlu0 %6125
    %v6127 = vsel %vm4868, %v5891, -inf
    %6128 = vmax.xlane.f32.xlu0 %v6127
    %v6129 = vpop.xlane.xlu0 %6128
    %v6130 = vsel %vm4868, %v5896, -inf
    %6131 = vmax.xlane.f32.xlu0 %v6130
    %v6132 = vpop.xlane.xlu0 %6131
    %v6133 = vsel %vm4868, %v5899, -inf
    %6134 = vmax.xlane.f32.xlu0 %v6133
    %v6135 = vpop.xlane.xlu0 %6134
    %v6136 = vsel %vm4868, %v5904, -inf
    %6137 = vmax.xlane.f32.xlu0 %v6136
    %v6138 = vpop.xlane.xlu0 %6137
    %v6139 = vsel %vm4868, %v5907, -inf
    %6140 = vmax.xlane.f32.xlu0 %v6139
    %v6141 = vpop.xlane.xlu0 %6140
    %v6142 = vsel %vm4868, %v5912, -inf
    %6143 = vmax.xlane.f32.xlu0 %v6142
    %v6144 = vpop.xlane.xlu0 %6143
    %v6145 = vsel %vm4868, %v5915, -inf
    %6146 = vmax.xlane.f32.xlu0 %v6145
    %v6147 = vpop.xlane.xlu0 %6146
    %v6148 = vsel %vm4868, %v5920, -inf
    %6149 = vmax.xlane.f32.xlu0 %v6148
    %v6150 = vpop.xlane.xlu0 %6149
    %v6151 = vsel %vm4868, %v5923, -inf
    %6152 = vmax.xlane.f32.xlu0 %v6151
    %v6153 = vpop.xlane.xlu0 %6152
    %v6154 = vsel %vm4868, %v5928, -inf
    %6155 = vmax.xlane.f32.xlu0 %v6154
    %v6156 = vpop.xlane.xlu0 %6155
    %v6157 = vsel %vm4868, %v5931, -inf
    %6158 = vmax.xlane.f32.xlu0 %v6157
    %v6159 = vpop.xlane.xlu0 %6158
    %v6160 = vsel %vm4868, %v5936, -inf
    %6161 = vmax.xlane.f32.xlu0 %v6160
    %v6162 = vpop.xlane.xlu0 %6161
    %v6163 = vsel %vm4868, %v5939, -inf
    %6164 = vmax.xlane.f32.xlu0 %v6163
    %v6165 = vpop.xlane.xlu0 %6164
    %v6166 = vsub.f32 %v5880, %v6120
    %v6167 = vsub.f32 %v5883, %v6123
    %v6168 = vsub.f32 %v5888, %v6126
    %v6169 = vsub.f32 %v5891, %v6129
    %v6170 = vsub.f32 %v5896, %v6132
    %v6171 = vsub.f32 %v5899, %v6135
    %v6172 = vsub.f32 %v5904, %v6138
    %v6173 = vsub.f32 %v5907, %v6141
    %v6174 = vsub.f32 %v5912, %v6144
    %v6175 = vsub.f32 %v5915, %v6147
    %v6176 = vsub.f32 %v5920, %v6150
    %v6177 = vsub.f32 %v5923, %v6153
    %v6178 = vsub.f32 %v5928, %v6156
    %v6179 = vsub.f32 %v5931, %v6159
    %v6180 = vsub.f32 %v5936, %v6162
    %v6181 = vsub.f32 %v5939, %v6165
    %v6182 = vmul.f32 %v6166, 1.442695
    %v6183 = vpow.pop %v6182
    %v6184 = vmul.f32 %v6167, 1.442695
    %v6185 = vpow.pop %v6184
    %v6186 = vmul.f32 %v6168, 1.442695
    %v6187 = vpow.pop %v6186
    %v6188 = vmul.f32 %v6169, 1.442695
    %v6189 = vpow.pop %v6188
    %v6190 = vmul.f32 %v6170, 1.442695
    %v6191 = vpow.pop %v6190
    %v6192 = vmul.f32 %v6171, 1.442695
    %v6193 = vpow.pop %v6192
    %v6194 = vmul.f32 %v6172, 1.442695
    %v6195 = vpow.pop %v6194
    %v6196 = vmul.f32 %v6173, 1.442695
    %v6197 = vpow.pop %v6196
    %v6198 = vmul.f32 %v6174, 1.442695
    %v6199 = vpow.pop %v6198
    %v6200 = vmul.f32 %v6175, 1.442695
    %v6201 = vpow.pop %v6200
    %v6202 = vmul.f32 %v6176, 1.442695
    %v6203 = vpow.pop %v6202
    %v6204 = vmul.f32 %v6177, 1.442695
    %v6205 = vpow.pop %v6204
    %v6206 = vmul.f32 %v6178, 1.442695
    %v6207 = vpow.pop %v6206
    %v6208 = vmul.f32 %v6179, 1.442695
    %v6209 = vpow.pop %v6208
    %v6210 = vmul.f32 %v6180, 1.442695
    %v6211 = vpow.pop %v6210
    %v6212 = vmul.f32 %v6181, 1.442695
    %v6213 = vpow.pop %v6212
    %6230 = vrot.lane.b32.xlu0 %v6183, 125
    %v6231 = vpop.permute.xlu0 %6230
    %6232 = vrot.lane.b32.xlu0 %v6185, 125
    %v6233 = vpop.permute.xlu0 %6232
    %6234 = vrot.lane.b32.xlu0 %v6187, 125
    %v6235 = vpop.permute.xlu0 %6234
    %6236 = vrot.lane.b32.xlu0 %v6189, 125
    %v6237 = vpop.permute.xlu0 %6236
    %6238 = vrot.lane.b32.xlu0 %v6191, 125
    %v6239 = vpop.permute.xlu0 %6238
    %6240 = vrot.lane.b32.xlu0 %v6193, 125
    %v6241 = vpop.permute.xlu0 %6240
    %6242 = vrot.lane.b32.xlu0 %v6195, 125
    %v6243 = vpop.permute.xlu0 %6242
    %6244 = vrot.lane.b32.xlu0 %v6197, 125
    %v6245 = vpop.permute.xlu0 %6244
    %6246 = vrot.lane.b32.xlu0 %v6199, 125
    %v6247 = vpop.permute.xlu0 %6246
    %6248 = vrot.lane.b32.xlu0 %v6201, 125
    %v6249 = vpop.permute.xlu0 %6248
    %6250 = vrot.lane.b32.xlu0 %v6203, 125
    %v6251 = vpop.permute.xlu0 %6250
    %6252 = vrot.lane.b32.xlu0 %v6205, 125
    %v6253 = vpop.permute.xlu0 %6252
    %6254 = vrot.lane.b32.xlu0 %v6207, 125
    %v6255 = vpop.permute.xlu0 %6254
    %6256 = vrot.lane.b32.xlu0 %v6209, 125
    %v6257 = vpop.permute.xlu0 %6256
    %6258 = vrot.lane.b32.xlu0 %v6211, 125
    %v6259 = vpop.permute.xlu0 %6258
    %6260 = vrot.lane.b32.xlu0 %v6213, 125
    %v6261 = vpop.permute.xlu0 %6260
    %v6278 = vsel %vm3633, %v6231, 0.0
    %6279 = vadd.xlane.f32.xlu0 %v6278
    %v6280 = vpop.xlane.xlu0 %6279
    %v6281 = vsel %vm3633, %v6233, 0.0
    %6282 = vadd.xlane.f32.xlu0 %v6281
    %v6283 = vpop.xlane.xlu0 %6282
    %v6284 = vsel %vm3633, %v6235, 0.0
    %6285 = vadd.xlane.f32.xlu0 %v6284
    %v6286 = vpop.xlane.xlu0 %6285
    %v6287 = vsel %vm3633, %v6237, 0.0
    %6288 = vadd.xlane.f32.xlu0 %v6287
    %v6289 = vpop.xlane.xlu0 %6288
    %v6290 = vsel %vm3633, %v6239, 0.0
    %6291 = vadd.xlane.f32.xlu0 %v6290
    %v6292 = vpop.xlane.xlu0 %6291
    %v6293 = vsel %vm3633, %v6241, 0.0
    %6294 = vadd.xlane.f32.xlu0 %v6293
    %v6295 = vpop.xlane.xlu0 %6294
    %v6296 = vsel %vm3633, %v6243, 0.0
    %6297 = vadd.xlane.f32.xlu0 %v6296
    %v6298 = vpop.xlane.xlu0 %6297
    %v6299 = vsel %vm3633, %v6245, 0.0
    %6300 = vadd.xlane.f32.xlu0 %v6299
    %v6301 = vpop.xlane.xlu0 %6300
    %v6302 = vsel %vm3633, %v6247, 0.0
    %6303 = vadd.xlane.f32.xlu0 %v6302
    %v6304 = vpop.xlane.xlu0 %6303
    %v6305 = vsel %vm3633, %v6249, 0.0
    %6306 = vadd.xlane.f32.xlu0 %v6305
    %v6307 = vpop.xlane.xlu0 %6306
    %v6308 = vsel %vm3633, %v6251, 0.0
    %6309 = vadd.xlane.f32.xlu0 %v6308
    %v6310 = vpop.xlane.xlu0 %6309
    %v6311 = vsel %vm3633, %v6253, 0.0
    %6312 = vadd.xlane.f32.xlu0 %v6311
    %v6313 = vpop.xlane.xlu0 %6312
    %v6314 = vsel %vm3633, %v6255, 0.0
    %6315 = vadd.xlane.f32.xlu0 %v6314
    %v6316 = vpop.xlane.xlu0 %6315
    %v6317 = vsel %vm3633, %v6257, 0.0
    %6318 = vadd.xlane.f32.xlu0 %v6317
    %v6319 = vpop.xlane.xlu0 %6318
    %v6320 = vsel %vm3633, %v6259, 0.0
    %6321 = vadd.xlane.f32.xlu0 %v6320
    %v6322 = vpop.xlane.xlu0 %6321
    %v6323 = vsel %vm3633, %v6261, 0.0
    %6324 = vadd.xlane.f32.xlu0 %v6323
    %v6325 = vpop.xlane.xlu0 %6324
    %v6326 = vrcp.pop %v6280
    %v6327 = vrcp.pop %v6283
    %v6328 = vrcp.pop %v6286
    %v6329 = vrcp.pop %v6289
    %v6330 = vrcp.pop %v6292
    %v6331 = vrcp.pop %v6295
    %v6332 = vrcp.pop %v6298
    %v6333 = vrcp.pop %v6301
    %v6334 = vrcp.pop %v6304
    %v6335 = vrcp.pop %v6307
    %v6336 = vrcp.pop %v6310
    %v6337 = vrcp.pop %v6313
    %v6338 = vrcp.pop %v6316
    %v6339 = vrcp.pop %v6319
    %v6340 = vrcp.pop %v6322
    %v6341 = vrcp.pop %v6325
    %v6342 = vmul.f32 %v6183, %v6326
    %v6343 = vmul.f32 %v6185, %v6327
    %v6344 = vmul.f32 %v6187, %v6328
    %v6345 = vmul.f32 %v6189, %v6329
    %v6346 = vmul.f32 %v6191, %v6330
    %v6347 = vmul.f32 %v6193, %v6331
    %v6348 = vmul.f32 %v6195, %v6332
    %v6349 = vmul.f32 %v6197, %v6333
    %v6350 = vmul.f32 %v6199, %v6334
    %v6351 = vmul.f32 %v6201, %v6335
    %v6352 = vmul.f32 %v6203, %v6336
    %v6353 = vmul.f32 %v6205, %v6337
    %v6354 = vmul.f32 %v6207, %v6338
    %v6355 = vmul.f32 %v6209, %v6339
    %v6356 = vmul.f32 %v6211, %v6340
    %v6357 = vmul.f32 %v6213, %v6341
    %6359 = vset.pattern.permute.xlu0 0
    %6360 = vperm.xlu0 %6359, %v6102
    %v6361 = vpop.permute.xlu0 %6360
    %6364 = vset.pattern.permute.xlu0 0
    %6365 = vperm.xlu0 %6364, %v6103
    %v6366 = vpop.permute.xlu0 %6365
    %6369 = vset.pattern.permute.xlu0 0
    %6370 = vperm.xlu0 %6369, %v6104
    %v6371 = vpop.permute.xlu0 %6370
    %6374 = vset.pattern.permute.xlu0 0
    %6375 = vperm.xlu0 %6374, %v6105
    %v6376 = vpop.permute.xlu0 %6375
    %6379 = vset.pattern.permute.xlu0 0
    %6380 = vperm.xlu0 %6379, %v6106
    %v6381 = vpop.permute.xlu0 %6380
    %6384 = vset.pattern.permute.xlu0 0
    %6385 = vperm.xlu0 %6384, %v6107
    %v6386 = vpop.permute.xlu0 %6385
    %6389 = vset.pattern.permute.xlu0 0
    %6390 = vperm.xlu0 %6389, %v6108
    %v6391 = vpop.permute.xlu0 %6390
    %6394 = vset.pattern.permute.xlu0 0
    %6395 = vperm.xlu0 %6394, %v6109
    %v6396 = vpop.permute.xlu0 %6395
    %6399 = vset.pattern.permute.xlu0 0
    %6400 = vperm.xlu0 %6399, %v6110
    %v6401 = vpop.permute.xlu0 %6400
    %6404 = vset.pattern.permute.xlu0 0
    %6405 = vperm.xlu0 %6404, %v6111
    %v6406 = vpop.permute.xlu0 %6405
    %6409 = vset.pattern.permute.xlu0 0
    %6410 = vperm.xlu0 %6409, %v6112
    %v6411 = vpop.permute.xlu0 %6410
    %6414 = vset.pattern.permute.xlu0 0
    %6415 = vperm.xlu0 %6414, %v6113
    %v6416 = vpop.permute.xlu0 %6415
    %6419 = vset.pattern.permute.xlu0 0
    %6420 = vperm.xlu0 %6419, %v6114
    %v6421 = vpop.permute.xlu0 %6420
    %6424 = vset.pattern.permute.xlu0 0
    %6425 = vperm.xlu0 %6424, %v6115
    %v6426 = vpop.permute.xlu0 %6425
    %6429 = vset.pattern.permute.xlu0 0
    %6430 = vperm.xlu0 %6429, %v6116
    %v6431 = vpop.permute.xlu0 %6430
    %6434 = vset.pattern.permute.xlu0 0
    %6435 = vperm.xlu0 %6434, %v6117
    %v6436 = vpop.permute.xlu0 %6435
    %v6438 = vmul.f32 %v6361, %v428
    %v6439 = vmul.f32 %v6366, %v429
    %v6440 = vmul.f32 %v6371, %v430
    %v6441 = vmul.f32 %v6376, %v431
    %v6442 = vmul.f32 %v6381, %v432
    %v6443 = vmul.f32 %v6386, %v433
    %v6444 = vmul.f32 %v6391, %v434
    %v6445 = vmul.f32 %v6396, %v435
    %v6446 = vmul.f32 %v6401, %v436
    %v6447 = vmul.f32 %v6406, %v437
    %v6448 = vmul.f32 %v6411, %v438
    %v6449 = vmul.f32 %v6416, %v439
    %v6450 = vmul.f32 %v6421, %v440
    %v6451 = vmul.f32 %v6426, %v441
    %v6452 = vmul.f32 %v6431, %v442
    %v6453 = vmul.f32 %v6436, %v443
    %6454 = vset.pattern.permute.xlu0 1
    %6455 = vperm.xlu0 %6454, %v6102
    %v6456 = vpop.permute.xlu0 %6455
    %6458 = vset.pattern.permute.xlu0 1
    %6459 = vperm.xlu0 %6458, %v6103
    %v6460 = vpop.permute.xlu0 %6459
    %6462 = vset.pattern.permute.xlu0 1
    %6463 = vperm.xlu0 %6462, %v6104
    %v6464 = vpop.permute.xlu0 %6463
    %6466 = vset.pattern.permute.xlu0 1
    %6467 = vperm.xlu0 %6466, %v6105
    %v6468 = vpop.permute.xlu0 %6467
    %6470 = vset.pattern.permute.xlu0 1
    %6471 = vperm.xlu0 %6470, %v6106
    %v6472 = vpop.permute.xlu0 %6471
    %6474 = vset.pattern.permute.xlu0 1
    %6475 = vperm.xlu0 %6474, %v6107
    %v6476 = vpop.permute.xlu0 %6475
    %6478 = vset.pattern.permute.xlu0 1
    %6479 = vperm.xlu0 %6478, %v6108
    %v6480 = vpop.permute.xlu0 %6479
    %6482 = vset.pattern.permute.xlu0 1
    %6483 = vperm.xlu0 %6482, %v6109
    %v6484 = vpop.permute.xlu0 %6483
    %6486 = vset.pattern.permute.xlu0 1
    %6487 = vperm.xlu0 %6486, %v6110
    %v6488 = vpop.permute.xlu0 %6487
    %6490 = vset.pattern.permute.xlu0 1
    %6491 = vperm.xlu0 %6490, %v6111
    %v6492 = vpop.permute.xlu0 %6491
    %6494 = vset.pattern.permute.xlu0 1
    %6495 = vperm.xlu0 %6494, %v6112
    %v6496 = vpop.permute.xlu0 %6495
    %6498 = vset.pattern.permute.xlu0 1
    %6499 = vperm.xlu0 %6498, %v6113
    %v6500 = vpop.permute.xlu0 %6499
    %6502 = vset.pattern.permute.xlu0 1
    %6503 = vperm.xlu0 %6502, %v6114
    %v6504 = vpop.permute.xlu0 %6503
    %6506 = vset.pattern.permute.xlu0 1
    %6507 = vperm.xlu0 %6506, %v6115
    %v6508 = vpop.permute.xlu0 %6507
    %6510 = vset.pattern.permute.xlu0 1
    %6511 = vperm.xlu0 %6510, %v6116
    %v6512 = vpop.permute.xlu0 %6511
    %6514 = vset.pattern.permute.xlu0 1
    %6515 = vperm.xlu0 %6514, %v6117
    %v6516 = vpop.permute.xlu0 %6515
    %v6518 = vmul.f32 %v6456, %v1874
    %v6519 = vmul.f32 %v6460, %v1875
    %v6520 = vmul.f32 %v6464, %v1876
    %v6521 = vmul.f32 %v6468, %v1877
    %v6522 = vmul.f32 %v6472, %v1878
    %v6523 = vmul.f32 %v6476, %v1879
    %v6524 = vmul.f32 %v6480, %v1880
    %v6525 = vmul.f32 %v6484, %v1881
    %v6526 = vmul.f32 %v6488, %v1882
    %v6527 = vmul.f32 %v6492, %v1883
    %v6528 = vmul.f32 %v6496, %v1884
    %v6529 = vmul.f32 %v6500, %v1885
    %v6530 = vmul.f32 %v6504, %v1886
    %v6531 = vmul.f32 %v6508, %v1887
    %v6532 = vmul.f32 %v6512, %v1888
    %v6533 = vmul.f32 %v6516, %v1889
    %v6534 = vadd.f32 %v6438, %v6518
    %v6535 = vadd.f32 %v6439, %v6519
    %v6536 = vadd.f32 %v6440, %v6520
    %v6537 = vadd.f32 %v6441, %v6521
    %v6538 = vadd.f32 %v6442, %v6522
    %v6539 = vadd.f32 %v6443, %v6523
    %v6540 = vadd.f32 %v6444, %v6524
    %v6541 = vadd.f32 %v6445, %v6525
    %v6542 = vadd.f32 %v6446, %v6526
    %v6543 = vadd.f32 %v6447, %v6527
    %v6544 = vadd.f32 %v6448, %v6528
    %v6545 = vadd.f32 %v6449, %v6529
    %v6546 = vadd.f32 %v6450, %v6530
    %v6547 = vadd.f32 %v6451, %v6531
    %v6548 = vadd.f32 %v6452, %v6532
    %v6549 = vadd.f32 %v6453, %v6533
    %6550 = vset.pattern.permute.xlu0 2
    %6551 = vperm.xlu0 %6550, %v6102
    %v6552 = vpop.permute.xlu0 %6551
    %6554 = vset.pattern.permute.xlu0 2
    %6555 = vperm.xlu0 %6554, %v6103
    %v6556 = vpop.permute.xlu0 %6555
    %6558 = vset.pattern.permute.xlu0 2
    %6559 = vperm.xlu0 %6558, %v6104
    %v6560 = vpop.permute.xlu0 %6559
    %6562 = vset.pattern.permute.xlu0 2
    %6563 = vperm.xlu0 %6562, %v6105
    %v6564 = vpop.permute.xlu0 %6563
    %6566 = vset.pattern.permute.xlu0 2
    %6567 = vperm.xlu0 %6566, %v6106
    %v6568 = vpop.permute.xlu0 %6567
    %6570 = vset.pattern.permute.xlu0 2
    %6571 = vperm.xlu0 %6570, %v6107
    %v6572 = vpop.permute.xlu0 %6571
    %6574 = vset.pattern.permute.xlu0 2
    %6575 = vperm.xlu0 %6574, %v6108
    %v6576 = vpop.permute.xlu0 %6575
    %6578 = vset.pattern.permute.xlu0 2
    %6579 = vperm.xlu0 %6578, %v6109
    %v6580 = vpop.permute.xlu0 %6579
    %6582 = vset.pattern.permute.xlu0 2
    %6583 = vperm.xlu0 %6582, %v6110
    %v6584 = vpop.permute.xlu0 %6583
    %6586 = vset.pattern.permute.xlu0 2
    %6587 = vperm.xlu0 %6586, %v6111
    %v6588 = vpop.permute.xlu0 %6587
    %6590 = vset.pattern.permute.xlu0 2
    %6591 = vperm.xlu0 %6590, %v6112
    %v6592 = vpop.permute.xlu0 %6591
    %6594 = vset.pattern.permute.xlu0 2
    %6595 = vperm.xlu0 %6594, %v6113
    %v6596 = vpop.permute.xlu0 %6595
    %6598 = vset.pattern.permute.xlu0 2
    %6599 = vperm.xlu0 %6598, %v6114
    %v6600 = vpop.permute.xlu0 %6599
    %6602 = vset.pattern.permute.xlu0 2
    %6603 = vperm.xlu0 %6602, %v6115
    %v6604 = vpop.permute.xlu0 %6603
    %6606 = vset.pattern.permute.xlu0 2
    %6607 = vperm.xlu0 %6606, %v6116
    %v6608 = vpop.permute.xlu0 %6607
    %6610 = vset.pattern.permute.xlu0 2
    %6611 = vperm.xlu0 %6610, %v6117
    %v6612 = vpop.permute.xlu0 %6611
    %v6614 = vmul.f32 %v6552, %v3593
    %v6615 = vmul.f32 %v6556, %v3594
    %v6616 = vmul.f32 %v6560, %v3595
    %v6617 = vmul.f32 %v6564, %v3596
    %v6618 = vmul.f32 %v6568, %v3597
    %v6619 = vmul.f32 %v6572, %v3598
    %v6620 = vmul.f32 %v6576, %v3599
    %v6621 = vmul.f32 %v6580, %v3600
    %v6622 = vmul.f32 %v6584, %v3601
    %v6623 = vmul.f32 %v6588, %v3602
    %v6624 = vmul.f32 %v6592, %v3603
    %v6625 = vmul.f32 %v6596, %v3604
    %v6626 = vmul.f32 %v6600, %v3605
    %v6627 = vmul.f32 %v6604, %v3606
    %v6628 = vmul.f32 %v6608, %v3607
    %v6629 = vmul.f32 %v6612, %v3608
    %v6630 = vadd.f32 %v6534, %v6614
    %v6631 = vadd.f32 %v6535, %v6615
    %v6632 = vadd.f32 %v6536, %v6616
    %v6633 = vadd.f32 %v6537, %v6617
    %v6634 = vadd.f32 %v6538, %v6618
    %v6635 = vadd.f32 %v6539, %v6619
    %v6636 = vadd.f32 %v6540, %v6620
    %v6637 = vadd.f32 %v6541, %v6621
    %v6638 = vadd.f32 %v6542, %v6622
    %v6639 = vadd.f32 %v6543, %v6623
    %v6640 = vadd.f32 %v6544, %v6624
    %v6641 = vadd.f32 %v6545, %v6625
    %v6642 = vadd.f32 %v6546, %v6626
    %v6643 = vadd.f32 %v6547, %v6627
    %v6644 = vadd.f32 %v6548, %v6628
    %v6645 = vadd.f32 %v6549, %v6629
    %v6646 = vmax.f32 %v6630, 0.0
    %v6647 = vmax.f32 %v6631, 0.0
    %v6648 = vmax.f32 %v6632, 0.0
    %v6649 = vmax.f32 %v6633, 0.0
    %v6650 = vmax.f32 %v6634, 0.0
    %v6651 = vmax.f32 %v6635, 0.0
    %v6652 = vmax.f32 %v6636, 0.0
    %v6653 = vmax.f32 %v6637, 0.0
    %v6654 = vmax.f32 %v6638, 0.0
    %v6655 = vmax.f32 %v6639, 0.0
    %v6656 = vmax.f32 %v6640, 0.0
    %v6657 = vmax.f32 %v6641, 0.0
    %v6658 = vmax.f32 %v6642, 0.0
    %v6659 = vmax.f32 %v6643, 0.0
    %v6660 = vmax.f32 %v6644, 0.0
    %v6661 = vmax.f32 %v6645, 0.0
    %6663 = vset.pattern.permute.xlu0 3
    %6664 = vperm.xlu0 %6663, %v6342
    %v6665 = vpop.permute.xlu0 %6664
    %6668 = vset.pattern.permute.xlu0 3
    %6669 = vperm.xlu0 %6668, %v6343
    %v6670 = vpop.permute.xlu0 %6669
    %6673 = vset.pattern.permute.xlu0 3
    %6674 = vperm.xlu0 %6673, %v6344
    %v6675 = vpop.permute.xlu0 %6674
    %6678 = vset.pattern.permute.xlu0 3
    %6679 = vperm.xlu0 %6678, %v6345
    %v6680 = vpop.permute.xlu0 %6679
    %6683 = vset.pattern.permute.xlu0 3
    %6684 = vperm.xlu0 %6683, %v6346
    %v6685 = vpop.permute.xlu0 %6684
    %6688 = vset.pattern.permute.xlu0 3
    %6689 = vperm.xlu0 %6688, %v6347
    %v6690 = vpop.permute.xlu0 %6689
    %6693 = vset.pattern.permute.xlu0 3
    %6694 = vperm.xlu0 %6693, %v6348
    %v6695 = vpop.permute.xlu0 %6694
    %6698 = vset.pattern.permute.xlu0 3
    %6699 = vperm.xlu0 %6698, %v6349
    %v6700 = vpop.permute.xlu0 %6699
    %6703 = vset.pattern.permute.xlu0 3
    %6704 = vperm.xlu0 %6703, %v6350
    %v6705 = vpop.permute.xlu0 %6704
    %6708 = vset.pattern.permute.xlu0 3
    %6709 = vperm.xlu0 %6708, %v6351
    %v6710 = vpop.permute.xlu0 %6709
    %6713 = vset.pattern.permute.xlu0 3
    %6714 = vperm.xlu0 %6713, %v6352
    %v6715 = vpop.permute.xlu0 %6714
    %6718 = vset.pattern.permute.xlu0 3
    %6719 = vperm.xlu0 %6718, %v6353
    %v6720 = vpop.permute.xlu0 %6719
    %6723 = vset.pattern.permute.xlu0 3
    %6724 = vperm.xlu0 %6723, %v6354
    %v6725 = vpop.permute.xlu0 %6724
    %6728 = vset.pattern.permute.xlu0 3
    %6729 = vperm.xlu0 %6728, %v6355
    %v6730 = vpop.permute.xlu0 %6729
    %6733 = vset.pattern.permute.xlu0 3
    %6734 = vperm.xlu0 %6733, %v6356
    %v6735 = vpop.permute.xlu0 %6734
    %6738 = vset.pattern.permute.xlu0 3
    %6739 = vperm.xlu0 %6738, %v6357
    %v6740 = vpop.permute.xlu0 %6739
    %v6742 = vmul.f32 %v6665, %v4450
    %v6743 = vmul.f32 %v6670, %v4451
    %v6744 = vmul.f32 %v6675, %v4452
    %v6745 = vmul.f32 %v6680, %v4453
    %v6746 = vmul.f32 %v6685, %v4454
    %v6747 = vmul.f32 %v6690, %v4455
    %v6748 = vmul.f32 %v6695, %v4456
    %v6749 = vmul.f32 %v6700, %v4457
    %v6750 = vmul.f32 %v6705, %v4458
    %v6751 = vmul.f32 %v6710, %v4459
    %v6752 = vmul.f32 %v6715, %v4460
    %v6753 = vmul.f32 %v6720, %v4461
    %v6754 = vmul.f32 %v6725, %v4462
    %v6755 = vmul.f32 %v6730, %v4463
    %v6756 = vmul.f32 %v6735, %v4464
    %v6757 = vmul.f32 %v6740, %v4465
    %6758 = vset.pattern.permute.xlu0 4
    %6759 = vperm.xlu0 %6758, %v6342
    %v6760 = vpop.permute.xlu0 %6759
    %6762 = vset.pattern.permute.xlu0 4
    %6763 = vperm.xlu0 %6762, %v6343
    %v6764 = vpop.permute.xlu0 %6763
    %6766 = vset.pattern.permute.xlu0 4
    %6767 = vperm.xlu0 %6766, %v6344
    %v6768 = vpop.permute.xlu0 %6767
    %6770 = vset.pattern.permute.xlu0 4
    %6771 = vperm.xlu0 %6770, %v6345
    %v6772 = vpop.permute.xlu0 %6771
    %6774 = vset.pattern.permute.xlu0 4
    %6775 = vperm.xlu0 %6774, %v6346
    %v6776 = vpop.permute.xlu0 %6775
    %6778 = vset.pattern.permute.xlu0 4
    %6779 = vperm.xlu0 %6778, %v6347
    %v6780 = vpop.permute.xlu0 %6779
    %6782 = vset.pattern.permute.xlu0 4
    %6783 = vperm.xlu0 %6782, %v6348
    %v6784 = vpop.permute.xlu0 %6783
    %6786 = vset.pattern.permute.xlu0 4
    %6787 = vperm.xlu0 %6786, %v6349
    %v6788 = vpop.permute.xlu0 %6787
    %6790 = vset.pattern.permute.xlu0 4
    %6791 = vperm.xlu0 %6790, %v6350
    %v6792 = vpop.permute.xlu0 %6791
    %6794 = vset.pattern.permute.xlu0 4
    %6795 = vperm.xlu0 %6794, %v6351
    %v6796 = vpop.permute.xlu0 %6795
    %6798 = vset.pattern.permute.xlu0 4
    %6799 = vperm.xlu0 %6798, %v6352
    %v6800 = vpop.permute.xlu0 %6799
    %6802 = vset.pattern.permute.xlu0 4
    %6803 = vperm.xlu0 %6802, %v6353
    %v6804 = vpop.permute.xlu0 %6803
    %6806 = vset.pattern.permute.xlu0 4
    %6807 = vperm.xlu0 %6806, %v6354
    %v6808 = vpop.permute.xlu0 %6807
    %6810 = vset.pattern.permute.xlu0 4
    %6811 = vperm.xlu0 %6810, %v6355
    %v6812 = vpop.permute.xlu0 %6811
    %6814 = vset.pattern.permute.xlu0 4
    %6815 = vperm.xlu0 %6814, %v6356
    %v6816 = vpop.permute.xlu0 %6815
    %6818 = vset.pattern.permute.xlu0 4
    %6819 = vperm.xlu0 %6818, %v6357
    %v6820 = vpop.permute.xlu0 %6819
    %v6822 = vmul.f32 %v6760, %v6646
    %v6823 = vmul.f32 %v6764, %v6647
    %v6824 = vmul.f32 %v6768, %v6648
    %v6825 = vmul.f32 %v6772, %v6649
    %v6826 = vmul.f32 %v6776, %v6650
    %v6827 = vmul.f32 %v6780, %v6651
    %v6828 = vmul.f32 %v6784, %v6652
    %v6829 = vmul.f32 %v6788, %v6653
    %v6830 = vmul.f32 %v6792, %v6654
    %v6831 = vmul.f32 %v6796, %v6655
    %v6832 = vmul.f32 %v6800, %v6656
    %v6833 = vmul.f32 %v6804, %v6657
    %v6834 = vmul.f32 %v6808, %v6658
    %v6835 = vmul.f32 %v6812, %v6659
    %v6836 = vmul.f32 %v6816, %v6660
    %v6837 = vmul.f32 %v6820, %v6661
    %v6838 = vadd.f32 %v6742, %v6822
    %v6839 = vadd.f32 %v6743, %v6823
    %v6840 = vadd.f32 %v6744, %v6824
    %v6841 = vadd.f32 %v6745, %v6825
    %v6842 = vadd.f32 %v6746, %v6826
    %v6843 = vadd.f32 %v6747, %v6827
    %v6844 = vadd.f32 %v6748, %v6828
    %v6845 = vadd.f32 %v6749, %v6829
    %v6846 = vadd.f32 %v6750, %v6830
    %v6847 = vadd.f32 %v6751, %v6831
    %v6848 = vadd.f32 %v6752, %v6832
    %v6849 = vadd.f32 %v6753, %v6833
    %v6850 = vadd.f32 %v6754, %v6834
    %v6851 = vadd.f32 %v6755, %v6835
    %v6852 = vadd.f32 %v6756, %v6836
    %v6853 = vadd.f32 %v6757, %v6837
    %v6854 = vmax.f32 %v6838, 0.0
    %v6855 = vmax.f32 %v6839, 0.0
    %v6856 = vmax.f32 %v6840, 0.0
    %v6857 = vmax.f32 %v6841, 0.0
    %v6858 = vmax.f32 %v6842, 0.0
    %v6859 = vmax.f32 %v6843, 0.0
    %v6860 = vmax.f32 %v6844, 0.0
    %v6861 = vmax.f32 %v6845, 0.0
    %v6862 = vmax.f32 %v6846, 0.0
    %v6863 = vmax.f32 %v6847, 0.0
    %v6864 = vmax.f32 %v6848, 0.0
    %v6865 = vmax.f32 %v6849, 0.0
    %v6866 = vmax.f32 %v6850, 0.0
    %v6867 = vmax.f32 %v6851, 0.0
    %v6868 = vmax.f32 %v6852, 0.0
    %v6869 = vmax.f32 %v6853, 0.0
    %6870 = vst [vmem:[#allocation17] sm:$0xff] %v5749
    %6871 = vst [vmem:[#allocation17 + $0x8] sm:$0xff] %v5750
    %6872 = vst [vmem:[#allocation17 + $0x18] sm:$0xff] %v5751
    %6873 = vst [vmem:[#allocation17 + $0x20] sm:$0xff] %v5752
    %6874 = vst [vmem:[#allocation17 + $0x30] sm:$0xff] %v5753
    %6875 = vst [vmem:[#allocation17 + $0x38] sm:$0xff] %v5754
    %6876 = vst [vmem:[#allocation17 + $0x48] sm:$0xff] %v5755
    %6877 = vst [vmem:[#allocation17 + $0x50] sm:$0xff] %v5756
    %6878 = vst [vmem:[#allocation17 + $0x60] sm:$0xff] %v5757
    %6879 = vst [vmem:[#allocation17 + $0x68] sm:$0xff] %v5758
    %6880 = vst [vmem:[#allocation17 + $0x78] sm:$0xff] %v5759
    %6881 = vst [vmem:[#allocation17 + $0x80] sm:$0xff] %v5760
    %6882 = vst [vmem:[#allocation17 + $0x90] sm:$0xff] %v5761
    %6883 = vst [vmem:[#allocation17 + $0x98] sm:$0xff] %v5762
    %6884 = vst [vmem:[#allocation17 + $0xa8] sm:$0xff] %v5763
    %6885 = vst [vmem:[#allocation17 + $0xb0] sm:$0xff] %v5764
    %6886 = vst [vmem:[#allocation17 + $0xc0] sm:$0xff] %v5765
    %6887 = vst [vmem:[#allocation17 + $0xc8] sm:$0xff] %v5766
    %6888 = vst [vmem:[#allocation17 + $0xd8] sm:$0xff] %v5767
    %6889 = vst [vmem:[#allocation17 + $0xe0] sm:$0xff] %v5768
    %6890 = vst [vmem:[#allocation17 + $0xf0] sm:$0xff] %v5769
    %6891 = vst [vmem:[#allocation17 + $0xf8] sm:$0xff] %v5770
    %6892 = vst [vmem:[#allocation17 + $0x108] sm:$0xff] %v5771
    %6893 = vst [vmem:[#allocation17 + $0x110] sm:$0xff] %v5772
    %6894 = vst [vmem:[#allocation17 + $0x120] sm:$0xff] %v5773
    %6895 = vst [vmem:[#allocation17 + $0x128] sm:$0xff] %v5774
    %6896 = vst [vmem:[#allocation17 + $0x138] sm:$0xff] %v5775
    %6897 = vst [vmem:[#allocation17 + $0x140] sm:$0xff] %v5776
    %6898 = vst [vmem:[#allocation17 + $0x150] sm:$0xff] %v5777
    %6899 = vst [vmem:[#allocation17 + $0x158] sm:$0xff] %v5778
    %6900 = vst [vmem:[#allocation17 + $0x168] sm:$0xff] %v5779
    %6901 = vst [vmem:[#allocation17 + $0x170] sm:$0xff] %v5780
    %6902 = vst [vmem:[#allocation17 + $0x10] sm:$0xff] %v6854
    %6903 = vst [vmem:[#allocation17 + $0x28] sm:$0xff] %v6855
    %6904 = vst [vmem:[#allocation17 + $0x40] sm:$0xff] %v6856
    %6905 = vst [vmem:[#allocation17 + $0x58] sm:$0xff] %v6857
    %6906 = vst [vmem:[#allocation17 + $0x70] sm:$0xff] %v6858
    %6907 = vst [vmem:[#allocation17 + $0x88] sm:$0xff] %v6859
    %6908 = vst [vmem:[#allocation17 + $0xa0] sm:$0xff] %v6860
    %6909 = vst [vmem:[#allocation17 + $0xb8] sm:$0xff] %v6861
    %6910 = vst [vmem:[#allocation17 + $0xd0] sm:$0xff] %v6862
    %6911 = vst [vmem:[#allocation17 + $0xe8] sm:$0xff] %v6863
    %6912 = vst [vmem:[#allocation17 + $0x100] sm:$0xff] %v6864
    %6913 = vst [vmem:[#allocation17 + $0x118] sm:$0xff] %v6865
    %6914 = vst [vmem:[#allocation17 + $0x130] sm:$0xff] %v6866
    %6915 = vst [vmem:[#allocation17 + $0x148] sm:$0xff] %v6867
    %6916 = vst [vmem:[#allocation17 + $0x160] sm:$0xff] %v6868
    %6917 = vst [vmem:[#allocation17 + $0x178] sm:$0xff] %v6869
    // Predicated region
    $region74: #{tpu_custom_call.1} parent=1 // pred_check
      _
    $region75: #{tpu_custom_call.1} parent=1 // pred_check_branch
      %6919 = sbr.rel (0) target = $region77
    $region76: #{tpu_custom_call.1} parent=1 // pred_region
      %s6921 = ssub.s32 6144, 6144
      %6922 = vsyncadd [#allocation4], %s6921
      %s6923 = sshll.u32 [#allocation17], 4
      %s6924 = int_to_ptr.vmem [resolvable:$true] %s6923
      %6929 = dma.vmem_to_hbm [thread:$0]  %s6924, 6144, %s9, [#allocation4], 384, 384, 24
    $region77: #{tpu_custom_call.1} parent=1 // pred_fallthru
      _
    // Predicated region
    $region78: #{tpu_custom_call.1} parent=1 // pred_check
      _
    $region79: #{tpu_custom_call.1} parent=1 // pred_check_branch
      %6931 = sbr.rel (0) target = $region81
    $region80: #{tpu_custom_call.1} parent=1 // pred_region
      %6932 = dma.done [#allocation4], 6144
    $region81: #{tpu_custom_call.1} parent=1 // pred_fallthru
      _
    %6933 = vsyncpa [#allocation3], 1
    %6934 = vsyncpa [#allocation6], 1
    %6935 = vsyncpa [#allocation9], 1
    %6936 = vsyncpa [#allocation12], 1
    %6937 = vsyncpa [#allocation15], 1
    %6938 = vsyncpa [#allocation4], 1

</llo_original>
